<compile_context>
chip_gen: v6e
topology: v6e:2x2x1
jax: 0.10.0
libtpu: 0.0.40
codegen_flags: <defaults>
</compile_context>

<pallas_src>
import functools

import jax
import jax.numpy as jnp
from jax import lax
from jax.experimental import pallas as pl
from jax.experimental.pallas import tpu as pltpu

NODE_INPUT_DIM = 32      # node_input_dim (small stand-in for 133, padded to 128)
NODE_HIDDEN_DIM = 128    # node_hidden_dim H (lane-dense stand-in for 300)
NUM_MP_STEPS = 3         # num_step_message_passing
NUM_S2S_STEPS = 2        # num_step_set2set
LANE = 128               # TPU lane width
NEG_INF = -1e30


def _round_up(n, m):
    return ((n + m - 1) // m) * m


# ------------------------------------------------------------ fused kernel --

def _cgib_kernel(sx_ref, vx_ref, sadj_ref, vadj_ref,
                 gid_s_ref, gid_v_ref, slen_ref, vlen_ref,
                 w_in_ref, b_in_ref, w_msg_ref, b_msg_ref,
                 w_ih_ref, w_hh_ref, b_lstm_ref, pred_w_ref, pred_b_ref,
                 preds_ref, imap_ref):
    bf16 = jnp.bfloat16
    f32 = jnp.float32

    # ---- weights resident in VMEM, cast once to bf16 for the MXU ----
    w_in_b = w_in_ref[...].astype(bf16)      # (IN_PAD, H)
    w_msg_b = w_msg_ref[...].astype(bf16)    # (H, H)
    b_in = b_in_ref[...]                     # (1, H) f32
    b_msg = b_msg_ref[...]                   # (1, H) f32

    # ---- "gather" = GIN-style message passing (see TODO above) ----
    def gine(x_ref, adj_ref):
        adj_b = adj_ref[...].astype(bf16)
        h = jnp.maximum(
            jnp.dot(x_ref[...].astype(bf16), w_in_b,
                    preferred_element_type=f32) + b_in, 0.0)
        # TODO(synk): convert to lax.fori_loop(..., unroll=True) at real sizes
        for _ in range(NUM_MP_STEPS):
            agg = h + jnp.dot(adj_b, h.astype(bf16),
                              preferred_element_type=f32)
            h = jnp.maximum(
                jnp.dot(agg.astype(bf16), w_msg_b,
                        preferred_element_type=f32) + b_msg, 0.0)
        return h

    su = gine(sx_ref, sadj_ref)      # (Ns, H) f32
    sv = gine(vx_ref, vadj_ref)      # (Nv, H) f32

    # ---- F.normalize(dim=1), eps=1e-12, via rsqrt (EUP) ----
    def l2norm(v):
        ss = jnp.sum(v * v, axis=1, keepdims=True)
        return v * lax.rsqrt(jnp.maximum(ss, 1e-24))

    su_n = l2norm(su)
    sv_n = l2norm(sv)
    su_b = su_n.astype(bf16)
    sv_b = sv_n.astype(bf16)

    # ---- len_map: VPU broadcast equality of graph-id vectors (no matmul) ----
    len_map = jnp.where(gid_s_ref[...] == gid_v_ref[...], 1.0, 0.0)  # (Ns,Nv)

    # ---- interaction map (lane-dense full store) ----
    imap = lax.dot_general(su_b, sv_b, (((1,), (1,)), ((), ())),
                           preferred_element_type=f32) * len_map
    imap_ref[...] = imap

    imap_b = imap.astype(bf16)
    solute_prime = jnp.dot(imap_b, sv_b, preferred_element_type=f32)   # (Ns,H)
    # TODO(synk): when grid-tiled, accumulate per-tile with XLU tile transposes
    solvent_prime = lax.dot_general(imap_b, su_b, (((0,), (0,)), ((), ())),
                                    preferred_element_type=f32)        # (Nv,H)

    solute_cat = jnp.concatenate([su_n, solute_prime], axis=1)    # (Ns, 2H)
    solvent_cat = jnp.concatenate([sv_n, solvent_prime], axis=1)  # (Nv, 2H)

    # ---- Set2Set: ONE batched LSTM for solute+solvent + segment softmax ----
    w_ih_t = w_ih_ref[...].astype(bf16)     # (2D, 4D)  pre-transposed
    w_hh_t = w_hh_ref[...].astype(bf16)     # (D, 4D)
    b_lstm = b_lstm_ref[...]                # (1, 4D) f32
    d = w_hh_t.shape[0]                     # D = 2H (set2set in_channels)

    slen = slen_ref[...]                    # (B_pad, Ns) membership mask
    vlen = vlen_ref[...]                    # (B_pad, Nv)
    b = slen.shape[0]                       # B_pad (multiple of 8)

    xs_b = solute_cat.astype(bf16)          # (Ns, D)
    xv_b = solvent_cat.astype(bf16)         # (Nv, D)
    xs_t = solute_cat.T.astype(bf16)        # (D, Ns)  hoisted out of step loop
    xv_t = solvent_cat.T.astype(bf16)       # (D, Nv)

    def pool(h_part, x_t, x_full, mask):
        logits = jnp.dot(h_part.astype(bf16), x_t,
                         preferred_element_type=f32)           # (B_pad, N)
        logits = jnp.where(mask > 0.5, logits, NEG_INF)
        m = jnp.max(logits, axis=1, keepdims=True)
        p = jnp.where(mask > 0.5, jnp.exp(logits - m), 0.0)
        denom = jnp.maximum(jnp.sum(p, axis=1, keepdims=True), 1e-20)
        a = p * pl.reciprocal(denom, approx=True)
        return jnp.dot(a.astype(bf16), x_full,
                       preferred_element_type=f32)             # (B_pad, D)

    # rows [0, b) = solute set, rows [b, 2b) = solvent set (8-aligned halves)
    q = jnp.zeros((2 * b, 2 * d), f32)
    h = jnp.zeros((2 * b, d), f32)
    c = jnp.zeros((2 * b, d), f32)
    for _ in range(NUM_S2S_STEPS):
        gates = (jnp.dot(q.astype(bf16), w_ih_t, preferred_element_type=f32)
                 + jnp.dot(h.astype(bf16), w_hh_t, preferred_element_type=f32)
                 + b_lstm)                                     # (2B_pad, 4D)
        ig = jax.nn.sigmoid(gates[:, 0 * d:1 * d])             # torch i,f,g,o
        fg = jax.nn.sigmoid(gates[:, 1 * d:2 * d])
        gg = jnp.tanh(gates[:, 2 * d:3 * d])
        og = jax.nn.sigmoid(gates[:, 3 * d:4 * d])
        c = fg * c + ig * gg
        h = og * jnp.tanh(c)
        r_s = pool(h[:b], xs_t, xs_b, slen)                    # (B_pad, D)
        r_v = pool(h[b:], xv_t, xv_b, vlen)                    # (B_pad, D)
        q = jnp.concatenate([h, jnp.concatenate([r_s, r_v], axis=0)], axis=1)

    final = jnp.concatenate([q[:b], q[b:]], axis=1)            # (B_pad, 8H)

    # ---- predictor Linear(8H, 1) as a lane reduction (no 1-col matmul) ----
    w_pred = pred_w_ref[...]                                   # (1, 8H) f32
    scores = jnp.sum(final * w_pred, axis=1, keepdims=True) + pred_b_ref[...]
    preds_ref[...] = jnp.broadcast_to(scores, preds_ref.shape)  # lane-dense


# ----------------------------------------------------------------- wrapper --

@functools.partial(jax.jit, static_argnums=(7,))
def cgib_forward(params, solute_x, solute_adj, solute_batch,
                 solvent_x, solvent_adj, solvent_batch, num_graphs):
    gather_p, lstm_p, pred_w, pred_b = params
    w_in, b_in, w_msg, b_msg = gather_p
    w_ih, w_hh, b_lstm = lstm_p

    ns, in_dim = solute_x.shape
    nv = solvent_x.shape[0]
    np_s = _round_up(ns, LANE)          # lane-dense node dims
    np_v = _round_up(nv, LANE)
    in_pad = _round_up(in_dim, LANE)    # lane-dense input-feature dim
    b_pad = _round_up(num_graphs, 8)    # sublane-aligned batch halves

    sx = jnp.pad(solute_x, ((0, np_s - ns), (0, in_pad - in_dim)))
    vx = jnp.pad(solvent_x, ((0, np_v - nv), (0, in_pad - in_dim)))
    sadj = jnp.pad(solute_adj, ((0, np_s - ns), (0, np_s - ns)))
    vadj = jnp.pad(solvent_adj, ((0, np_v - nv), (0, np_v - nv)))

    # per-node graph ids; distinct sentinels so padded nodes never match
    gid_s = jnp.pad(solute_batch.astype(jnp.float32), (0, np_s - ns),
                    constant_values=-1.0)
    gid_v = jnp.pad(solvent_batch.astype(jnp.float32), (0, np_v - nv),
                    constant_values=-2.0)
    batch_ids = jnp.arange(b_pad, dtype=jnp.float32)[:, None]
    slen = (batch_ids == gid_s[None, :]).astype(jnp.float32)   # (B_pad, np_s)
    vlen = (batch_ids == gid_v[None, :]).astype(jnp.float32)   # (B_pad, np_v)

    w_in_p = jnp.pad(w_in, ((0, in_pad - in_dim), (0, 0)))      # zero rows

    preds_pad, imap_pad = pl.pallas_call(
        _cgib_kernel,
        out_shape=(
            jax.ShapeDtypeStruct((b_pad, LANE), jnp.float32),   # padded preds
            jax.ShapeDtypeStruct((np_s, np_v), jnp.float32),    # padded imap
        ),
        compiler_params=pltpu.CompilerParams(
            vmem_limit_bytes=64 * 1024 * 1024),
    )(sx, vx, sadj, vadj,
      gid_s.reshape(np_s, 1), gid_v.reshape(1, np_v), slen, vlen,
      w_in_p, b_in.reshape(1, -1), w_msg, b_msg.reshape(1, -1),
      w_ih.T, w_hh.T, b_lstm.reshape(1, -1),        # pre-transposed LSTM wts
      pred_w.reshape(1, -1), pred_b.reshape(1, 1))

    return preds_pad[:num_graphs, :1], imap_pad[:ns, :nv]


# ------------------------------------------------------------------ params --

def xavier_uniform(key, shape):
    fan_in, fan_out = shape
    limit = (6.0 / (fan_in + fan_out)) ** 0.5
    return jax.random.uniform(key, shape, jnp.float32, -limit, limit)


def init_params(key):
    h = NODE_HIDDEN_DIM
    keys = jax.random.split(key, 8)
    gather_p = (
        xavier_uniform(keys[0], (NODE_INPUT_DIM, h)),
        jnp.zeros((h,), jnp.float32),
        xavier_uniform(keys[1], (h, h)),
        jnp.zeros((h,), jnp.float32),
    )
    d = 2 * h                   # set2set in_channels; LSTM hidden = d, input = 2d
    k = 1.0 / (d ** 0.5)
    lstm_p = (
        jax.random.uniform(keys[2], (4 * d, 2 * d), jnp.float32, -k, k),  # w_ih
        jax.random.uniform(keys[3], (4 * d, d), jnp.float32, -k, k),      # w_hh
        jnp.zeros((4 * d,), jnp.float32),       # b_ih + b_hh (combined)
    )
    pred_w = xavier_uniform(keys[4], (8 * h, 1)).reshape(1, 8 * h)  # Linear(8H,1)
    pred_b = jnp.zeros((1,), jnp.float32)
    return gather_p, lstm_p, pred_w, pred_b


# -------------------------------------------------------------------- main --

def ring_adj(n_graphs, n_per):
    eye = jnp.eye(n_per, dtype=jnp.float32)
    ring = jnp.roll(eye, 1, axis=1) + jnp.roll(eye, -1, axis=1)
    return jnp.kron(jnp.eye(n_graphs, dtype=jnp.float32), ring)


if __name__ == "__main__":
    key = jax.random.PRNGKey(0)
    pkey, xkey1, xkey2 = jax.random.split(key, 3)
    params = init_params(pkey)

    B = 2                  # number of graphs per "batch"
    NS_PER, NV_PER = 8, 8
    Ns, Nv = B * NS_PER, B * NV_PER

    solute_x = jax.random.normal(xkey1, (Ns, NODE_INPUT_DIM), jnp.float32)
    solvent_x = jax.random.normal(xkey2, (Nv, NODE_INPUT_DIM), jnp.float32)

    solute_adj = ring_adj(B, NS_PER)       # (Ns, Ns)
    solvent_adj = ring_adj(B, NV_PER)      # (Nv, Nv)
    solute_batch = jnp.repeat(jnp.arange(B, dtype=jnp.int32), NS_PER)   # (Ns,)
    solvent_batch = jnp.repeat(jnp.arange(B, dtype=jnp.int32), NV_PER)  # (Nv,)

    preds, imap = cgib_forward(params, solute_x, solute_adj, solute_batch,
                               solvent_x, solvent_adj, solvent_batch, B)
    jax.block_until_ready((preds, imap))

    assert preds.shape == (B, 1) and imap.shape == (Ns, Nv)
    assert bool(jnp.all(jnp.isfinite(preds))) and bool(jnp.all(jnp.isfinite(imap)))
    print("KERNEL_OK")
</pallas_src>

<mosaic_0001>
module attributes {stable_mosaic.version = 11 : i64} {
  func.func @_cgib_kernel(%arg0: memref<128x128xf32, #tpu.memory_space<vmem>>, %arg1: memref<128x128xf32, #tpu.memory_space<vmem>>, %arg2: memref<128x128xf32, #tpu.memory_space<vmem>>, %arg3: memref<128x128xf32, #tpu.memory_space<vmem>>, %arg4: memref<128x1xf32, #tpu.memory_space<vmem>>, %arg5: memref<1x128xf32, #tpu.memory_space<vmem>>, %arg6: memref<8x128xf32, #tpu.memory_space<vmem>>, %arg7: memref<8x128xf32, #tpu.memory_space<vmem>>, %arg8: memref<128x128xf32, #tpu.memory_space<vmem>>, %arg9: memref<1x128xf32, #tpu.memory_space<vmem>>, %arg10: memref<128x128xf32, #tpu.memory_space<vmem>>, %arg11: memref<1x128xf32, #tpu.memory_space<vmem>>, %arg12: memref<512x1024xf32, #tpu.memory_space<vmem>>, %arg13: memref<256x1024xf32, #tpu.memory_space<vmem>>, %arg14: memref<1x1024xf32, #tpu.memory_space<vmem>>, %arg15: memref<1x1024xf32, #tpu.memory_space<vmem>>, %arg16: memref<1x1xf32, #tpu.memory_space<vmem>>, %arg17: memref<8x128xf32, #tpu.memory_space<vmem>>, %arg18: memref<128x128xf32, #tpu.memory_space<vmem>>) attributes {dimension_semantics = [], scalar_prefetch = 0 : i64, scratch_operands = 0 : i64, tpu.core_type = #tpu.core_type<tc>} {
    %c0 = arith.constant 0 : index
    %c0_0 = arith.constant 0 : index
    %0 = vector.load %arg8[%c0, %c0_0] : memref<128x128xf32, #tpu.memory_space<vmem>>, vector<128x128xf32>
    %1 = arith.truncf %0 : vector<128x128xf32> to vector<128x128xbf16>
    %c0_1 = arith.constant 0 : index
    %c0_2 = arith.constant 0 : index
    %2 = vector.load %arg10[%c0_1, %c0_2] : memref<128x128xf32, #tpu.memory_space<vmem>>, vector<128x128xf32>
    %3 = arith.truncf %2 : vector<128x128xf32> to vector<128x128xbf16>
    %c0_3 = arith.constant 0 : index
    %c0_4 = arith.constant 0 : index
    %4 = vector.load %arg9[%c0_3, %c0_4] : memref<1x128xf32, #tpu.memory_space<vmem>>, vector<1x128xf32>
    %c0_5 = arith.constant 0 : index
    %c0_6 = arith.constant 0 : index
    %5 = vector.load %arg11[%c0_5, %c0_6] : memref<1x128xf32, #tpu.memory_space<vmem>>, vector<1x128xf32>
    %c0_7 = arith.constant 0 : index
    %c0_8 = arith.constant 0 : index
    %6 = vector.load %arg2[%c0_7, %c0_8] : memref<128x128xf32, #tpu.memory_space<vmem>>, vector<128x128xf32>
    %7 = arith.truncf %6 : vector<128x128xf32> to vector<128x128xbf16>
    %c0_9 = arith.constant 0 : index
    %c0_10 = arith.constant 0 : index
    %8 = vector.load %arg0[%c0_9, %c0_10] : memref<128x128xf32, #tpu.memory_space<vmem>>, vector<128x128xf32>
    %9 = arith.truncf %8 : vector<128x128xf32> to vector<128x128xbf16>
    %cst = arith.constant dense<0.000000e+00> : vector<128x128xf32>
    %10 = tpu.matmul %9, %1, %cst {dimension_numbers = #tpu.dot_dimension_numbers<[1], [0], [0], [1], [0, 0, 1, 1], [], []>} : vector<128x128xbf16>, vector<128x128xbf16>, vector<128x128xf32> -> vector<128x128xf32>
    %11 = vector.broadcast %4 : vector<1x128xf32> to vector<128x128xf32>
    %12 = arith.addf %10, %11 : vector<128x128xf32>
    %cst_11 = arith.constant 0.000000e+00 : f32
    %13 = vector.broadcast %cst_11 : f32 to vector<128x128xf32>
    %14 = arith.maximumf %12, %13 : vector<128x128xf32>
    %15 = arith.truncf %14 : vector<128x128xf32> to vector<128x128xbf16>
    %cst_12 = arith.constant dense<0.000000e+00> : vector<128x128xf32>
    %16 = tpu.matmul %7, %15, %cst_12 {dimension_numbers = #tpu.dot_dimension_numbers<[1], [0], [0], [1], [0, 0, 1, 1], [], []>} : vector<128x128xbf16>, vector<128x128xbf16>, vector<128x128xf32> -> vector<128x128xf32>
    %17 = arith.addf %14, %16 : vector<128x128xf32>
    %18 = arith.truncf %17 : vector<128x128xf32> to vector<128x128xbf16>
    %cst_13 = arith.constant dense<0.000000e+00> : vector<128x128xf32>
    %19 = tpu.matmul %18, %3, %cst_13 {dimension_numbers = #tpu.dot_dimension_numbers<[1], [0], [0], [1], [0, 0, 1, 1], [], []>} : vector<128x128xbf16>, vector<128x128xbf16>, vector<128x128xf32> -> vector<128x128xf32>
    %20 = vector.broadcast %5 : vector<1x128xf32> to vector<128x128xf32>
    %21 = arith.addf %19, %20 : vector<128x128xf32>
    %cst_14 = arith.constant 0.000000e+00 : f32
    %22 = vector.broadcast %cst_14 : f32 to vector<128x128xf32>
    %23 = arith.maximumf %21, %22 : vector<128x128xf32>
    %24 = arith.truncf %23 : vector<128x128xf32> to vector<128x128xbf16>
    %cst_15 = arith.constant dense<0.000000e+00> : vector<128x128xf32>
    %25 = tpu.matmul %7, %24, %cst_15 {dimension_numbers = #tpu.dot_dimension_numbers<[1], [0], [0], [1], [0, 0, 1, 1], [], []>} : vector<128x128xbf16>, vector<128x128xbf16>, vector<128x128xf32> -> vector<128x128xf32>
    %26 = arith.addf %23, %25 : vector<128x128xf32>
    %27 = arith.truncf %26 : vector<128x128xf32> to vector<128x128xbf16>
    %cst_16 = arith.constant dense<0.000000e+00> : vector<128x128xf32>
    %28 = tpu.matmul %27, %3, %cst_16 {dimension_numbers = #tpu.dot_dimension_numbers<[1], [0], [0], [1], [0, 0, 1, 1], [], []>} : vector<128x128xbf16>, vector<128x128xbf16>, vector<128x128xf32> -> vector<128x128xf32>
    %29 = vector.broadcast %5 : vector<1x128xf32> to vector<128x128xf32>
    %30 = arith.addf %28, %29 : vector<128x128xf32>
    %cst_17 = arith.constant 0.000000e+00 : f32
    %31 = vector.broadcast %cst_17 : f32 to vector<128x128xf32>
    %32 = arith.maximumf %30, %31 : vector<128x128xf32>
    %33 = arith.truncf %32 : vector<128x128xf32> to vector<128x128xbf16>
    %cst_18 = arith.constant dense<0.000000e+00> : vector<128x128xf32>
    %34 = tpu.matmul %7, %33, %cst_18 {dimension_numbers = #tpu.dot_dimension_numbers<[1], [0], [0], [1], [0, 0, 1, 1], [], []>} : vector<128x128xbf16>, vector<128x128xbf16>, vector<128x128xf32> -> vector<128x128xf32>
    %35 = arith.addf %32, %34 : vector<128x128xf32>
    %36 = arith.truncf %35 : vector<128x128xf32> to vector<128x128xbf16>
    %cst_19 = arith.constant dense<0.000000e+00> : vector<128x128xf32>
    %37 = tpu.matmul %36, %3, %cst_19 {dimension_numbers = #tpu.dot_dimension_numbers<[1], [0], [0], [1], [0, 0, 1, 1], [], []>} : vector<128x128xbf16>, vector<128x128xbf16>, vector<128x128xf32> -> vector<128x128xf32>
    %38 = vector.broadcast %5 : vector<1x128xf32> to vector<128x128xf32>
    %39 = arith.addf %37, %38 : vector<128x128xf32>
    %cst_20 = arith.constant 0.000000e+00 : f32
    %40 = vector.broadcast %cst_20 : f32 to vector<128x128xf32>
    %41 = arith.maximumf %39, %40 : vector<128x128xf32>
    %c0_21 = arith.constant 0 : index
    %c0_22 = arith.constant 0 : index
    %42 = vector.load %arg3[%c0_21, %c0_22] : memref<128x128xf32, #tpu.memory_space<vmem>>, vector<128x128xf32>
    %43 = arith.truncf %42 : vector<128x128xf32> to vector<128x128xbf16>
    %c0_23 = arith.constant 0 : index
    %c0_24 = arith.constant 0 : index
    %44 = vector.load %arg1[%c0_23, %c0_24] : memref<128x128xf32, #tpu.memory_space<vmem>>, vector<128x128xf32>
    %45 = arith.truncf %44 : vector<128x128xf32> to vector<128x128xbf16>
    %cst_25 = arith.constant dense<0.000000e+00> : vector<128x128xf32>
    %46 = tpu.matmul %45, %1, %cst_25 {dimension_numbers = #tpu.dot_dimension_numbers<[1], [0], [0], [1], [0, 0, 1, 1], [], []>} : vector<128x128xbf16>, vector<128x128xbf16>, vector<128x128xf32> -> vector<128x128xf32>
    %47 = vector.broadcast %4 : vector<1x128xf32> to vector<128x128xf32>
    %48 = arith.addf %46, %47 : vector<128x128xf32>
    %cst_26 = arith.constant 0.000000e+00 : f32
    %49 = vector.broadcast %cst_26 : f32 to vector<128x128xf32>
    %50 = arith.maximumf %48, %49 : vector<128x128xf32>
    %51 = arith.truncf %50 : vector<128x128xf32> to vector<128x128xbf16>
    %cst_27 = arith.constant dense<0.000000e+00> : vector<128x128xf32>
    %52 = tpu.matmul %43, %51, %cst_27 {dimension_numbers = #tpu.dot_dimension_numbers<[1], [0], [0], [1], [0, 0, 1, 1], [], []>} : vector<128x128xbf16>, vector<128x128xbf16>, vector<128x128xf32> -> vector<128x128xf32>
    %53 = arith.addf %50, %52 : vector<128x128xf32>
    %54 = arith.truncf %53 : vector<128x128xf32> to vector<128x128xbf16>
    %cst_28 = arith.constant dense<0.000000e+00> : vector<128x128xf32>
    %55 = tpu.matmul %54, %3, %cst_28 {dimension_numbers = #tpu.dot_dimension_numbers<[1], [0], [0], [1], [0, 0, 1, 1], [], []>} : vector<128x128xbf16>, vector<128x128xbf16>, vector<128x128xf32> -> vector<128x128xf32>
    %56 = vector.broadcast %5 : vector<1x128xf32> to vector<128x128xf32>
    %57 = arith.addf %55, %56 : vector<128x128xf32>
    %cst_29 = arith.constant 0.000000e+00 : f32
    %58 = vector.broadcast %cst_29 : f32 to vector<128x128xf32>
    %59 = arith.maximumf %57, %58 : vector<128x128xf32>
    %60 = arith.truncf %59 : vector<128x128xf32> to vector<128x128xbf16>
    %cst_30 = arith.constant dense<0.000000e+00> : vector<128x128xf32>
    %61 = tpu.matmul %43, %60, %cst_30 {dimension_numbers = #tpu.dot_dimension_numbers<[1], [0], [0], [1], [0, 0, 1, 1], [], []>} : vector<128x128xbf16>, vector<128x128xbf16>, vector<128x128xf32> -> vector<128x128xf32>
    %62 = arith.addf %59, %61 : vector<128x128xf32>
    %63 = arith.truncf %62 : vector<128x128xf32> to vector<128x128xbf16>
    %cst_31 = arith.constant dense<0.000000e+00> : vector<128x128xf32>
    %64 = tpu.matmul %63, %3, %cst_31 {dimension_numbers = #tpu.dot_dimension_numbers<[1], [0], [0], [1], [0, 0, 1, 1], [], []>} : vector<128x128xbf16>, vector<128x128xbf16>, vector<128x128xf32> -> vector<128x128xf32>
    %65 = vector.broadcast %5 : vector<1x128xf32> to vector<128x128xf32>
    %66 = arith.addf %64, %65 : vector<128x128xf32>
    %cst_32 = arith.constant 0.000000e+00 : f32
    %67 = vector.broadcast %cst_32 : f32 to vector<128x128xf32>
    %68 = arith.maximumf %66, %67 : vector<128x128xf32>
    %69 = arith.truncf %68 : vector<128x128xf32> to vector<128x128xbf16>
    %cst_33 = arith.constant dense<0.000000e+00> : vector<128x128xf32>
    %70 = tpu.matmul %43, %69, %cst_33 {dimension_numbers = #tpu.dot_dimension_numbers<[1], [0], [0], [1], [0, 0, 1, 1], [], []>} : vector<128x128xbf16>, vector<128x128xbf16>, vector<128x128xf32> -> vector<128x128xf32>
    %71 = arith.addf %68, %70 : vector<128x128xf32>
    %72 = arith.truncf %71 : vector<128x128xf32> to vector<128x128xbf16>
    %cst_34 = arith.constant dense<0.000000e+00> : vector<128x128xf32>
    %73 = tpu.matmul %72, %3, %cst_34 {dimension_numbers = #tpu.dot_dimension_numbers<[1], [0], [0], [1], [0, 0, 1, 1], [], []>} : vector<128x128xbf16>, vector<128x128xbf16>, vector<128x128xf32> -> vector<128x128xf32>
    %74 = vector.broadcast %5 : vector<1x128xf32> to vector<128x128xf32>
    %75 = arith.addf %73, %74 : vector<128x128xf32>
    %cst_35 = arith.constant 0.000000e+00 : f32
    %76 = vector.broadcast %cst_35 : f32 to vector<128x128xf32>
    %77 = arith.maximumf %75, %76 : vector<128x128xf32>
    %78 = arith.mulf %41, %41 : vector<128x128xf32>
    %cst_36 = arith.constant dense<0.000000e+00> : vector<128xf32>
    %79 = vector.multi_reduction <add>, %78, %cst_36 [1] : vector<128x128xf32> to vector<128xf32>
    %80 = vector.shape_cast %79 : vector<128xf32> to vector<128x1xf32>
    %cst_37 = arith.constant 1.000000e-24 : f32
    %81 = vector.broadcast %cst_37 : f32 to vector<128x1xf32>
    %82 = arith.maximumf %80, %81 : vector<128x1xf32>
    %83 = math.rsqrt %82 : vector<128x1xf32>
    %84 = vector.broadcast %83 : vector<128x1xf32> to vector<128x128xf32>
    %85 = arith.mulf %41, %84 : vector<128x128xf32>
    %86 = arith.mulf %77, %77 : vector<128x128xf32>
    %cst_38 = arith.constant dense<0.000000e+00> : vector<128xf32>
    %87 = vector.multi_reduction <add>, %86, %cst_38 [1] : vector<128x128xf32> to vector<128xf32>
    %88 = vector.shape_cast %87 : vector<128xf32> to vector<128x1xf32>
    %cst_39 = arith.constant 1.000000e-24 : f32
    %89 = vector.broadcast %cst_39 : f32 to vector<128x1xf32>
    %90 = arith.maximumf %88, %89 : vector<128x1xf32>
    %91 = math.rsqrt %90 : vector<128x1xf32>
    %92 = vector.broadcast %91 : vector<128x1xf32> to vector<128x128xf32>
    %93 = arith.mulf %77, %92 : vector<128x128xf32>
    %94 = arith.truncf %85 : vector<128x128xf32> to vector<128x128xbf16>
    %95 = arith.truncf %93 : vector<128x128xf32> to vector<128x128xbf16>
    %c0_40 = arith.constant 0 : index
    %c0_41 = arith.constant 0 : index
    %96 = vector.load %arg4[%c0_40, %c0_41] : memref<128x1xf32, #tpu.memory_space<vmem>>, vector<128x1xf32>
    %c0_42 = arith.constant 0 : index
    %c0_43 = arith.constant 0 : index
    %97 = vector.load %arg5[%c0_42, %c0_43] : memref<1x128xf32, #tpu.memory_space<vmem>>, vector<1x128xf32>
    %98 = vector.broadcast %96 : vector<128x1xf32> to vector<128x128xf32>
    %99 = vector.broadcast %97 : vector<1x128xf32> to vector<128x128xf32>
    %100 = arith.cmpf oeq, %98, %99 : vector<128x128xf32>
    %cst_44 = arith.constant 1.000000e+00 : f32
    %cst_45 = arith.constant 0.000000e+00 : f32
    %101 = vector.broadcast %cst_44 : f32 to vector<128x128xf32>
    %102 = vector.broadcast %cst_45 : f32 to vector<128x128xf32>
    %103 = arith.select %100, %101, %102 : vector<128x128xi1>, vector<128x128xf32>
    %cst_46 = arith.constant dense<0.000000e+00> : vector<128x128xf32>
    %104 = tpu.matmul %94, %95, %cst_46 {dimension_numbers = #tpu.dot_dimension_numbers<[1], [1], [0], [0], [0, 0, 1, 0], [], []>} : vector<128x128xbf16>, vector<128x128xbf16>, vector<128x128xf32> -> vector<128x128xf32>
    %105 = arith.mulf %104, %103 : vector<128x128xf32>
    %c0_47 = arith.constant 0 : index
    %c0_48 = arith.constant 0 : index
    %106 = vector.load %arg18[%c0_47, %c0_48] : memref<128x128xf32, #tpu.memory_space<vmem>>, vector<128x128xf32>
    tpu.vector_store %arg18[%c0_47, %c0_48], %105 {strides = array<i32>} : memref<128x128xf32, #tpu.memory_space<vmem>>, vector<128x128xf32>,
    %107 = arith.truncf %105 : vector<128x128xf32> to vector<128x128xbf16>
    %cst_49 = arith.constant dense<0.000000e+00> : vector<128x128xf32>
    %108 = tpu.matmul %107, %95, %cst_49 {dimension_numbers = #tpu.dot_dimension_numbers<[1], [0], [0], [1], [0, 0, 1, 1], [], []>} : vector<128x128xbf16>, vector<128x128xbf16>, vector<128x128xf32> -> vector<128x128xf32>
    %cst_50 = arith.constant dense<0.000000e+00> : vector<128x128xf32>
    %109 = tpu.matmul %107, %94, %cst_50 {dimension_numbers = #tpu.dot_dimension_numbers<[0], [0], [1], [1], [0, 1, 1, 1], [], []>} : vector<128x128xbf16>, vector<128x128xbf16>, vector<128x128xf32> -> vector<128x128xf32>
    %110 = tpu.concatenate %85, %108 in 1 : vector<128x128xf32>, vector<128x128xf32> -> vector<128x256xf32>
    %111 = tpu.concatenate %93, %109 in 1 : vector<128x128xf32>, vector<128x128xf32> -> vector<128x256xf32>
    %c0_51 = arith.constant 0 : index
    %c0_52 = arith.constant 0 : index
    %112 = vector.load %arg12[%c0_51, %c0_52] : memref<512x1024xf32, #tpu.memory_space<vmem>>, vector<512x1024xf32>
    %113 = arith.truncf %112 : vector<512x1024xf32> to vector<512x1024xbf16>
    %c0_53 = arith.constant 0 : index
    %c0_54 = arith.constant 0 : index
    %114 = vector.load %arg13[%c0_53, %c0_54] : memref<256x1024xf32, #tpu.memory_space<vmem>>, vector<256x1024xf32>
    %115 = arith.truncf %114 : vector<256x1024xf32> to vector<256x1024xbf16>
    %c0_55 = arith.constant 0 : index
    %c0_56 = arith.constant 0 : index
    %116 = vector.load %arg14[%c0_55, %c0_56] : memref<1x1024xf32, #tpu.memory_space<vmem>>, vector<1x1024xf32>
    %c0_57 = arith.constant 0 : index
    %c0_58 = arith.constant 0 : index
    %117 = vector.load %arg6[%c0_57, %c0_58] : memref<8x128xf32, #tpu.memory_space<vmem>>, vector<8x128xf32>
    %c0_59 = arith.constant 0 : index
    %c0_60 = arith.constant 0 : index
    %118 = vector.load %arg7[%c0_59, %c0_60] : memref<8x128xf32, #tpu.memory_space<vmem>>, vector<8x128xf32>
    %119 = arith.truncf %110 : vector<128x256xf32> to vector<128x256xbf16>
    %120 = arith.truncf %111 : vector<128x256xf32> to vector<128x256xbf16>
    %121 = tpu.transpose %110, [1, 0] : vector<128x256xf32> -> vector<256x128xf32>
    %122 = arith.truncf %121 : vector<256x128xf32> to vector<256x128xbf16>
    %123 = tpu.transpose %111, [1, 0] : vector<128x256xf32> -> vector<256x128xf32>
    %124 = arith.truncf %123 : vector<256x128xf32> to vector<256x128xbf16>
    %cst_61 = arith.constant 0.000000e+00 : f32
    %125 = vector.broadcast %cst_61 : f32 to vector<16x512xf32>
    %cst_62 = arith.constant 0.000000e+00 : f32
    %126 = vector.broadcast %cst_62 : f32 to vector<16x256xf32>
    %cst_63 = arith.constant 0.000000e+00 : f32
    %127 = vector.broadcast %cst_63 : f32 to vector<16x256xf32>
    %128 = arith.truncf %125 : vector<16x512xf32> to vector<16x512xbf16>
    %cst_64 = arith.constant dense<0.000000e+00> : vector<16x1024xf32>
    %129 = tpu.matmul %128, %113, %cst_64 {dimension_numbers = #tpu.dot_dimension_numbers<[1], [0], [0], [1], [0, 0, 1, 1], [], []>} : vector<16x512xbf16>, vector<512x1024xbf16>, vector<16x1024xf32> -> vector<16x1024xf32>
    %130 = arith.truncf %126 : vector<16x256xf32> to vector<16x256xbf16>
    %cst_65 = arith.constant dense<0.000000e+00> : vector<16x1024xf32>
    %131 = tpu.matmul %130, %115, %cst_65 {dimension_numbers = #tpu.dot_dimension_numbers<[1], [0], [0], [1], [0, 0, 1, 1], [], []>} : vector<16x256xbf16>, vector<256x1024xbf16>, vector<16x1024xf32> -> vector<16x1024xf32>
    %132 = arith.addf %129, %131 : vector<16x1024xf32>
    %133 = vector.broadcast %116 : vector<1x1024xf32> to vector<16x1024xf32>
    %134 = arith.addf %132, %133 : vector<16x1024xf32>
    %135 = vector.extract_strided_slice %134 {offsets = [0, 0], sizes = [16, 256], strides = [1, 1]} : vector<16x1024xf32> to vector<16x256xf32>
    %136 = arith.negf %135 : vector<16x256xf32>
    %137 = math.exp %136 : vector<16x256xf32>
    %cst_66 = arith.constant 1.000000e+00 : f32
    %138 = vector.broadcast %cst_66 : f32 to vector<16x256xf32>
    %139 = arith.addf %138, %137 : vector<16x256xf32>
    %140 = arith.divf %138, %139 : vector<16x256xf32>
    %141 = vector.extract_strided_slice %134 {offsets = [0, 256], sizes = [16, 256], strides = [1, 1]} : vector<16x1024xf32> to vector<16x256xf32>
    %142 = arith.negf %141 : vector<16x256xf32>
    %143 = math.exp %142 : vector<16x256xf32>
    %cst_67 = arith.constant 1.000000e+00 : f32
    %144 = vector.broadcast %cst_67 : f32 to vector<16x256xf32>
    %145 = arith.addf %144, %143 : vector<16x256xf32>
    %146 = arith.divf %144, %145 : vector<16x256xf32>
    %147 = vector.extract_strided_slice %134 {offsets = [0, 512], sizes = [16, 256], strides = [1, 1]} : vector<16x1024xf32> to vector<16x256xf32>
    %148 = math.tanh %147 : vector<16x256xf32>
    %149 = vector.extract_strided_slice %134 {offsets = [0, 768], sizes = [16, 256], strides = [1, 1]} : vector<16x1024xf32> to vector<16x256xf32>
    %150 = arith.negf %149 : vector<16x256xf32>
    %151 = math.exp %150 : vector<16x256xf32>
    %cst_68 = arith.constant 1.000000e+00 : f32
    %152 = vector.broadcast %cst_68 : f32 to vector<16x256xf32>
    %153 = arith.addf %152, %151 : vector<16x256xf32>
    %154 = arith.divf %152, %153 : vector<16x256xf32>
    %155 = arith.mulf %146, %127 : vector<16x256xf32>
    %156 = arith.mulf %140, %148 : vector<16x256xf32>
    %157 = arith.addf %155, %156 : vector<16x256xf32>
    %158 = math.tanh %157 : vector<16x256xf32>
    %159 = arith.mulf %154, %158 : vector<16x256xf32>
    %160 = vector.extract_strided_slice %159 {offsets = [0, 0], sizes = [8, 256], strides = [1, 1]} : vector<16x256xf32> to vector<8x256xf32>
    %161 = arith.truncf %160 : vector<8x256xf32> to vector<8x256xbf16>
    %cst_69 = arith.constant dense<0.000000e+00> : vector<8x128xf32>
    %162 = tpu.matmul %161, %122, %cst_69 {dimension_numbers = #tpu.dot_dimension_numbers<[1], [0], [0], [1], [0, 0, 1, 1], [], []>} : vector<8x256xbf16>, vector<256x128xbf16>, vector<8x128xf32> -> vector<8x128xf32>
    %cst_70 = arith.constant 5.000000e-01 : f32
    %163 = vector.broadcast %cst_70 : f32 to vector<8x128xf32>
    %164 = arith.cmpf ogt, %117, %163 : vector<8x128xf32>
    %cst_71 = arith.constant -1.000000e+30 : f32
    %165 = vector.broadcast %cst_71 : f32 to vector<8x128xf32>
    %166 = arith.select %164, %162, %165 : vector<8x128xi1>, vector<8x128xf32>
    %cst_72 = arith.constant dense<0xFF800000> : vector<8xf32>
    %167 = vector.multi_reduction <maximumf>, %166, %cst_72 [1] : vector<8x128xf32> to vector<8xf32>
    %168 = vector.shape_cast %167 : vector<8xf32> to vector<8x1xf32>
    %cst_73 = arith.constant 5.000000e-01 : f32
    %169 = vector.broadcast %cst_73 : f32 to vector<8x128xf32>
    %170 = arith.cmpf ogt, %117, %169 : vector<8x128xf32>
    %171 = vector.broadcast %168 : vector<8x1xf32> to vector<8x128xf32>
    %172 = arith.subf %166, %171 : vector<8x128xf32>
    %173 = math.exp %172 : vector<8x128xf32>
    %cst_74 = arith.constant 0.000000e+00 : f32
    %174 = vector.broadcast %cst_74 : f32 to vector<8x128xf32>
    %175 = arith.select %170, %173, %174 : vector<8x128xi1>, vector<8x128xf32>
    %cst_75 = arith.constant dense<0.000000e+00> : vector<8xf32>
    %176 = vector.multi_reduction <add>, %175, %cst_75 [1] : vector<8x128xf32> to vector<8xf32>
    %177 = vector.shape_cast %176 : vector<8xf32> to vector<8x1xf32>
    %cst_76 = arith.constant 9.99999968E-21 : f32
    %178 = vector.broadcast %cst_76 : f32 to vector<8x1xf32>
    %179 = arith.maximumf %177, %178 : vector<8x1xf32>
    %180 = tpu.reciprocal %179 {approx = true} : vector<8x1xf32> -> vector<8x1xf32>
    %181 = vector.broadcast %180 : vector<8x1xf32> to vector<8x128xf32>
    %182 = arith.mulf %175, %181 : vector<8x128xf32>
    %183 = arith.truncf %182 : vector<8x128xf32> to vector<8x128xbf16>
    %cst_77 = arith.constant dense<0.000000e+00> : vector<8x256xf32>
    %184 = tpu.matmul %183, %119, %cst_77 {dimension_numbers = #tpu.dot_dimension_numbers<[1], [0], [0], [1], [0, 0, 1, 1], [], []>} : vector<8x128xbf16>, vector<128x256xbf16>, vector<8x256xf32> -> vector<8x256xf32>
    %185 = vector.extract_strided_slice %159 {offsets = [8, 0], sizes = [8, 256], strides = [1, 1]} : vector<16x256xf32> to vector<8x256xf32>
    %186 = arith.truncf %185 : vector<8x256xf32> to vector<8x256xbf16>
    %cst_78 = arith.constant dense<0.000000e+00> : vector<8x128xf32>
    %187 = tpu.matmul %186, %124, %cst_78 {dimension_numbers = #tpu.dot_dimension_numbers<[1], [0], [0], [1], [0, 0, 1, 1], [], []>} : vector<8x256xbf16>, vector<256x128xbf16>, vector<8x128xf32> -> vector<8x128xf32>
    %cst_79 = arith.constant 5.000000e-01 : f32
    %188 = vector.broadcast %cst_79 : f32 to vector<8x128xf32>
    %189 = arith.cmpf ogt, %118, %188 : vector<8x128xf32>
    %cst_80 = arith.constant -1.000000e+30 : f32
    %190 = vector.broadcast %cst_80 : f32 to vector<8x128xf32>
    %191 = arith.select %189, %187, %190 : vector<8x128xi1>, vector<8x128xf32>
    %cst_81 = arith.constant dense<0xFF800000> : vector<8xf32>
    %192 = vector.multi_reduction <maximumf>, %191, %cst_81 [1] : vector<8x128xf32> to vector<8xf32>
    %193 = vector.shape_cast %192 : vector<8xf32> to vector<8x1xf32>
    %cst_82 = arith.constant 5.000000e-01 : f32
    %194 = vector.broadcast %cst_82 : f32 to vector<8x128xf32>
    %195 = arith.cmpf ogt, %118, %194 : vector<8x128xf32>
    %196 = vector.broadcast %193 : vector<8x1xf32> to vector<8x128xf32>
    %197 = arith.subf %191, %196 : vector<8x128xf32>
    %198 = math.exp %197 : vector<8x128xf32>
    %cst_83 = arith.constant 0.000000e+00 : f32
    %199 = vector.broadcast %cst_83 : f32 to vector<8x128xf32>
    %200 = arith.select %195, %198, %199 : vector<8x128xi1>, vector<8x128xf32>
    %cst_84 = arith.constant dense<0.000000e+00> : vector<8xf32>
    %201 = vector.multi_reduction <add>, %200, %cst_84 [1] : vector<8x128xf32> to vector<8xf32>
    %202 = vector.shape_cast %201 : vector<8xf32> to vector<8x1xf32>
    %cst_85 = arith.constant 9.99999968E-21 : f32
    %203 = vector.broadcast %cst_85 : f32 to vector<8x1xf32>
    %204 = arith.maximumf %202, %203 : vector<8x1xf32>
    %205 = tpu.reciprocal %204 {approx = true} : vector<8x1xf32> -> vector<8x1xf32>
    %206 = vector.broadcast %205 : vector<8x1xf32> to vector<8x128xf32>
    %207 = arith.mulf %200, %206 : vector<8x128xf32>
    %208 = arith.truncf %207 : vector<8x128xf32> to vector<8x128xbf16>
    %cst_86 = arith.constant dense<0.000000e+00> : vector<8x256xf32>
    %209 = tpu.matmul %208, %120, %cst_86 {dimension_numbers = #tpu.dot_dimension_numbers<[1], [0], [0], [1], [0, 0, 1, 1], [], []>} : vector<8x128xbf16>, vector<128x256xbf16>, vector<8x256xf32> -> vector<8x256xf32>
    %210 = tpu.concatenate %184, %209 in 0 : vector<8x256xf32>, vector<8x256xf32> -> vector<16x256xf32>
    %211 = tpu.concatenate %159, %210 in 1 : vector<16x256xf32>, vector<16x256xf32> -> vector<16x512xf32>
    %212 = arith.truncf %211 : vector<16x512xf32> to vector<16x512xbf16>
    %cst_87 = arith.constant dense<0.000000e+00> : vector<16x1024xf32>
    %213 = tpu.matmul %212, %113, %cst_87 {dimension_numbers = #tpu.dot_dimension_numbers<[1], [0], [0], [1], [0, 0, 1, 1], [], []>} : vector<16x512xbf16>, vector<512x1024xbf16>, vector<16x1024xf32> -> vector<16x1024xf32>
    %214 = arith.truncf %159 : vector<16x256xf32> to vector<16x256xbf16>
    %cst_88 = arith.constant dense<0.000000e+00> : vector<16x1024xf32>
    %215 = tpu.matmul %214, %115, %cst_88 {dimension_numbers = #tpu.dot_dimension_numbers<[1], [0], [0], [1], [0, 0, 1, 1], [], []>} : vector<16x256xbf16>, vector<256x1024xbf16>, vector<16x1024xf32> -> vector<16x1024xf32>
    %216 = arith.addf %213, %215 : vector<16x1024xf32>
    %217 = vector.broadcast %116 : vector<1x1024xf32> to vector<16x1024xf32>
    %218 = arith.addf %216, %217 : vector<16x1024xf32>
    %219 = vector.extract_strided_slice %218 {offsets = [0, 0], sizes = [16, 256], strides = [1, 1]} : vector<16x1024xf32> to vector<16x256xf32>
    %220 = arith.negf %219 : vector<16x256xf32>
    %221 = math.exp %220 : vector<16x256xf32>
    %cst_89 = arith.constant 1.000000e+00 : f32
    %222 = vector.broadcast %cst_89 : f32 to vector<16x256xf32>
    %223 = arith.addf %222, %221 : vector<16x256xf32>
    %224 = arith.divf %222, %223 : vector<16x256xf32>
    %225 = vector.extract_strided_slice %218 {offsets = [0, 256], sizes = [16, 256], strides = [1, 1]} : vector<16x1024xf32> to vector<16x256xf32>
    %226 = arith.negf %225 : vector<16x256xf32>
    %227 = math.exp %226 : vector<16x256xf32>
    %cst_90 = arith.constant 1.000000e+00 : f32
    %228 = vector.broadcast %cst_90 : f32 to vector<16x256xf32>
    %229 = arith.addf %228, %227 : vector<16x256xf32>
    %230 = arith.divf %228, %229 : vector<16x256xf32>
    %231 = vector.extract_strided_slice %218 {offsets = [0, 512], sizes = [16, 256], strides = [1, 1]} : vector<16x1024xf32> to vector<16x256xf32>
    %232 = math.tanh %231 : vector<16x256xf32>
    %233 = vector.extract_strided_slice %218 {offsets = [0, 768], sizes = [16, 256], strides = [1, 1]} : vector<16x1024xf32> to vector<16x256xf32>
    %234 = arith.negf %233 : vector<16x256xf32>
    %235 = math.exp %234 : vector<16x256xf32>
    %cst_91 = arith.constant 1.000000e+00 : f32
    %236 = vector.broadcast %cst_91 : f32 to vector<16x256xf32>
    %237 = arith.addf %236, %235 : vector<16x256xf32>
    %238 = arith.divf %236, %237 : vector<16x256xf32>
    %239 = arith.mulf %230, %157 : vector<16x256xf32>
    %240 = arith.mulf %224, %232 : vector<16x256xf32>
    %241 = arith.addf %239, %240 : vector<16x256xf32>
    %242 = math.tanh %241 : vector<16x256xf32>
    %243 = arith.mulf %238, %242 : vector<16x256xf32>
    %244 = vector.extract_strided_slice %243 {offsets = [0, 0], sizes = [8, 256], strides = [1, 1]} : vector<16x256xf32> to vector<8x256xf32>
    %245 = arith.truncf %244 : vector<8x256xf32> to vector<8x256xbf16>
    %cst_92 = arith.constant dense<0.000000e+00> : vector<8x128xf32>
    %246 = tpu.matmul %245, %122, %cst_92 {dimension_numbers = #tpu.dot_dimension_numbers<[1], [0], [0], [1], [0, 0, 1, 1], [], []>} : vector<8x256xbf16>, vector<256x128xbf16>, vector<8x128xf32> -> vector<8x128xf32>
    %cst_93 = arith.constant 5.000000e-01 : f32
    %247 = vector.broadcast %cst_93 : f32 to vector<8x128xf32>
    %248 = arith.cmpf ogt, %117, %247 : vector<8x128xf32>
    %cst_94 = arith.constant -1.000000e+30 : f32
    %249 = vector.broadcast %cst_94 : f32 to vector<8x128xf32>
    %250 = arith.select %248, %246, %249 : vector<8x128xi1>, vector<8x128xf32>
    %cst_95 = arith.constant dense<0xFF800000> : vector<8xf32>
    %251 = vector.multi_reduction <maximumf>, %250, %cst_95 [1] : vector<8x128xf32> to vector<8xf32>
    %252 = vector.shape_cast %251 : vector<8xf32> to vector<8x1xf32>
    %cst_96 = arith.constant 5.000000e-01 : f32
    %253 = vector.broadcast %cst_96 : f32 to vector<8x128xf32>
    %254 = arith.cmpf ogt, %117, %253 : vector<8x128xf32>
    %255 = vector.broadcast %252 : vector<8x1xf32> to vector<8x128xf32>
    %256 = arith.subf %250, %255 : vector<8x128xf32>
    %257 = math.exp %256 : vector<8x128xf32>
    %cst_97 = arith.constant 0.000000e+00 : f32
    %258 = vector.broadcast %cst_97 : f32 to vector<8x128xf32>
    %259 = arith.select %254, %257, %258 : vector<8x128xi1>, vector<8x128xf32>
    %cst_98 = arith.constant dense<0.000000e+00> : vector<8xf32>
    %260 = vector.multi_reduction <add>, %259, %cst_98 [1] : vector<8x128xf32> to vector<8xf32>
    %261 = vector.shape_cast %260 : vector<8xf32> to vector<8x1xf32>
    %cst_99 = arith.constant 9.99999968E-21 : f32
    %262 = vector.broadcast %cst_99 : f32 to vector<8x1xf32>
    %263 = arith.maximumf %261, %262 : vector<8x1xf32>
    %264 = tpu.reciprocal %263 {approx = true} : vector<8x1xf32> -> vector<8x1xf32>
    %265 = vector.broadcast %264 : vector<8x1xf32> to vector<8x128xf32>
    %266 = arith.mulf %259, %265 : vector<8x128xf32>
    %267 = arith.truncf %266 : vector<8x128xf32> to vector<8x128xbf16>
    %cst_100 = arith.constant dense<0.000000e+00> : vector<8x256xf32>
    %268 = tpu.matmul %267, %119, %cst_100 {dimension_numbers = #tpu.dot_dimension_numbers<[1], [0], [0], [1], [0, 0, 1, 1], [], []>} : vector<8x128xbf16>, vector<128x256xbf16>, vector<8x256xf32> -> vector<8x256xf32>
    %269 = vector.extract_strided_slice %243 {offsets = [8, 0], sizes = [8, 256], strides = [1, 1]} : vector<16x256xf32> to vector<8x256xf32>
    %270 = arith.truncf %269 : vector<8x256xf32> to vector<8x256xbf16>
    %cst_101 = arith.constant dense<0.000000e+00> : vector<8x128xf32>
    %271 = tpu.matmul %270, %124, %cst_101 {dimension_numbers = #tpu.dot_dimension_numbers<[1], [0], [0], [1], [0, 0, 1, 1], [], []>} : vector<8x256xbf16>, vector<256x128xbf16>, vector<8x128xf32> -> vector<8x128xf32>
    %cst_102 = arith.constant 5.000000e-01 : f32
    %272 = vector.broadcast %cst_102 : f32 to vector<8x128xf32>
    %273 = arith.cmpf ogt, %118, %272 : vector<8x128xf32>
    %cst_103 = arith.constant -1.000000e+30 : f32
    %274 = vector.broadcast %cst_103 : f32 to vector<8x128xf32>
    %275 = arith.select %273, %271, %274 : vector<8x128xi1>, vector<8x128xf32>
    %cst_104 = arith.constant dense<0xFF800000> : vector<8xf32>
    %276 = vector.multi_reduction <maximumf>, %275, %cst_104 [1] : vector<8x128xf32> to vector<8xf32>
    %277 = vector.shape_cast %276 : vector<8xf32> to vector<8x1xf32>
    %cst_105 = arith.constant 5.000000e-01 : f32
    %278 = vector.broadcast %cst_105 : f32 to vector<8x128xf32>
    %279 = arith.cmpf ogt, %118, %278 : vector<8x128xf32>
    %280 = vector.broadcast %277 : vector<8x1xf32> to vector<8x128xf32>
    %281 = arith.subf %275, %280 : vector<8x128xf32>
    %282 = math.exp %281 : vector<8x128xf32>
    %cst_106 = arith.constant 0.000000e+00 : f32
    %283 = vector.broadcast %cst_106 : f32 to vector<8x128xf32>
    %284 = arith.select %279, %282, %283 : vector<8x128xi1>, vector<8x128xf32>
    %cst_107 = arith.constant dense<0.000000e+00> : vector<8xf32>
    %285 = vector.multi_reduction <add>, %284, %cst_107 [1] : vector<8x128xf32> to vector<8xf32>
    %286 = vector.shape_cast %285 : vector<8xf32> to vector<8x1xf32>
    %cst_108 = arith.constant 9.99999968E-21 : f32
    %287 = vector.broadcast %cst_108 : f32 to vector<8x1xf32>
    %288 = arith.maximumf %286, %287 : vector<8x1xf32>
    %289 = tpu.reciprocal %288 {approx = true} : vector<8x1xf32> -> vector<8x1xf32>
    %290 = vector.broadcast %289 : vector<8x1xf32> to vector<8x128xf32>
    %291 = arith.mulf %284, %290 : vector<8x128xf32>
    %292 = arith.truncf %291 : vector<8x128xf32> to vector<8x128xbf16>
    %cst_109 = arith.constant dense<0.000000e+00> : vector<8x256xf32>
    %293 = tpu.matmul %292, %120, %cst_109 {dimension_numbers = #tpu.dot_dimension_numbers<[1], [0], [0], [1], [0, 0, 1, 1], [], []>} : vector<8x128xbf16>, vector<128x256xbf16>, vector<8x256xf32> -> vector<8x256xf32>
    %294 = tpu.concatenate %268, %293 in 0 : vector<8x256xf32>, vector<8x256xf32> -> vector<16x256xf32>
    %295 = tpu.concatenate %243, %294 in 1 : vector<16x256xf32>, vector<16x256xf32> -> vector<16x512xf32>
    %296 = vector.extract_strided_slice %295 {offsets = [0, 0], sizes = [8, 512], strides = [1, 1]} : vector<16x512xf32> to vector<8x512xf32>
    %297 = vector.extract_strided_slice %295 {offsets = [8, 0], sizes = [8, 512], strides = [1, 1]} : vector<16x512xf32> to vector<8x512xf32>
    %298 = tpu.concatenate %296, %297 in 1 : vector<8x512xf32>, vector<8x512xf32> -> vector<8x1024xf32>
    %c0_110 = arith.constant 0 : index
    %c0_111 = arith.constant 0 : index
    %299 = vector.load %arg15[%c0_110, %c0_111] : memref<1x1024xf32, #tpu.memory_space<vmem>>, vector<1x1024xf32>
    %300 = vector.broadcast %299 : vector<1x1024xf32> to vector<8x1024xf32>
    %301 = arith.mulf %298, %300 : vector<8x1024xf32>
    %cst_112 = arith.constant dense<0.000000e+00> : vector<8xf32>
    %302 = vector.multi_reduction <add>, %301, %cst_112 [1] : vector<8x1024xf32> to vector<8xf32>
    %303 = vector.shape_cast %302 : vector<8xf32> to vector<8x1xf32>
    %c0_113 = arith.constant 0 : index
    %c0_114 = arith.constant 0 : index
    %304 = vector.load %arg16[%c0_113, %c0_114] : memref<1x1xf32, #tpu.memory_space<vmem>>, vector<1x1xf32>
    %305 = vector.broadcast %304 : vector<1x1xf32> to vector<8x1xf32>
    %306 = arith.addf %303, %305 : vector<8x1xf32>
    %307 = vector.shape_cast %306 : vector<8x1xf32> to vector<8x1xf32>
    %308 = vector.broadcast %307 : vector<8x1xf32> to vector<8x128xf32>
    %c0_115 = arith.constant 0 : index
    %c0_116 = arith.constant 0 : index
    %309 = vector.load %arg17[%c0_115, %c0_116] : memref<8x128xf32, #tpu.memory_space<vmem>>, vector<8x128xf32>
    tpu.vector_store %arg17[%c0_115, %c0_116], %308 {strides = array<i32>} : memref<8x128xf32, #tpu.memory_space<vmem>>, vector<8x128xf32>,
    return
  }
}

</mosaic_0001>

<llo_original>
// kernel: cgib_forward.1
$region0: #{cgib_forward.1}
  #allocation0 [shape = 'u32[]', space=smem, size = 0x4, offset = 0x4, fixed_abs, tag = 'smem constant byte address 0x4 - core index']
  #allocation1 [shape = 'u32[144,128]{1,0:T(1,128)}', space=vmem, size = 0x12000, scoped, tag = 'internal scratch']
  #allocation2 [shape = 'f32[1,1]{1,0:T(1,128)S(1)}', space=vmem, size = 0x200, scoped, tag = 'scoped memory for cgib_forward.1']
  %s0 = inlined_call_operand.vmem [shape: f32[128,128], index: 0, kind: input, shape index: {}]
  %s1 = inlined_call_operand.vmem [shape: f32[128,128], index: 1, kind: input, shape index: {}]
  %s2 = inlined_call_operand.vmem [shape: f32[128,128], index: 2, kind: input, shape index: {}]
  %s3 = inlined_call_operand.vmem [shape: f32[128,128], index: 3, kind: input, shape index: {}]
  %s4 = inlined_call_operand.vmem [shape: f32[128,1], index: 4, kind: input, shape index: {}]
  %s5 = inlined_call_operand.vmem [shape: f32[1,128], index: 5, kind: input, shape index: {}]
  %s6 = inlined_call_operand.vmem [shape: f32[8,128], index: 6, kind: input, shape index: {}]
  %s7 = inlined_call_operand.vmem [shape: f32[8,128], index: 7, kind: input, shape index: {}]
  %s8 = inlined_call_operand.vmem [shape: f32[128,128], index: 8, kind: input, shape index: {}]
  %s9 = inlined_call_operand.vmem [shape: f32[1,128], index: 9, kind: input, shape index: {}]
  %s10 = inlined_call_operand.vmem [shape: f32[128,128], index: 10, kind: input, shape index: {}]
  %s11 = inlined_call_operand.vmem [shape: f32[1,128], index: 11, kind: input, shape index: {}]
  %s12 = inlined_call_operand.vmem [shape: f32[512,1024], index: 12, kind: input, shape index: {}]
  %s13 = inlined_call_operand.vmem [shape: f32[256,1024], index: 13, kind: input, shape index: {}]
  %s14 = inlined_call_operand.vmem [shape: f32[1,1024], index: 14, kind: input, shape index: {}]
  %s15 = inlined_call_operand.vmem [shape: f32[1,1024], index: 15, kind: input, shape index: {}]
  %s16 = inlined_call_operand.<no memory space> [shape: f32[1,1], index: 16, kind: input, shape index: {}]
  %s17 = inlined_call_operand.vmem [shape: f32[8,128], index: 17, kind: output, shape index: {0}]
  %s18 = inlined_call_operand.vmem [shape: f32[128,128], index: 18, kind: output, shape index: {1}]
  %19 = xla_tuple %s17, %s18
  %s20 = sld [smem:[#allocation0]]
  $region86: #{cgib_forward.1} parent=0
    _
  %s22 = ssub.s32 1, %s20
  %s23 = scalar_select 0, %s22, %s20
  %v24 = vstv %s16
  %25 = vst [vmem:[#allocation2] sm:$0x1] %v24
  // Predicated region
  $region2: #{cgib_forward.1} parent=0 // pred_check
    _
  $region3: #{cgib_forward.1} parent=0 // pred_check_branch
    %27 = sbr.rel (0) target = $region5
  $region4: #{cgib_forward.1} parent=0 // pred_region
    _
  $region5: #{cgib_forward.1} parent=0 // pred_fallthru
    _
  // Predicated region
  $region6: #{cgib_forward.1} parent=0 // pred_check
    _
  $region7: #{cgib_forward.1} parent=0 // pred_check_branch
    %29 = sbr.rel (0) target = $region9
  $region8: #{cgib_forward.1} parent=0 // pred_region
    _
  $region9: #{cgib_forward.1} parent=0 // pred_fallthru
    _
  // Predicated region
  $region10: #{cgib_forward.1} parent=0 // pred_check
    _
  $region11: #{cgib_forward.1} parent=0 // pred_check_branch
    %31 = sbr.rel (0) target = $region13
  $region12: #{cgib_forward.1} parent=0 // pred_region
    _
  $region13: #{cgib_forward.1} parent=0 // pred_fallthru
    _
  // Predicated region
  $region14: #{cgib_forward.1} parent=0 // pred_check
    _
  $region15: #{cgib_forward.1} parent=0 // pred_check_branch
    %33 = sbr.rel (0) target = $region17
  $region16: #{cgib_forward.1} parent=0 // pred_region
    _
  $region17: #{cgib_forward.1} parent=0 // pred_fallthru
    _
  // Predicated region
  $region18: #{cgib_forward.1} parent=0 // pred_check
    _
  $region19: #{cgib_forward.1} parent=0 // pred_check_branch
    %35 = sbr.rel (0) target = $region21
  $region20: #{cgib_forward.1} parent=0 // pred_region
    _
  $region21: #{cgib_forward.1} parent=0 // pred_fallthru
    _
  // Predicated region
  $region22: #{cgib_forward.1} parent=0 // pred_check
    _
  $region23: #{cgib_forward.1} parent=0 // pred_check_branch
    %37 = sbr.rel (0) target = $region25
  $region24: #{cgib_forward.1} parent=0 // pred_region
    _
  $region25: #{cgib_forward.1} parent=0 // pred_fallthru
    _
  // Predicated region
  $region26: #{cgib_forward.1} parent=0 // pred_check
    _
  $region27: #{cgib_forward.1} parent=0 // pred_check_branch
    %39 = sbr.rel (0) target = $region29
  $region28: #{cgib_forward.1} parent=0 // pred_region
    _
  $region29: #{cgib_forward.1} parent=0 // pred_fallthru
    _
  // Predicated region
  $region30: #{cgib_forward.1} parent=0 // pred_check
    _
  $region31: #{cgib_forward.1} parent=0 // pred_check_branch
    %41 = sbr.rel (0) target = $region33
  $region32: #{cgib_forward.1} parent=0 // pred_region
    _
  $region33: #{cgib_forward.1} parent=0 // pred_fallthru
    _
  // Predicated region
  $region34: #{cgib_forward.1} parent=0 // pred_check
    _
  $region35: #{cgib_forward.1} parent=0 // pred_check_branch
    %43 = sbr.rel (0) target = $region37
  $region36: #{cgib_forward.1} parent=0 // pred_region
    _
  $region37: #{cgib_forward.1} parent=0 // pred_fallthru
    _
  // Predicated region
  $region38: #{cgib_forward.1} parent=0 // pred_check
    _
  $region39: #{cgib_forward.1} parent=0 // pred_check_branch
    %45 = sbr.rel (0) target = $region41
  $region40: #{cgib_forward.1} parent=0 // pred_region
    _
  $region41: #{cgib_forward.1} parent=0 // pred_fallthru
    _
  // Predicated region
  $region42: #{cgib_forward.1} parent=0 // pred_check
    _
  $region43: #{cgib_forward.1} parent=0 // pred_check_branch
    %47 = sbr.rel (0) target = $region45
  $region44: #{cgib_forward.1} parent=0 // pred_region
    _
  $region45: #{cgib_forward.1} parent=0 // pred_fallthru
    _
  // Predicated region
  $region46: #{cgib_forward.1} parent=0 // pred_check
    _
  $region47: #{cgib_forward.1} parent=0 // pred_check_branch
    %49 = sbr.rel (0) target = $region49
  $region48: #{cgib_forward.1} parent=0 // pred_region
    _
  $region49: #{cgib_forward.1} parent=0 // pred_fallthru
    _
  // Predicated region
  $region50: #{cgib_forward.1} parent=0 // pred_check
    _
  $region51: #{cgib_forward.1} parent=0 // pred_check_branch
    %51 = sbr.rel (0) target = $region53
  $region52: #{cgib_forward.1} parent=0 // pred_region
    _
  $region53: #{cgib_forward.1} parent=0 // pred_fallthru
    _
  // Predicated region
  $region54: #{cgib_forward.1} parent=0 // pred_check
    _
  $region55: #{cgib_forward.1} parent=0 // pred_check_branch
    %53 = sbr.rel (0) target = $region57
  $region56: #{cgib_forward.1} parent=0 // pred_region
    _
  $region57: #{cgib_forward.1} parent=0 // pred_fallthru
    _
  // Predicated region
  $region58: #{cgib_forward.1} parent=0 // pred_check
    _
  $region59: #{cgib_forward.1} parent=0 // pred_check_branch
    %55 = sbr.rel (0) target = $region61
  $region60: #{cgib_forward.1} parent=0 // pred_region
    _
  $region61: #{cgib_forward.1} parent=0 // pred_fallthru
    _
  // Predicated region
  $region62: #{cgib_forward.1} parent=0 // pred_check
    _
  $region63: #{cgib_forward.1} parent=0 // pred_check_branch
    %57 = sbr.rel (0) target = $region65
  $region64: #{cgib_forward.1} parent=0 // pred_region
    _
  $region65: #{cgib_forward.1} parent=0 // pred_fallthru
    _
  // Predicated region
  $region66: #{cgib_forward.1} parent=0 // pred_check
    _
  $region67: #{cgib_forward.1} parent=0 // pred_check_branch
    %59 = sbr.rel (0) target = $region69
  $region68: #{cgib_forward.1} parent=0 // pred_region
    _
  $region69: #{cgib_forward.1} parent=0 // pred_fallthru
    _
  %v61 = vld [vmem:[%s8] sm:$0xff]
  %v62 = vld [vmem:[%s8 + $0x8] sm:$0xff]
  %v63 = vld [vmem:[%s8 + $0x10] sm:$0xff]
  %v64 = vld [vmem:[%s8 + $0x18] sm:$0xff]
  %v65 = vld [vmem:[%s8 + $0x20] sm:$0xff]
  %v66 = vld [vmem:[%s8 + $0x28] sm:$0xff]
  %v67 = vld [vmem:[%s8 + $0x30] sm:$0xff]
  %v68 = vld [vmem:[%s8 + $0x38] sm:$0xff]
  %v69 = vld [vmem:[%s8 + $0x40] sm:$0xff]
  %v70 = vld [vmem:[%s8 + $0x48] sm:$0xff]
  %v71 = vld [vmem:[%s8 + $0x50] sm:$0xff]
  %v72 = vld [vmem:[%s8 + $0x58] sm:$0xff]
  %v73 = vld [vmem:[%s8 + $0x60] sm:$0xff]
  %v74 = vld [vmem:[%s8 + $0x68] sm:$0xff]
  %v75 = vld [vmem:[%s8 + $0x70] sm:$0xff]
  %v76 = vld [vmem:[%s8 + $0x78] sm:$0xff]
  %v77 = vpack.c.bf16 %v62, %v61
  %v78 = vpack.c.bf16 %v64, %v63
  %v79 = vpack.c.bf16 %v66, %v65
  %v80 = vpack.c.bf16 %v68, %v67
  %v81 = vpack.c.bf16 %v70, %v69
  %v82 = vpack.c.bf16 %v72, %v71
  %v83 = vpack.c.bf16 %v74, %v73
  %v84 = vpack.c.bf16 %v76, %v75
  %v85 = vld [vmem:[%s10] sm:$0xff]
  %v86 = vld [vmem:[%s10 + $0x8] sm:$0xff]
  %v87 = vld [vmem:[%s10 + $0x10] sm:$0xff]
  %v88 = vld [vmem:[%s10 + $0x18] sm:$0xff]
  %v89 = vld [vmem:[%s10 + $0x20] sm:$0xff]
  %v90 = vld [vmem:[%s10 + $0x28] sm:$0xff]
  %v91 = vld [vmem:[%s10 + $0x30] sm:$0xff]
  %v92 = vld [vmem:[%s10 + $0x38] sm:$0xff]
  %v93 = vld [vmem:[%s10 + $0x40] sm:$0xff]
  %v94 = vld [vmem:[%s10 + $0x48] sm:$0xff]
  %v95 = vld [vmem:[%s10 + $0x50] sm:$0xff]
  %v96 = vld [vmem:[%s10 + $0x58] sm:$0xff]
  %v97 = vld [vmem:[%s10 + $0x60] sm:$0xff]
  %v98 = vld [vmem:[%s10 + $0x68] sm:$0xff]
  %v99 = vld [vmem:[%s10 + $0x70] sm:$0xff]
  %v100 = vld [vmem:[%s10 + $0x78] sm:$0xff]
  %v101 = vpack.c.bf16 %v86, %v85
  %v102 = vpack.c.bf16 %v88, %v87
  %v103 = vpack.c.bf16 %v90, %v89
  %v104 = vpack.c.bf16 %v92, %v91
  %v105 = vpack.c.bf16 %v94, %v93
  %v106 = vpack.c.bf16 %v96, %v95
  %v107 = vpack.c.bf16 %v98, %v97
  %v108 = vpack.c.bf16 %v100, %v99
  %v109 = vld [vmem:[%s9] sm:$0x1]
  %v110 = vld [vmem:[%s11] sm:$0x1]
  %v111 = vld [vmem:[%s2] sm:$0xff]
  %v112 = vld [vmem:[%s2 + $0x8] sm:$0xff]
  %v113 = vld [vmem:[%s2 + $0x10] sm:$0xff]
  %v114 = vld [vmem:[%s2 + $0x18] sm:$0xff]
  %v115 = vld [vmem:[%s2 + $0x20] sm:$0xff]
  %v116 = vld [vmem:[%s2 + $0x28] sm:$0xff]
  %v117 = vld [vmem:[%s2 + $0x30] sm:$0xff]
  %v118 = vld [vmem:[%s2 + $0x38] sm:$0xff]
  %v119 = vld [vmem:[%s2 + $0x40] sm:$0xff]
  %v120 = vld [vmem:[%s2 + $0x48] sm:$0xff]
  %v121 = vld [vmem:[%s2 + $0x50] sm:$0xff]
  %v122 = vld [vmem:[%s2 + $0x58] sm:$0xff]
  %v123 = vld [vmem:[%s2 + $0x60] sm:$0xff]
  %v124 = vld [vmem:[%s2 + $0x68] sm:$0xff]
  %v125 = vld [vmem:[%s2 + $0x70] sm:$0xff]
  %v126 = vld [vmem:[%s2 + $0x78] sm:$0xff]
  %v127 = vpack.c.bf16 %v112, %v111
  %v128 = vpack.c.bf16 %v114, %v113
  %v129 = vpack.c.bf16 %v116, %v115
  %v130 = vpack.c.bf16 %v118, %v117
  %v131 = vpack.c.bf16 %v120, %v119
  %v132 = vpack.c.bf16 %v122, %v121
  %v133 = vpack.c.bf16 %v124, %v123
  %v134 = vpack.c.bf16 %v126, %v125
  %v135 = vld [vmem:[%s0] sm:$0xff]
  %v136 = vld [vmem:[%s0 + $0x8] sm:$0xff]
  %v137 = vld [vmem:[%s0 + $0x10] sm:$0xff]
  %v138 = vld [vmem:[%s0 + $0x18] sm:$0xff]
  %v139 = vld [vmem:[%s0 + $0x20] sm:$0xff]
  %v140 = vld [vmem:[%s0 + $0x28] sm:$0xff]
  %v141 = vld [vmem:[%s0 + $0x30] sm:$0xff]
  %v142 = vld [vmem:[%s0 + $0x38] sm:$0xff]
  %v143 = vld [vmem:[%s0 + $0x40] sm:$0xff]
  %v144 = vld [vmem:[%s0 + $0x48] sm:$0xff]
  %v145 = vld [vmem:[%s0 + $0x50] sm:$0xff]
  %v146 = vld [vmem:[%s0 + $0x58] sm:$0xff]
  %v147 = vld [vmem:[%s0 + $0x60] sm:$0xff]
  %v148 = vld [vmem:[%s0 + $0x68] sm:$0xff]
  %v149 = vld [vmem:[%s0 + $0x70] sm:$0xff]
  %v150 = vld [vmem:[%s0 + $0x78] sm:$0xff]
  %v151 = vpack.c.bf16 %v136, %v135
  %v152 = vpack.c.bf16 %v138, %v137
  %v153 = vpack.c.bf16 %v140, %v139
  %v154 = vpack.c.bf16 %v142, %v141
  %v155 = vpack.c.bf16 %v144, %v143
  %v156 = vpack.c.bf16 %v146, %v145
  %v157 = vpack.c.bf16 %v148, %v147
  %v158 = vpack.c.bf16 %v150, %v149
  %v160 = vlaneseq
  %v161 = vshrl.u32 %v160, 7
  %v162 = vsub.s32 0, %v161
  %v163 = vrot.slane %v109, %v162
  %165 = vmatprep.subr.bf16.mxu0 0
  %166 = vmatpush1.bf16.msra.mxu0 %v84
  %167 = vmatprep.subr.bf16.mxu0 0
  %168 = vmatpush1.bf16.msra.mxu0 %v83
  %169 = vmatprep.subr.bf16.mxu0 0
  %170 = vmatpush1.bf16.msra.mxu0 %v82
  %171 = vmatprep.subr.bf16.mxu0 0
  %172 = vmatpush1.bf16.msra.mxu0 %v81
  %173 = vmatprep.subr.bf16.mxu0 0
  %174 = vmatpush1.bf16.msra.mxu0 %v80
  %175 = vmatprep.subr.bf16.mxu0 0
  %176 = vmatpush1.bf16.msra.mxu0 %v79
  %177 = vmatprep.subr.bf16.mxu0 0
  %178 = vmatpush1.bf16.msra.mxu0 %v78
  %179 = vmatprep.subr.bf16.mxu0 0
  %180 = vmatpush1.bf16.msra.mxu0 %v77
  %181 = vmatprep.subr.bf16.mxu0 0
  %182 = vmatpush2.bf16.msra.mxu0 0
  %183 = vmatprep.subr.bf16.mxu0 0
  %184 = vmatpush2.bf16.msra.mxu0 0
  %185 = vmatprep.subr.bf16.mxu0 0
  %186 = vmatpush2.bf16.msra.mxu0 0
  %187 = vmatprep.subr.bf16.mxu0 0
  %188 = vmatpush2.bf16.msra.mxu0 0
  %189 = vmatprep.subr.bf16.mxu0 0
  %190 = vmatpush2.bf16.msra.mxu0 0
  %191 = vmatprep.subr.bf16.mxu0 0
  %192 = vmatpush2.bf16.msra.mxu0 0
  %193 = vmatprep.subr.bf16.mxu0 0
  %194 = vmatpush2.bf16.msra.mxu0 0
  %195 = vmatprep.subr.bf16.mxu0 0
  %196 = vmatpush2.bf16.msra.mxu0 0
  %197 = vmatprep.mubr.bf16.mxu0 0
  %198 = vmatmul.mubr.bf16.gmra.mxu0 %v151
  %v199 = vpop.f32.mrf.mxu0
  %v200 = vadd.f32 %v163, %v199
  %v201 = vpop.f32.mrf.mxu0
  %v202 = vpop.f32.mrf.mxu0
  %v203 = vadd.f32 %v163, %v202
  %v204 = vpop.f32.mrf.mxu0
  %205 = vmatprep.mubr.bf16.mxu0 0
  %206 = vmatmul.mubr.bf16.gmra.mxu0 %v152
  %v207 = vpop.f32.mrf.mxu0
  %v208 = vadd.f32 %v163, %v207
  %v209 = vpop.f32.mrf.mxu0
  %v210 = vpop.f32.mrf.mxu0
  %v211 = vadd.f32 %v163, %v210
  %v212 = vpop.f32.mrf.mxu0
  %213 = vmatprep.mubr.bf16.mxu0 0
  %214 = vmatmul.mubr.bf16.gmra.mxu0 %v153
  %v215 = vpop.f32.mrf.mxu0
  %v216 = vadd.f32 %v163, %v215
  %v217 = vpop.f32.mrf.mxu0
  %v218 = vpop.f32.mrf.mxu0
  %v219 = vadd.f32 %v163, %v218
  %v220 = vpop.f32.mrf.mxu0
  %221 = vmatprep.mubr.bf16.mxu0 0
  %222 = vmatmul.mubr.bf16.gmra.mxu0 %v154
  %v223 = vpop.f32.mrf.mxu0
  %v224 = vadd.f32 %v163, %v223
  %v225 = vpop.f32.mrf.mxu0
  %v226 = vpop.f32.mrf.mxu0
  %v227 = vadd.f32 %v163, %v226
  %v228 = vpop.f32.mrf.mxu0
  %229 = vmatprep.mubr.bf16.mxu0 0
  %230 = vmatmul.mubr.bf16.gmra.mxu0 %v155
  %v231 = vpop.f32.mrf.mxu0
  %v232 = vadd.f32 %v163, %v231
  %v233 = vpop.f32.mrf.mxu0
  %v234 = vpop.f32.mrf.mxu0
  %v235 = vadd.f32 %v163, %v234
  %v236 = vpop.f32.mrf.mxu0
  %237 = vmatprep.mubr.bf16.mxu0 0
  %238 = vmatmul.mubr.bf16.gmra.mxu0 %v156
  %v239 = vpop.f32.mrf.mxu0
  %v240 = vadd.f32 %v163, %v239
  %v241 = vpop.f32.mrf.mxu0
  %v242 = vpop.f32.mrf.mxu0
  %v243 = vadd.f32 %v163, %v242
  %v244 = vpop.f32.mrf.mxu0
  %245 = vmatprep.mubr.bf16.mxu0 0
  %246 = vmatmul.mubr.bf16.gmra.mxu0 %v157
  %v247 = vpop.f32.mrf.mxu0
  %v248 = vadd.f32 %v163, %v247
  %v249 = vpop.f32.mrf.mxu0
  %v250 = vpop.f32.mrf.mxu0
  %v251 = vadd.f32 %v163, %v250
  %v252 = vpop.f32.mrf.mxu0
  %253 = vmatprep.mubr.bf16.mxu0 0
  %254 = vmatmul.mubr.bf16.gmra.mxu0 %v158
  %v255 = vpop.f32.mrf.mxu0
  %v256 = vadd.f32 %v163, %v255
  %v257 = vpop.f32.mrf.mxu0
  %v258 = vpop.f32.mrf.mxu0
  %v259 = vadd.f32 %v163, %v258
  %v260 = vpop.f32.mrf.mxu0
  %261 = vdwg.mxu0
  %v262 = vmax.f32 %v200, 0.0
  %v263 = vmax.f32 %v203, 0.0
  %v264 = vmax.f32 %v208, 0.0
  %v265 = vmax.f32 %v211, 0.0
  %v266 = vmax.f32 %v216, 0.0
  %v267 = vmax.f32 %v219, 0.0
  %v268 = vmax.f32 %v224, 0.0
  %v269 = vmax.f32 %v227, 0.0
  %v270 = vmax.f32 %v232, 0.0
  %v271 = vmax.f32 %v235, 0.0
  %v272 = vmax.f32 %v240, 0.0
  %v273 = vmax.f32 %v243, 0.0
  %v274 = vmax.f32 %v248, 0.0
  %v275 = vmax.f32 %v251, 0.0
  %v276 = vmax.f32 %v256, 0.0
  %v277 = vmax.f32 %v259, 0.0
  %v278 = vpack.c.bf16 %v263, %v262
  %v279 = vpack.c.bf16 %v265, %v264
  %v280 = vpack.c.bf16 %v267, %v266
  %v281 = vpack.c.bf16 %v269, %v268
  %v282 = vpack.c.bf16 %v271, %v270
  %v283 = vpack.c.bf16 %v273, %v272
  %v284 = vpack.c.bf16 %v275, %v274
  %v285 = vpack.c.bf16 %v277, %v276
  %286 = vmatprep.subr.bf16.mxu0 0
  %287 = vmatpush1.bf16.msra.mxu0 %v285
  %288 = vmatprep.subr.bf16.mxu0 0
  %289 = vmatpush1.bf16.msra.mxu0 %v284
  %290 = vmatprep.subr.bf16.mxu0 0
  %291 = vmatpush1.bf16.msra.mxu0 %v283
  %292 = vmatprep.subr.bf16.mxu0 0
  %293 = vmatpush1.bf16.msra.mxu0 %v282
  %294 = vmatprep.subr.bf16.mxu0 0
  %295 = vmatpush1.bf16.msra.mxu0 %v281
  %296 = vmatprep.subr.bf16.mxu0 0
  %297 = vmatpush1.bf16.msra.mxu0 %v280
  %298 = vmatprep.subr.bf16.mxu0 0
  %299 = vmatpush1.bf16.msra.mxu0 %v279
  %300 = vmatprep.subr.bf16.mxu0 0
  %301 = vmatpush1.bf16.msra.mxu0 %v278
  %302 = vmatprep.subr.bf16.mxu0 0
  %303 = vmatpush2.bf16.msra.mxu0 0
  %304 = vmatprep.subr.bf16.mxu0 0
  %305 = vmatpush2.bf16.msra.mxu0 0
  %306 = vmatprep.subr.bf16.mxu0 0
  %307 = vmatpush2.bf16.msra.mxu0 0
  %308 = vmatprep.subr.bf16.mxu0 0
  %309 = vmatpush2.bf16.msra.mxu0 0
  %310 = vmatprep.subr.bf16.mxu0 0
  %311 = vmatpush2.bf16.msra.mxu0 0
  %312 = vmatprep.subr.bf16.mxu0 0
  %313 = vmatpush2.bf16.msra.mxu0 0
  %314 = vmatprep.subr.bf16.mxu0 0
  %315 = vmatpush2.bf16.msra.mxu0 0
  %316 = vmatprep.subr.bf16.mxu0 0
  %317 = vmatpush2.bf16.msra.mxu0 0
  %318 = vmatprep.mubr.bf16.mxu0 0
  %319 = vmatmul.mubr.bf16.gmra.mxu0 %v127
  %v320 = vpop.f32.mrf.mxu0
  %v321 = vadd.f32 0.0, %v320
  %v322 = vpop.f32.mrf.mxu0
  %v323 = vpop.f32.mrf.mxu0
  %v324 = vadd.f32 0.0, %v323
  %v325 = vpop.f32.mrf.mxu0
  %326 = vmatprep.mubr.bf16.mxu0 0
  %327 = vmatmul.mubr.bf16.gmra.mxu0 %v128
  %v328 = vpop.f32.mrf.mxu0
  %v329 = vadd.f32 0.0, %v328
  %v330 = vpop.f32.mrf.mxu0
  %v331 = vpop.f32.mrf.mxu0
  %v332 = vadd.f32 0.0, %v331
  %v333 = vpop.f32.mrf.mxu0
  %334 = vmatprep.mubr.bf16.mxu0 0
  %335 = vmatmul.mubr.bf16.gmra.mxu0 %v129
  %v336 = vpop.f32.mrf.mxu0
  %v337 = vadd.f32 0.0, %v336
  %v338 = vpop.f32.mrf.mxu0
  %v339 = vpop.f32.mrf.mxu0
  %v340 = vadd.f32 0.0, %v339
  %v341 = vpop.f32.mrf.mxu0
  %342 = vmatprep.mubr.bf16.mxu0 0
  %343 = vmatmul.mubr.bf16.gmra.mxu0 %v130
  %v344 = vpop.f32.mrf.mxu0
  %v345 = vadd.f32 0.0, %v344
  %v346 = vpop.f32.mrf.mxu0
  %v347 = vpop.f32.mrf.mxu0
  %v348 = vadd.f32 0.0, %v347
  %v349 = vpop.f32.mrf.mxu0
  %350 = vmatprep.mubr.bf16.mxu0 0
  %351 = vmatmul.mubr.bf16.gmra.mxu0 %v131
  %v352 = vpop.f32.mrf.mxu0
  %v353 = vadd.f32 0.0, %v352
  %v354 = vpop.f32.mrf.mxu0
  %v355 = vpop.f32.mrf.mxu0
  %v356 = vadd.f32 0.0, %v355
  %v357 = vpop.f32.mrf.mxu0
  %358 = vmatprep.mubr.bf16.mxu0 0
  %359 = vmatmul.mubr.bf16.gmra.mxu0 %v132
  %v360 = vpop.f32.mrf.mxu0
  %v361 = vadd.f32 0.0, %v360
  %v362 = vpop.f32.mrf.mxu0
  %v363 = vpop.f32.mrf.mxu0
  %v364 = vadd.f32 0.0, %v363
  %v365 = vpop.f32.mrf.mxu0
  %366 = vmatprep.mubr.bf16.mxu0 0
  %367 = vmatmul.mubr.bf16.gmra.mxu0 %v133
  %v368 = vpop.f32.mrf.mxu0
  %v369 = vadd.f32 0.0, %v368
  %v370 = vpop.f32.mrf.mxu0
  %v371 = vpop.f32.mrf.mxu0
  %v372 = vadd.f32 0.0, %v371
  %v373 = vpop.f32.mrf.mxu0
  %374 = vmatprep.mubr.bf16.mxu0 0
  %375 = vmatmul.mubr.bf16.gmra.mxu0 %v134
  %v376 = vpop.f32.mrf.mxu0
  %v377 = vadd.f32 0.0, %v376
  %v378 = vpop.f32.mrf.mxu0
  %v379 = vpop.f32.mrf.mxu0
  %v380 = vadd.f32 0.0, %v379
  %v381 = vpop.f32.mrf.mxu0
  %382 = vdwg.mxu0
  %v383 = vadd.f32 %v262, %v321
  %v384 = vadd.f32 %v263, %v324
  %v385 = vadd.f32 %v264, %v329
  %v386 = vadd.f32 %v265, %v332
  %v387 = vadd.f32 %v266, %v337
  %v388 = vadd.f32 %v267, %v340
  %v389 = vadd.f32 %v268, %v345
  %v390 = vadd.f32 %v269, %v348
  %v391 = vadd.f32 %v270, %v353
  %v392 = vadd.f32 %v271, %v356
  %v393 = vadd.f32 %v272, %v361
  %v394 = vadd.f32 %v273, %v364
  %v395 = vadd.f32 %v274, %v369
  %v396 = vadd.f32 %v275, %v372
  %v397 = vadd.f32 %v276, %v377
  %v398 = vadd.f32 %v277, %v380
  %v399 = vpack.c.bf16 %v384, %v383
  %v400 = vpack.c.bf16 %v386, %v385
  %v401 = vpack.c.bf16 %v388, %v387
  %v402 = vpack.c.bf16 %v390, %v389
  %v403 = vpack.c.bf16 %v392, %v391
  %v404 = vpack.c.bf16 %v394, %v393
  %v405 = vpack.c.bf16 %v396, %v395
  %v406 = vpack.c.bf16 %v398, %v397
  %v408 = vlaneseq
  %v409 = vshrl.u32 %v408, 7
  %v410 = vsub.s32 0, %v409
  %v411 = vrot.slane %v110, %v410
  %413 = vmatprep.subr.bf16.mxu0 0
  %414 = vmatpush1.bf16.msra.mxu0 %v108
  %415 = vmatprep.subr.bf16.mxu0 0
  %416 = vmatpush1.bf16.msra.mxu0 %v107
  %417 = vmatprep.subr.bf16.mxu0 0
  %418 = vmatpush1.bf16.msra.mxu0 %v106
  %419 = vmatprep.subr.bf16.mxu0 0
  %420 = vmatpush1.bf16.msra.mxu0 %v105
  %421 = vmatprep.subr.bf16.mxu0 0
  %422 = vmatpush1.bf16.msra.mxu0 %v104
  %423 = vmatprep.subr.bf16.mxu0 0
  %424 = vmatpush1.bf16.msra.mxu0 %v103
  %425 = vmatprep.subr.bf16.mxu0 0
  %426 = vmatpush1.bf16.msra.mxu0 %v102
  %427 = vmatprep.subr.bf16.mxu0 0
  %428 = vmatpush1.bf16.msra.mxu0 %v101
  %429 = vmatprep.subr.bf16.mxu0 0
  %430 = vmatpush2.bf16.msra.mxu0 0
  %431 = vmatprep.subr.bf16.mxu0 0
  %432 = vmatpush2.bf16.msra.mxu0 0
  %433 = vmatprep.subr.bf16.mxu0 0
  %434 = vmatpush2.bf16.msra.mxu0 0
  %435 = vmatprep.subr.bf16.mxu0 0
  %436 = vmatpush2.bf16.msra.mxu0 0
  %437 = vmatprep.subr.bf16.mxu0 0
  %438 = vmatpush2.bf16.msra.mxu0 0
  %439 = vmatprep.subr.bf16.mxu0 0
  %440 = vmatpush2.bf16.msra.mxu0 0
  %441 = vmatprep.subr.bf16.mxu0 0
  %442 = vmatpush2.bf16.msra.mxu0 0
  %443 = vmatprep.subr.bf16.mxu0 0
  %444 = vmatpush2.bf16.msra.mxu0 0
  %445 = vmatprep.mubr.bf16.mxu0 0
  %446 = vmatmul.mubr.bf16.gmra.mxu0 %v399
  %v447 = vpop.f32.mrf.mxu0
  %v448 = vadd.f32 %v411, %v447
  %v449 = vpop.f32.mrf.mxu0
  %v450 = vpop.f32.mrf.mxu0
  %v451 = vadd.f32 %v411, %v450
  %v452 = vpop.f32.mrf.mxu0
  %453 = vmatprep.mubr.bf16.mxu0 0
  %454 = vmatmul.mubr.bf16.gmra.mxu0 %v400
  %v455 = vpop.f32.mrf.mxu0
  %v456 = vadd.f32 %v411, %v455
  %v457 = vpop.f32.mrf.mxu0
  %v458 = vpop.f32.mrf.mxu0
  %v459 = vadd.f32 %v411, %v458
  %v460 = vpop.f32.mrf.mxu0
  %461 = vmatprep.mubr.bf16.mxu0 0
  %462 = vmatmul.mubr.bf16.gmra.mxu0 %v401
  %v463 = vpop.f32.mrf.mxu0
  %v464 = vadd.f32 %v411, %v463
  %v465 = vpop.f32.mrf.mxu0
  %v466 = vpop.f32.mrf.mxu0
  %v467 = vadd.f32 %v411, %v466
  %v468 = vpop.f32.mrf.mxu0
  %469 = vmatprep.mubr.bf16.mxu0 0
  %470 = vmatmul.mubr.bf16.gmra.mxu0 %v402
  %v471 = vpop.f32.mrf.mxu0
  %v472 = vadd.f32 %v411, %v471
  %v473 = vpop.f32.mrf.mxu0
  %v474 = vpop.f32.mrf.mxu0
  %v475 = vadd.f32 %v411, %v474
  %v476 = vpop.f32.mrf.mxu0
  %477 = vmatprep.mubr.bf16.mxu0 0
  %478 = vmatmul.mubr.bf16.gmra.mxu0 %v403
  %v479 = vpop.f32.mrf.mxu0
  %v480 = vadd.f32 %v411, %v479
  %v481 = vpop.f32.mrf.mxu0
  %v482 = vpop.f32.mrf.mxu0
  %v483 = vadd.f32 %v411, %v482
  %v484 = vpop.f32.mrf.mxu0
  %485 = vmatprep.mubr.bf16.mxu0 0
  %486 = vmatmul.mubr.bf16.gmra.mxu0 %v404
  %v487 = vpop.f32.mrf.mxu0
  %v488 = vadd.f32 %v411, %v487
  %v489 = vpop.f32.mrf.mxu0
  %v490 = vpop.f32.mrf.mxu0
  %v491 = vadd.f32 %v411, %v490
  %v492 = vpop.f32.mrf.mxu0
  %493 = vmatprep.mubr.bf16.mxu0 0
  %494 = vmatmul.mubr.bf16.gmra.mxu0 %v405
  %v495 = vpop.f32.mrf.mxu0
  %v496 = vadd.f32 %v411, %v495
  %v497 = vpop.f32.mrf.mxu0
  %v498 = vpop.f32.mrf.mxu0
  %v499 = vadd.f32 %v411, %v498
  %v500 = vpop.f32.mrf.mxu0
  %501 = vmatprep.mubr.bf16.mxu0 0
  %502 = vmatmul.mubr.bf16.gmra.mxu0 %v406
  %v503 = vpop.f32.mrf.mxu0
  %v504 = vadd.f32 %v411, %v503
  %v505 = vpop.f32.mrf.mxu0
  %v506 = vpop.f32.mrf.mxu0
  %v507 = vadd.f32 %v411, %v506
  %v508 = vpop.f32.mrf.mxu0
  %509 = vdwg.mxu0
  %v510 = vmax.f32 %v448, 0.0
  %v511 = vmax.f32 %v451, 0.0
  %v512 = vmax.f32 %v456, 0.0
  %v513 = vmax.f32 %v459, 0.0
  %v514 = vmax.f32 %v464, 0.0
  %v515 = vmax.f32 %v467, 0.0
  %v516 = vmax.f32 %v472, 0.0
  %v517 = vmax.f32 %v475, 0.0
  %v518 = vmax.f32 %v480, 0.0
  %v519 = vmax.f32 %v483, 0.0
  %v520 = vmax.f32 %v488, 0.0
  %v521 = vmax.f32 %v491, 0.0
  %v522 = vmax.f32 %v496, 0.0
  %v523 = vmax.f32 %v499, 0.0
  %v524 = vmax.f32 %v504, 0.0
  %v525 = vmax.f32 %v507, 0.0
  %v526 = vpack.c.bf16 %v511, %v510
  %v527 = vpack.c.bf16 %v513, %v512
  %v528 = vpack.c.bf16 %v515, %v514
  %v529 = vpack.c.bf16 %v517, %v516
  %v530 = vpack.c.bf16 %v519, %v518
  %v531 = vpack.c.bf16 %v521, %v520
  %v532 = vpack.c.bf16 %v523, %v522
  %v533 = vpack.c.bf16 %v525, %v524
  %534 = vmatprep.subr.bf16.mxu0 0
  %535 = vmatpush1.bf16.msra.mxu0 %v533
  %536 = vmatprep.subr.bf16.mxu0 0
  %537 = vmatpush1.bf16.msra.mxu0 %v532
  %538 = vmatprep.subr.bf16.mxu0 0
  %539 = vmatpush1.bf16.msra.mxu0 %v531
  %540 = vmatprep.subr.bf16.mxu0 0
  %541 = vmatpush1.bf16.msra.mxu0 %v530
  %542 = vmatprep.subr.bf16.mxu0 0
  %543 = vmatpush1.bf16.msra.mxu0 %v529
  %544 = vmatprep.subr.bf16.mxu0 0
  %545 = vmatpush1.bf16.msra.mxu0 %v528
  %546 = vmatprep.subr.bf16.mxu0 0
  %547 = vmatpush1.bf16.msra.mxu0 %v527
  %548 = vmatprep.subr.bf16.mxu0 0
  %549 = vmatpush1.bf16.msra.mxu0 %v526
  %550 = vmatprep.subr.bf16.mxu0 0
  %551 = vmatpush2.bf16.msra.mxu0 0
  %552 = vmatprep.subr.bf16.mxu0 0
  %553 = vmatpush2.bf16.msra.mxu0 0
  %554 = vmatprep.subr.bf16.mxu0 0
  %555 = vmatpush2.bf16.msra.mxu0 0
  %556 = vmatprep.subr.bf16.mxu0 0
  %557 = vmatpush2.bf16.msra.mxu0 0
  %558 = vmatprep.subr.bf16.mxu0 0
  %559 = vmatpush2.bf16.msra.mxu0 0
  %560 = vmatprep.subr.bf16.mxu0 0
  %561 = vmatpush2.bf16.msra.mxu0 0
  %562 = vmatprep.subr.bf16.mxu0 0
  %563 = vmatpush2.bf16.msra.mxu0 0
  %564 = vmatprep.subr.bf16.mxu0 0
  %565 = vmatpush2.bf16.msra.mxu0 0
  %566 = vmatprep.mubr.bf16.mxu0 0
  %567 = vmatmul.mubr.bf16.gmra.mxu0 %v127
  %v568 = vpop.f32.mrf.mxu0
  %v569 = vadd.f32 0.0, %v568
  %v570 = vpop.f32.mrf.mxu0
  %v571 = vpop.f32.mrf.mxu0
  %v572 = vadd.f32 0.0, %v571
  %v573 = vpop.f32.mrf.mxu0
  %574 = vmatprep.mubr.bf16.mxu0 0
  %575 = vmatmul.mubr.bf16.gmra.mxu0 %v128
  %v576 = vpop.f32.mrf.mxu0
  %v577 = vadd.f32 0.0, %v576
  %v578 = vpop.f32.mrf.mxu0
  %v579 = vpop.f32.mrf.mxu0
  %v580 = vadd.f32 0.0, %v579
  %v581 = vpop.f32.mrf.mxu0
  %582 = vmatprep.mubr.bf16.mxu0 0
  %583 = vmatmul.mubr.bf16.gmra.mxu0 %v129
  %v584 = vpop.f32.mrf.mxu0
  %v585 = vadd.f32 0.0, %v584
  %v586 = vpop.f32.mrf.mxu0
  %v587 = vpop.f32.mrf.mxu0
  %v588 = vadd.f32 0.0, %v587
  %v589 = vpop.f32.mrf.mxu0
  %590 = vmatprep.mubr.bf16.mxu0 0
  %591 = vmatmul.mubr.bf16.gmra.mxu0 %v130
  %v592 = vpop.f32.mrf.mxu0
  %v593 = vadd.f32 0.0, %v592
  %v594 = vpop.f32.mrf.mxu0
  %v595 = vpop.f32.mrf.mxu0
  %v596 = vadd.f32 0.0, %v595
  %v597 = vpop.f32.mrf.mxu0
  %598 = vmatprep.mubr.bf16.mxu0 0
  %599 = vmatmul.mubr.bf16.gmra.mxu0 %v131
  %v600 = vpop.f32.mrf.mxu0
  %v601 = vadd.f32 0.0, %v600
  %v602 = vpop.f32.mrf.mxu0
  %v603 = vpop.f32.mrf.mxu0
  %v604 = vadd.f32 0.0, %v603
  %v605 = vpop.f32.mrf.mxu0
  %606 = vmatprep.mubr.bf16.mxu0 0
  %607 = vmatmul.mubr.bf16.gmra.mxu0 %v132
  %v608 = vpop.f32.mrf.mxu0
  %v609 = vadd.f32 0.0, %v608
  %v610 = vpop.f32.mrf.mxu0
  %v611 = vpop.f32.mrf.mxu0
  %v612 = vadd.f32 0.0, %v611
  %v613 = vpop.f32.mrf.mxu0
  %614 = vmatprep.mubr.bf16.mxu0 0
  %615 = vmatmul.mubr.bf16.gmra.mxu0 %v133
  %v616 = vpop.f32.mrf.mxu0
  %v617 = vadd.f32 0.0, %v616
  %v618 = vpop.f32.mrf.mxu0
  %v619 = vpop.f32.mrf.mxu0
  %v620 = vadd.f32 0.0, %v619
  %v621 = vpop.f32.mrf.mxu0
  %622 = vmatprep.mubr.bf16.mxu0 0
  %623 = vmatmul.mubr.bf16.gmra.mxu0 %v134
  %v624 = vpop.f32.mrf.mxu0
  %v625 = vadd.f32 0.0, %v624
  %v626 = vpop.f32.mrf.mxu0
  %v627 = vpop.f32.mrf.mxu0
  %v628 = vadd.f32 0.0, %v627
  %v629 = vpop.f32.mrf.mxu0
  %630 = vdwg.mxu0
  %v631 = vadd.f32 %v510, %v569
  %v632 = vadd.f32 %v511, %v572
  %v633 = vadd.f32 %v512, %v577
  %v634 = vadd.f32 %v513, %v580
  %v635 = vadd.f32 %v514, %v585
  %v636 = vadd.f32 %v515, %v588
  %v637 = vadd.f32 %v516, %v593
  %v638 = vadd.f32 %v517, %v596
  %v639 = vadd.f32 %v518, %v601
  %v640 = vadd.f32 %v519, %v604
  %v641 = vadd.f32 %v520, %v609
  %v642 = vadd.f32 %v521, %v612
  %v643 = vadd.f32 %v522, %v617
  %v644 = vadd.f32 %v523, %v620
  %v645 = vadd.f32 %v524, %v625
  %v646 = vadd.f32 %v525, %v628
  %v647 = vpack.c.bf16 %v632, %v631
  %v648 = vpack.c.bf16 %v634, %v633
  %v649 = vpack.c.bf16 %v636, %v635
  %v650 = vpack.c.bf16 %v638, %v637
  %v651 = vpack.c.bf16 %v640, %v639
  %v652 = vpack.c.bf16 %v642, %v641
  %v653 = vpack.c.bf16 %v644, %v643
  %v654 = vpack.c.bf16 %v646, %v645
  %655 = vmatprep.subr.bf16.mxu0 0
  %656 = vmatpush1.bf16.msra.mxu0 %v108
  %657 = vmatprep.subr.bf16.mxu0 0
  %658 = vmatpush1.bf16.msra.mxu0 %v107
  %659 = vmatprep.subr.bf16.mxu0 0
  %660 = vmatpush1.bf16.msra.mxu0 %v106
  %661 = vmatprep.subr.bf16.mxu0 0
  %662 = vmatpush1.bf16.msra.mxu0 %v105
  %663 = vmatprep.subr.bf16.mxu0 0
  %664 = vmatpush1.bf16.msra.mxu0 %v104
  %665 = vmatprep.subr.bf16.mxu0 0
  %666 = vmatpush1.bf16.msra.mxu0 %v103
  %667 = vmatprep.subr.bf16.mxu0 0
  %668 = vmatpush1.bf16.msra.mxu0 %v102
  %669 = vmatprep.subr.bf16.mxu0 0
  %670 = vmatpush1.bf16.msra.mxu0 %v101
  %671 = vmatprep.subr.bf16.mxu0 0
  %672 = vmatpush2.bf16.msra.mxu0 0
  %673 = vmatprep.subr.bf16.mxu0 0
  %674 = vmatpush2.bf16.msra.mxu0 0
  %675 = vmatprep.subr.bf16.mxu0 0
  %676 = vmatpush2.bf16.msra.mxu0 0
  %677 = vmatprep.subr.bf16.mxu0 0
  %678 = vmatpush2.bf16.msra.mxu0 0
  %679 = vmatprep.subr.bf16.mxu0 0
  %680 = vmatpush2.bf16.msra.mxu0 0
  %681 = vmatprep.subr.bf16.mxu0 0
  %682 = vmatpush2.bf16.msra.mxu0 0
  %683 = vmatprep.subr.bf16.mxu0 0
  %684 = vmatpush2.bf16.msra.mxu0 0
  %685 = vmatprep.subr.bf16.mxu0 0
  %686 = vmatpush2.bf16.msra.mxu0 0
  %687 = vmatprep.mubr.bf16.mxu0 0
  %688 = vmatmul.mubr.bf16.gmra.mxu0 %v647
  %v689 = vpop.f32.mrf.mxu0
  %v690 = vadd.f32 %v411, %v689
  %v691 = vpop.f32.mrf.mxu0
  %v692 = vpop.f32.mrf.mxu0
  %v693 = vadd.f32 %v411, %v692
  %v694 = vpop.f32.mrf.mxu0
  %695 = vmatprep.mubr.bf16.mxu0 0
  %696 = vmatmul.mubr.bf16.gmra.mxu0 %v648
  %v697 = vpop.f32.mrf.mxu0
  %v698 = vadd.f32 %v411, %v697
  %v699 = vpop.f32.mrf.mxu0
  %v700 = vpop.f32.mrf.mxu0
  %v701 = vadd.f32 %v411, %v700
  %v702 = vpop.f32.mrf.mxu0
  %703 = vmatprep.mubr.bf16.mxu0 0
  %704 = vmatmul.mubr.bf16.gmra.mxu0 %v649
  %v705 = vpop.f32.mrf.mxu0
  %v706 = vadd.f32 %v411, %v705
  %v707 = vpop.f32.mrf.mxu0
  %v708 = vpop.f32.mrf.mxu0
  %v709 = vadd.f32 %v411, %v708
  %v710 = vpop.f32.mrf.mxu0
  %711 = vmatprep.mubr.bf16.mxu0 0
  %712 = vmatmul.mubr.bf16.gmra.mxu0 %v650
  %v713 = vpop.f32.mrf.mxu0
  %v714 = vadd.f32 %v411, %v713
  %v715 = vpop.f32.mrf.mxu0
  %v716 = vpop.f32.mrf.mxu0
  %v717 = vadd.f32 %v411, %v716
  %v718 = vpop.f32.mrf.mxu0
  %719 = vmatprep.mubr.bf16.mxu0 0
  %720 = vmatmul.mubr.bf16.gmra.mxu0 %v651
  %v721 = vpop.f32.mrf.mxu0
  %v722 = vadd.f32 %v411, %v721
  %v723 = vpop.f32.mrf.mxu0
  %v724 = vpop.f32.mrf.mxu0
  %v725 = vadd.f32 %v411, %v724
  %v726 = vpop.f32.mrf.mxu0
  %727 = vmatprep.mubr.bf16.mxu0 0
  %728 = vmatmul.mubr.bf16.gmra.mxu0 %v652
  %v729 = vpop.f32.mrf.mxu0
  %v730 = vadd.f32 %v411, %v729
  %v731 = vpop.f32.mrf.mxu0
  %v732 = vpop.f32.mrf.mxu0
  %v733 = vadd.f32 %v411, %v732
  %v734 = vpop.f32.mrf.mxu0
  %735 = vmatprep.mubr.bf16.mxu0 0
  %736 = vmatmul.mubr.bf16.gmra.mxu0 %v653
  %v737 = vpop.f32.mrf.mxu0
  %v738 = vadd.f32 %v411, %v737
  %v739 = vpop.f32.mrf.mxu0
  %v740 = vpop.f32.mrf.mxu0
  %v741 = vadd.f32 %v411, %v740
  %v742 = vpop.f32.mrf.mxu0
  %743 = vmatprep.mubr.bf16.mxu0 0
  %744 = vmatmul.mubr.bf16.gmra.mxu0 %v654
  %v745 = vpop.f32.mrf.mxu0
  %v746 = vadd.f32 %v411, %v745
  %v747 = vpop.f32.mrf.mxu0
  %v748 = vpop.f32.mrf.mxu0
  %v749 = vadd.f32 %v411, %v748
  %v750 = vpop.f32.mrf.mxu0
  %751 = vdwg.mxu0
  %v752 = vmax.f32 %v690, 0.0
  %v753 = vmax.f32 %v693, 0.0
  %v754 = vmax.f32 %v698, 0.0
  %v755 = vmax.f32 %v701, 0.0
  %v756 = vmax.f32 %v706, 0.0
  %v757 = vmax.f32 %v709, 0.0
  %v758 = vmax.f32 %v714, 0.0
  %v759 = vmax.f32 %v717, 0.0
  %v760 = vmax.f32 %v722, 0.0
  %v761 = vmax.f32 %v725, 0.0
  %v762 = vmax.f32 %v730, 0.0
  %v763 = vmax.f32 %v733, 0.0
  %v764 = vmax.f32 %v738, 0.0
  %v765 = vmax.f32 %v741, 0.0
  %v766 = vmax.f32 %v746, 0.0
  %v767 = vmax.f32 %v749, 0.0
  %v768 = vpack.c.bf16 %v753, %v752
  %v769 = vpack.c.bf16 %v755, %v754
  %v770 = vpack.c.bf16 %v757, %v756
  %v771 = vpack.c.bf16 %v759, %v758
  %v772 = vpack.c.bf16 %v761, %v760
  %v773 = vpack.c.bf16 %v763, %v762
  %v774 = vpack.c.bf16 %v765, %v764
  %v775 = vpack.c.bf16 %v767, %v766
  %776 = vmatprep.subr.bf16.mxu0 0
  %777 = vmatpush1.bf16.msra.mxu0 %v775
  %778 = vmatprep.subr.bf16.mxu0 0
  %779 = vmatpush1.bf16.msra.mxu0 %v774
  %780 = vmatprep.subr.bf16.mxu0 0
  %781 = vmatpush1.bf16.msra.mxu0 %v773
  %782 = vmatprep.subr.bf16.mxu0 0
  %783 = vmatpush1.bf16.msra.mxu0 %v772
  %784 = vmatprep.subr.bf16.mxu0 0
  %785 = vmatpush1.bf16.msra.mxu0 %v771
  %786 = vmatprep.subr.bf16.mxu0 0
  %787 = vmatpush1.bf16.msra.mxu0 %v770
  %788 = vmatprep.subr.bf16.mxu0 0
  %789 = vmatpush1.bf16.msra.mxu0 %v769
  %790 = vmatprep.subr.bf16.mxu0 0
  %791 = vmatpush1.bf16.msra.mxu0 %v768
  %792 = vmatprep.subr.bf16.mxu0 0
  %793 = vmatpush2.bf16.msra.mxu0 0
  %794 = vmatprep.subr.bf16.mxu0 0
  %795 = vmatpush2.bf16.msra.mxu0 0
  %796 = vmatprep.subr.bf16.mxu0 0
  %797 = vmatpush2.bf16.msra.mxu0 0
  %798 = vmatprep.subr.bf16.mxu0 0
  %799 = vmatpush2.bf16.msra.mxu0 0
  %800 = vmatprep.subr.bf16.mxu0 0
  %801 = vmatpush2.bf16.msra.mxu0 0
  %802 = vmatprep.subr.bf16.mxu0 0
  %803 = vmatpush2.bf16.msra.mxu0 0
  %804 = vmatprep.subr.bf16.mxu0 0
  %805 = vmatpush2.bf16.msra.mxu0 0
  %806 = vmatprep.subr.bf16.mxu0 0
  %807 = vmatpush2.bf16.msra.mxu0 0
  %808 = vmatprep.mubr.bf16.mxu0 0
  %809 = vmatmul.mubr.bf16.gmra.mxu0 %v127
  %v810 = vpop.f32.mrf.mxu0
  %v811 = vadd.f32 0.0, %v810
  %v812 = vpop.f32.mrf.mxu0
  %v813 = vpop.f32.mrf.mxu0
  %v814 = vadd.f32 0.0, %v813
  %v815 = vpop.f32.mrf.mxu0
  %816 = vmatprep.mubr.bf16.mxu0 0
  %817 = vmatmul.mubr.bf16.gmra.mxu0 %v128
  %v818 = vpop.f32.mrf.mxu0
  %v819 = vadd.f32 0.0, %v818
  %v820 = vpop.f32.mrf.mxu0
  %v821 = vpop.f32.mrf.mxu0
  %v822 = vadd.f32 0.0, %v821
  %v823 = vpop.f32.mrf.mxu0
  %824 = vmatprep.mubr.bf16.mxu0 0
  %825 = vmatmul.mubr.bf16.gmra.mxu0 %v129
  %v826 = vpop.f32.mrf.mxu0
  %v827 = vadd.f32 0.0, %v826
  %v828 = vpop.f32.mrf.mxu0
  %v829 = vpop.f32.mrf.mxu0
  %v830 = vadd.f32 0.0, %v829
  %v831 = vpop.f32.mrf.mxu0
  %832 = vmatprep.mubr.bf16.mxu0 0
  %833 = vmatmul.mubr.bf16.gmra.mxu0 %v130
  %v834 = vpop.f32.mrf.mxu0
  %v835 = vadd.f32 0.0, %v834
  %v836 = vpop.f32.mrf.mxu0
  %v837 = vpop.f32.mrf.mxu0
  %v838 = vadd.f32 0.0, %v837
  %v839 = vpop.f32.mrf.mxu0
  %840 = vmatprep.mubr.bf16.mxu0 0
  %841 = vmatmul.mubr.bf16.gmra.mxu0 %v131
  %v842 = vpop.f32.mrf.mxu0
  %v843 = vadd.f32 0.0, %v842
  %v844 = vpop.f32.mrf.mxu0
  %v845 = vpop.f32.mrf.mxu0
  %v846 = vadd.f32 0.0, %v845
  %v847 = vpop.f32.mrf.mxu0
  %848 = vmatprep.mubr.bf16.mxu0 0
  %849 = vmatmul.mubr.bf16.gmra.mxu0 %v132
  %v850 = vpop.f32.mrf.mxu0
  %v851 = vadd.f32 0.0, %v850
  %v852 = vpop.f32.mrf.mxu0
  %v853 = vpop.f32.mrf.mxu0
  %v854 = vadd.f32 0.0, %v853
  %v855 = vpop.f32.mrf.mxu0
  %856 = vmatprep.mubr.bf16.mxu0 0
  %857 = vmatmul.mubr.bf16.gmra.mxu0 %v133
  %v858 = vpop.f32.mrf.mxu0
  %v859 = vadd.f32 0.0, %v858
  %v860 = vpop.f32.mrf.mxu0
  %v861 = vpop.f32.mrf.mxu0
  %v862 = vadd.f32 0.0, %v861
  %v863 = vpop.f32.mrf.mxu0
  %864 = vmatprep.mubr.bf16.mxu0 0
  %865 = vmatmul.mubr.bf16.gmra.mxu0 %v134
  %v866 = vpop.f32.mrf.mxu0
  %v867 = vadd.f32 0.0, %v866
  %v868 = vpop.f32.mrf.mxu0
  %v869 = vpop.f32.mrf.mxu0
  %v870 = vadd.f32 0.0, %v869
  %v871 = vpop.f32.mrf.mxu0
  %872 = vdwg.mxu0
  %v873 = vadd.f32 %v752, %v811
  %v874 = vadd.f32 %v753, %v814
  %v875 = vadd.f32 %v754, %v819
  %v876 = vadd.f32 %v755, %v822
  %v877 = vadd.f32 %v756, %v827
  %v878 = vadd.f32 %v757, %v830
  %v879 = vadd.f32 %v758, %v835
  %v880 = vadd.f32 %v759, %v838
  %v881 = vadd.f32 %v760, %v843
  %v882 = vadd.f32 %v761, %v846
  %v883 = vadd.f32 %v762, %v851
  %v884 = vadd.f32 %v763, %v854
  %v885 = vadd.f32 %v764, %v859
  %v886 = vadd.f32 %v765, %v862
  %v887 = vadd.f32 %v766, %v867
  %v888 = vadd.f32 %v767, %v870
  %v889 = vpack.c.bf16 %v874, %v873
  %v890 = vpack.c.bf16 %v876, %v875
  %v891 = vpack.c.bf16 %v878, %v877
  %v892 = vpack.c.bf16 %v880, %v879
  %v893 = vpack.c.bf16 %v882, %v881
  %v894 = vpack.c.bf16 %v884, %v883
  %v895 = vpack.c.bf16 %v886, %v885
  %v896 = vpack.c.bf16 %v888, %v887
  %897 = vmatprep.subr.bf16.mxu0 0
  %898 = vmatpush1.bf16.msra.mxu0 %v108
  %899 = vmatprep.subr.bf16.mxu0 0
  %900 = vmatpush1.bf16.msra.mxu0 %v107
  %901 = vmatprep.subr.bf16.mxu0 0
  %902 = vmatpush1.bf16.msra.mxu0 %v106
  %903 = vmatprep.subr.bf16.mxu0 0
  %904 = vmatpush1.bf16.msra.mxu0 %v105
  %905 = vmatprep.subr.bf16.mxu0 0
  %906 = vmatpush1.bf16.msra.mxu0 %v104
  %907 = vmatprep.subr.bf16.mxu0 0
  %908 = vmatpush1.bf16.msra.mxu0 %v103
  %909 = vmatprep.subr.bf16.mxu0 0
  %910 = vmatpush1.bf16.msra.mxu0 %v102
  %911 = vmatprep.subr.bf16.mxu0 0
  %912 = vmatpush1.bf16.msra.mxu0 %v101
  %913 = vmatprep.subr.bf16.mxu0 0
  %914 = vmatpush2.bf16.msra.mxu0 0
  %915 = vmatprep.subr.bf16.mxu0 0
  %916 = vmatpush2.bf16.msra.mxu0 0
  %917 = vmatprep.subr.bf16.mxu0 0
  %918 = vmatpush2.bf16.msra.mxu0 0
  %919 = vmatprep.subr.bf16.mxu0 0
  %920 = vmatpush2.bf16.msra.mxu0 0
  %921 = vmatprep.subr.bf16.mxu0 0
  %922 = vmatpush2.bf16.msra.mxu0 0
  %923 = vmatprep.subr.bf16.mxu0 0
  %924 = vmatpush2.bf16.msra.mxu0 0
  %925 = vmatprep.subr.bf16.mxu0 0
  %926 = vmatpush2.bf16.msra.mxu0 0
  %927 = vmatprep.subr.bf16.mxu0 0
  %928 = vmatpush2.bf16.msra.mxu0 0
  %929 = vmatprep.mubr.bf16.mxu0 0
  %930 = vmatmul.mubr.bf16.gmra.mxu0 %v889
  %v931 = vpop.f32.mrf.mxu0
  %v932 = vadd.f32 %v411, %v931
  %v933 = vpop.f32.mrf.mxu0
  %v934 = vpop.f32.mrf.mxu0
  %v935 = vadd.f32 %v411, %v934
  %v936 = vpop.f32.mrf.mxu0
  %937 = vmatprep.mubr.bf16.mxu0 0
  %938 = vmatmul.mubr.bf16.gmra.mxu0 %v890
  %v939 = vpop.f32.mrf.mxu0
  %v940 = vadd.f32 %v411, %v939
  %v941 = vpop.f32.mrf.mxu0
  %v942 = vpop.f32.mrf.mxu0
  %v943 = vadd.f32 %v411, %v942
  %v944 = vpop.f32.mrf.mxu0
  %945 = vmatprep.mubr.bf16.mxu0 0
  %946 = vmatmul.mubr.bf16.gmra.mxu0 %v891
  %v947 = vpop.f32.mrf.mxu0
  %v948 = vadd.f32 %v411, %v947
  %v949 = vpop.f32.mrf.mxu0
  %v950 = vpop.f32.mrf.mxu0
  %v951 = vadd.f32 %v411, %v950
  %v952 = vpop.f32.mrf.mxu0
  %953 = vmatprep.mubr.bf16.mxu0 0
  %954 = vmatmul.mubr.bf16.gmra.mxu0 %v892
  %v955 = vpop.f32.mrf.mxu0
  %v956 = vadd.f32 %v411, %v955
  %v957 = vpop.f32.mrf.mxu0
  %v958 = vpop.f32.mrf.mxu0
  %v959 = vadd.f32 %v411, %v958
  %v960 = vpop.f32.mrf.mxu0
  %961 = vmatprep.mubr.bf16.mxu0 0
  %962 = vmatmul.mubr.bf16.gmra.mxu0 %v893
  %v963 = vpop.f32.mrf.mxu0
  %v964 = vadd.f32 %v411, %v963
  %v965 = vpop.f32.mrf.mxu0
  %v966 = vpop.f32.mrf.mxu0
  %v967 = vadd.f32 %v411, %v966
  %v968 = vpop.f32.mrf.mxu0
  %969 = vmatprep.mubr.bf16.mxu0 0
  %970 = vmatmul.mubr.bf16.gmra.mxu0 %v894
  %v971 = vpop.f32.mrf.mxu0
  %v972 = vadd.f32 %v411, %v971
  %v973 = vpop.f32.mrf.mxu0
  %v974 = vpop.f32.mrf.mxu0
  %v975 = vadd.f32 %v411, %v974
  %v976 = vpop.f32.mrf.mxu0
  %977 = vmatprep.mubr.bf16.mxu0 0
  %978 = vmatmul.mubr.bf16.gmra.mxu0 %v895
  %v979 = vpop.f32.mrf.mxu0
  %v980 = vadd.f32 %v411, %v979
  %v981 = vpop.f32.mrf.mxu0
  %v982 = vpop.f32.mrf.mxu0
  %v983 = vadd.f32 %v411, %v982
  %v984 = vpop.f32.mrf.mxu0
  %985 = vmatprep.mubr.bf16.mxu0 0
  %986 = vmatmul.mubr.bf16.gmra.mxu0 %v896
  %v987 = vpop.f32.mrf.mxu0
  %v988 = vadd.f32 %v411, %v987
  %v989 = vpop.f32.mrf.mxu0
  %v990 = vpop.f32.mrf.mxu0
  %v991 = vadd.f32 %v411, %v990
  %v992 = vpop.f32.mrf.mxu0
  %993 = vdwg.mxu0
  %v994 = vmax.f32 %v932, 0.0
  %v995 = vmax.f32 %v935, 0.0
  %v996 = vmax.f32 %v940, 0.0
  %v997 = vmax.f32 %v943, 0.0
  %v998 = vmax.f32 %v948, 0.0
  %v999 = vmax.f32 %v951, 0.0
  %v1000 = vmax.f32 %v956, 0.0
  %v1001 = vmax.f32 %v959, 0.0
  %v1002 = vmax.f32 %v964, 0.0
  %v1003 = vmax.f32 %v967, 0.0
  %v1004 = vmax.f32 %v972, 0.0
  %v1005 = vmax.f32 %v975, 0.0
  %v1006 = vmax.f32 %v980, 0.0
  %v1007 = vmax.f32 %v983, 0.0
  %v1008 = vmax.f32 %v988, 0.0
  %v1009 = vmax.f32 %v991, 0.0
  %v1010 = vld [vmem:[%s3] sm:$0xff]
  %v1011 = vld [vmem:[%s3 + $0x8] sm:$0xff]
  %v1012 = vld [vmem:[%s3 + $0x10] sm:$0xff]
  %v1013 = vld [vmem:[%s3 + $0x18] sm:$0xff]
  %v1014 = vld [vmem:[%s3 + $0x20] sm:$0xff]
  %v1015 = vld [vmem:[%s3 + $0x28] sm:$0xff]
  %v1016 = vld [vmem:[%s3 + $0x30] sm:$0xff]
  %v1017 = vld [vmem:[%s3 + $0x38] sm:$0xff]
  %v1018 = vld [vmem:[%s3 + $0x40] sm:$0xff]
  %v1019 = vld [vmem:[%s3 + $0x48] sm:$0xff]
  %v1020 = vld [vmem:[%s3 + $0x50] sm:$0xff]
  %v1021 = vld [vmem:[%s3 + $0x58] sm:$0xff]
  %v1022 = vld [vmem:[%s3 + $0x60] sm:$0xff]
  %v1023 = vld [vmem:[%s3 + $0x68] sm:$0xff]
  %v1024 = vld [vmem:[%s3 + $0x70] sm:$0xff]
  %v1025 = vld [vmem:[%s3 + $0x78] sm:$0xff]
  %v1026 = vpack.c.bf16 %v1011, %v1010
  %v1027 = vpack.c.bf16 %v1013, %v1012
  %v1028 = vpack.c.bf16 %v1015, %v1014
  %v1029 = vpack.c.bf16 %v1017, %v1016
  %v1030 = vpack.c.bf16 %v1019, %v1018
  %v1031 = vpack.c.bf16 %v1021, %v1020
  %v1032 = vpack.c.bf16 %v1023, %v1022
  %v1033 = vpack.c.bf16 %v1025, %v1024
  %v1034 = vld [vmem:[%s1] sm:$0xff]
  %v1035 = vld [vmem:[%s1 + $0x8] sm:$0xff]
  %v1036 = vld [vmem:[%s1 + $0x10] sm:$0xff]
  %v1037 = vld [vmem:[%s1 + $0x18] sm:$0xff]
  %v1038 = vld [vmem:[%s1 + $0x20] sm:$0xff]
  %v1039 = vld [vmem:[%s1 + $0x28] sm:$0xff]
  %v1040 = vld [vmem:[%s1 + $0x30] sm:$0xff]
  %v1041 = vld [vmem:[%s1 + $0x38] sm:$0xff]
  %v1042 = vld [vmem:[%s1 + $0x40] sm:$0xff]
  %v1043 = vld [vmem:[%s1 + $0x48] sm:$0xff]
  %v1044 = vld [vmem:[%s1 + $0x50] sm:$0xff]
  %v1045 = vld [vmem:[%s1 + $0x58] sm:$0xff]
  %v1046 = vld [vmem:[%s1 + $0x60] sm:$0xff]
  %v1047 = vld [vmem:[%s1 + $0x68] sm:$0xff]
  %v1048 = vld [vmem:[%s1 + $0x70] sm:$0xff]
  %v1049 = vld [vmem:[%s1 + $0x78] sm:$0xff]
  %v1050 = vpack.c.bf16 %v1035, %v1034
  %v1051 = vpack.c.bf16 %v1037, %v1036
  %v1052 = vpack.c.bf16 %v1039, %v1038
  %v1053 = vpack.c.bf16 %v1041, %v1040
  %v1054 = vpack.c.bf16 %v1043, %v1042
  %v1055 = vpack.c.bf16 %v1045, %v1044
  %v1056 = vpack.c.bf16 %v1047, %v1046
  %v1057 = vpack.c.bf16 %v1049, %v1048
  %1058 = vmatprep.subr.bf16.mxu0 0
  %1059 = vmatpush1.bf16.msra.mxu0 %v84
  %1060 = vmatprep.subr.bf16.mxu0 0
  %1061 = vmatpush1.bf16.msra.mxu0 %v83
  %1062 = vmatprep.subr.bf16.mxu0 0
  %1063 = vmatpush1.bf16.msra.mxu0 %v82
  %1064 = vmatprep.subr.bf16.mxu0 0
  %1065 = vmatpush1.bf16.msra.mxu0 %v81
  %1066 = vmatprep.subr.bf16.mxu0 0
  %1067 = vmatpush1.bf16.msra.mxu0 %v80
  %1068 = vmatprep.subr.bf16.mxu0 0
  %1069 = vmatpush1.bf16.msra.mxu0 %v79
  %1070 = vmatprep.subr.bf16.mxu0 0
  %1071 = vmatpush1.bf16.msra.mxu0 %v78
  %1072 = vmatprep.subr.bf16.mxu0 0
  %1073 = vmatpush1.bf16.msra.mxu0 %v77
  %1074 = vmatprep.subr.bf16.mxu0 0
  %1075 = vmatpush2.bf16.msra.mxu0 0
  %1076 = vmatprep.subr.bf16.mxu0 0
  %1077 = vmatpush2.bf16.msra.mxu0 0
  %1078 = vmatprep.subr.bf16.mxu0 0
  %1079 = vmatpush2.bf16.msra.mxu0 0
  %1080 = vmatprep.subr.bf16.mxu0 0
  %1081 = vmatpush2.bf16.msra.mxu0 0
  %1082 = vmatprep.subr.bf16.mxu0 0
  %1083 = vmatpush2.bf16.msra.mxu0 0
  %1084 = vmatprep.subr.bf16.mxu0 0
  %1085 = vmatpush2.bf16.msra.mxu0 0
  %1086 = vmatprep.subr.bf16.mxu0 0
  %1087 = vmatpush2.bf16.msra.mxu0 0
  %1088 = vmatprep.subr.bf16.mxu0 0
  %1089 = vmatpush2.bf16.msra.mxu0 0
  %1090 = vmatprep.mubr.bf16.mxu0 0
  %1091 = vmatmul.mubr.bf16.gmra.mxu0 %v1050
  %v1092 = vpop.f32.mrf.mxu0
  %v1093 = vadd.f32 %v163, %v1092
  %v1094 = vpop.f32.mrf.mxu0
  %v1095 = vpop.f32.mrf.mxu0
  %v1096 = vadd.f32 %v163, %v1095
  %v1097 = vpop.f32.mrf.mxu0
  %1098 = vmatprep.mubr.bf16.mxu0 0
  %1099 = vmatmul.mubr.bf16.gmra.mxu0 %v1051
  %v1100 = vpop.f32.mrf.mxu0
  %v1101 = vadd.f32 %v163, %v1100
  %v1102 = vpop.f32.mrf.mxu0
  %v1103 = vpop.f32.mrf.mxu0
  %v1104 = vadd.f32 %v163, %v1103
  %v1105 = vpop.f32.mrf.mxu0
  %1106 = vmatprep.mubr.bf16.mxu0 0
  %1107 = vmatmul.mubr.bf16.gmra.mxu0 %v1052
  %v1108 = vpop.f32.mrf.mxu0
  %v1109 = vadd.f32 %v163, %v1108
  %v1110 = vpop.f32.mrf.mxu0
  %v1111 = vpop.f32.mrf.mxu0
  %v1112 = vadd.f32 %v163, %v1111
  %v1113 = vpop.f32.mrf.mxu0
  %1114 = vmatprep.mubr.bf16.mxu0 0
  %1115 = vmatmul.mubr.bf16.gmra.mxu0 %v1053
  %v1116 = vpop.f32.mrf.mxu0
  %v1117 = vadd.f32 %v163, %v1116
  %v1118 = vpop.f32.mrf.mxu0
  %v1119 = vpop.f32.mrf.mxu0
  %v1120 = vadd.f32 %v163, %v1119
  %v1121 = vpop.f32.mrf.mxu0
  %1122 = vmatprep.mubr.bf16.mxu0 0
  %1123 = vmatmul.mubr.bf16.gmra.mxu0 %v1054
  %v1124 = vpop.f32.mrf.mxu0
  %v1125 = vadd.f32 %v163, %v1124
  %v1126 = vpop.f32.mrf.mxu0
  %v1127 = vpop.f32.mrf.mxu0
  %v1128 = vadd.f32 %v163, %v1127
  %v1129 = vpop.f32.mrf.mxu0
  %1130 = vmatprep.mubr.bf16.mxu0 0
  %1131 = vmatmul.mubr.bf16.gmra.mxu0 %v1055
  %v1132 = vpop.f32.mrf.mxu0
  %v1133 = vadd.f32 %v163, %v1132
  %v1134 = vpop.f32.mrf.mxu0
  %v1135 = vpop.f32.mrf.mxu0
  %v1136 = vadd.f32 %v163, %v1135
  %v1137 = vpop.f32.mrf.mxu0
  %1138 = vmatprep.mubr.bf16.mxu0 0
  %1139 = vmatmul.mubr.bf16.gmra.mxu0 %v1056
  %v1140 = vpop.f32.mrf.mxu0
  %v1141 = vadd.f32 %v163, %v1140
  %v1142 = vpop.f32.mrf.mxu0
  %v1143 = vpop.f32.mrf.mxu0
  %v1144 = vadd.f32 %v163, %v1143
  %v1145 = vpop.f32.mrf.mxu0
  %1146 = vmatprep.mubr.bf16.mxu0 0
  %1147 = vmatmul.mubr.bf16.gmra.mxu0 %v1057
  %v1148 = vpop.f32.mrf.mxu0
  %v1149 = vadd.f32 %v163, %v1148
  %v1150 = vpop.f32.mrf.mxu0
  %v1151 = vpop.f32.mrf.mxu0
  %v1152 = vadd.f32 %v163, %v1151
  %v1153 = vpop.f32.mrf.mxu0
  %1154 = vdwg.mxu0
  %v1155 = vmax.f32 %v1093, 0.0
  %v1156 = vmax.f32 %v1096, 0.0
  %v1157 = vmax.f32 %v1101, 0.0
  %v1158 = vmax.f32 %v1104, 0.0
  %v1159 = vmax.f32 %v1109, 0.0
  %v1160 = vmax.f32 %v1112, 0.0
  %v1161 = vmax.f32 %v1117, 0.0
  %v1162 = vmax.f32 %v1120, 0.0
  %v1163 = vmax.f32 %v1125, 0.0
  %v1164 = vmax.f32 %v1128, 0.0
  %v1165 = vmax.f32 %v1133, 0.0
  %v1166 = vmax.f32 %v1136, 0.0
  %v1167 = vmax.f32 %v1141, 0.0
  %v1168 = vmax.f32 %v1144, 0.0
  %v1169 = vmax.f32 %v1149, 0.0
  %v1170 = vmax.f32 %v1152, 0.0
  %v1171 = vpack.c.bf16 %v1156, %v1155
  %v1172 = vpack.c.bf16 %v1158, %v1157
  %v1173 = vpack.c.bf16 %v1160, %v1159
  %v1174 = vpack.c.bf16 %v1162, %v1161
  %v1175 = vpack.c.bf16 %v1164, %v1163
  %v1176 = vpack.c.bf16 %v1166, %v1165
  %v1177 = vpack.c.bf16 %v1168, %v1167
  %v1178 = vpack.c.bf16 %v1170, %v1169
  %1179 = vmatprep.subr.bf16.mxu0 0
  %1180 = vmatpush1.bf16.msra.mxu0 %v1178
  %1181 = vmatprep.subr.bf16.mxu0 0
  %1182 = vmatpush1.bf16.msra.mxu0 %v1177
  %1183 = vmatprep.subr.bf16.mxu0 0
  %1184 = vmatpush1.bf16.msra.mxu0 %v1176
  %1185 = vmatprep.subr.bf16.mxu0 0
  %1186 = vmatpush1.bf16.msra.mxu0 %v1175
  %1187 = vmatprep.subr.bf16.mxu0 0
  %1188 = vmatpush1.bf16.msra.mxu0 %v1174
  %1189 = vmatprep.subr.bf16.mxu0 0
  %1190 = vmatpush1.bf16.msra.mxu0 %v1173
  %1191 = vmatprep.subr.bf16.mxu0 0
  %1192 = vmatpush1.bf16.msra.mxu0 %v1172
  %1193 = vmatprep.subr.bf16.mxu0 0
  %1194 = vmatpush1.bf16.msra.mxu0 %v1171
  %1195 = vmatprep.subr.bf16.mxu0 0
  %1196 = vmatpush2.bf16.msra.mxu0 0
  %1197 = vmatprep.subr.bf16.mxu0 0
  %1198 = vmatpush2.bf16.msra.mxu0 0
  %1199 = vmatprep.subr.bf16.mxu0 0
  %1200 = vmatpush2.bf16.msra.mxu0 0
  %1201 = vmatprep.subr.bf16.mxu0 0
  %1202 = vmatpush2.bf16.msra.mxu0 0
  %1203 = vmatprep.subr.bf16.mxu0 0
  %1204 = vmatpush2.bf16.msra.mxu0 0
  %1205 = vmatprep.subr.bf16.mxu0 0
  %1206 = vmatpush2.bf16.msra.mxu0 0
  %1207 = vmatprep.subr.bf16.mxu0 0
  %1208 = vmatpush2.bf16.msra.mxu0 0
  %1209 = vmatprep.subr.bf16.mxu0 0
  %1210 = vmatpush2.bf16.msra.mxu0 0
  %1211 = vmatprep.mubr.bf16.mxu0 0
  %1212 = vmatmul.mubr.bf16.gmra.mxu0 %v1026
  %v1213 = vpop.f32.mrf.mxu0
  %v1214 = vadd.f32 0.0, %v1213
  %v1215 = vpop.f32.mrf.mxu0
  %v1216 = vpop.f32.mrf.mxu0
  %v1217 = vadd.f32 0.0, %v1216
  %v1218 = vpop.f32.mrf.mxu0
  %1219 = vmatprep.mubr.bf16.mxu0 0
  %1220 = vmatmul.mubr.bf16.gmra.mxu0 %v1027
  %v1221 = vpop.f32.mrf.mxu0
  %v1222 = vadd.f32 0.0, %v1221
  %v1223 = vpop.f32.mrf.mxu0
  %v1224 = vpop.f32.mrf.mxu0
  %v1225 = vadd.f32 0.0, %v1224
  %v1226 = vpop.f32.mrf.mxu0
  %1227 = vmatprep.mubr.bf16.mxu0 0
  %1228 = vmatmul.mubr.bf16.gmra.mxu0 %v1028
  %v1229 = vpop.f32.mrf.mxu0
  %v1230 = vadd.f32 0.0, %v1229
  %v1231 = vpop.f32.mrf.mxu0
  %v1232 = vpop.f32.mrf.mxu0
  %v1233 = vadd.f32 0.0, %v1232
  %v1234 = vpop.f32.mrf.mxu0
  %1235 = vmatprep.mubr.bf16.mxu0 0
  %1236 = vmatmul.mubr.bf16.gmra.mxu0 %v1029
  %v1237 = vpop.f32.mrf.mxu0
  %v1238 = vadd.f32 0.0, %v1237
  %v1239 = vpop.f32.mrf.mxu0
  %v1240 = vpop.f32.mrf.mxu0
  %v1241 = vadd.f32 0.0, %v1240
  %v1242 = vpop.f32.mrf.mxu0
  %1243 = vmatprep.mubr.bf16.mxu0 0
  %1244 = vmatmul.mubr.bf16.gmra.mxu0 %v1030
  %v1245 = vpop.f32.mrf.mxu0
  %v1246 = vadd.f32 0.0, %v1245
  %v1247 = vpop.f32.mrf.mxu0
  %v1248 = vpop.f32.mrf.mxu0
  %v1249 = vadd.f32 0.0, %v1248
  %v1250 = vpop.f32.mrf.mxu0
  %1251 = vmatprep.mubr.bf16.mxu0 0
  %1252 = vmatmul.mubr.bf16.gmra.mxu0 %v1031
  %v1253 = vpop.f32.mrf.mxu0
  %v1254 = vadd.f32 0.0, %v1253
  %v1255 = vpop.f32.mrf.mxu0
  %v1256 = vpop.f32.mrf.mxu0
  %v1257 = vadd.f32 0.0, %v1256
  %v1258 = vpop.f32.mrf.mxu0
  %1259 = vmatprep.mubr.bf16.mxu0 0
  %1260 = vmatmul.mubr.bf16.gmra.mxu0 %v1032
  %v1261 = vpop.f32.mrf.mxu0
  %v1262 = vadd.f32 0.0, %v1261
  %v1263 = vpop.f32.mrf.mxu0
  %v1264 = vpop.f32.mrf.mxu0
  %v1265 = vadd.f32 0.0, %v1264
  %v1266 = vpop.f32.mrf.mxu0
  %1267 = vmatprep.mubr.bf16.mxu0 0
  %1268 = vmatmul.mubr.bf16.gmra.mxu0 %v1033
  %v1269 = vpop.f32.mrf.mxu0
  %v1270 = vadd.f32 0.0, %v1269
  %v1271 = vpop.f32.mrf.mxu0
  %v1272 = vpop.f32.mrf.mxu0
  %v1273 = vadd.f32 0.0, %v1272
  %v1274 = vpop.f32.mrf.mxu0
  %1275 = vdwg.mxu0
  %v1276 = vadd.f32 %v1155, %v1214
  %v1277 = vadd.f32 %v1156, %v1217
  %v1278 = vadd.f32 %v1157, %v1222
  %v1279 = vadd.f32 %v1158, %v1225
  %v1280 = vadd.f32 %v1159, %v1230
  %v1281 = vadd.f32 %v1160, %v1233
  %v1282 = vadd.f32 %v1161, %v1238
  %v1283 = vadd.f32 %v1162, %v1241
  %v1284 = vadd.f32 %v1163, %v1246
  %v1285 = vadd.f32 %v1164, %v1249
  %v1286 = vadd.f32 %v1165, %v1254
  %v1287 = vadd.f32 %v1166, %v1257
  %v1288 = vadd.f32 %v1167, %v1262
  %v1289 = vadd.f32 %v1168, %v1265
  %v1290 = vadd.f32 %v1169, %v1270
  %v1291 = vadd.f32 %v1170, %v1273
  %v1292 = vpack.c.bf16 %v1277, %v1276
  %v1293 = vpack.c.bf16 %v1279, %v1278
  %v1294 = vpack.c.bf16 %v1281, %v1280
  %v1295 = vpack.c.bf16 %v1283, %v1282
  %v1296 = vpack.c.bf16 %v1285, %v1284
  %v1297 = vpack.c.bf16 %v1287, %v1286
  %v1298 = vpack.c.bf16 %v1289, %v1288
  %v1299 = vpack.c.bf16 %v1291, %v1290
  %1300 = vmatprep.subr.bf16.mxu0 0
  %1301 = vmatpush1.bf16.msra.mxu0 %v108
  %1302 = vmatprep.subr.bf16.mxu0 0
  %1303 = vmatpush1.bf16.msra.mxu0 %v107
  %1304 = vmatprep.subr.bf16.mxu0 0
  %1305 = vmatpush1.bf16.msra.mxu0 %v106
  %1306 = vmatprep.subr.bf16.mxu0 0
  %1307 = vmatpush1.bf16.msra.mxu0 %v105
  %1308 = vmatprep.subr.bf16.mxu0 0
  %1309 = vmatpush1.bf16.msra.mxu0 %v104
  %1310 = vmatprep.subr.bf16.mxu0 0
  %1311 = vmatpush1.bf16.msra.mxu0 %v103
  %1312 = vmatprep.subr.bf16.mxu0 0
  %1313 = vmatpush1.bf16.msra.mxu0 %v102
  %1314 = vmatprep.subr.bf16.mxu0 0
  %1315 = vmatpush1.bf16.msra.mxu0 %v101
  %1316 = vmatprep.subr.bf16.mxu0 0
  %1317 = vmatpush2.bf16.msra.mxu0 0
  %1318 = vmatprep.subr.bf16.mxu0 0
  %1319 = vmatpush2.bf16.msra.mxu0 0
  %1320 = vmatprep.subr.bf16.mxu0 0
  %1321 = vmatpush2.bf16.msra.mxu0 0
  %1322 = vmatprep.subr.bf16.mxu0 0
  %1323 = vmatpush2.bf16.msra.mxu0 0
  %1324 = vmatprep.subr.bf16.mxu0 0
  %1325 = vmatpush2.bf16.msra.mxu0 0
  %1326 = vmatprep.subr.bf16.mxu0 0
  %1327 = vmatpush2.bf16.msra.mxu0 0
  %1328 = vmatprep.subr.bf16.mxu0 0
  %1329 = vmatpush2.bf16.msra.mxu0 0
  %1330 = vmatprep.subr.bf16.mxu0 0
  %1331 = vmatpush2.bf16.msra.mxu0 0
  %1332 = vmatprep.mubr.bf16.mxu0 0
  %1333 = vmatmul.mubr.bf16.gmra.mxu0 %v1292
  %v1334 = vpop.f32.mrf.mxu0
  %v1335 = vadd.f32 %v411, %v1334
  %v1336 = vpop.f32.mrf.mxu0
  %v1337 = vpop.f32.mrf.mxu0
  %v1338 = vadd.f32 %v411, %v1337
  %v1339 = vpop.f32.mrf.mxu0
  %1340 = vmatprep.mubr.bf16.mxu0 0
  %1341 = vmatmul.mubr.bf16.gmra.mxu0 %v1293
  %v1342 = vpop.f32.mrf.mxu0
  %v1343 = vadd.f32 %v411, %v1342
  %v1344 = vpop.f32.mrf.mxu0
  %v1345 = vpop.f32.mrf.mxu0
  %v1346 = vadd.f32 %v411, %v1345
  %v1347 = vpop.f32.mrf.mxu0
  %1348 = vmatprep.mubr.bf16.mxu0 0
  %1349 = vmatmul.mubr.bf16.gmra.mxu0 %v1294
  %v1350 = vpop.f32.mrf.mxu0
  %v1351 = vadd.f32 %v411, %v1350
  %v1352 = vpop.f32.mrf.mxu0
  %v1353 = vpop.f32.mrf.mxu0
  %v1354 = vadd.f32 %v411, %v1353
  %v1355 = vpop.f32.mrf.mxu0
  %1356 = vmatprep.mubr.bf16.mxu0 0
  %1357 = vmatmul.mubr.bf16.gmra.mxu0 %v1295
  %v1358 = vpop.f32.mrf.mxu0
  %v1359 = vadd.f32 %v411, %v1358
  %v1360 = vpop.f32.mrf.mxu0
  %v1361 = vpop.f32.mrf.mxu0
  %v1362 = vadd.f32 %v411, %v1361
  %v1363 = vpop.f32.mrf.mxu0
  %1364 = vmatprep.mubr.bf16.mxu0 0
  %1365 = vmatmul.mubr.bf16.gmra.mxu0 %v1296
  %v1366 = vpop.f32.mrf.mxu0
  %v1367 = vadd.f32 %v411, %v1366
  %v1368 = vpop.f32.mrf.mxu0
  %v1369 = vpop.f32.mrf.mxu0
  %v1370 = vadd.f32 %v411, %v1369
  %v1371 = vpop.f32.mrf.mxu0
  %1372 = vmatprep.mubr.bf16.mxu0 0
  %1373 = vmatmul.mubr.bf16.gmra.mxu0 %v1297
  %v1374 = vpop.f32.mrf.mxu0
  %v1375 = vadd.f32 %v411, %v1374
  %v1376 = vpop.f32.mrf.mxu0
  %v1377 = vpop.f32.mrf.mxu0
  %v1378 = vadd.f32 %v411, %v1377
  %v1379 = vpop.f32.mrf.mxu0
  %1380 = vmatprep.mubr.bf16.mxu0 0
  %1381 = vmatmul.mubr.bf16.gmra.mxu0 %v1298
  %v1382 = vpop.f32.mrf.mxu0
  %v1383 = vadd.f32 %v411, %v1382
  %v1384 = vpop.f32.mrf.mxu0
  %v1385 = vpop.f32.mrf.mxu0
  %v1386 = vadd.f32 %v411, %v1385
  %v1387 = vpop.f32.mrf.mxu0
  %1388 = vmatprep.mubr.bf16.mxu0 0
  %1389 = vmatmul.mubr.bf16.gmra.mxu0 %v1299
  %v1390 = vpop.f32.mrf.mxu0
  %v1391 = vadd.f32 %v411, %v1390
  %v1392 = vpop.f32.mrf.mxu0
  %v1393 = vpop.f32.mrf.mxu0
  %v1394 = vadd.f32 %v411, %v1393
  %v1395 = vpop.f32.mrf.mxu0
  %1396 = vdwg.mxu0
  %v1397 = vmax.f32 %v1335, 0.0
  %v1398 = vmax.f32 %v1338, 0.0
  %v1399 = vmax.f32 %v1343, 0.0
  %v1400 = vmax.f32 %v1346, 0.0
  %v1401 = vmax.f32 %v1351, 0.0
  %v1402 = vmax.f32 %v1354, 0.0
  %v1403 = vmax.f32 %v1359, 0.0
  %v1404 = vmax.f32 %v1362, 0.0
  %v1405 = vmax.f32 %v1367, 0.0
  %v1406 = vmax.f32 %v1370, 0.0
  %v1407 = vmax.f32 %v1375, 0.0
  %v1408 = vmax.f32 %v1378, 0.0
  %v1409 = vmax.f32 %v1383, 0.0
  %v1410 = vmax.f32 %v1386, 0.0
  %v1411 = vmax.f32 %v1391, 0.0
  %v1412 = vmax.f32 %v1394, 0.0
  %v1413 = vpack.c.bf16 %v1398, %v1397
  %v1414 = vpack.c.bf16 %v1400, %v1399
  %v1415 = vpack.c.bf16 %v1402, %v1401
  %v1416 = vpack.c.bf16 %v1404, %v1403
  %v1417 = vpack.c.bf16 %v1406, %v1405
  %v1418 = vpack.c.bf16 %v1408, %v1407
  %v1419 = vpack.c.bf16 %v1410, %v1409
  %v1420 = vpack.c.bf16 %v1412, %v1411
  %1421 = vmatprep.subr.bf16.mxu0 0
  %1422 = vmatpush1.bf16.msra.mxu0 %v1420
  %1423 = vmatprep.subr.bf16.mxu0 0
  %1424 = vmatpush1.bf16.msra.mxu0 %v1419
  %1425 = vmatprep.subr.bf16.mxu0 0
  %1426 = vmatpush1.bf16.msra.mxu0 %v1418
  %1427 = vmatprep.subr.bf16.mxu0 0
  %1428 = vmatpush1.bf16.msra.mxu0 %v1417
  %1429 = vmatprep.subr.bf16.mxu0 0
  %1430 = vmatpush1.bf16.msra.mxu0 %v1416
  %1431 = vmatprep.subr.bf16.mxu0 0
  %1432 = vmatpush1.bf16.msra.mxu0 %v1415
  %1433 = vmatprep.subr.bf16.mxu0 0
  %1434 = vmatpush1.bf16.msra.mxu0 %v1414
  %1435 = vmatprep.subr.bf16.mxu0 0
  %1436 = vmatpush1.bf16.msra.mxu0 %v1413
  %1437 = vmatprep.subr.bf16.mxu0 0
  %1438 = vmatpush2.bf16.msra.mxu0 0
  %1439 = vmatprep.subr.bf16.mxu0 0
  %1440 = vmatpush2.bf16.msra.mxu0 0
  %1441 = vmatprep.subr.bf16.mxu0 0
  %1442 = vmatpush2.bf16.msra.mxu0 0
  %1443 = vmatprep.subr.bf16.mxu0 0
  %1444 = vmatpush2.bf16.msra.mxu0 0
  %1445 = vmatprep.subr.bf16.mxu0 0
  %1446 = vmatpush2.bf16.msra.mxu0 0
  %1447 = vmatprep.subr.bf16.mxu0 0
  %1448 = vmatpush2.bf16.msra.mxu0 0
  %1449 = vmatprep.subr.bf16.mxu0 0
  %1450 = vmatpush2.bf16.msra.mxu0 0
  %1451 = vmatprep.subr.bf16.mxu0 0
  %1452 = vmatpush2.bf16.msra.mxu0 0
  %1453 = vmatprep.mubr.bf16.mxu0 0
  %1454 = vmatmul.mubr.bf16.gmra.mxu0 %v1026
  %v1455 = vpop.f32.mrf.mxu0
  %v1456 = vadd.f32 0.0, %v1455
  %v1457 = vpop.f32.mrf.mxu0
  %v1458 = vpop.f32.mrf.mxu0
  %v1459 = vadd.f32 0.0, %v1458
  %v1460 = vpop.f32.mrf.mxu0
  %1461 = vmatprep.mubr.bf16.mxu0 0
  %1462 = vmatmul.mubr.bf16.gmra.mxu0 %v1027
  %v1463 = vpop.f32.mrf.mxu0
  %v1464 = vadd.f32 0.0, %v1463
  %v1465 = vpop.f32.mrf.mxu0
  %v1466 = vpop.f32.mrf.mxu0
  %v1467 = vadd.f32 0.0, %v1466
  %v1468 = vpop.f32.mrf.mxu0
  %1469 = vmatprep.mubr.bf16.mxu0 0
  %1470 = vmatmul.mubr.bf16.gmra.mxu0 %v1028
  %v1471 = vpop.f32.mrf.mxu0
  %v1472 = vadd.f32 0.0, %v1471
  %v1473 = vpop.f32.mrf.mxu0
  %v1474 = vpop.f32.mrf.mxu0
  %v1475 = vadd.f32 0.0, %v1474
  %v1476 = vpop.f32.mrf.mxu0
  %1477 = vmatprep.mubr.bf16.mxu0 0
  %1478 = vmatmul.mubr.bf16.gmra.mxu0 %v1029
  %v1479 = vpop.f32.mrf.mxu0
  %v1480 = vadd.f32 0.0, %v1479
  %v1481 = vpop.f32.mrf.mxu0
  %v1482 = vpop.f32.mrf.mxu0
  %v1483 = vadd.f32 0.0, %v1482
  %v1484 = vpop.f32.mrf.mxu0
  %1485 = vmatprep.mubr.bf16.mxu0 0
  %1486 = vmatmul.mubr.bf16.gmra.mxu0 %v1030
  %v1487 = vpop.f32.mrf.mxu0
  %v1488 = vadd.f32 0.0, %v1487
  %v1489 = vpop.f32.mrf.mxu0
  %v1490 = vpop.f32.mrf.mxu0
  %v1491 = vadd.f32 0.0, %v1490
  %v1492 = vpop.f32.mrf.mxu0
  %1493 = vmatprep.mubr.bf16.mxu0 0
  %1494 = vmatmul.mubr.bf16.gmra.mxu0 %v1031
  %v1495 = vpop.f32.mrf.mxu0
  %v1496 = vadd.f32 0.0, %v1495
  %v1497 = vpop.f32.mrf.mxu0
  %v1498 = vpop.f32.mrf.mxu0
  %v1499 = vadd.f32 0.0, %v1498
  %v1500 = vpop.f32.mrf.mxu0
  %1501 = vmatprep.mubr.bf16.mxu0 0
  %1502 = vmatmul.mubr.bf16.gmra.mxu0 %v1032
  %v1503 = vpop.f32.mrf.mxu0
  %v1504 = vadd.f32 0.0, %v1503
  %v1505 = vpop.f32.mrf.mxu0
  %v1506 = vpop.f32.mrf.mxu0
  %v1507 = vadd.f32 0.0, %v1506
  %v1508 = vpop.f32.mrf.mxu0
  %1509 = vmatprep.mubr.bf16.mxu0 0
  %1510 = vmatmul.mubr.bf16.gmra.mxu0 %v1033
  %v1511 = vpop.f32.mrf.mxu0
  %v1512 = vadd.f32 0.0, %v1511
  %v1513 = vpop.f32.mrf.mxu0
  %v1514 = vpop.f32.mrf.mxu0
  %v1515 = vadd.f32 0.0, %v1514
  %v1516 = vpop.f32.mrf.mxu0
  %1517 = vdwg.mxu0
  %v1518 = vadd.f32 %v1397, %v1456
  %v1519 = vadd.f32 %v1398, %v1459
  %v1520 = vadd.f32 %v1399, %v1464
  %v1521 = vadd.f32 %v1400, %v1467
  %v1522 = vadd.f32 %v1401, %v1472
  %v1523 = vadd.f32 %v1402, %v1475
  %v1524 = vadd.f32 %v1403, %v1480
  %v1525 = vadd.f32 %v1404, %v1483
  %v1526 = vadd.f32 %v1405, %v1488
  %v1527 = vadd.f32 %v1406, %v1491
  %v1528 = vadd.f32 %v1407, %v1496
  %v1529 = vadd.f32 %v1408, %v1499
  %v1530 = vadd.f32 %v1409, %v1504
  %v1531 = vadd.f32 %v1410, %v1507
  %v1532 = vadd.f32 %v1411, %v1512
  %v1533 = vadd.f32 %v1412, %v1515
  %v1534 = vpack.c.bf16 %v1519, %v1518
  %v1535 = vpack.c.bf16 %v1521, %v1520
  %v1536 = vpack.c.bf16 %v1523, %v1522
  %v1537 = vpack.c.bf16 %v1525, %v1524
  %v1538 = vpack.c.bf16 %v1527, %v1526
  %v1539 = vpack.c.bf16 %v1529, %v1528
  %v1540 = vpack.c.bf16 %v1531, %v1530
  %v1541 = vpack.c.bf16 %v1533, %v1532
  %1542 = vmatprep.subr.bf16.mxu0 0
  %1543 = vmatpush1.bf16.msra.mxu0 %v108
  %1544 = vmatprep.subr.bf16.mxu0 0
  %1545 = vmatpush1.bf16.msra.mxu0 %v107
  %1546 = vmatprep.subr.bf16.mxu0 0
  %1547 = vmatpush1.bf16.msra.mxu0 %v106
  %1548 = vmatprep.subr.bf16.mxu0 0
  %1549 = vmatpush1.bf16.msra.mxu0 %v105
  %1550 = vmatprep.subr.bf16.mxu0 0
  %1551 = vmatpush1.bf16.msra.mxu0 %v104
  %1552 = vmatprep.subr.bf16.mxu0 0
  %1553 = vmatpush1.bf16.msra.mxu0 %v103
  %1554 = vmatprep.subr.bf16.mxu0 0
  %1555 = vmatpush1.bf16.msra.mxu0 %v102
  %1556 = vmatprep.subr.bf16.mxu0 0
  %1557 = vmatpush1.bf16.msra.mxu0 %v101
  %1558 = vmatprep.subr.bf16.mxu0 0
  %1559 = vmatpush2.bf16.msra.mxu0 0
  %1560 = vmatprep.subr.bf16.mxu0 0
  %1561 = vmatpush2.bf16.msra.mxu0 0
  %1562 = vmatprep.subr.bf16.mxu0 0
  %1563 = vmatpush2.bf16.msra.mxu0 0
  %1564 = vmatprep.subr.bf16.mxu0 0
  %1565 = vmatpush2.bf16.msra.mxu0 0
  %1566 = vmatprep.subr.bf16.mxu0 0
  %1567 = vmatpush2.bf16.msra.mxu0 0
  %1568 = vmatprep.subr.bf16.mxu0 0
  %1569 = vmatpush2.bf16.msra.mxu0 0
  %1570 = vmatprep.subr.bf16.mxu0 0
  %1571 = vmatpush2.bf16.msra.mxu0 0
  %1572 = vmatprep.subr.bf16.mxu0 0
  %1573 = vmatpush2.bf16.msra.mxu0 0
  %1574 = vmatprep.mubr.bf16.mxu0 0
  %1575 = vmatmul.mubr.bf16.gmra.mxu0 %v1534
  %v1576 = vpop.f32.mrf.mxu0
  %v1577 = vadd.f32 %v411, %v1576
  %v1578 = vpop.f32.mrf.mxu0
  %v1579 = vpop.f32.mrf.mxu0
  %v1580 = vadd.f32 %v411, %v1579
  %v1581 = vpop.f32.mrf.mxu0
  %1582 = vmatprep.mubr.bf16.mxu0 0
  %1583 = vmatmul.mubr.bf16.gmra.mxu0 %v1535
  %v1584 = vpop.f32.mrf.mxu0
  %v1585 = vadd.f32 %v411, %v1584
  %v1586 = vpop.f32.mrf.mxu0
  %v1587 = vpop.f32.mrf.mxu0
  %v1588 = vadd.f32 %v411, %v1587
  %v1589 = vpop.f32.mrf.mxu0
  %1590 = vmatprep.mubr.bf16.mxu0 0
  %1591 = vmatmul.mubr.bf16.gmra.mxu0 %v1536
  %v1592 = vpop.f32.mrf.mxu0
  %v1593 = vadd.f32 %v411, %v1592
  %v1594 = vpop.f32.mrf.mxu0
  %v1595 = vpop.f32.mrf.mxu0
  %v1596 = vadd.f32 %v411, %v1595
  %v1597 = vpop.f32.mrf.mxu0
  %1598 = vmatprep.mubr.bf16.mxu0 0
  %1599 = vmatmul.mubr.bf16.gmra.mxu0 %v1537
  %v1600 = vpop.f32.mrf.mxu0
  %v1601 = vadd.f32 %v411, %v1600
  %v1602 = vpop.f32.mrf.mxu0
  %v1603 = vpop.f32.mrf.mxu0
  %v1604 = vadd.f32 %v411, %v1603
  %v1605 = vpop.f32.mrf.mxu0
  %1606 = vmatprep.mubr.bf16.mxu0 0
  %1607 = vmatmul.mubr.bf16.gmra.mxu0 %v1538
  %v1608 = vpop.f32.mrf.mxu0
  %v1609 = vadd.f32 %v411, %v1608
  %v1610 = vpop.f32.mrf.mxu0
  %v1611 = vpop.f32.mrf.mxu0
  %v1612 = vadd.f32 %v411, %v1611
  %v1613 = vpop.f32.mrf.mxu0
  %1614 = vmatprep.mubr.bf16.mxu0 0
  %1615 = vmatmul.mubr.bf16.gmra.mxu0 %v1539
  %v1616 = vpop.f32.mrf.mxu0
  %v1617 = vadd.f32 %v411, %v1616
  %v1618 = vpop.f32.mrf.mxu0
  %v1619 = vpop.f32.mrf.mxu0
  %v1620 = vadd.f32 %v411, %v1619
  %v1621 = vpop.f32.mrf.mxu0
  %1622 = vmatprep.mubr.bf16.mxu0 0
  %1623 = vmatmul.mubr.bf16.gmra.mxu0 %v1540
  %v1624 = vpop.f32.mrf.mxu0
  %v1625 = vadd.f32 %v411, %v1624
  %v1626 = vpop.f32.mrf.mxu0
  %v1627 = vpop.f32.mrf.mxu0
  %v1628 = vadd.f32 %v411, %v1627
  %v1629 = vpop.f32.mrf.mxu0
  %1630 = vmatprep.mubr.bf16.mxu0 0
  %1631 = vmatmul.mubr.bf16.gmra.mxu0 %v1541
  %v1632 = vpop.f32.mrf.mxu0
  %v1633 = vadd.f32 %v411, %v1632
  %v1634 = vpop.f32.mrf.mxu0
  %v1635 = vpop.f32.mrf.mxu0
  %v1636 = vadd.f32 %v411, %v1635
  %v1637 = vpop.f32.mrf.mxu0
  %1638 = vdwg.mxu0
  %v1639 = vmax.f32 %v1577, 0.0
  %v1640 = vmax.f32 %v1580, 0.0
  %v1641 = vmax.f32 %v1585, 0.0
  %v1642 = vmax.f32 %v1588, 0.0
  %v1643 = vmax.f32 %v1593, 0.0
  %v1644 = vmax.f32 %v1596, 0.0
  %v1645 = vmax.f32 %v1601, 0.0
  %v1646 = vmax.f32 %v1604, 0.0
  %v1647 = vmax.f32 %v1609, 0.0
  %v1648 = vmax.f32 %v1612, 0.0
  %v1649 = vmax.f32 %v1617, 0.0
  %v1650 = vmax.f32 %v1620, 0.0
  %v1651 = vmax.f32 %v1625, 0.0
  %v1652 = vmax.f32 %v1628, 0.0
  %v1653 = vmax.f32 %v1633, 0.0
  %v1654 = vmax.f32 %v1636, 0.0
  %v1655 = vpack.c.bf16 %v1640, %v1639
  %v1656 = vpack.c.bf16 %v1642, %v1641
  %v1657 = vpack.c.bf16 %v1644, %v1643
  %v1658 = vpack.c.bf16 %v1646, %v1645
  %v1659 = vpack.c.bf16 %v1648, %v1647
  %v1660 = vpack.c.bf16 %v1650, %v1649
  %v1661 = vpack.c.bf16 %v1652, %v1651
  %v1662 = vpack.c.bf16 %v1654, %v1653
  %1663 = vmatprep.subr.bf16.mxu0 0
  %1664 = vmatpush1.bf16.msra.mxu0 %v1662
  %1665 = vmatprep.subr.bf16.mxu0 0
  %1666 = vmatpush1.bf16.msra.mxu0 %v1661
  %1667 = vmatprep.subr.bf16.mxu0 0
  %1668 = vmatpush1.bf16.msra.mxu0 %v1660
  %1669 = vmatprep.subr.bf16.mxu0 0
  %1670 = vmatpush1.bf16.msra.mxu0 %v1659
  %1671 = vmatprep.subr.bf16.mxu0 0
  %1672 = vmatpush1.bf16.msra.mxu0 %v1658
  %1673 = vmatprep.subr.bf16.mxu0 0
  %1674 = vmatpush1.bf16.msra.mxu0 %v1657
  %1675 = vmatprep.subr.bf16.mxu0 0
  %1676 = vmatpush1.bf16.msra.mxu0 %v1656
  %1677 = vmatprep.subr.bf16.mxu0 0
  %1678 = vmatpush1.bf16.msra.mxu0 %v1655
  %1679 = vmatprep.subr.bf16.mxu0 0
  %1680 = vmatpush2.bf16.msra.mxu0 0
  %1681 = vmatprep.subr.bf16.mxu0 0
  %1682 = vmatpush2.bf16.msra.mxu0 0
  %1683 = vmatprep.subr.bf16.mxu0 0
  %1684 = vmatpush2.bf16.msra.mxu0 0
  %1685 = vmatprep.subr.bf16.mxu0 0
  %1686 = vmatpush2.bf16.msra.mxu0 0
  %1687 = vmatprep.subr.bf16.mxu0 0
  %1688 = vmatpush2.bf16.msra.mxu0 0
  %1689 = vmatprep.subr.bf16.mxu0 0
  %1690 = vmatpush2.bf16.msra.mxu0 0
  %1691 = vmatprep.subr.bf16.mxu0 0
  %1692 = vmatpush2.bf16.msra.mxu0 0
  %1693 = vmatprep.subr.bf16.mxu0 0
  %1694 = vmatpush2.bf16.msra.mxu0 0
  %1695 = vmatprep.mubr.bf16.mxu0 0
  %1696 = vmatmul.mubr.bf16.gmra.mxu0 %v1026
  %v1697 = vpop.f32.mrf.mxu0
  %v1698 = vadd.f32 0.0, %v1697
  %v1699 = vpop.f32.mrf.mxu0
  %v1700 = vpop.f32.mrf.mxu0
  %v1701 = vadd.f32 0.0, %v1700
  %v1702 = vpop.f32.mrf.mxu0
  %1703 = vmatprep.mubr.bf16.mxu0 0
  %1704 = vmatmul.mubr.bf16.gmra.mxu0 %v1027
  %v1705 = vpop.f32.mrf.mxu0
  %v1706 = vadd.f32 0.0, %v1705
  %v1707 = vpop.f32.mrf.mxu0
  %v1708 = vpop.f32.mrf.mxu0
  %v1709 = vadd.f32 0.0, %v1708
  %v1710 = vpop.f32.mrf.mxu0
  %1711 = vmatprep.mubr.bf16.mxu0 0
  %1712 = vmatmul.mubr.bf16.gmra.mxu0 %v1028
  %v1713 = vpop.f32.mrf.mxu0
  %v1714 = vadd.f32 0.0, %v1713
  %v1715 = vpop.f32.mrf.mxu0
  %v1716 = vpop.f32.mrf.mxu0
  %v1717 = vadd.f32 0.0, %v1716
  %v1718 = vpop.f32.mrf.mxu0
  %1719 = vmatprep.mubr.bf16.mxu0 0
  %1720 = vmatmul.mubr.bf16.gmra.mxu0 %v1029
  %v1721 = vpop.f32.mrf.mxu0
  %v1722 = vadd.f32 0.0, %v1721
  %v1723 = vpop.f32.mrf.mxu0
  %v1724 = vpop.f32.mrf.mxu0
  %v1725 = vadd.f32 0.0, %v1724
  %v1726 = vpop.f32.mrf.mxu0
  %1727 = vmatprep.mubr.bf16.mxu0 0
  %1728 = vmatmul.mubr.bf16.gmra.mxu0 %v1030
  %v1729 = vpop.f32.mrf.mxu0
  %v1730 = vadd.f32 0.0, %v1729
  %v1731 = vpop.f32.mrf.mxu0
  %v1732 = vpop.f32.mrf.mxu0
  %v1733 = vadd.f32 0.0, %v1732
  %v1734 = vpop.f32.mrf.mxu0
  %1735 = vmatprep.mubr.bf16.mxu0 0
  %1736 = vmatmul.mubr.bf16.gmra.mxu0 %v1031
  %v1737 = vpop.f32.mrf.mxu0
  %v1738 = vadd.f32 0.0, %v1737
  %v1739 = vpop.f32.mrf.mxu0
  %v1740 = vpop.f32.mrf.mxu0
  %v1741 = vadd.f32 0.0, %v1740
  %v1742 = vpop.f32.mrf.mxu0
  %1743 = vmatprep.mubr.bf16.mxu0 0
  %1744 = vmatmul.mubr.bf16.gmra.mxu0 %v1032
  %v1745 = vpop.f32.mrf.mxu0
  %v1746 = vadd.f32 0.0, %v1745
  %v1747 = vpop.f32.mrf.mxu0
  %v1748 = vpop.f32.mrf.mxu0
  %v1749 = vadd.f32 0.0, %v1748
  %v1750 = vpop.f32.mrf.mxu0
  %1751 = vmatprep.mubr.bf16.mxu0 0
  %1752 = vmatmul.mubr.bf16.gmra.mxu0 %v1033
  %v1753 = vpop.f32.mrf.mxu0
  %v1754 = vadd.f32 0.0, %v1753
  %v1755 = vpop.f32.mrf.mxu0
  %v1756 = vpop.f32.mrf.mxu0
  %v1757 = vadd.f32 0.0, %v1756
  %v1758 = vpop.f32.mrf.mxu0
  %1759 = vdwg.mxu0
  %v1760 = vadd.f32 %v1639, %v1698
  %v1761 = vadd.f32 %v1640, %v1701
  %v1762 = vadd.f32 %v1641, %v1706
  %v1763 = vadd.f32 %v1642, %v1709
  %v1764 = vadd.f32 %v1643, %v1714
  %v1765 = vadd.f32 %v1644, %v1717
  %v1766 = vadd.f32 %v1645, %v1722
  %v1767 = vadd.f32 %v1646, %v1725
  %v1768 = vadd.f32 %v1647, %v1730
  %v1769 = vadd.f32 %v1648, %v1733
  %v1770 = vadd.f32 %v1649, %v1738
  %v1771 = vadd.f32 %v1650, %v1741
  %v1772 = vadd.f32 %v1651, %v1746
  %v1773 = vadd.f32 %v1652, %v1749
  %v1774 = vadd.f32 %v1653, %v1754
  %v1775 = vadd.f32 %v1654, %v1757
  %v1776 = vpack.c.bf16 %v1761, %v1760
  %v1777 = vpack.c.bf16 %v1763, %v1762
  %v1778 = vpack.c.bf16 %v1765, %v1764
  %v1779 = vpack.c.bf16 %v1767, %v1766
  %v1780 = vpack.c.bf16 %v1769, %v1768
  %v1781 = vpack.c.bf16 %v1771, %v1770
  %v1782 = vpack.c.bf16 %v1773, %v1772
  %v1783 = vpack.c.bf16 %v1775, %v1774
  %1784 = vmatprep.subr.bf16.mxu0 0
  %1785 = vmatpush1.bf16.msra.mxu0 %v108
  %1786 = vmatprep.subr.bf16.mxu0 0
  %1787 = vmatpush1.bf16.msra.mxu0 %v107
  %1788 = vmatprep.subr.bf16.mxu0 0
  %1789 = vmatpush1.bf16.msra.mxu0 %v106
  %1790 = vmatprep.subr.bf16.mxu0 0
  %1791 = vmatpush1.bf16.msra.mxu0 %v105
  %1792 = vmatprep.subr.bf16.mxu0 0
  %1793 = vmatpush1.bf16.msra.mxu0 %v104
  %1794 = vmatprep.subr.bf16.mxu0 0
  %1795 = vmatpush1.bf16.msra.mxu0 %v103
  %1796 = vmatprep.subr.bf16.mxu0 0
  %1797 = vmatpush1.bf16.msra.mxu0 %v102
  %1798 = vmatprep.subr.bf16.mxu0 0
  %1799 = vmatpush1.bf16.msra.mxu0 %v101
  %1800 = vmatprep.subr.bf16.mxu0 0
  %1801 = vmatpush2.bf16.msra.mxu0 0
  %1802 = vmatprep.subr.bf16.mxu0 0
  %1803 = vmatpush2.bf16.msra.mxu0 0
  %1804 = vmatprep.subr.bf16.mxu0 0
  %1805 = vmatpush2.bf16.msra.mxu0 0
  %1806 = vmatprep.subr.bf16.mxu0 0
  %1807 = vmatpush2.bf16.msra.mxu0 0
  %1808 = vmatprep.subr.bf16.mxu0 0
  %1809 = vmatpush2.bf16.msra.mxu0 0
  %1810 = vmatprep.subr.bf16.mxu0 0
  %1811 = vmatpush2.bf16.msra.mxu0 0
  %1812 = vmatprep.subr.bf16.mxu0 0
  %1813 = vmatpush2.bf16.msra.mxu0 0
  %1814 = vmatprep.subr.bf16.mxu0 0
  %1815 = vmatpush2.bf16.msra.mxu0 0
  %1816 = vmatprep.mubr.bf16.mxu0 0
  %1817 = vmatmul.mubr.bf16.gmra.mxu0 %v1776
  %v1818 = vpop.f32.mrf.mxu0
  %v1819 = vadd.f32 %v411, %v1818
  %v1820 = vpop.f32.mrf.mxu0
  %v1821 = vpop.f32.mrf.mxu0
  %v1822 = vadd.f32 %v411, %v1821
  %v1823 = vpop.f32.mrf.mxu0
  %1824 = vmatprep.mubr.bf16.mxu0 0
  %1825 = vmatmul.mubr.bf16.gmra.mxu0 %v1777
  %v1826 = vpop.f32.mrf.mxu0
  %v1827 = vadd.f32 %v411, %v1826
  %v1828 = vpop.f32.mrf.mxu0
  %v1829 = vpop.f32.mrf.mxu0
  %v1830 = vadd.f32 %v411, %v1829
  %v1831 = vpop.f32.mrf.mxu0
  %1832 = vmatprep.mubr.bf16.mxu0 0
  %1833 = vmatmul.mubr.bf16.gmra.mxu0 %v1778
  %v1834 = vpop.f32.mrf.mxu0
  %v1835 = vadd.f32 %v411, %v1834
  %v1836 = vpop.f32.mrf.mxu0
  %v1837 = vpop.f32.mrf.mxu0
  %v1838 = vadd.f32 %v411, %v1837
  %v1839 = vpop.f32.mrf.mxu0
  %1840 = vmatprep.mubr.bf16.mxu0 0
  %1841 = vmatmul.mubr.bf16.gmra.mxu0 %v1779
  %v1842 = vpop.f32.mrf.mxu0
  %v1843 = vadd.f32 %v411, %v1842
  %v1844 = vpop.f32.mrf.mxu0
  %v1845 = vpop.f32.mrf.mxu0
  %v1846 = vadd.f32 %v411, %v1845
  %v1847 = vpop.f32.mrf.mxu0
  %1848 = vmatprep.mubr.bf16.mxu0 0
  %1849 = vmatmul.mubr.bf16.gmra.mxu0 %v1780
  %v1850 = vpop.f32.mrf.mxu0
  %v1851 = vadd.f32 %v411, %v1850
  %v1852 = vpop.f32.mrf.mxu0
  %v1853 = vpop.f32.mrf.mxu0
  %v1854 = vadd.f32 %v411, %v1853
  %v1855 = vpop.f32.mrf.mxu0
  %1856 = vmatprep.mubr.bf16.mxu0 0
  %1857 = vmatmul.mubr.bf16.gmra.mxu0 %v1781
  %v1858 = vpop.f32.mrf.mxu0
  %v1859 = vadd.f32 %v411, %v1858
  %v1860 = vpop.f32.mrf.mxu0
  %v1861 = vpop.f32.mrf.mxu0
  %v1862 = vadd.f32 %v411, %v1861
  %v1863 = vpop.f32.mrf.mxu0
  %1864 = vmatprep.mubr.bf16.mxu0 0
  %1865 = vmatmul.mubr.bf16.gmra.mxu0 %v1782
  %v1866 = vpop.f32.mrf.mxu0
  %v1867 = vadd.f32 %v411, %v1866
  %v1868 = vpop.f32.mrf.mxu0
  %v1869 = vpop.f32.mrf.mxu0
  %v1870 = vadd.f32 %v411, %v1869
  %v1871 = vpop.f32.mrf.mxu0
  %1872 = vmatprep.mubr.bf16.mxu0 0
  %1873 = vmatmul.mubr.bf16.gmra.mxu0 %v1783
  %v1874 = vpop.f32.mrf.mxu0
  %v1875 = vadd.f32 %v411, %v1874
  %v1876 = vpop.f32.mrf.mxu0
  %v1877 = vpop.f32.mrf.mxu0
  %v1878 = vadd.f32 %v411, %v1877
  %v1879 = vpop.f32.mrf.mxu0
  %1880 = vdwg.mxu0
  %v1881 = vmax.f32 %v1819, 0.0
  %v1882 = vmax.f32 %v1822, 0.0
  %v1883 = vmax.f32 %v1827, 0.0
  %v1884 = vmax.f32 %v1830, 0.0
  %v1885 = vmax.f32 %v1835, 0.0
  %v1886 = vmax.f32 %v1838, 0.0
  %v1887 = vmax.f32 %v1843, 0.0
  %v1888 = vmax.f32 %v1846, 0.0
  %v1889 = vmax.f32 %v1851, 0.0
  %v1890 = vmax.f32 %v1854, 0.0
  %v1891 = vmax.f32 %v1859, 0.0
  %v1892 = vmax.f32 %v1862, 0.0
  %v1893 = vmax.f32 %v1867, 0.0
  %v1894 = vmax.f32 %v1870, 0.0
  %v1895 = vmax.f32 %v1875, 0.0
  %v1896 = vmax.f32 %v1878, 0.0
  %v1897 = vmul.f32 %v994, %v994
  %v1898 = vmul.f32 %v995, %v995
  %v1899 = vmul.f32 %v996, %v996
  %v1900 = vmul.f32 %v997, %v997
  %v1901 = vmul.f32 %v998, %v998
  %v1902 = vmul.f32 %v999, %v999
  %v1903 = vmul.f32 %v1000, %v1000
  %v1904 = vmul.f32 %v1001, %v1001
  %v1905 = vmul.f32 %v1002, %v1002
  %v1906 = vmul.f32 %v1003, %v1003
  %v1907 = vmul.f32 %v1004, %v1004
  %v1908 = vmul.f32 %v1005, %v1005
  %v1909 = vmul.f32 %v1006, %v1006
  %v1910 = vmul.f32 %v1007, %v1007
  %v1911 = vmul.f32 %v1008, %v1008
  %v1912 = vmul.f32 %v1009, %v1009
  %1913 = vadd.xlane.f32.xlu0 %v1897
  %v1914 = vpop.xlane.xlu0 %1913
  %1915 = vadd.xlane.f32.xlu0 %v1898
  %v1916 = vpop.xlane.xlu0 %1915
  %1917 = vadd.xlane.f32.xlu0 %v1899
  %v1918 = vpop.xlane.xlu0 %1917
  %1919 = vadd.xlane.f32.xlu0 %v1900
  %v1920 = vpop.xlane.xlu0 %1919
  %1921 = vadd.xlane.f32.xlu0 %v1901
  %v1922 = vpop.xlane.xlu0 %1921
  %1923 = vadd.xlane.f32.xlu0 %v1902
  %v1924 = vpop.xlane.xlu0 %1923
  %1925 = vadd.xlane.f32.xlu0 %v1903
  %v1926 = vpop.xlane.xlu0 %1925
  %1927 = vadd.xlane.f32.xlu0 %v1904
  %v1928 = vpop.xlane.xlu0 %1927
  %1929 = vadd.xlane.f32.xlu0 %v1905
  %v1930 = vpop.xlane.xlu0 %1929
  %1931 = vadd.xlane.f32.xlu0 %v1906
  %v1932 = vpop.xlane.xlu0 %1931
  %1933 = vadd.xlane.f32.xlu0 %v1907
  %v1934 = vpop.xlane.xlu0 %1933
  %1935 = vadd.xlane.f32.xlu0 %v1908
  %v1936 = vpop.xlane.xlu0 %1935
  %1937 = vadd.xlane.f32.xlu0 %v1909
  %v1938 = vpop.xlane.xlu0 %1937
  %1939 = vadd.xlane.f32.xlu0 %v1910
  %v1940 = vpop.xlane.xlu0 %1939
  %1941 = vadd.xlane.f32.xlu0 %v1911
  %v1942 = vpop.xlane.xlu0 %1941
  %1943 = vadd.xlane.f32.xlu0 %v1912
  %v1944 = vpop.xlane.xlu0 %1943
  %v1945 = vmax.f32 %v1914, 1e-24
  %v1946 = vmax.f32 %v1916, 1e-24
  %v1947 = vmax.f32 %v1918, 1e-24
  %v1948 = vmax.f32 %v1920, 1e-24
  %v1949 = vmax.f32 %v1922, 1e-24
  %v1950 = vmax.f32 %v1924, 1e-24
  %v1951 = vmax.f32 %v1926, 1e-24
  %v1952 = vmax.f32 %v1928, 1e-24
  %v1953 = vmax.f32 %v1930, 1e-24
  %v1954 = vmax.f32 %v1932, 1e-24
  %v1955 = vmax.f32 %v1934, 1e-24
  %v1956 = vmax.f32 %v1936, 1e-24
  %v1957 = vmax.f32 %v1938, 1e-24
  %v1958 = vmax.f32 %v1940, 1e-24
  %v1959 = vmax.f32 %v1942, 1e-24
  %v1960 = vmax.f32 %v1944, 1e-24
  %v1961 = vrsqrt.pop %v1945
  %v1962 = vrsqrt.pop %v1946
  %v1963 = vrsqrt.pop %v1947
  %v1964 = vrsqrt.pop %v1948
  %v1965 = vrsqrt.pop %v1949
  %v1966 = vrsqrt.pop %v1950
  %v1967 = vrsqrt.pop %v1951
  %v1968 = vrsqrt.pop %v1952
  %v1969 = vrsqrt.pop %v1953
  %v1970 = vrsqrt.pop %v1954
  %v1971 = vrsqrt.pop %v1955
  %v1972 = vrsqrt.pop %v1956
  %v1973 = vrsqrt.pop %v1957
  %v1974 = vrsqrt.pop %v1958
  %v1975 = vrsqrt.pop %v1959
  %v1976 = vrsqrt.pop %v1960
  %v1977 = vmul.f32 %v994, %v1961
  %v1978 = vmul.f32 %v995, %v1962
  %v1979 = vmul.f32 %v996, %v1963
  %v1980 = vmul.f32 %v997, %v1964
  %v1981 = vmul.f32 %v998, %v1965
  %v1982 = vmul.f32 %v999, %v1966
  %v1983 = vmul.f32 %v1000, %v1967
  %v1984 = vmul.f32 %v1001, %v1968
  %v1985 = vmul.f32 %v1002, %v1969
  %v1986 = vmul.f32 %v1003, %v1970
  %v1987 = vmul.f32 %v1004, %v1971
  %v1988 = vmul.f32 %v1005, %v1972
  %v1989 = vmul.f32 %v1006, %v1973
  %v1990 = vmul.f32 %v1007, %v1974
  %v1991 = vmul.f32 %v1008, %v1975
  %v1992 = vmul.f32 %v1009, %v1976
  %v1993 = vmul.f32 %v1881, %v1881
  %v1994 = vmul.f32 %v1882, %v1882
  %v1995 = vmul.f32 %v1883, %v1883
  %v1996 = vmul.f32 %v1884, %v1884
  %v1997 = vmul.f32 %v1885, %v1885
  %v1998 = vmul.f32 %v1886, %v1886
  %v1999 = vmul.f32 %v1887, %v1887
  %v2000 = vmul.f32 %v1888, %v1888
  %v2001 = vmul.f32 %v1889, %v1889
  %v2002 = vmul.f32 %v1890, %v1890
  %v2003 = vmul.f32 %v1891, %v1891
  %v2004 = vmul.f32 %v1892, %v1892
  %v2005 = vmul.f32 %v1893, %v1893
  %v2006 = vmul.f32 %v1894, %v1894
  %v2007 = vmul.f32 %v1895, %v1895
  %v2008 = vmul.f32 %v1896, %v1896
  %2009 = vadd.xlane.f32.xlu0 %v1993
  %v2010 = vpop.xlane.xlu0 %2009
  %2011 = vadd.xlane.f32.xlu0 %v1994
  %v2012 = vpop.xlane.xlu0 %2011
  %2013 = vadd.xlane.f32.xlu0 %v1995
  %v2014 = vpop.xlane.xlu0 %2013
  %2015 = vadd.xlane.f32.xlu0 %v1996
  %v2016 = vpop.xlane.xlu0 %2015
  %2017 = vadd.xlane.f32.xlu0 %v1997
  %v2018 = vpop.xlane.xlu0 %2017
  %2019 = vadd.xlane.f32.xlu0 %v1998
  %v2020 = vpop.xlane.xlu0 %2019
  %2021 = vadd.xlane.f32.xlu0 %v1999
  %v2022 = vpop.xlane.xlu0 %2021
  %2023 = vadd.xlane.f32.xlu0 %v2000
  %v2024 = vpop.xlane.xlu0 %2023
  %2025 = vadd.xlane.f32.xlu0 %v2001
  %v2026 = vpop.xlane.xlu0 %2025
  %2027 = vadd.xlane.f32.xlu0 %v2002
  %v2028 = vpop.xlane.xlu0 %2027
  %2029 = vadd.xlane.f32.xlu0 %v2003
  %v2030 = vpop.xlane.xlu0 %2029
  %2031 = vadd.xlane.f32.xlu0 %v2004
  %v2032 = vpop.xlane.xlu0 %2031
  %2033 = vadd.xlane.f32.xlu0 %v2005
  %v2034 = vpop.xlane.xlu0 %2033
  %2035 = vadd.xlane.f32.xlu0 %v2006
  %v2036 = vpop.xlane.xlu0 %2035
  %2037 = vadd.xlane.f32.xlu0 %v2007
  %v2038 = vpop.xlane.xlu0 %2037
  %2039 = vadd.xlane.f32.xlu0 %v2008
  %v2040 = vpop.xlane.xlu0 %2039
  %v2041 = vmax.f32 %v2010, 1e-24
  %v2042 = vmax.f32 %v2012, 1e-24
  %v2043 = vmax.f32 %v2014, 1e-24
  %v2044 = vmax.f32 %v2016, 1e-24
  %v2045 = vmax.f32 %v2018, 1e-24
  %v2046 = vmax.f32 %v2020, 1e-24
  %v2047 = vmax.f32 %v2022, 1e-24
  %v2048 = vmax.f32 %v2024, 1e-24
  %v2049 = vmax.f32 %v2026, 1e-24
  %v2050 = vmax.f32 %v2028, 1e-24
  %v2051 = vmax.f32 %v2030, 1e-24
  %v2052 = vmax.f32 %v2032, 1e-24
  %v2053 = vmax.f32 %v2034, 1e-24
  %v2054 = vmax.f32 %v2036, 1e-24
  %v2055 = vmax.f32 %v2038, 1e-24
  %v2056 = vmax.f32 %v2040, 1e-24
  %v2057 = vrsqrt.pop %v2041
  %v2058 = vrsqrt.pop %v2042
  %v2059 = vrsqrt.pop %v2043
  %v2060 = vrsqrt.pop %v2044
  %v2061 = vrsqrt.pop %v2045
  %v2062 = vrsqrt.pop %v2046
  %v2063 = vrsqrt.pop %v2047
  %v2064 = vrsqrt.pop %v2048
  %v2065 = vrsqrt.pop %v2049
  %v2066 = vrsqrt.pop %v2050
  %v2067 = vrsqrt.pop %v2051
  %v2068 = vrsqrt.pop %v2052
  %v2069 = vrsqrt.pop %v2053
  %v2070 = vrsqrt.pop %v2054
  %v2071 = vrsqrt.pop %v2055
  %v2072 = vrsqrt.pop %v2056
  %v2073 = vmul.f32 %v1881, %v2057
  %v2074 = vmul.f32 %v1882, %v2058
  %v2075 = vmul.f32 %v1883, %v2059
  %v2076 = vmul.f32 %v1884, %v2060
  %v2077 = vmul.f32 %v1885, %v2061
  %v2078 = vmul.f32 %v1886, %v2062
  %v2079 = vmul.f32 %v1887, %v2063
  %v2080 = vmul.f32 %v1888, %v2064
  %v2081 = vmul.f32 %v1889, %v2065
  %v2082 = vmul.f32 %v1890, %v2066
  %v2083 = vmul.f32 %v1891, %v2067
  %v2084 = vmul.f32 %v1892, %v2068
  %v2085 = vmul.f32 %v1893, %v2069
  %v2086 = vmul.f32 %v1894, %v2070
  %v2087 = vmul.f32 %v1895, %v2071
  %v2088 = vmul.f32 %v1896, %v2072
  %v2089 = vpack.c.bf16 %v1978, %v1977
  %v2090 = vpack.c.bf16 %v1980, %v1979
  %v2091 = vpack.c.bf16 %v1982, %v1981
  %v2092 = vpack.c.bf16 %v1984, %v1983
  %v2093 = vpack.c.bf16 %v1986, %v1985
  %v2094 = vpack.c.bf16 %v1988, %v1987
  %v2095 = vpack.c.bf16 %v1990, %v1989
  %v2096 = vpack.c.bf16 %v1992, %v1991
  %v2097 = vpack.c.bf16 %v2074, %v2073
  %v2098 = vpack.c.bf16 %v2076, %v2075
  %v2099 = vpack.c.bf16 %v2078, %v2077
  %v2100 = vpack.c.bf16 %v2080, %v2079
  %v2101 = vpack.c.bf16 %v2082, %v2081
  %v2102 = vpack.c.bf16 %v2084, %v2083
  %v2103 = vpack.c.bf16 %v2086, %v2085
  %v2104 = vpack.c.bf16 %v2088, %v2087
  %v2105 = vld [vmem:[%s4] sm:$0xff]
  %v2106 = vld [vmem:[%s4 + $0x8] sm:$0xff]
  %v2107 = vld [vmem:[%s4 + $0x10] sm:$0xff]
  %v2108 = vld [vmem:[%s4 + $0x18] sm:$0xff]
  %v2109 = vld [vmem:[%s4 + $0x20] sm:$0xff]
  %v2110 = vld [vmem:[%s4 + $0x28] sm:$0xff]
  %v2111 = vld [vmem:[%s4 + $0x30] sm:$0xff]
  %v2112 = vld [vmem:[%s4 + $0x38] sm:$0xff]
  %v2113 = vld [vmem:[%s4 + $0x40] sm:$0xff]
  %v2114 = vld [vmem:[%s4 + $0x48] sm:$0xff]
  %v2115 = vld [vmem:[%s4 + $0x50] sm:$0xff]
  %v2116 = vld [vmem:[%s4 + $0x58] sm:$0xff]
  %v2117 = vld [vmem:[%s4 + $0x60] sm:$0xff]
  %v2118 = vld [vmem:[%s4 + $0x68] sm:$0xff]
  %v2119 = vld [vmem:[%s4 + $0x70] sm:$0xff]
  %v2120 = vld [vmem:[%s4 + $0x78] sm:$0xff]
  %v2121 = vld [vmem:[%s5] sm:$0x1]
  %2123 = vset.pattern.permute.xlu0 0
  %2124 = vperm.xlu0 %2123, %v2105
  %v2125 = vpop.permute.xlu0 %2124
  %2128 = vset.pattern.permute.xlu0 0
  %2129 = vperm.xlu0 %2128, %v2106
  %v2130 = vpop.permute.xlu0 %2129
  %2133 = vset.pattern.permute.xlu0 0
  %2134 = vperm.xlu0 %2133, %v2107
  %v2135 = vpop.permute.xlu0 %2134
  %2138 = vset.pattern.permute.xlu0 0
  %2139 = vperm.xlu0 %2138, %v2108
  %v2140 = vpop.permute.xlu0 %2139
  %2143 = vset.pattern.permute.xlu0 0
  %2144 = vperm.xlu0 %2143, %v2109
  %v2145 = vpop.permute.xlu0 %2144
  %2148 = vset.pattern.permute.xlu0 0
  %2149 = vperm.xlu0 %2148, %v2110
  %v2150 = vpop.permute.xlu0 %2149
  %2153 = vset.pattern.permute.xlu0 0
  %2154 = vperm.xlu0 %2153, %v2111
  %v2155 = vpop.permute.xlu0 %2154
  %2158 = vset.pattern.permute.xlu0 0
  %2159 = vperm.xlu0 %2158, %v2112
  %v2160 = vpop.permute.xlu0 %2159
  %2163 = vset.pattern.permute.xlu0 0
  %2164 = vperm.xlu0 %2163, %v2113
  %v2165 = vpop.permute.xlu0 %2164
  %2168 = vset.pattern.permute.xlu0 0
  %2169 = vperm.xlu0 %2168, %v2114
  %v2170 = vpop.permute.xlu0 %2169
  %2173 = vset.pattern.permute.xlu0 0
  %2174 = vperm.xlu0 %2173, %v2115
  %v2175 = vpop.permute.xlu0 %2174
  %2178 = vset.pattern.permute.xlu0 0
  %2179 = vperm.xlu0 %2178, %v2116
  %v2180 = vpop.permute.xlu0 %2179
  %2183 = vset.pattern.permute.xlu0 0
  %2184 = vperm.xlu0 %2183, %v2117
  %v2185 = vpop.permute.xlu0 %2184
  %2188 = vset.pattern.permute.xlu0 0
  %2189 = vperm.xlu0 %2188, %v2118
  %v2190 = vpop.permute.xlu0 %2189
  %2193 = vset.pattern.permute.xlu0 0
  %2194 = vperm.xlu0 %2193, %v2119
  %v2195 = vpop.permute.xlu0 %2194
  %2198 = vset.pattern.permute.xlu0 0
  %2199 = vperm.xlu0 %2198, %v2120
  %v2200 = vpop.permute.xlu0 %2199
  %v2203 = vlaneseq
  %v2204 = vshrl.u32 %v2203, 7
  %v2205 = vsub.s32 0, %v2204
  %v2206 = vrot.slane %v2121, %v2205
  %vm2208 = vcmp.eq.f32.partialorder %v2125, %v2206
  %vm2209 = vcmp.eq.f32.partialorder %v2130, %v2206
  %vm2210 = vcmp.eq.f32.partialorder %v2135, %v2206
  %vm2211 = vcmp.eq.f32.partialorder %v2140, %v2206
  %vm2212 = vcmp.eq.f32.partialorder %v2145, %v2206
  %vm2213 = vcmp.eq.f32.partialorder %v2150, %v2206
  %vm2214 = vcmp.eq.f32.partialorder %v2155, %v2206
  %vm2215 = vcmp.eq.f32.partialorder %v2160, %v2206
  %vm2216 = vcmp.eq.f32.partialorder %v2165, %v2206
  %vm2217 = vcmp.eq.f32.partialorder %v2170, %v2206
  %vm2218 = vcmp.eq.f32.partialorder %v2175, %v2206
  %vm2219 = vcmp.eq.f32.partialorder %v2180, %v2206
  %vm2220 = vcmp.eq.f32.partialorder %v2185, %v2206
  %vm2221 = vcmp.eq.f32.partialorder %v2190, %v2206
  %vm2222 = vcmp.eq.f32.partialorder %v2195, %v2206
  %vm2223 = vcmp.eq.f32.partialorder %v2200, %v2206
  %v2224 = vsel %vm2208, 1.0, 0.0
  %v2225 = vsel %vm2209, 1.0, 0.0
  %v2226 = vsel %vm2210, 1.0, 0.0
  %v2227 = vsel %vm2211, 1.0, 0.0
  %v2228 = vsel %vm2212, 1.0, 0.0
  %v2229 = vsel %vm2213, 1.0, 0.0
  %v2230 = vsel %vm2214, 1.0, 0.0
  %v2231 = vsel %vm2215, 1.0, 0.0
  %v2232 = vsel %vm2216, 1.0, 0.0
  %v2233 = vsel %vm2217, 1.0, 0.0
  %v2234 = vsel %vm2218, 1.0, 0.0
  %v2235 = vsel %vm2219, 1.0, 0.0
  %v2236 = vsel %vm2220, 1.0, 0.0
  %v2237 = vsel %vm2221, 1.0, 0.0
  %v2238 = vsel %vm2222, 1.0, 0.0
  %v2239 = vsel %vm2223, 1.0, 0.0
  %2240 = vmatprep.subr.bf16.mxu0 0
  %2241 = vmatpush1.bf16.xpose.msra.mxu0 %v2104
  %2242 = vmatprep.subr.bf16.mxu0 0
  %2243 = vmatpush1.bf16.xpose.msra.mxu0 %v2103
  %2244 = vmatprep.subr.bf16.mxu0 0
  %2245 = vmatpush1.bf16.xpose.msra.mxu0 %v2102
  %2246 = vmatprep.subr.bf16.mxu0 0
  %2247 = vmatpush1.bf16.xpose.msra.mxu0 %v2101
  %2248 = vmatprep.subr.bf16.mxu0 0
  %2249 = vmatpush1.bf16.xpose.msra.mxu0 %v2100
  %2250 = vmatprep.subr.bf16.mxu0 0
  %2251 = vmatpush1.bf16.xpose.msra.mxu0 %v2099
  %2252 = vmatprep.subr.bf16.mxu0 0
  %2253 = vmatpush1.bf16.xpose.msra.mxu0 %v2098
  %2254 = vmatprep.subr.bf16.mxu0 0
  %2255 = vmatpush1.bf16.xpose.msra.mxu0 %v2097
  %2256 = vmatprep.subr.bf16.mxu0 0
  %2257 = vmatpush2.bf16.xpose.msra.mxu0 0
  %2258 = vmatprep.subr.bf16.mxu0 0
  %2259 = vmatpush2.bf16.xpose.msra.mxu0 0
  %2260 = vmatprep.subr.bf16.mxu0 0
  %2261 = vmatpush2.bf16.xpose.msra.mxu0 0
  %2262 = vmatprep.subr.bf16.mxu0 0
  %2263 = vmatpush2.bf16.xpose.msra.mxu0 0
  %2264 = vmatprep.subr.bf16.mxu0 0
  %2265 = vmatpush2.bf16.xpose.msra.mxu0 0
  %2266 = vmatprep.subr.bf16.mxu0 0
  %2267 = vmatpush2.bf16.xpose.msra.mxu0 0
  %2268 = vmatprep.subr.bf16.mxu0 0
  %2269 = vmatpush2.bf16.xpose.msra.mxu0 0
  %2270 = vmatprep.subr.bf16.mxu0 0
  %2271 = vmatpush2.bf16.xpose.msra.mxu0 0
  %2272 = vmatprep.mubr.bf16.mxu0 0
  %2273 = vmatmul.mubr.bf16.gmra.mxu0 %v2089
  %v2274 = vpop.f32.mrf.mxu0
  %v2275 = vadd.f32 0.0, %v2274
  %v2276 = vpop.f32.mrf.mxu0
  %v2277 = vpop.f32.mrf.mxu0
  %v2278 = vadd.f32 0.0, %v2277
  %v2279 = vpop.f32.mrf.mxu0
  %2280 = vmatprep.mubr.bf16.mxu0 0
  %2281 = vmatmul.mubr.bf16.gmra.mxu0 %v2090
  %v2282 = vpop.f32.mrf.mxu0
  %v2283 = vadd.f32 0.0, %v2282
  %v2284 = vpop.f32.mrf.mxu0
  %v2285 = vpop.f32.mrf.mxu0
  %v2286 = vadd.f32 0.0, %v2285
  %v2287 = vpop.f32.mrf.mxu0
  %2288 = vmatprep.mubr.bf16.mxu0 0
  %2289 = vmatmul.mubr.bf16.gmra.mxu0 %v2091
  %v2290 = vpop.f32.mrf.mxu0
  %v2291 = vadd.f32 0.0, %v2290
  %v2292 = vpop.f32.mrf.mxu0
  %v2293 = vpop.f32.mrf.mxu0
  %v2294 = vadd.f32 0.0, %v2293
  %v2295 = vpop.f32.mrf.mxu0
  %2296 = vmatprep.mubr.bf16.mxu0 0
  %2297 = vmatmul.mubr.bf16.gmra.mxu0 %v2092
  %v2298 = vpop.f32.mrf.mxu0
  %v2299 = vadd.f32 0.0, %v2298
  %v2300 = vpop.f32.mrf.mxu0
  %v2301 = vpop.f32.mrf.mxu0
  %v2302 = vadd.f32 0.0, %v2301
  %v2303 = vpop.f32.mrf.mxu0
  %2304 = vmatprep.mubr.bf16.mxu0 0
  %2305 = vmatmul.mubr.bf16.gmra.mxu0 %v2093
  %v2306 = vpop.f32.mrf.mxu0
  %v2307 = vadd.f32 0.0, %v2306
  %v2308 = vpop.f32.mrf.mxu0
  %v2309 = vpop.f32.mrf.mxu0
  %v2310 = vadd.f32 0.0, %v2309
  %v2311 = vpop.f32.mrf.mxu0
  %2312 = vmatprep.mubr.bf16.mxu0 0
  %2313 = vmatmul.mubr.bf16.gmra.mxu0 %v2094
  %v2314 = vpop.f32.mrf.mxu0
  %v2315 = vadd.f32 0.0, %v2314
  %v2316 = vpop.f32.mrf.mxu0
  %v2317 = vpop.f32.mrf.mxu0
  %v2318 = vadd.f32 0.0, %v2317
  %v2319 = vpop.f32.mrf.mxu0
  %2320 = vmatprep.mubr.bf16.mxu0 0
  %2321 = vmatmul.mubr.bf16.gmra.mxu0 %v2095
  %v2322 = vpop.f32.mrf.mxu0
  %v2323 = vadd.f32 0.0, %v2322
  %v2324 = vpop.f32.mrf.mxu0
  %v2325 = vpop.f32.mrf.mxu0
  %v2326 = vadd.f32 0.0, %v2325
  %v2327 = vpop.f32.mrf.mxu0
  %2328 = vmatprep.mubr.bf16.mxu0 0
  %2329 = vmatmul.mubr.bf16.gmra.mxu0 %v2096
  %v2330 = vpop.f32.mrf.mxu0
  %v2331 = vadd.f32 0.0, %v2330
  %v2332 = vpop.f32.mrf.mxu0
  %v2333 = vpop.f32.mrf.mxu0
  %v2334 = vadd.f32 0.0, %v2333
  %v2335 = vpop.f32.mrf.mxu0
  %2336 = vdwg.mxu0
  %v2337 = vmul.f32 %v2275, %v2224
  %v2338 = vmul.f32 %v2278, %v2225
  %v2339 = vmul.f32 %v2283, %v2226
  %v2340 = vmul.f32 %v2286, %v2227
  %v2341 = vmul.f32 %v2291, %v2228
  %v2342 = vmul.f32 %v2294, %v2229
  %v2343 = vmul.f32 %v2299, %v2230
  %v2344 = vmul.f32 %v2302, %v2231
  %v2345 = vmul.f32 %v2307, %v2232
  %v2346 = vmul.f32 %v2310, %v2233
  %v2347 = vmul.f32 %v2315, %v2234
  %v2348 = vmul.f32 %v2318, %v2235
  %v2349 = vmul.f32 %v2323, %v2236
  %v2350 = vmul.f32 %v2326, %v2237
  %v2351 = vmul.f32 %v2331, %v2238
  %v2352 = vmul.f32 %v2334, %v2239
  %2353 = vst [vmem:[%s18] sm:$0xff] %v2337
  %2354 = vst [vmem:[%s18 + $0x8] sm:$0xff] %v2338
  %2355 = vst [vmem:[%s18 + $0x10] sm:$0xff] %v2339
  %2356 = vst [vmem:[%s18 + $0x18] sm:$0xff] %v2340
  %2357 = vst [vmem:[%s18 + $0x20] sm:$0xff] %v2341
  %2358 = vst [vmem:[%s18 + $0x28] sm:$0xff] %v2342
  %2359 = vst [vmem:[%s18 + $0x30] sm:$0xff] %v2343
  %2360 = vst [vmem:[%s18 + $0x38] sm:$0xff] %v2344
  %2361 = vst [vmem:[%s18 + $0x40] sm:$0xff] %v2345
  %2362 = vst [vmem:[%s18 + $0x48] sm:$0xff] %v2346
  %2363 = vst [vmem:[%s18 + $0x50] sm:$0xff] %v2347
  %2364 = vst [vmem:[%s18 + $0x58] sm:$0xff] %v2348
  %2365 = vst [vmem:[%s18 + $0x60] sm:$0xff] %v2349
  %2366 = vst [vmem:[%s18 + $0x68] sm:$0xff] %v2350
  %2367 = vst [vmem:[%s18 + $0x70] sm:$0xff] %v2351
  %2368 = vst [vmem:[%s18 + $0x78] sm:$0xff] %v2352
  %v2369 = vpack.c.bf16 %v2338, %v2337
  %v2370 = vpack.c.bf16 %v2340, %v2339
  %v2371 = vpack.c.bf16 %v2342, %v2341
  %v2372 = vpack.c.bf16 %v2344, %v2343
  %v2373 = vpack.c.bf16 %v2346, %v2345
  %v2374 = vpack.c.bf16 %v2348, %v2347
  %v2375 = vpack.c.bf16 %v2350, %v2349
  %v2376 = vpack.c.bf16 %v2352, %v2351
  %2377 = vmatprep.subr.bf16.mxu0 0
  %2378 = vmatpush1.bf16.msra.mxu0 %v2104
  %2379 = vmatprep.subr.bf16.mxu0 0
  %2380 = vmatpush1.bf16.msra.mxu0 %v2103
  %2381 = vmatprep.subr.bf16.mxu0 0
  %2382 = vmatpush1.bf16.msra.mxu0 %v2102
  %2383 = vmatprep.subr.bf16.mxu0 0
  %2384 = vmatpush1.bf16.msra.mxu0 %v2101
  %2385 = vmatprep.subr.bf16.mxu0 0
  %2386 = vmatpush1.bf16.msra.mxu0 %v2100
  %2387 = vmatprep.subr.bf16.mxu0 0
  %2388 = vmatpush1.bf16.msra.mxu0 %v2099
  %2389 = vmatprep.subr.bf16.mxu0 0
  %2390 = vmatpush1.bf16.msra.mxu0 %v2098
  %2391 = vmatprep.subr.bf16.mxu0 0
  %2392 = vmatpush1.bf16.msra.mxu0 %v2097
  %2393 = vmatprep.subr.bf16.mxu0 0
  %2394 = vmatpush2.bf16.msra.mxu0 0
  %2395 = vmatprep.subr.bf16.mxu0 0
  %2396 = vmatpush2.bf16.msra.mxu0 0
  %2397 = vmatprep.subr.bf16.mxu0 0
  %2398 = vmatpush2.bf16.msra.mxu0 0
  %2399 = vmatprep.subr.bf16.mxu0 0
  %2400 = vmatpush2.bf16.msra.mxu0 0
  %2401 = vmatprep.subr.bf16.mxu0 0
  %2402 = vmatpush2.bf16.msra.mxu0 0
  %2403 = vmatprep.subr.bf16.mxu0 0
  %2404 = vmatpush2.bf16.msra.mxu0 0
  %2405 = vmatprep.subr.bf16.mxu0 0
  %2406 = vmatpush2.bf16.msra.mxu0 0
  %2407 = vmatprep.subr.bf16.mxu0 0
  %2408 = vmatpush2.bf16.msra.mxu0 0
  %2409 = vmatprep.mubr.bf16.mxu0 0
  %2410 = vmatmul.mubr.bf16.gmra.mxu0 %v2369
  %v2411 = vpop.f32.mrf.mxu0
  %v2412 = vadd.f32 0.0, %v2411
  %v2413 = vpop.f32.mrf.mxu0
  %v2414 = vpop.f32.mrf.mxu0
  %v2415 = vadd.f32 0.0, %v2414
  %v2416 = vpop.f32.mrf.mxu0
  %2417 = vmatprep.mubr.bf16.mxu0 0
  %2418 = vmatmul.mubr.bf16.gmra.mxu0 %v2370
  %v2419 = vpop.f32.mrf.mxu0
  %v2420 = vadd.f32 0.0, %v2419
  %v2421 = vpop.f32.mrf.mxu0
  %v2422 = vpop.f32.mrf.mxu0
  %v2423 = vadd.f32 0.0, %v2422
  %v2424 = vpop.f32.mrf.mxu0
  %2425 = vmatprep.mubr.bf16.mxu0 0
  %2426 = vmatmul.mubr.bf16.gmra.mxu0 %v2371
  %v2427 = vpop.f32.mrf.mxu0
  %v2428 = vadd.f32 0.0, %v2427
  %v2429 = vpop.f32.mrf.mxu0
  %v2430 = vpop.f32.mrf.mxu0
  %v2431 = vadd.f32 0.0, %v2430
  %v2432 = vpop.f32.mrf.mxu0
  %2433 = vmatprep.mubr.bf16.mxu0 0
  %2434 = vmatmul.mubr.bf16.gmra.mxu0 %v2372
  %v2435 = vpop.f32.mrf.mxu0
  %v2436 = vadd.f32 0.0, %v2435
  %v2437 = vpop.f32.mrf.mxu0
  %v2438 = vpop.f32.mrf.mxu0
  %v2439 = vadd.f32 0.0, %v2438
  %v2440 = vpop.f32.mrf.mxu0
  %2441 = vmatprep.mubr.bf16.mxu0 0
  %2442 = vmatmul.mubr.bf16.gmra.mxu0 %v2373
  %v2443 = vpop.f32.mrf.mxu0
  %v2444 = vadd.f32 0.0, %v2443
  %v2445 = vpop.f32.mrf.mxu0
  %v2446 = vpop.f32.mrf.mxu0
  %v2447 = vadd.f32 0.0, %v2446
  %v2448 = vpop.f32.mrf.mxu0
  %2449 = vmatprep.mubr.bf16.mxu0 0
  %2450 = vmatmul.mubr.bf16.gmra.mxu0 %v2374
  %v2451 = vpop.f32.mrf.mxu0
  %v2452 = vadd.f32 0.0, %v2451
  %v2453 = vpop.f32.mrf.mxu0
  %v2454 = vpop.f32.mrf.mxu0
  %v2455 = vadd.f32 0.0, %v2454
  %v2456 = vpop.f32.mrf.mxu0
  %2457 = vmatprep.mubr.bf16.mxu0 0
  %2458 = vmatmul.mubr.bf16.gmra.mxu0 %v2375
  %v2459 = vpop.f32.mrf.mxu0
  %v2460 = vadd.f32 0.0, %v2459
  %v2461 = vpop.f32.mrf.mxu0
  %v2462 = vpop.f32.mrf.mxu0
  %v2463 = vadd.f32 0.0, %v2462
  %v2464 = vpop.f32.mrf.mxu0
  %2465 = vmatprep.mubr.bf16.mxu0 0
  %2466 = vmatmul.mubr.bf16.gmra.mxu0 %v2376
  %v2467 = vpop.f32.mrf.mxu0
  %v2468 = vadd.f32 0.0, %v2467
  %v2469 = vpop.f32.mrf.mxu0
  %v2470 = vpop.f32.mrf.mxu0
  %v2471 = vadd.f32 0.0, %v2470
  %v2472 = vpop.f32.mrf.mxu0
  %2473 = vdwg.mxu0
  %2474 = vxpose.xlu0.c.b16.start [1/8] %v2369, 128
  %2475 = vxpose.xlu0.c.b16.cont [2/8] %v2370, 128
  %2476 = vxpose.xlu0.c.b16.cont [3/8] %v2371, 128
  %2477 = vxpose.xlu0.c.b16.cont [4/8] %v2372, 128
  %2478 = vxpose.xlu0.c.b16.cont [5/8] %v2373, 128
  %2479 = vxpose.xlu0.c.b16.cont [6/8] %v2374, 128
  %2480 = vxpose.xlu0.c.b16.cont [7/8] %v2375, 128
  %2481 = vxpose.xlu0.c.b16.end [8/8] %v2376, 128
  %v2482 = vpop.trf.xlu0
  %v2483 = vpop.trf.xlu0
  %v2484 = vpop.trf.xlu0
  %v2485 = vpop.trf.xlu0
  %v2486 = vpop.trf.xlu0
  %v2487 = vpop.trf.xlu0
  %v2488 = vpop.trf.xlu0
  %v2489 = vpop.trf.xlu0
  %2490 = vmatprep.subr.bf16.mxu0 0
  %2491 = vmatpush1.bf16.msra.mxu0 %v2096
  %2492 = vmatprep.subr.bf16.mxu0 0
  %2493 = vmatpush1.bf16.msra.mxu0 %v2095
  %2494 = vmatprep.subr.bf16.mxu0 0
  %2495 = vmatpush1.bf16.msra.mxu0 %v2094
  %2496 = vmatprep.subr.bf16.mxu0 0
  %2497 = vmatpush1.bf16.msra.mxu0 %v2093
  %2498 = vmatprep.subr.bf16.mxu0 0
  %2499 = vmatpush1.bf16.msra.mxu0 %v2092
  %2500 = vmatprep.subr.bf16.mxu0 0
  %2501 = vmatpush1.bf16.msra.mxu0 %v2091
  %2502 = vmatprep.subr.bf16.mxu0 0
  %2503 = vmatpush1.bf16.msra.mxu0 %v2090
  %2504 = vmatprep.subr.bf16.mxu0 0
  %2505 = vmatpush1.bf16.msra.mxu0 %v2089
  %2506 = vmatprep.subr.bf16.mxu0 0
  %2507 = vmatpush2.bf16.msra.mxu0 0
  %2508 = vmatprep.subr.bf16.mxu0 0
  %2509 = vmatpush2.bf16.msra.mxu0 0
  %2510 = vmatprep.subr.bf16.mxu0 0
  %2511 = vmatpush2.bf16.msra.mxu0 0
  %2512 = vmatprep.subr.bf16.mxu0 0
  %2513 = vmatpush2.bf16.msra.mxu0 0
  %2514 = vmatprep.subr.bf16.mxu0 0
  %2515 = vmatpush2.bf16.msra.mxu0 0
  %2516 = vmatprep.subr.bf16.mxu0 0
  %2517 = vmatpush2.bf16.msra.mxu0 0
  %2518 = vmatprep.subr.bf16.mxu0 0
  %2519 = vmatpush2.bf16.msra.mxu0 0
  %2520 = vmatprep.subr.bf16.mxu0 0
  %2521 = vmatpush2.bf16.msra.mxu0 0
  %2522 = vmatprep.mubr.bf16.mxu0 0
  %2523 = vmatmul.mubr.bf16.gmra.mxu0 %v2482
  %v2524 = vpop.f32.mrf.mxu0
  %v2525 = vadd.f32 0.0, %v2524
  %v2526 = vpop.f32.mrf.mxu0
  %v2527 = vpop.f32.mrf.mxu0
  %v2528 = vadd.f32 0.0, %v2527
  %v2529 = vpop.f32.mrf.mxu0
  %2530 = vmatprep.mubr.bf16.mxu0 0
  %2531 = vmatmul.mubr.bf16.gmra.mxu0 %v2483
  %v2532 = vpop.f32.mrf.mxu0
  %v2533 = vadd.f32 0.0, %v2532
  %v2534 = vpop.f32.mrf.mxu0
  %v2535 = vpop.f32.mrf.mxu0
  %v2536 = vadd.f32 0.0, %v2535
  %v2537 = vpop.f32.mrf.mxu0
  %2538 = vmatprep.mubr.bf16.mxu0 0
  %2539 = vmatmul.mubr.bf16.gmra.mxu0 %v2484
  %v2540 = vpop.f32.mrf.mxu0
  %v2541 = vadd.f32 0.0, %v2540
  %v2542 = vpop.f32.mrf.mxu0
  %v2543 = vpop.f32.mrf.mxu0
  %v2544 = vadd.f32 0.0, %v2543
  %v2545 = vpop.f32.mrf.mxu0
  %2546 = vmatprep.mubr.bf16.mxu0 0
  %2547 = vmatmul.mubr.bf16.gmra.mxu0 %v2485
  %v2548 = vpop.f32.mrf.mxu0
  %v2549 = vadd.f32 0.0, %v2548
  %v2550 = vpop.f32.mrf.mxu0
  %v2551 = vpop.f32.mrf.mxu0
  %v2552 = vadd.f32 0.0, %v2551
  %v2553 = vpop.f32.mrf.mxu0
  %2554 = vmatprep.mubr.bf16.mxu0 0
  %2555 = vmatmul.mubr.bf16.gmra.mxu0 %v2486
  %v2556 = vpop.f32.mrf.mxu0
  %v2557 = vadd.f32 0.0, %v2556
  %v2558 = vpop.f32.mrf.mxu0
  %v2559 = vpop.f32.mrf.mxu0
  %v2560 = vadd.f32 0.0, %v2559
  %v2561 = vpop.f32.mrf.mxu0
  %2562 = vmatprep.mubr.bf16.mxu0 0
  %2563 = vmatmul.mubr.bf16.gmra.mxu0 %v2487
  %v2564 = vpop.f32.mrf.mxu0
  %v2565 = vadd.f32 0.0, %v2564
  %v2566 = vpop.f32.mrf.mxu0
  %v2567 = vpop.f32.mrf.mxu0
  %v2568 = vadd.f32 0.0, %v2567
  %v2569 = vpop.f32.mrf.mxu0
  %2570 = vmatprep.mubr.bf16.mxu0 0
  %2571 = vmatmul.mubr.bf16.gmra.mxu0 %v2488
  %v2572 = vpop.f32.mrf.mxu0
  %v2573 = vadd.f32 0.0, %v2572
  %v2574 = vpop.f32.mrf.mxu0
  %v2575 = vpop.f32.mrf.mxu0
  %v2576 = vadd.f32 0.0, %v2575
  %v2577 = vpop.f32.mrf.mxu0
  %2578 = vmatprep.mubr.bf16.mxu0 0
  %2579 = vmatmul.mubr.bf16.gmra.mxu0 %v2489
  %v2580 = vpop.f32.mrf.mxu0
  %v2581 = vadd.f32 0.0, %v2580
  %v2582 = vpop.f32.mrf.mxu0
  %v2583 = vpop.f32.mrf.mxu0
  %v2584 = vadd.f32 0.0, %v2583
  %v2585 = vpop.f32.mrf.mxu0
  %2586 = vdwg.mxu0
  %v2587 = vld [vmem:[%s12] sm:$0xff]
  %v2588 = vld [vmem:[%s12 + $0x8] sm:$0xff]
  %v2589 = vld [vmem:[%s12 + $0x10] sm:$0xff]
  %v2590 = vld [vmem:[%s12 + $0x18] sm:$0xff]
  %v2591 = vld [vmem:[%s12 + $0x20] sm:$0xff]
  %v2592 = vld [vmem:[%s12 + $0x28] sm:$0xff]
  %v2593 = vld [vmem:[%s12 + $0x30] sm:$0xff]
  %v2594 = vld [vmem:[%s12 + $0x38] sm:$0xff]
  %v2595 = vld [vmem:[%s12 + $0x40] sm:$0xff]
  %v2596 = vld [vmem:[%s12 + $0x48] sm:$0xff]
  %v2597 = vld [vmem:[%s12 + $0x50] sm:$0xff]
  %v2598 = vld [vmem:[%s12 + $0x58] sm:$0xff]
  %v2599 = vld [vmem:[%s12 + $0x60] sm:$0xff]
  %v2600 = vld [vmem:[%s12 + $0x68] sm:$0xff]
  %v2601 = vld [vmem:[%s12 + $0x70] sm:$0xff]
  %v2602 = vld [vmem:[%s12 + $0x78] sm:$0xff]
  %v2603 = vld [vmem:[%s12 + $0x80] sm:$0xff]
  %v2604 = vld [vmem:[%s12 + $0x88] sm:$0xff]
  %v2605 = vld [vmem:[%s12 + $0x90] sm:$0xff]
  %v2606 = vld [vmem:[%s12 + $0x98] sm:$0xff]
  %v2607 = vld [vmem:[%s12 + $0xa0] sm:$0xff]
  %v2608 = vld [vmem:[%s12 + $0xa8] sm:$0xff]
  %v2609 = vld [vmem:[%s12 + $0xb0] sm:$0xff]
  %v2610 = vld [vmem:[%s12 + $0xb8] sm:$0xff]
  %v2611 = vld [vmem:[%s12 + $0xc0] sm:$0xff]
  %v2612 = vld [vmem:[%s12 + $0xc8] sm:$0xff]
  %v2613 = vld [vmem:[%s12 + $0xd0] sm:$0xff]
  %v2614 = vld [vmem:[%s12 + $0xd8] sm:$0xff]
  %v2615 = vld [vmem:[%s12 + $0xe0] sm:$0xff]
  %v2616 = vld [vmem:[%s12 + $0xe8] sm:$0xff]
  %v2617 = vld [vmem:[%s12 + $0xf0] sm:$0xff]
  %v2618 = vld [vmem:[%s12 + $0xf8] sm:$0xff]
  %v2619 = vld [vmem:[%s12 + $0x100] sm:$0xff]
  %v2620 = vld [vmem:[%s12 + $0x108] sm:$0xff]
  %v2621 = vld [vmem:[%s12 + $0x110] sm:$0xff]
  %v2622 = vld [vmem:[%s12 + $0x118] sm:$0xff]
  %v2623 = vld [vmem:[%s12 + $0x120] sm:$0xff]
  %v2624 = vld [vmem:[%s12 + $0x128] sm:$0xff]
  %v2625 = vld [vmem:[%s12 + $0x130] sm:$0xff]
  %v2626 = vld [vmem:[%s12 + $0x138] sm:$0xff]
  %v2627 = vld [vmem:[%s12 + $0x140] sm:$0xff]
  %v2628 = vld [vmem:[%s12 + $0x148] sm:$0xff]
  %v2629 = vld [vmem:[%s12 + $0x150] sm:$0xff]
  %v2630 = vld [vmem:[%s12 + $0x158] sm:$0xff]
  %v2631 = vld [vmem:[%s12 + $0x160] sm:$0xff]
  %v2632 = vld [vmem:[%s12 + $0x168] sm:$0xff]
  %v2633 = vld [vmem:[%s12 + $0x170] sm:$0xff]
  %v2634 = vld [vmem:[%s12 + $0x178] sm:$0xff]
  %v2635 = vld [vmem:[%s12 + $0x180] sm:$0xff]
  %v2636 = vld [vmem:[%s12 + $0x188] sm:$0xff]
  %v2637 = vld [vmem:[%s12 + $0x190] sm:$0xff]
  %v2638 = vld [vmem:[%s12 + $0x198] sm:$0xff]
  %v2639 = vld [vmem:[%s12 + $0x1a0] sm:$0xff]
  %v2640 = vld [vmem:[%s12 + $0x1a8] sm:$0xff]
  %v2641 = vld [vmem:[%s12 + $0x1b0] sm:$0xff]
  %v2642 = vld [vmem:[%s12 + $0x1b8] sm:$0xff]
  %v2643 = vld [vmem:[%s12 + $0x1c0] sm:$0xff]
  %v2644 = vld [vmem:[%s12 + $0x1c8] sm:$0xff]
  %v2645 = vld [vmem:[%s12 + $0x1d0] sm:$0xff]
  %v2646 = vld [vmem:[%s12 + $0x1d8] sm:$0xff]
  %v2647 = vld [vmem:[%s12 + $0x1e0] sm:$0xff]
  %v2648 = vld [vmem:[%s12 + $0x1e8] sm:$0xff]
  %v2649 = vld [vmem:[%s12 + $0x1f0] sm:$0xff]
  %v2650 = vld [vmem:[%s12 + $0x1f8] sm:$0xff]
  %v2651 = vld [vmem:[%s12 + $0x200] sm:$0xff]
  %v2652 = vld [vmem:[%s12 + $0x208] sm:$0xff]
  %v2653 = vld [vmem:[%s12 + $0x210] sm:$0xff]
  %v2654 = vld [vmem:[%s12 + $0x218] sm:$0xff]
  %v2655 = vld [vmem:[%s12 + $0x220] sm:$0xff]
  %v2656 = vld [vmem:[%s12 + $0x228] sm:$0xff]
  %v2657 = vld [vmem:[%s12 + $0x230] sm:$0xff]
  %v2658 = vld [vmem:[%s12 + $0x238] sm:$0xff]
  %v2659 = vld [vmem:[%s12 + $0x240] sm:$0xff]
  %v2660 = vld [vmem:[%s12 + $0x248] sm:$0xff]
  %v2661 = vld [vmem:[%s12 + $0x250] sm:$0xff]
  %v2662 = vld [vmem:[%s12 + $0x258] sm:$0xff]
  %v2663 = vld [vmem:[%s12 + $0x260] sm:$0xff]
  %v2664 = vld [vmem:[%s12 + $0x268] sm:$0xff]
  %v2665 = vld [vmem:[%s12 + $0x270] sm:$0xff]
  %v2666 = vld [vmem:[%s12 + $0x278] sm:$0xff]
  %v2667 = vld [vmem:[%s12 + $0x280] sm:$0xff]
  %v2668 = vld [vmem:[%s12 + $0x288] sm:$0xff]
  %v2669 = vld [vmem:[%s12 + $0x290] sm:$0xff]
  %v2670 = vld [vmem:[%s12 + $0x298] sm:$0xff]
  %v2671 = vld [vmem:[%s12 + $0x2a0] sm:$0xff]
  %v2672 = vld [vmem:[%s12 + $0x2a8] sm:$0xff]
  %v2673 = vld [vmem:[%s12 + $0x2b0] sm:$0xff]
  %v2674 = vld [vmem:[%s12 + $0x2b8] sm:$0xff]
  %v2675 = vld [vmem:[%s12 + $0x2c0] sm:$0xff]
  %v2676 = vld [vmem:[%s12 + $0x2c8] sm:$0xff]
  %v2677 = vld [vmem:[%s12 + $0x2d0] sm:$0xff]
  %v2678 = vld [vmem:[%s12 + $0x2d8] sm:$0xff]
  %v2679 = vld [vmem:[%s12 + $0x2e0] sm:$0xff]
  %v2680 = vld [vmem:[%s12 + $0x2e8] sm:$0xff]
  %v2681 = vld [vmem:[%s12 + $0x2f0] sm:$0xff]
  %v2682 = vld [vmem:[%s12 + $0x2f8] sm:$0xff]
  %v2683 = vld [vmem:[%s12 + $0x300] sm:$0xff]
  %v2684 = vld [vmem:[%s12 + $0x308] sm:$0xff]
  %v2685 = vld [vmem:[%s12 + $0x310] sm:$0xff]
  %v2686 = vld [vmem:[%s12 + $0x318] sm:$0xff]
  %v2687 = vld [vmem:[%s12 + $0x320] sm:$0xff]
  %v2688 = vld [vmem:[%s12 + $0x328] sm:$0xff]
  %v2689 = vld [vmem:[%s12 + $0x330] sm:$0xff]
  %v2690 = vld [vmem:[%s12 + $0x338] sm:$0xff]
  %v2691 = vld [vmem:[%s12 + $0x340] sm:$0xff]
  %v2692 = vld [vmem:[%s12 + $0x348] sm:$0xff]
  %v2693 = vld [vmem:[%s12 + $0x350] sm:$0xff]
  %v2694 = vld [vmem:[%s12 + $0x358] sm:$0xff]
  %v2695 = vld [vmem:[%s12 + $0x360] sm:$0xff]
  %v2696 = vld [vmem:[%s12 + $0x368] sm:$0xff]
  %v2697 = vld [vmem:[%s12 + $0x370] sm:$0xff]
  %v2698 = vld [vmem:[%s12 + $0x378] sm:$0xff]
  %v2699 = vld [vmem:[%s12 + $0x380] sm:$0xff]
  %v2700 = vld [vmem:[%s12 + $0x388] sm:$0xff]
  %v2701 = vld [vmem:[%s12 + $0x390] sm:$0xff]
  %v2702 = vld [vmem:[%s12 + $0x398] sm:$0xff]
  %v2703 = vld [vmem:[%s12 + $0x3a0] sm:$0xff]
  %v2704 = vld [vmem:[%s12 + $0x3a8] sm:$0xff]
  %v2705 = vld [vmem:[%s12 + $0x3b0] sm:$0xff]
  %v2706 = vld [vmem:[%s12 + $0x3b8] sm:$0xff]
  %v2707 = vld [vmem:[%s12 + $0x3c0] sm:$0xff]
  %v2708 = vld [vmem:[%s12 + $0x3c8] sm:$0xff]
  %v2709 = vld [vmem:[%s12 + $0x3d0] sm:$0xff]
  %v2710 = vld [vmem:[%s12 + $0x3d8] sm:$0xff]
  %v2711 = vld [vmem:[%s12 + $0x3e0] sm:$0xff]
  %v2712 = vld [vmem:[%s12 + $0x3e8] sm:$0xff]
  %v2713 = vld [vmem:[%s12 + $0x3f0] sm:$0xff]
  %v2714 = vld [vmem:[%s12 + $0x3f8] sm:$0xff]
  %v2715 = vld [vmem:[%s12 + $0x400] sm:$0xff]
  %v2716 = vld [vmem:[%s12 + $0x408] sm:$0xff]
  %v2717 = vld [vmem:[%s12 + $0x410] sm:$0xff]
  %v2718 = vld [vmem:[%s12 + $0x418] sm:$0xff]
  %v2719 = vld [vmem:[%s12 + $0x420] sm:$0xff]
  %v2720 = vld [vmem:[%s12 + $0x428] sm:$0xff]
  %v2721 = vld [vmem:[%s12 + $0x430] sm:$0xff]
  %v2722 = vld [vmem:[%s12 + $0x438] sm:$0xff]
  %v2723 = vld [vmem:[%s12 + $0x440] sm:$0xff]
  %v2724 = vld [vmem:[%s12 + $0x448] sm:$0xff]
  %v2725 = vld [vmem:[%s12 + $0x450] sm:$0xff]
  %v2726 = vld [vmem:[%s12 + $0x458] sm:$0xff]
  %v2727 = vld [vmem:[%s12 + $0x460] sm:$0xff]
  %v2728 = vld [vmem:[%s12 + $0x468] sm:$0xff]
  %v2729 = vld [vmem:[%s12 + $0x470] sm:$0xff]
  %v2730 = vld [vmem:[%s12 + $0x478] sm:$0xff]
  %v2731 = vld [vmem:[%s12 + $0x480] sm:$0xff]
  %v2732 = vld [vmem:[%s12 + $0x488] sm:$0xff]
  %v2733 = vld [vmem:[%s12 + $0x490] sm:$0xff]
  %v2734 = vld [vmem:[%s12 + $0x498] sm:$0xff]
  %v2735 = vld [vmem:[%s12 + $0x4a0] sm:$0xff]
  %v2736 = vld [vmem:[%s12 + $0x4a8] sm:$0xff]
  %v2737 = vld [vmem:[%s12 + $0x4b0] sm:$0xff]
  %v2738 = vld [vmem:[%s12 + $0x4b8] sm:$0xff]
  %v2739 = vld [vmem:[%s12 + $0x4c0] sm:$0xff]
  %v2740 = vld [vmem:[%s12 + $0x4c8] sm:$0xff]
  %v2741 = vld [vmem:[%s12 + $0x4d0] sm:$0xff]
  %v2742 = vld [vmem:[%s12 + $0x4d8] sm:$0xff]
  %v2743 = vld [vmem:[%s12 + $0x4e0] sm:$0xff]
  %v2744 = vld [vmem:[%s12 + $0x4e8] sm:$0xff]
  %v2745 = vld [vmem:[%s12 + $0x4f0] sm:$0xff]
  %v2746 = vld [vmem:[%s12 + $0x4f8] sm:$0xff]
  %v2747 = vld [vmem:[%s12 + $0x500] sm:$0xff]
  %v2748 = vld [vmem:[%s12 + $0x508] sm:$0xff]
  %v2749 = vld [vmem:[%s12 + $0x510] sm:$0xff]
  %v2750 = vld [vmem:[%s12 + $0x518] sm:$0xff]
  %v2751 = vld [vmem:[%s12 + $0x520] sm:$0xff]
  %v2752 = vld [vmem:[%s12 + $0x528] sm:$0xff]
  %v2753 = vld [vmem:[%s12 + $0x530] sm:$0xff]
  %v2754 = vld [vmem:[%s12 + $0x538] sm:$0xff]
  %v2755 = vld [vmem:[%s12 + $0x540] sm:$0xff]
  %v2756 = vld [vmem:[%s12 + $0x548] sm:$0xff]
  %v2757 = vld [vmem:[%s12 + $0x550] sm:$0xff]
  %v2758 = vld [vmem:[%s12 + $0x558] sm:$0xff]
  %v2759 = vld [vmem:[%s12 + $0x560] sm:$0xff]
  %v2760 = vld [vmem:[%s12 + $0x568] sm:$0xff]
  %v2761 = vld [vmem:[%s12 + $0x570] sm:$0xff]
  %v2762 = vld [vmem:[%s12 + $0x578] sm:$0xff]
  %v2763 = vld [vmem:[%s12 + $0x580] sm:$0xff]
  %v2764 = vld [vmem:[%s12 + $0x588] sm:$0xff]
  %v2765 = vld [vmem:[%s12 + $0x590] sm:$0xff]
  %v2766 = vld [vmem:[%s12 + $0x598] sm:$0xff]
  %v2767 = vld [vmem:[%s12 + $0x5a0] sm:$0xff]
  %v2768 = vld [vmem:[%s12 + $0x5a8] sm:$0xff]
  %v2769 = vld [vmem:[%s12 + $0x5b0] sm:$0xff]
  %v2770 = vld [vmem:[%s12 + $0x5b8] sm:$0xff]
  %v2771 = vld [vmem:[%s12 + $0x5c0] sm:$0xff]
  %v2772 = vld [vmem:[%s12 + $0x5c8] sm:$0xff]
  %v2773 = vld [vmem:[%s12 + $0x5d0] sm:$0xff]
  %v2774 = vld [vmem:[%s12 + $0x5d8] sm:$0xff]
  %v2775 = vld [vmem:[%s12 + $0x5e0] sm:$0xff]
  %v2776 = vld [vmem:[%s12 + $0x5e8] sm:$0xff]
  %v2777 = vld [vmem:[%s12 + $0x5f0] sm:$0xff]
  %v2778 = vld [vmem:[%s12 + $0x5f8] sm:$0xff]
  %v2779 = vld [vmem:[%s12 + $0x600] sm:$0xff]
  %v2780 = vld [vmem:[%s12 + $0x608] sm:$0xff]
  %v2781 = vld [vmem:[%s12 + $0x610] sm:$0xff]
  %v2782 = vld [vmem:[%s12 + $0x618] sm:$0xff]
  %v2783 = vld [vmem:[%s12 + $0x620] sm:$0xff]
  %v2784 = vld [vmem:[%s12 + $0x628] sm:$0xff]
  %v2785 = vld [vmem:[%s12 + $0x630] sm:$0xff]
  %v2786 = vld [vmem:[%s12 + $0x638] sm:$0xff]
  %v2787 = vld [vmem:[%s12 + $0x640] sm:$0xff]
  %v2788 = vld [vmem:[%s12 + $0x648] sm:$0xff]
  %v2789 = vld [vmem:[%s12 + $0x650] sm:$0xff]
  %v2790 = vld [vmem:[%s12 + $0x658] sm:$0xff]
  %v2791 = vld [vmem:[%s12 + $0x660] sm:$0xff]
  %v2792 = vld [vmem:[%s12 + $0x668] sm:$0xff]
  %v2793 = vld [vmem:[%s12 + $0x670] sm:$0xff]
  %v2794 = vld [vmem:[%s12 + $0x678] sm:$0xff]
  %v2795 = vld [vmem:[%s12 + $0x680] sm:$0xff]
  %v2796 = vld [vmem:[%s12 + $0x688] sm:$0xff]
  %v2797 = vld [vmem:[%s12 + $0x690] sm:$0xff]
  %v2798 = vld [vmem:[%s12 + $0x698] sm:$0xff]
  %v2799 = vld [vmem:[%s12 + $0x6a0] sm:$0xff]
  %v2800 = vld [vmem:[%s12 + $0x6a8] sm:$0xff]
  %v2801 = vld [vmem:[%s12 + $0x6b0] sm:$0xff]
  %v2802 = vld [vmem:[%s12 + $0x6b8] sm:$0xff]
  %v2803 = vld [vmem:[%s12 + $0x6c0] sm:$0xff]
  %v2804 = vld [vmem:[%s12 + $0x6c8] sm:$0xff]
  %v2805 = vld [vmem:[%s12 + $0x6d0] sm:$0xff]
  %v2806 = vld [vmem:[%s12 + $0x6d8] sm:$0xff]
  %v2807 = vld [vmem:[%s12 + $0x6e0] sm:$0xff]
  %v2808 = vld [vmem:[%s12 + $0x6e8] sm:$0xff]
  %v2809 = vld [vmem:[%s12 + $0x6f0] sm:$0xff]
  %v2810 = vld [vmem:[%s12 + $0x6f8] sm:$0xff]
  %v2811 = vld [vmem:[%s12 + $0x700] sm:$0xff]
  %v2812 = vld [vmem:[%s12 + $0x708] sm:$0xff]
  %v2813 = vld [vmem:[%s12 + $0x710] sm:$0xff]
  %v2814 = vld [vmem:[%s12 + $0x718] sm:$0xff]
  %v2815 = vld [vmem:[%s12 + $0x720] sm:$0xff]
  %v2816 = vld [vmem:[%s12 + $0x728] sm:$0xff]
  %v2817 = vld [vmem:[%s12 + $0x730] sm:$0xff]
  %v2818 = vld [vmem:[%s12 + $0x738] sm:$0xff]
  %v2819 = vld [vmem:[%s12 + $0x740] sm:$0xff]
  %v2820 = vld [vmem:[%s12 + $0x748] sm:$0xff]
  %v2821 = vld [vmem:[%s12 + $0x750] sm:$0xff]
  %v2822 = vld [vmem:[%s12 + $0x758] sm:$0xff]
  %v2823 = vld [vmem:[%s12 + $0x760] sm:$0xff]
  %v2824 = vld [vmem:[%s12 + $0x768] sm:$0xff]
  %v2825 = vld [vmem:[%s12 + $0x770] sm:$0xff]
  %v2826 = vld [vmem:[%s12 + $0x778] sm:$0xff]
  %v2827 = vld [vmem:[%s12 + $0x780] sm:$0xff]
  %v2828 = vld [vmem:[%s12 + $0x788] sm:$0xff]
  %v2829 = vld [vmem:[%s12 + $0x790] sm:$0xff]
  %v2830 = vld [vmem:[%s12 + $0x798] sm:$0xff]
  %v2831 = vld [vmem:[%s12 + $0x7a0] sm:$0xff]
  %v2832 = vld [vmem:[%s12 + $0x7a8] sm:$0xff]
  %v2833 = vld [vmem:[%s12 + $0x7b0] sm:$0xff]
  %v2834 = vld [vmem:[%s12 + $0x7b8] sm:$0xff]
  %v2835 = vld [vmem:[%s12 + $0x7c0] sm:$0xff]
  %v2836 = vld [vmem:[%s12 + $0x7c8] sm:$0xff]
  %v2837 = vld [vmem:[%s12 + $0x7d0] sm:$0xff]
  %v2838 = vld [vmem:[%s12 + $0x7d8] sm:$0xff]
  %v2839 = vld [vmem:[%s12 + $0x7e0] sm:$0xff]
  %v2840 = vld [vmem:[%s12 + $0x7e8] sm:$0xff]
  %v2841 = vld [vmem:[%s12 + $0x7f0] sm:$0xff]
  %v2842 = vld [vmem:[%s12 + $0x7f8] sm:$0xff]
  %v2843 = vld [vmem:[%s12 + $0x800] sm:$0xff]
  %v2844 = vld [vmem:[%s12 + $0x808] sm:$0xff]
  %v2845 = vld [vmem:[%s12 + $0x810] sm:$0xff]
  %v2846 = vld [vmem:[%s12 + $0x818] sm:$0xff]
  %v2847 = vld [vmem:[%s12 + $0x820] sm:$0xff]
  %v2848 = vld [vmem:[%s12 + $0x828] sm:$0xff]
  %v2849 = vld [vmem:[%s12 + $0x830] sm:$0xff]
  %v2850 = vld [vmem:[%s12 + $0x838] sm:$0xff]
  %v2851 = vld [vmem:[%s12 + $0x840] sm:$0xff]
  %v2852 = vld [vmem:[%s12 + $0x848] sm:$0xff]
  %v2853 = vld [vmem:[%s12 + $0x850] sm:$0xff]
  %v2854 = vld [vmem:[%s12 + $0x858] sm:$0xff]
  %v2855 = vld [vmem:[%s12 + $0x860] sm:$0xff]
  %v2856 = vld [vmem:[%s12 + $0x868] sm:$0xff]
  %v2857 = vld [vmem:[%s12 + $0x870] sm:$0xff]
  %v2858 = vld [vmem:[%s12 + $0x878] sm:$0xff]
  %v2859 = vld [vmem:[%s12 + $0x880] sm:$0xff]
  %v2860 = vld [vmem:[%s12 + $0x888] sm:$0xff]
  %v2861 = vld [vmem:[%s12 + $0x890] sm:$0xff]
  %v2862 = vld [vmem:[%s12 + $0x898] sm:$0xff]
  %v2863 = vld [vmem:[%s12 + $0x8a0] sm:$0xff]
  %v2864 = vld [vmem:[%s12 + $0x8a8] sm:$0xff]
  %v2865 = vld [vmem:[%s12 + $0x8b0] sm:$0xff]
  %v2866 = vld [vmem:[%s12 + $0x8b8] sm:$0xff]
  %v2867 = vld [vmem:[%s12 + $0x8c0] sm:$0xff]
  %v2868 = vld [vmem:[%s12 + $0x8c8] sm:$0xff]
  %v2869 = vld [vmem:[%s12 + $0x8d0] sm:$0xff]
  %v2870 = vld [vmem:[%s12 + $0x8d8] sm:$0xff]
  %v2871 = vld [vmem:[%s12 + $0x8e0] sm:$0xff]
  %v2872 = vld [vmem:[%s12 + $0x8e8] sm:$0xff]
  %v2873 = vld [vmem:[%s12 + $0x8f0] sm:$0xff]
  %v2874 = vld [vmem:[%s12 + $0x8f8] sm:$0xff]
  %v2875 = vld [vmem:[%s12 + $0x900] sm:$0xff]
  %v2876 = vld [vmem:[%s12 + $0x908] sm:$0xff]
  %v2877 = vld [vmem:[%s12 + $0x910] sm:$0xff]
  %v2878 = vld [vmem:[%s12 + $0x918] sm:$0xff]
  %v2879 = vld [vmem:[%s12 + $0x920] sm:$0xff]
  %v2880 = vld [vmem:[%s12 + $0x928] sm:$0xff]
  %v2881 = vld [vmem:[%s12 + $0x930] sm:$0xff]
  %v2882 = vld [vmem:[%s12 + $0x938] sm:$0xff]
  %v2883 = vld [vmem:[%s12 + $0x940] sm:$0xff]
  %v2884 = vld [vmem:[%s12 + $0x948] sm:$0xff]
  %v2885 = vld [vmem:[%s12 + $0x950] sm:$0xff]
  %v2886 = vld [vmem:[%s12 + $0x958] sm:$0xff]
  %v2887 = vld [vmem:[%s12 + $0x960] sm:$0xff]
  %v2888 = vld [vmem:[%s12 + $0x968] sm:$0xff]
  %v2889 = vld [vmem:[%s12 + $0x970] sm:$0xff]
  %v2890 = vld [vmem:[%s12 + $0x978] sm:$0xff]
  %v2891 = vld [vmem:[%s12 + $0x980] sm:$0xff]
  %v2892 = vld [vmem:[%s12 + $0x988] sm:$0xff]
  %v2893 = vld [vmem:[%s12 + $0x990] sm:$0xff]
  %v2894 = vld [vmem:[%s12 + $0x998] sm:$0xff]
  %v2895 = vld [vmem:[%s12 + $0x9a0] sm:$0xff]
  %v2896 = vld [vmem:[%s12 + $0x9a8] sm:$0xff]
  %v2897 = vld [vmem:[%s12 + $0x9b0] sm:$0xff]
  %v2898 = vld [vmem:[%s12 + $0x9b8] sm:$0xff]
  %v2899 = vld [vmem:[%s12 + $0x9c0] sm:$0xff]
  %v2900 = vld [vmem:[%s12 + $0x9c8] sm:$0xff]
  %v2901 = vld [vmem:[%s12 + $0x9d0] sm:$0xff]
  %v2902 = vld [vmem:[%s12 + $0x9d8] sm:$0xff]
  %v2903 = vld [vmem:[%s12 + $0x9e0] sm:$0xff]
  %v2904 = vld [vmem:[%s12 + $0x9e8] sm:$0xff]
  %v2905 = vld [vmem:[%s12 + $0x9f0] sm:$0xff]
  %v2906 = vld [vmem:[%s12 + $0x9f8] sm:$0xff]
  %v2907 = vld [vmem:[%s12 + $0xa00] sm:$0xff]
  %v2908 = vld [vmem:[%s12 + $0xa08] sm:$0xff]
  %v2909 = vld [vmem:[%s12 + $0xa10] sm:$0xff]
  %v2910 = vld [vmem:[%s12 + $0xa18] sm:$0xff]
  %v2911 = vld [vmem:[%s12 + $0xa20] sm:$0xff]
  %v2912 = vld [vmem:[%s12 + $0xa28] sm:$0xff]
  %v2913 = vld [vmem:[%s12 + $0xa30] sm:$0xff]
  %v2914 = vld [vmem:[%s12 + $0xa38] sm:$0xff]
  %v2915 = vld [vmem:[%s12 + $0xa40] sm:$0xff]
  %v2916 = vld [vmem:[%s12 + $0xa48] sm:$0xff]
  %v2917 = vld [vmem:[%s12 + $0xa50] sm:$0xff]
  %v2918 = vld [vmem:[%s12 + $0xa58] sm:$0xff]
  %v2919 = vld [vmem:[%s12 + $0xa60] sm:$0xff]
  %v2920 = vld [vmem:[%s12 + $0xa68] sm:$0xff]
  %v2921 = vld [vmem:[%s12 + $0xa70] sm:$0xff]
  %v2922 = vld [vmem:[%s12 + $0xa78] sm:$0xff]
  %v2923 = vld [vmem:[%s12 + $0xa80] sm:$0xff]
  %v2924 = vld [vmem:[%s12 + $0xa88] sm:$0xff]
  %v2925 = vld [vmem:[%s12 + $0xa90] sm:$0xff]
  %v2926 = vld [vmem:[%s12 + $0xa98] sm:$0xff]
  %v2927 = vld [vmem:[%s12 + $0xaa0] sm:$0xff]
  %v2928 = vld [vmem:[%s12 + $0xaa8] sm:$0xff]
  %v2929 = vld [vmem:[%s12 + $0xab0] sm:$0xff]
  %v2930 = vld [vmem:[%s12 + $0xab8] sm:$0xff]
  %v2931 = vld [vmem:[%s12 + $0xac0] sm:$0xff]
  %v2932 = vld [vmem:[%s12 + $0xac8] sm:$0xff]
  %v2933 = vld [vmem:[%s12 + $0xad0] sm:$0xff]
  %v2934 = vld [vmem:[%s12 + $0xad8] sm:$0xff]
  %v2935 = vld [vmem:[%s12 + $0xae0] sm:$0xff]
  %v2936 = vld [vmem:[%s12 + $0xae8] sm:$0xff]
  %v2937 = vld [vmem:[%s12 + $0xaf0] sm:$0xff]
  %v2938 = vld [vmem:[%s12 + $0xaf8] sm:$0xff]
  %v2939 = vld [vmem:[%s12 + $0xb00] sm:$0xff]
  %v2940 = vld [vmem:[%s12 + $0xb08] sm:$0xff]
  %v2941 = vld [vmem:[%s12 + $0xb10] sm:$0xff]
  %v2942 = vld [vmem:[%s12 + $0xb18] sm:$0xff]
  %v2943 = vld [vmem:[%s12 + $0xb20] sm:$0xff]
  %v2944 = vld [vmem:[%s12 + $0xb28] sm:$0xff]
  %v2945 = vld [vmem:[%s12 + $0xb30] sm:$0xff]
  %v2946 = vld [vmem:[%s12 + $0xb38] sm:$0xff]
  %v2947 = vld [vmem:[%s12 + $0xb40] sm:$0xff]
  %v2948 = vld [vmem:[%s12 + $0xb48] sm:$0xff]
  %v2949 = vld [vmem:[%s12 + $0xb50] sm:$0xff]
  %v2950 = vld [vmem:[%s12 + $0xb58] sm:$0xff]
  %v2951 = vld [vmem:[%s12 + $0xb60] sm:$0xff]
  %v2952 = vld [vmem:[%s12 + $0xb68] sm:$0xff]
  %v2953 = vld [vmem:[%s12 + $0xb70] sm:$0xff]
  %v2954 = vld [vmem:[%s12 + $0xb78] sm:$0xff]
  %v2955 = vld [vmem:[%s12 + $0xb80] sm:$0xff]
  %v2956 = vld [vmem:[%s12 + $0xb88] sm:$0xff]
  %v2957 = vld [vmem:[%s12 + $0xb90] sm:$0xff]
  %v2958 = vld [vmem:[%s12 + $0xb98] sm:$0xff]
  %v2959 = vld [vmem:[%s12 + $0xba0] sm:$0xff]
  %v2960 = vld [vmem:[%s12 + $0xba8] sm:$0xff]
  %v2961 = vld [vmem:[%s12 + $0xbb0] sm:$0xff]
  %v2962 = vld [vmem:[%s12 + $0xbb8] sm:$0xff]
  %v2963 = vld [vmem:[%s12 + $0xbc0] sm:$0xff]
  %v2964 = vld [vmem:[%s12 + $0xbc8] sm:$0xff]
  %v2965 = vld [vmem:[%s12 + $0xbd0] sm:$0xff]
  %v2966 = vld [vmem:[%s12 + $0xbd8] sm:$0xff]
  %v2967 = vld [vmem:[%s12 + $0xbe0] sm:$0xff]
  %v2968 = vld [vmem:[%s12 + $0xbe8] sm:$0xff]
  %v2969 = vld [vmem:[%s12 + $0xbf0] sm:$0xff]
  %v2970 = vld [vmem:[%s12 + $0xbf8] sm:$0xff]
  %v2971 = vld [vmem:[%s12 + $0xc00] sm:$0xff]
  %v2972 = vld [vmem:[%s12 + $0xc08] sm:$0xff]
  %v2973 = vld [vmem:[%s12 + $0xc10] sm:$0xff]
  %v2974 = vld [vmem:[%s12 + $0xc18] sm:$0xff]
  %v2975 = vld [vmem:[%s12 + $0xc20] sm:$0xff]
  %v2976 = vld [vmem:[%s12 + $0xc28] sm:$0xff]
  %v2977 = vld [vmem:[%s12 + $0xc30] sm:$0xff]
  %v2978 = vld [vmem:[%s12 + $0xc38] sm:$0xff]
  %v2979 = vld [vmem:[%s12 + $0xc40] sm:$0xff]
  %v2980 = vld [vmem:[%s12 + $0xc48] sm:$0xff]
  %v2981 = vld [vmem:[%s12 + $0xc50] sm:$0xff]
  %v2982 = vld [vmem:[%s12 + $0xc58] sm:$0xff]
  %v2983 = vld [vmem:[%s12 + $0xc60] sm:$0xff]
  %v2984 = vld [vmem:[%s12 + $0xc68] sm:$0xff]
  %v2985 = vld [vmem:[%s12 + $0xc70] sm:$0xff]
  %v2986 = vld [vmem:[%s12 + $0xc78] sm:$0xff]
  %v2987 = vld [vmem:[%s12 + $0xc80] sm:$0xff]
  %v2988 = vld [vmem:[%s12 + $0xc88] sm:$0xff]
  %v2989 = vld [vmem:[%s12 + $0xc90] sm:$0xff]
  %v2990 = vld [vmem:[%s12 + $0xc98] sm:$0xff]
  %v2991 = vld [vmem:[%s12 + $0xca0] sm:$0xff]
  %v2992 = vld [vmem:[%s12 + $0xca8] sm:$0xff]
  %v2993 = vld [vmem:[%s12 + $0xcb0] sm:$0xff]
  %v2994 = vld [vmem:[%s12 + $0xcb8] sm:$0xff]
  %v2995 = vld [vmem:[%s12 + $0xcc0] sm:$0xff]
  %v2996 = vld [vmem:[%s12 + $0xcc8] sm:$0xff]
  %v2997 = vld [vmem:[%s12 + $0xcd0] sm:$0xff]
  %v2998 = vld [vmem:[%s12 + $0xcd8] sm:$0xff]
  %v2999 = vld [vmem:[%s12 + $0xce0] sm:$0xff]
  %v3000 = vld [vmem:[%s12 + $0xce8] sm:$0xff]
  %v3001 = vld [vmem:[%s12 + $0xcf0] sm:$0xff]
  %v3002 = vld [vmem:[%s12 + $0xcf8] sm:$0xff]
  %v3003 = vld [vmem:[%s12 + $0xd00] sm:$0xff]
  %v3004 = vld [vmem:[%s12 + $0xd08] sm:$0xff]
  %v3005 = vld [vmem:[%s12 + $0xd10] sm:$0xff]
  %v3006 = vld [vmem:[%s12 + $0xd18] sm:$0xff]
  %v3007 = vld [vmem:[%s12 + $0xd20] sm:$0xff]
  %v3008 = vld [vmem:[%s12 + $0xd28] sm:$0xff]
  %v3009 = vld [vmem:[%s12 + $0xd30] sm:$0xff]
  %v3010 = vld [vmem:[%s12 + $0xd38] sm:$0xff]
  %v3011 = vld [vmem:[%s12 + $0xd40] sm:$0xff]
  %v3012 = vld [vmem:[%s12 + $0xd48] sm:$0xff]
  %v3013 = vld [vmem:[%s12 + $0xd50] sm:$0xff]
  %v3014 = vld [vmem:[%s12 + $0xd58] sm:$0xff]
  %v3015 = vld [vmem:[%s12 + $0xd60] sm:$0xff]
  %v3016 = vld [vmem:[%s12 + $0xd68] sm:$0xff]
  %v3017 = vld [vmem:[%s12 + $0xd70] sm:$0xff]
  %v3018 = vld [vmem:[%s12 + $0xd78] sm:$0xff]
  %v3019 = vld [vmem:[%s12 + $0xd80] sm:$0xff]
  %v3020 = vld [vmem:[%s12 + $0xd88] sm:$0xff]
  %v3021 = vld [vmem:[%s12 + $0xd90] sm:$0xff]
  %v3022 = vld [vmem:[%s12 + $0xd98] sm:$0xff]
  %v3023 = vld [vmem:[%s12 + $0xda0] sm:$0xff]
  %v3024 = vld [vmem:[%s12 + $0xda8] sm:$0xff]
  %v3025 = vld [vmem:[%s12 + $0xdb0] sm:$0xff]
  %v3026 = vld [vmem:[%s12 + $0xdb8] sm:$0xff]
  %v3027 = vld [vmem:[%s12 + $0xdc0] sm:$0xff]
  %v3028 = vld [vmem:[%s12 + $0xdc8] sm:$0xff]
  %v3029 = vld [vmem:[%s12 + $0xdd0] sm:$0xff]
  %v3030 = vld [vmem:[%s12 + $0xdd8] sm:$0xff]
  %v3031 = vld [vmem:[%s12 + $0xde0] sm:$0xff]
  %v3032 = vld [vmem:[%s12 + $0xde8] sm:$0xff]
  %v3033 = vld [vmem:[%s12 + $0xdf0] sm:$0xff]
  %v3034 = vld [vmem:[%s12 + $0xdf8] sm:$0xff]
  %v3035 = vld [vmem:[%s12 + $0xe00] sm:$0xff]
  %v3036 = vld [vmem:[%s12 + $0xe08] sm:$0xff]
  %v3037 = vld [vmem:[%s12 + $0xe10] sm:$0xff]
  %v3038 = vld [vmem:[%s12 + $0xe18] sm:$0xff]
  %v3039 = vld [vmem:[%s12 + $0xe20] sm:$0xff]
  %v3040 = vld [vmem:[%s12 + $0xe28] sm:$0xff]
  %v3041 = vld [vmem:[%s12 + $0xe30] sm:$0xff]
  %v3042 = vld [vmem:[%s12 + $0xe38] sm:$0xff]
  %v3043 = vld [vmem:[%s12 + $0xe40] sm:$0xff]
  %v3044 = vld [vmem:[%s12 + $0xe48] sm:$0xff]
  %v3045 = vld [vmem:[%s12 + $0xe50] sm:$0xff]
  %v3046 = vld [vmem:[%s12 + $0xe58] sm:$0xff]
  %v3047 = vld [vmem:[%s12 + $0xe60] sm:$0xff]
  %v3048 = vld [vmem:[%s12 + $0xe68] sm:$0xff]
  %v3049 = vld [vmem:[%s12 + $0xe70] sm:$0xff]
  %v3050 = vld [vmem:[%s12 + $0xe78] sm:$0xff]
  %v3051 = vld [vmem:[%s12 + $0xe80] sm:$0xff]
  %v3052 = vld [vmem:[%s12 + $0xe88] sm:$0xff]
  %v3053 = vld [vmem:[%s12 + $0xe90] sm:$0xff]
  %v3054 = vld [vmem:[%s12 + $0xe98] sm:$0xff]
  %v3055 = vld [vmem:[%s12 + $0xea0] sm:$0xff]
  %v3056 = vld [vmem:[%s12 + $0xea8] sm:$0xff]
  %v3057 = vld [vmem:[%s12 + $0xeb0] sm:$0xff]
  %v3058 = vld [vmem:[%s12 + $0xeb8] sm:$0xff]
  %v3059 = vld [vmem:[%s12 + $0xec0] sm:$0xff]
  %v3060 = vld [vmem:[%s12 + $0xec8] sm:$0xff]
  %v3061 = vld [vmem:[%s12 + $0xed0] sm:$0xff]
  %v3062 = vld [vmem:[%s12 + $0xed8] sm:$0xff]
  %v3063 = vld [vmem:[%s12 + $0xee0] sm:$0xff]
  %v3064 = vld [vmem:[%s12 + $0xee8] sm:$0xff]
  %v3065 = vld [vmem:[%s12 + $0xef0] sm:$0xff]
  %v3066 = vld [vmem:[%s12 + $0xef8] sm:$0xff]
  %v3067 = vld [vmem:[%s12 + $0xf00] sm:$0xff]
  %v3068 = vld [vmem:[%s12 + $0xf08] sm:$0xff]
  %v3069 = vld [vmem:[%s12 + $0xf10] sm:$0xff]
  %v3070 = vld [vmem:[%s12 + $0xf18] sm:$0xff]
  %v3071 = vld [vmem:[%s12 + $0xf20] sm:$0xff]
  %v3072 = vld [vmem:[%s12 + $0xf28] sm:$0xff]
  %v3073 = vld [vmem:[%s12 + $0xf30] sm:$0xff]
  %v3074 = vld [vmem:[%s12 + $0xf38] sm:$0xff]
  %v3075 = vld [vmem:[%s12 + $0xf40] sm:$0xff]
  %v3076 = vld [vmem:[%s12 + $0xf48] sm:$0xff]
  %v3077 = vld [vmem:[%s12 + $0xf50] sm:$0xff]
  %v3078 = vld [vmem:[%s12 + $0xf58] sm:$0xff]
  %v3079 = vld [vmem:[%s12 + $0xf60] sm:$0xff]
  %v3080 = vld [vmem:[%s12 + $0xf68] sm:$0xff]
  %v3081 = vld [vmem:[%s12 + $0xf70] sm:$0xff]
  %v3082 = vld [vmem:[%s12 + $0xf78] sm:$0xff]
  %v3083 = vld [vmem:[%s12 + $0xf80] sm:$0xff]
  %v3084 = vld [vmem:[%s12 + $0xf88] sm:$0xff]
  %v3085 = vld [vmem:[%s12 + $0xf90] sm:$0xff]
  %v3086 = vld [vmem:[%s12 + $0xf98] sm:$0xff]
  %v3087 = vld [vmem:[%s12 + $0xfa0] sm:$0xff]
  %v3088 = vld [vmem:[%s12 + $0xfa8] sm:$0xff]
  %v3089 = vld [vmem:[%s12 + $0xfb0] sm:$0xff]
  %v3090 = vld [vmem:[%s12 + $0xfb8] sm:$0xff]
  %v3091 = vld [vmem:[%s12 + $0xfc0] sm:$0xff]
  %v3092 = vld [vmem:[%s12 + $0xfc8] sm:$0xff]
  %v3093 = vld [vmem:[%s12 + $0xfd0] sm:$0xff]
  %v3094 = vld [vmem:[%s12 + $0xfd8] sm:$0xff]
  %v3095 = vld [vmem:[%s12 + $0xfe0] sm:$0xff]
  %v3096 = vld [vmem:[%s12 + $0xfe8] sm:$0xff]
  %v3097 = vld [vmem:[%s12 + $0xff0] sm:$0xff]
  %v3098 = vld [vmem:[%s12 + $0xff8] sm:$0xff]
  %v3099 = vpack.c.bf16 %v2595, %v2587
  %v3100 = vpack.c.bf16 %v2596, %v2588
  %v3101 = vpack.c.bf16 %v2597, %v2589
  %v3102 = vpack.c.bf16 %v2598, %v2590
  %v3103 = vpack.c.bf16 %v2599, %v2591
  %v3104 = vpack.c.bf16 %v2600, %v2592
  %v3105 = vpack.c.bf16 %v2601, %v2593
  %v3106 = vpack.c.bf16 %v2602, %v2594
  %v3107 = vpack.c.bf16 %v2611, %v2603
  %v3108 = vpack.c.bf16 %v2612, %v2604
  %v3109 = vpack.c.bf16 %v2613, %v2605
  %v3110 = vpack.c.bf16 %v2614, %v2606
  %v3111 = vpack.c.bf16 %v2615, %v2607
  %v3112 = vpack.c.bf16 %v2616, %v2608
  %v3113 = vpack.c.bf16 %v2617, %v2609
  %v3114 = vpack.c.bf16 %v2618, %v2610
  %v3115 = vpack.c.bf16 %v2627, %v2619
  %v3116 = vpack.c.bf16 %v2628, %v2620
  %v3117 = vpack.c.bf16 %v2629, %v2621
  %v3118 = vpack.c.bf16 %v2630, %v2622
  %v3119 = vpack.c.bf16 %v2631, %v2623
  %v3120 = vpack.c.bf16 %v2632, %v2624
  %v3121 = vpack.c.bf16 %v2633, %v2625
  %v3122 = vpack.c.bf16 %v2634, %v2626
  %v3123 = vpack.c.bf16 %v2643, %v2635
  %v3124 = vpack.c.bf16 %v2644, %v2636
  %v3125 = vpack.c.bf16 %v2645, %v2637
  %v3126 = vpack.c.bf16 %v2646, %v2638
  %v3127 = vpack.c.bf16 %v2647, %v2639
  %v3128 = vpack.c.bf16 %v2648, %v2640
  %v3129 = vpack.c.bf16 %v2649, %v2641
  %v3130 = vpack.c.bf16 %v2650, %v2642
  %v3131 = vpack.c.bf16 %v2659, %v2651
  %v3132 = vpack.c.bf16 %v2660, %v2652
  %v3133 = vpack.c.bf16 %v2661, %v2653
  %v3134 = vpack.c.bf16 %v2662, %v2654
  %v3135 = vpack.c.bf16 %v2663, %v2655
  %v3136 = vpack.c.bf16 %v2664, %v2656
  %v3137 = vpack.c.bf16 %v2665, %v2657
  %v3138 = vpack.c.bf16 %v2666, %v2658
  %v3139 = vpack.c.bf16 %v2675, %v2667
  %v3140 = vpack.c.bf16 %v2676, %v2668
  %v3141 = vpack.c.bf16 %v2677, %v2669
  %v3142 = vpack.c.bf16 %v2678, %v2670
  %v3143 = vpack.c.bf16 %v2679, %v2671
  %v3144 = vpack.c.bf16 %v2680, %v2672
  %v3145 = vpack.c.bf16 %v2681, %v2673
  %v3146 = vpack.c.bf16 %v2682, %v2674
  %v3147 = vpack.c.bf16 %v2691, %v2683
  %v3148 = vpack.c.bf16 %v2692, %v2684
  %v3149 = vpack.c.bf16 %v2693, %v2685
  %v3150 = vpack.c.bf16 %v2694, %v2686
  %v3151 = vpack.c.bf16 %v2695, %v2687
  %v3152 = vpack.c.bf16 %v2696, %v2688
  %v3153 = vpack.c.bf16 %v2697, %v2689
  %v3154 = vpack.c.bf16 %v2698, %v2690
  %v3155 = vpack.c.bf16 %v2707, %v2699
  %v3156 = vpack.c.bf16 %v2708, %v2700
  %v3157 = vpack.c.bf16 %v2709, %v2701
  %v3158 = vpack.c.bf16 %v2710, %v2702
  %v3159 = vpack.c.bf16 %v2711, %v2703
  %v3160 = vpack.c.bf16 %v2712, %v2704
  %v3161 = vpack.c.bf16 %v2713, %v2705
  %v3162 = vpack.c.bf16 %v2714, %v2706
  %v3163 = vpack.c.bf16 %v2723, %v2715
  %v3164 = vpack.c.bf16 %v2724, %v2716
  %v3165 = vpack.c.bf16 %v2725, %v2717
  %v3166 = vpack.c.bf16 %v2726, %v2718
  %v3167 = vpack.c.bf16 %v2727, %v2719
  %v3168 = vpack.c.bf16 %v2728, %v2720
  %v3169 = vpack.c.bf16 %v2729, %v2721
  %v3170 = vpack.c.bf16 %v2730, %v2722
  %v3171 = vpack.c.bf16 %v2739, %v2731
  %v3172 = vpack.c.bf16 %v2740, %v2732
  %v3173 = vpack.c.bf16 %v2741, %v2733
  %v3174 = vpack.c.bf16 %v2742, %v2734
  %v3175 = vpack.c.bf16 %v2743, %v2735
  %v3176 = vpack.c.bf16 %v2744, %v2736
  %v3177 = vpack.c.bf16 %v2745, %v2737
  %v3178 = vpack.c.bf16 %v2746, %v2738
  %v3179 = vpack.c.bf16 %v2755, %v2747
  %v3180 = vpack.c.bf16 %v2756, %v2748
  %v3181 = vpack.c.bf16 %v2757, %v2749
  %v3182 = vpack.c.bf16 %v2758, %v2750
  %v3183 = vpack.c.bf16 %v2759, %v2751
  %v3184 = vpack.c.bf16 %v2760, %v2752
  %v3185 = vpack.c.bf16 %v2761, %v2753
  %v3186 = vpack.c.bf16 %v2762, %v2754
  %v3187 = vpack.c.bf16 %v2771, %v2763
  %v3188 = vpack.c.bf16 %v2772, %v2764
  %v3189 = vpack.c.bf16 %v2773, %v2765
  %v3190 = vpack.c.bf16 %v2774, %v2766
  %v3191 = vpack.c.bf16 %v2775, %v2767
  %v3192 = vpack.c.bf16 %v2776, %v2768
  %v3193 = vpack.c.bf16 %v2777, %v2769
  %v3194 = vpack.c.bf16 %v2778, %v2770
  %v3195 = vpack.c.bf16 %v2787, %v2779
  %v3196 = vpack.c.bf16 %v2788, %v2780
  %v3197 = vpack.c.bf16 %v2789, %v2781
  %v3198 = vpack.c.bf16 %v2790, %v2782
  %v3199 = vpack.c.bf16 %v2791, %v2783
  %v3200 = vpack.c.bf16 %v2792, %v2784
  %v3201 = vpack.c.bf16 %v2793, %v2785
  %v3202 = vpack.c.bf16 %v2794, %v2786
  %v3203 = vpack.c.bf16 %v2803, %v2795
  %v3204 = vpack.c.bf16 %v2804, %v2796
  %v3205 = vpack.c.bf16 %v2805, %v2797
  %v3206 = vpack.c.bf16 %v2806, %v2798
  %v3207 = vpack.c.bf16 %v2807, %v2799
  %v3208 = vpack.c.bf16 %v2808, %v2800
  %v3209 = vpack.c.bf16 %v2809, %v2801
  %v3210 = vpack.c.bf16 %v2810, %v2802
  %v3211 = vpack.c.bf16 %v2819, %v2811
  %v3212 = vpack.c.bf16 %v2820, %v2812
  %v3213 = vpack.c.bf16 %v2821, %v2813
  %v3214 = vpack.c.bf16 %v2822, %v2814
  %v3215 = vpack.c.bf16 %v2823, %v2815
  %v3216 = vpack.c.bf16 %v2824, %v2816
  %v3217 = vpack.c.bf16 %v2825, %v2817
  %v3218 = vpack.c.bf16 %v2826, %v2818
  %v3219 = vpack.c.bf16 %v2835, %v2827
  %v3220 = vpack.c.bf16 %v2836, %v2828
  %v3221 = vpack.c.bf16 %v2837, %v2829
  %v3222 = vpack.c.bf16 %v2838, %v2830
  %v3223 = vpack.c.bf16 %v2839, %v2831
  %v3224 = vpack.c.bf16 %v2840, %v2832
  %v3225 = vpack.c.bf16 %v2841, %v2833
  %v3226 = vpack.c.bf16 %v2842, %v2834
  %v3227 = vpack.c.bf16 %v2851, %v2843
  %v3228 = vpack.c.bf16 %v2852, %v2844
  %v3229 = vpack.c.bf16 %v2853, %v2845
  %v3230 = vpack.c.bf16 %v2854, %v2846
  %v3231 = vpack.c.bf16 %v2855, %v2847
  %v3232 = vpack.c.bf16 %v2856, %v2848
  %v3233 = vpack.c.bf16 %v2857, %v2849
  %v3234 = vpack.c.bf16 %v2858, %v2850
  %v3235 = vpack.c.bf16 %v2867, %v2859
  %v3236 = vpack.c.bf16 %v2868, %v2860
  %v3237 = vpack.c.bf16 %v2869, %v2861
  %v3238 = vpack.c.bf16 %v2870, %v2862
  %v3239 = vpack.c.bf16 %v2871, %v2863
  %v3240 = vpack.c.bf16 %v2872, %v2864
  %v3241 = vpack.c.bf16 %v2873, %v2865
  %v3242 = vpack.c.bf16 %v2874, %v2866
  %v3243 = vpack.c.bf16 %v2883, %v2875
  %v3244 = vpack.c.bf16 %v2884, %v2876
  %v3245 = vpack.c.bf16 %v2885, %v2877
  %v3246 = vpack.c.bf16 %v2886, %v2878
  %v3247 = vpack.c.bf16 %v2887, %v2879
  %v3248 = vpack.c.bf16 %v2888, %v2880
  %v3249 = vpack.c.bf16 %v2889, %v2881
  %v3250 = vpack.c.bf16 %v2890, %v2882
  %v3251 = vpack.c.bf16 %v2899, %v2891
  %v3252 = vpack.c.bf16 %v2900, %v2892
  %v3253 = vpack.c.bf16 %v2901, %v2893
  %v3254 = vpack.c.bf16 %v2902, %v2894
  %v3255 = vpack.c.bf16 %v2903, %v2895
  %v3256 = vpack.c.bf16 %v2904, %v2896
  %v3257 = vpack.c.bf16 %v2905, %v2897
  %v3258 = vpack.c.bf16 %v2906, %v2898
  %v3259 = vpack.c.bf16 %v2915, %v2907
  %v3260 = vpack.c.bf16 %v2916, %v2908
  %v3261 = vpack.c.bf16 %v2917, %v2909
  %v3262 = vpack.c.bf16 %v2918, %v2910
  %v3263 = vpack.c.bf16 %v2919, %v2911
  %v3264 = vpack.c.bf16 %v2920, %v2912
  %v3265 = vpack.c.bf16 %v2921, %v2913
  %v3266 = vpack.c.bf16 %v2922, %v2914
  %v3267 = vpack.c.bf16 %v2931, %v2923
  %v3268 = vpack.c.bf16 %v2932, %v2924
  %v3269 = vpack.c.bf16 %v2933, %v2925
  %v3270 = vpack.c.bf16 %v2934, %v2926
  %v3271 = vpack.c.bf16 %v2935, %v2927
  %v3272 = vpack.c.bf16 %v2936, %v2928
  %v3273 = vpack.c.bf16 %v2937, %v2929
  %v3274 = vpack.c.bf16 %v2938, %v2930
  %v3275 = vpack.c.bf16 %v2947, %v2939
  %v3276 = vpack.c.bf16 %v2948, %v2940
  %v3277 = vpack.c.bf16 %v2949, %v2941
  %v3278 = vpack.c.bf16 %v2950, %v2942
  %v3279 = vpack.c.bf16 %v2951, %v2943
  %v3280 = vpack.c.bf16 %v2952, %v2944
  %v3281 = vpack.c.bf16 %v2953, %v2945
  %v3282 = vpack.c.bf16 %v2954, %v2946
  %v3283 = vpack.c.bf16 %v2963, %v2955
  %v3284 = vpack.c.bf16 %v2964, %v2956
  %v3285 = vpack.c.bf16 %v2965, %v2957
  %v3286 = vpack.c.bf16 %v2966, %v2958
  %v3287 = vpack.c.bf16 %v2967, %v2959
  %v3288 = vpack.c.bf16 %v2968, %v2960
  %v3289 = vpack.c.bf16 %v2969, %v2961
  %v3290 = vpack.c.bf16 %v2970, %v2962
  %v3291 = vpack.c.bf16 %v2979, %v2971
  %v3292 = vpack.c.bf16 %v2980, %v2972
  %v3293 = vpack.c.bf16 %v2981, %v2973
  %v3294 = vpack.c.bf16 %v2982, %v2974
  %v3295 = vpack.c.bf16 %v2983, %v2975
  %v3296 = vpack.c.bf16 %v2984, %v2976
  %v3297 = vpack.c.bf16 %v2985, %v2977
  %v3298 = vpack.c.bf16 %v2986, %v2978
  %v3299 = vpack.c.bf16 %v2995, %v2987
  %v3300 = vpack.c.bf16 %v2996, %v2988
  %v3301 = vpack.c.bf16 %v2997, %v2989
  %v3302 = vpack.c.bf16 %v2998, %v2990
  %v3303 = vpack.c.bf16 %v2999, %v2991
  %v3304 = vpack.c.bf16 %v3000, %v2992
  %v3305 = vpack.c.bf16 %v3001, %v2993
  %v3306 = vpack.c.bf16 %v3002, %v2994
  %v3307 = vpack.c.bf16 %v3011, %v3003
  %v3308 = vpack.c.bf16 %v3012, %v3004
  %v3309 = vpack.c.bf16 %v3013, %v3005
  %v3310 = vpack.c.bf16 %v3014, %v3006
  %v3311 = vpack.c.bf16 %v3015, %v3007
  %v3312 = vpack.c.bf16 %v3016, %v3008
  %v3313 = vpack.c.bf16 %v3017, %v3009
  %v3314 = vpack.c.bf16 %v3018, %v3010
  %v3315 = vpack.c.bf16 %v3027, %v3019
  %v3316 = vpack.c.bf16 %v3028, %v3020
  %v3317 = vpack.c.bf16 %v3029, %v3021
  %v3318 = vpack.c.bf16 %v3030, %v3022
  %v3319 = vpack.c.bf16 %v3031, %v3023
  %v3320 = vpack.c.bf16 %v3032, %v3024
  %v3321 = vpack.c.bf16 %v3033, %v3025
  %v3322 = vpack.c.bf16 %v3034, %v3026
  %v3323 = vpack.c.bf16 %v3043, %v3035
  %v3324 = vpack.c.bf16 %v3044, %v3036
  %v3325 = vpack.c.bf16 %v3045, %v3037
  %v3326 = vpack.c.bf16 %v3046, %v3038
  %v3327 = vpack.c.bf16 %v3047, %v3039
  %v3328 = vpack.c.bf16 %v3048, %v3040
  %v3329 = vpack.c.bf16 %v3049, %v3041
  %v3330 = vpack.c.bf16 %v3050, %v3042
  %v3331 = vpack.c.bf16 %v3059, %v3051
  %v3332 = vpack.c.bf16 %v3060, %v3052
  %v3333 = vpack.c.bf16 %v3061, %v3053
  %v3334 = vpack.c.bf16 %v3062, %v3054
  %v3335 = vpack.c.bf16 %v3063, %v3055
  %v3336 = vpack.c.bf16 %v3064, %v3056
  %v3337 = vpack.c.bf16 %v3065, %v3057
  %v3338 = vpack.c.bf16 %v3066, %v3058
  %v3339 = vpack.c.bf16 %v3075, %v3067
  %v3340 = vpack.c.bf16 %v3076, %v3068
  %v3341 = vpack.c.bf16 %v3077, %v3069
  %v3342 = vpack.c.bf16 %v3078, %v3070
  %v3343 = vpack.c.bf16 %v3079, %v3071
  %v3344 = vpack.c.bf16 %v3080, %v3072
  %v3345 = vpack.c.bf16 %v3081, %v3073
  %v3346 = vpack.c.bf16 %v3082, %v3074
  %v3347 = vpack.c.bf16 %v3091, %v3083
  %v3348 = vpack.c.bf16 %v3092, %v3084
  %v3349 = vpack.c.bf16 %v3093, %v3085
  %v3350 = vpack.c.bf16 %v3094, %v3086
  %v3351 = vpack.c.bf16 %v3095, %v3087
  %v3352 = vpack.c.bf16 %v3096, %v3088
  %v3353 = vpack.c.bf16 %v3097, %v3089
  %v3354 = vpack.c.bf16 %v3098, %v3090
  %v3355 = vld [vmem:[%s13] sm:$0xff]
  %v3356 = vld [vmem:[%s13 + $0x8] sm:$0xff]
  %v3357 = vld [vmem:[%s13 + $0x10] sm:$0xff]
  %v3358 = vld [vmem:[%s13 + $0x18] sm:$0xff]
  %v3359 = vld [vmem:[%s13 + $0x20] sm:$0xff]
  %v3360 = vld [vmem:[%s13 + $0x28] sm:$0xff]
  %v3361 = vld [vmem:[%s13 + $0x30] sm:$0xff]
  %v3362 = vld [vmem:[%s13 + $0x38] sm:$0xff]
  %v3363 = vld [vmem:[%s13 + $0x40] sm:$0xff]
  %v3364 = vld [vmem:[%s13 + $0x48] sm:$0xff]
  %v3365 = vld [vmem:[%s13 + $0x50] sm:$0xff]
  %v3366 = vld [vmem:[%s13 + $0x58] sm:$0xff]
  %v3367 = vld [vmem:[%s13 + $0x60] sm:$0xff]
  %v3368 = vld [vmem:[%s13 + $0x68] sm:$0xff]
  %v3369 = vld [vmem:[%s13 + $0x70] sm:$0xff]
  %v3370 = vld [vmem:[%s13 + $0x78] sm:$0xff]
  %v3371 = vld [vmem:[%s13 + $0x80] sm:$0xff]
  %v3372 = vld [vmem:[%s13 + $0x88] sm:$0xff]
  %v3373 = vld [vmem:[%s13 + $0x90] sm:$0xff]
  %v3374 = vld [vmem:[%s13 + $0x98] sm:$0xff]
  %v3375 = vld [vmem:[%s13 + $0xa0] sm:$0xff]
  %v3376 = vld [vmem:[%s13 + $0xa8] sm:$0xff]
  %v3377 = vld [vmem:[%s13 + $0xb0] sm:$0xff]
  %v3378 = vld [vmem:[%s13 + $0xb8] sm:$0xff]
  %v3379 = vld [vmem:[%s13 + $0xc0] sm:$0xff]
  %v3380 = vld [vmem:[%s13 + $0xc8] sm:$0xff]
  %v3381 = vld [vmem:[%s13 + $0xd0] sm:$0xff]
  %v3382 = vld [vmem:[%s13 + $0xd8] sm:$0xff]
  %v3383 = vld [vmem:[%s13 + $0xe0] sm:$0xff]
  %v3384 = vld [vmem:[%s13 + $0xe8] sm:$0xff]
  %v3385 = vld [vmem:[%s13 + $0xf0] sm:$0xff]
  %v3386 = vld [vmem:[%s13 + $0xf8] sm:$0xff]
  %v3387 = vld [vmem:[%s13 + $0x100] sm:$0xff]
  %v3388 = vld [vmem:[%s13 + $0x108] sm:$0xff]
  %v3389 = vld [vmem:[%s13 + $0x110] sm:$0xff]
  %v3390 = vld [vmem:[%s13 + $0x118] sm:$0xff]
  %v3391 = vld [vmem:[%s13 + $0x120] sm:$0xff]
  %v3392 = vld [vmem:[%s13 + $0x128] sm:$0xff]
  %v3393 = vld [vmem:[%s13 + $0x130] sm:$0xff]
  %v3394 = vld [vmem:[%s13 + $0x138] sm:$0xff]
  %v3395 = vld [vmem:[%s13 + $0x140] sm:$0xff]
  %v3396 = vld [vmem:[%s13 + $0x148] sm:$0xff]
  %v3397 = vld [vmem:[%s13 + $0x150] sm:$0xff]
  %v3398 = vld [vmem:[%s13 + $0x158] sm:$0xff]
  %v3399 = vld [vmem:[%s13 + $0x160] sm:$0xff]
  %v3400 = vld [vmem:[%s13 + $0x168] sm:$0xff]
  %v3401 = vld [vmem:[%s13 + $0x170] sm:$0xff]
  %v3402 = vld [vmem:[%s13 + $0x178] sm:$0xff]
  %v3403 = vld [vmem:[%s13 + $0x180] sm:$0xff]
  %v3404 = vld [vmem:[%s13 + $0x188] sm:$0xff]
  %v3405 = vld [vmem:[%s13 + $0x190] sm:$0xff]
  %v3406 = vld [vmem:[%s13 + $0x198] sm:$0xff]
  %v3407 = vld [vmem:[%s13 + $0x1a0] sm:$0xff]
  %v3408 = vld [vmem:[%s13 + $0x1a8] sm:$0xff]
  %v3409 = vld [vmem:[%s13 + $0x1b0] sm:$0xff]
  %v3410 = vld [vmem:[%s13 + $0x1b8] sm:$0xff]
  %v3411 = vld [vmem:[%s13 + $0x1c0] sm:$0xff]
  %v3412 = vld [vmem:[%s13 + $0x1c8] sm:$0xff]
  %v3413 = vld [vmem:[%s13 + $0x1d0] sm:$0xff]
  %v3414 = vld [vmem:[%s13 + $0x1d8] sm:$0xff]
  %v3415 = vld [vmem:[%s13 + $0x1e0] sm:$0xff]
  %v3416 = vld [vmem:[%s13 + $0x1e8] sm:$0xff]
  %v3417 = vld [vmem:[%s13 + $0x1f0] sm:$0xff]
  %v3418 = vld [vmem:[%s13 + $0x1f8] sm:$0xff]
  %v3419 = vld [vmem:[%s13 + $0x200] sm:$0xff]
  %v3420 = vld [vmem:[%s13 + $0x208] sm:$0xff]
  %v3421 = vld [vmem:[%s13 + $0x210] sm:$0xff]
  %v3422 = vld [vmem:[%s13 + $0x218] sm:$0xff]
  %v3423 = vld [vmem:[%s13 + $0x220] sm:$0xff]
  %v3424 = vld [vmem:[%s13 + $0x228] sm:$0xff]
  %v3425 = vld [vmem:[%s13 + $0x230] sm:$0xff]
  %v3426 = vld [vmem:[%s13 + $0x238] sm:$0xff]
  %v3427 = vld [vmem:[%s13 + $0x240] sm:$0xff]
  %v3428 = vld [vmem:[%s13 + $0x248] sm:$0xff]
  %v3429 = vld [vmem:[%s13 + $0x250] sm:$0xff]
  %v3430 = vld [vmem:[%s13 + $0x258] sm:$0xff]
  %v3431 = vld [vmem:[%s13 + $0x260] sm:$0xff]
  %v3432 = vld [vmem:[%s13 + $0x268] sm:$0xff]
  %v3433 = vld [vmem:[%s13 + $0x270] sm:$0xff]
  %v3434 = vld [vmem:[%s13 + $0x278] sm:$0xff]
  %v3435 = vld [vmem:[%s13 + $0x280] sm:$0xff]
  %v3436 = vld [vmem:[%s13 + $0x288] sm:$0xff]
  %v3437 = vld [vmem:[%s13 + $0x290] sm:$0xff]
  %v3438 = vld [vmem:[%s13 + $0x298] sm:$0xff]
  %v3439 = vld [vmem:[%s13 + $0x2a0] sm:$0xff]
  %v3440 = vld [vmem:[%s13 + $0x2a8] sm:$0xff]
  %v3441 = vld [vmem:[%s13 + $0x2b0] sm:$0xff]
  %v3442 = vld [vmem:[%s13 + $0x2b8] sm:$0xff]
  %v3443 = vld [vmem:[%s13 + $0x2c0] sm:$0xff]
  %v3444 = vld [vmem:[%s13 + $0x2c8] sm:$0xff]
  %v3445 = vld [vmem:[%s13 + $0x2d0] sm:$0xff]
  %v3446 = vld [vmem:[%s13 + $0x2d8] sm:$0xff]
  %v3447 = vld [vmem:[%s13 + $0x2e0] sm:$0xff]
  %v3448 = vld [vmem:[%s13 + $0x2e8] sm:$0xff]
  %v3449 = vld [vmem:[%s13 + $0x2f0] sm:$0xff]
  %v3450 = vld [vmem:[%s13 + $0x2f8] sm:$0xff]
  %v3451 = vld [vmem:[%s13 + $0x300] sm:$0xff]
  %v3452 = vld [vmem:[%s13 + $0x308] sm:$0xff]
  %v3453 = vld [vmem:[%s13 + $0x310] sm:$0xff]
  %v3454 = vld [vmem:[%s13 + $0x318] sm:$0xff]
  %v3455 = vld [vmem:[%s13 + $0x320] sm:$0xff]
  %v3456 = vld [vmem:[%s13 + $0x328] sm:$0xff]
  %v3457 = vld [vmem:[%s13 + $0x330] sm:$0xff]
  %v3458 = vld [vmem:[%s13 + $0x338] sm:$0xff]
  %v3459 = vld [vmem:[%s13 + $0x340] sm:$0xff]
  %v3460 = vld [vmem:[%s13 + $0x348] sm:$0xff]
  %v3461 = vld [vmem:[%s13 + $0x350] sm:$0xff]
  %v3462 = vld [vmem:[%s13 + $0x358] sm:$0xff]
  %v3463 = vld [vmem:[%s13 + $0x360] sm:$0xff]
  %v3464 = vld [vmem:[%s13 + $0x368] sm:$0xff]
  %v3465 = vld [vmem:[%s13 + $0x370] sm:$0xff]
  %v3466 = vld [vmem:[%s13 + $0x378] sm:$0xff]
  %v3467 = vld [vmem:[%s13 + $0x380] sm:$0xff]
  %v3468 = vld [vmem:[%s13 + $0x388] sm:$0xff]
  %v3469 = vld [vmem:[%s13 + $0x390] sm:$0xff]
  %v3470 = vld [vmem:[%s13 + $0x398] sm:$0xff]
  %v3471 = vld [vmem:[%s13 + $0x3a0] sm:$0xff]
  %v3472 = vld [vmem:[%s13 + $0x3a8] sm:$0xff]
  %v3473 = vld [vmem:[%s13 + $0x3b0] sm:$0xff]
  %v3474 = vld [vmem:[%s13 + $0x3b8] sm:$0xff]
  %v3475 = vld [vmem:[%s13 + $0x3c0] sm:$0xff]
  %v3476 = vld [vmem:[%s13 + $0x3c8] sm:$0xff]
  %v3477 = vld [vmem:[%s13 + $0x3d0] sm:$0xff]
  %v3478 = vld [vmem:[%s13 + $0x3d8] sm:$0xff]
  %v3479 = vld [vmem:[%s13 + $0x3e0] sm:$0xff]
  %v3480 = vld [vmem:[%s13 + $0x3e8] sm:$0xff]
  %v3481 = vld [vmem:[%s13 + $0x3f0] sm:$0xff]
  %v3482 = vld [vmem:[%s13 + $0x3f8] sm:$0xff]
  %v3483 = vld [vmem:[%s13 + $0x400] sm:$0xff]
  %v3484 = vld [vmem:[%s13 + $0x408] sm:$0xff]
  %v3485 = vld [vmem:[%s13 + $0x410] sm:$0xff]
  %v3486 = vld [vmem:[%s13 + $0x418] sm:$0xff]
  %v3487 = vld [vmem:[%s13 + $0x420] sm:$0xff]
  %v3488 = vld [vmem:[%s13 + $0x428] sm:$0xff]
  %v3489 = vld [vmem:[%s13 + $0x430] sm:$0xff]
  %v3490 = vld [vmem:[%s13 + $0x438] sm:$0xff]
  %v3491 = vld [vmem:[%s13 + $0x440] sm:$0xff]
  %v3492 = vld [vmem:[%s13 + $0x448] sm:$0xff]
  %v3493 = vld [vmem:[%s13 + $0x450] sm:$0xff]
  %v3494 = vld [vmem:[%s13 + $0x458] sm:$0xff]
  %v3495 = vld [vmem:[%s13 + $0x460] sm:$0xff]
  %v3496 = vld [vmem:[%s13 + $0x468] sm:$0xff]
  %v3497 = vld [vmem:[%s13 + $0x470] sm:$0xff]
  %v3498 = vld [vmem:[%s13 + $0x478] sm:$0xff]
  %v3499 = vld [vmem:[%s13 + $0x480] sm:$0xff]
  %v3500 = vld [vmem:[%s13 + $0x488] sm:$0xff]
  %v3501 = vld [vmem:[%s13 + $0x490] sm:$0xff]
  %v3502 = vld [vmem:[%s13 + $0x498] sm:$0xff]
  %v3503 = vld [vmem:[%s13 + $0x4a0] sm:$0xff]
  %v3504 = vld [vmem:[%s13 + $0x4a8] sm:$0xff]
  %v3505 = vld [vmem:[%s13 + $0x4b0] sm:$0xff]
  %v3506 = vld [vmem:[%s13 + $0x4b8] sm:$0xff]
  %v3507 = vld [vmem:[%s13 + $0x4c0] sm:$0xff]
  %v3508 = vld [vmem:[%s13 + $0x4c8] sm:$0xff]
  %v3509 = vld [vmem:[%s13 + $0x4d0] sm:$0xff]
  %v3510 = vld [vmem:[%s13 + $0x4d8] sm:$0xff]
  %v3511 = vld [vmem:[%s13 + $0x4e0] sm:$0xff]
  %v3512 = vld [vmem:[%s13 + $0x4e8] sm:$0xff]
  %v3513 = vld [vmem:[%s13 + $0x4f0] sm:$0xff]
  %v3514 = vld [vmem:[%s13 + $0x4f8] sm:$0xff]
  %v3515 = vld [vmem:[%s13 + $0x500] sm:$0xff]
  %v3516 = vld [vmem:[%s13 + $0x508] sm:$0xff]
  %v3517 = vld [vmem:[%s13 + $0x510] sm:$0xff]
  %v3518 = vld [vmem:[%s13 + $0x518] sm:$0xff]
  %v3519 = vld [vmem:[%s13 + $0x520] sm:$0xff]
  %v3520 = vld [vmem:[%s13 + $0x528] sm:$0xff]
  %v3521 = vld [vmem:[%s13 + $0x530] sm:$0xff]
  %v3522 = vld [vmem:[%s13 + $0x538] sm:$0xff]
  %v3523 = vld [vmem:[%s13 + $0x540] sm:$0xff]
  %v3524 = vld [vmem:[%s13 + $0x548] sm:$0xff]
  %v3525 = vld [vmem:[%s13 + $0x550] sm:$0xff]
  %v3526 = vld [vmem:[%s13 + $0x558] sm:$0xff]
  %v3527 = vld [vmem:[%s13 + $0x560] sm:$0xff]
  %v3528 = vld [vmem:[%s13 + $0x568] sm:$0xff]
  %v3529 = vld [vmem:[%s13 + $0x570] sm:$0xff]
  %v3530 = vld [vmem:[%s13 + $0x578] sm:$0xff]
  %v3531 = vld [vmem:[%s13 + $0x580] sm:$0xff]
  %v3532 = vld [vmem:[%s13 + $0x588] sm:$0xff]
  %v3533 = vld [vmem:[%s13 + $0x590] sm:$0xff]
  %v3534 = vld [vmem:[%s13 + $0x598] sm:$0xff]
  %v3535 = vld [vmem:[%s13 + $0x5a0] sm:$0xff]
  %v3536 = vld [vmem:[%s13 + $0x5a8] sm:$0xff]
  %v3537 = vld [vmem:[%s13 + $0x5b0] sm:$0xff]
  %v3538 = vld [vmem:[%s13 + $0x5b8] sm:$0xff]
  %v3539 = vld [vmem:[%s13 + $0x5c0] sm:$0xff]
  %v3540 = vld [vmem:[%s13 + $0x5c8] sm:$0xff]
  %v3541 = vld [vmem:[%s13 + $0x5d0] sm:$0xff]
  %v3542 = vld [vmem:[%s13 + $0x5d8] sm:$0xff]
  %v3543 = vld [vmem:[%s13 + $0x5e0] sm:$0xff]
  %v3544 = vld [vmem:[%s13 + $0x5e8] sm:$0xff]
  %v3545 = vld [vmem:[%s13 + $0x5f0] sm:$0xff]
  %v3546 = vld [vmem:[%s13 + $0x5f8] sm:$0xff]
  %v3547 = vld [vmem:[%s13 + $0x600] sm:$0xff]
  %v3548 = vld [vmem:[%s13 + $0x608] sm:$0xff]
  %v3549 = vld [vmem:[%s13 + $0x610] sm:$0xff]
  %v3550 = vld [vmem:[%s13 + $0x618] sm:$0xff]
  %v3551 = vld [vmem:[%s13 + $0x620] sm:$0xff]
  %v3552 = vld [vmem:[%s13 + $0x628] sm:$0xff]
  %v3553 = vld [vmem:[%s13 + $0x630] sm:$0xff]
  %v3554 = vld [vmem:[%s13 + $0x638] sm:$0xff]
  %v3555 = vld [vmem:[%s13 + $0x640] sm:$0xff]
  %v3556 = vld [vmem:[%s13 + $0x648] sm:$0xff]
  %v3557 = vld [vmem:[%s13 + $0x650] sm:$0xff]
  %v3558 = vld [vmem:[%s13 + $0x658] sm:$0xff]
  %v3559 = vld [vmem:[%s13 + $0x660] sm:$0xff]
  %v3560 = vld [vmem:[%s13 + $0x668] sm:$0xff]
  %v3561 = vld [vmem:[%s13 + $0x670] sm:$0xff]
  %v3562 = vld [vmem:[%s13 + $0x678] sm:$0xff]
  %v3563 = vld [vmem:[%s13 + $0x680] sm:$0xff]
  %v3564 = vld [vmem:[%s13 + $0x688] sm:$0xff]
  %v3565 = vld [vmem:[%s13 + $0x690] sm:$0xff]
  %v3566 = vld [vmem:[%s13 + $0x698] sm:$0xff]
  %v3567 = vld [vmem:[%s13 + $0x6a0] sm:$0xff]
  %v3568 = vld [vmem:[%s13 + $0x6a8] sm:$0xff]
  %v3569 = vld [vmem:[%s13 + $0x6b0] sm:$0xff]
  %v3570 = vld [vmem:[%s13 + $0x6b8] sm:$0xff]
  %v3571 = vld [vmem:[%s13 + $0x6c0] sm:$0xff]
  %v3572 = vld [vmem:[%s13 + $0x6c8] sm:$0xff]
  %v3573 = vld [vmem:[%s13 + $0x6d0] sm:$0xff]
  %v3574 = vld [vmem:[%s13 + $0x6d8] sm:$0xff]
  %v3575 = vld [vmem:[%s13 + $0x6e0] sm:$0xff]
  %v3576 = vld [vmem:[%s13 + $0x6e8] sm:$0xff]
  %v3577 = vld [vmem:[%s13 + $0x6f0] sm:$0xff]
  %v3578 = vld [vmem:[%s13 + $0x6f8] sm:$0xff]
  %v3579 = vld [vmem:[%s13 + $0x700] sm:$0xff]
  %v3580 = vld [vmem:[%s13 + $0x708] sm:$0xff]
  %v3581 = vld [vmem:[%s13 + $0x710] sm:$0xff]
  %v3582 = vld [vmem:[%s13 + $0x718] sm:$0xff]
  %v3583 = vld [vmem:[%s13 + $0x720] sm:$0xff]
  %v3584 = vld [vmem:[%s13 + $0x728] sm:$0xff]
  %v3585 = vld [vmem:[%s13 + $0x730] sm:$0xff]
  %v3586 = vld [vmem:[%s13 + $0x738] sm:$0xff]
  %v3587 = vld [vmem:[%s13 + $0x740] sm:$0xff]
  %v3588 = vld [vmem:[%s13 + $0x748] sm:$0xff]
  %v3589 = vld [vmem:[%s13 + $0x750] sm:$0xff]
  %v3590 = vld [vmem:[%s13 + $0x758] sm:$0xff]
  %v3591 = vld [vmem:[%s13 + $0x760] sm:$0xff]
  %v3592 = vld [vmem:[%s13 + $0x768] sm:$0xff]
  %v3593 = vld [vmem:[%s13 + $0x770] sm:$0xff]
  %v3594 = vld [vmem:[%s13 + $0x778] sm:$0xff]
  %v3595 = vld [vmem:[%s13 + $0x780] sm:$0xff]
  %v3596 = vld [vmem:[%s13 + $0x788] sm:$0xff]
  %v3597 = vld [vmem:[%s13 + $0x790] sm:$0xff]
  %v3598 = vld [vmem:[%s13 + $0x798] sm:$0xff]
  %v3599 = vld [vmem:[%s13 + $0x7a0] sm:$0xff]
  %v3600 = vld [vmem:[%s13 + $0x7a8] sm:$0xff]
  %v3601 = vld [vmem:[%s13 + $0x7b0] sm:$0xff]
  %v3602 = vld [vmem:[%s13 + $0x7b8] sm:$0xff]
  %v3603 = vld [vmem:[%s13 + $0x7c0] sm:$0xff]
  %v3604 = vld [vmem:[%s13 + $0x7c8] sm:$0xff]
  %v3605 = vld [vmem:[%s13 + $0x7d0] sm:$0xff]
  %v3606 = vld [vmem:[%s13 + $0x7d8] sm:$0xff]
  %v3607 = vld [vmem:[%s13 + $0x7e0] sm:$0xff]
  %v3608 = vld [vmem:[%s13 + $0x7e8] sm:$0xff]
  %v3609 = vld [vmem:[%s13 + $0x7f0] sm:$0xff]
  %v3610 = vld [vmem:[%s13 + $0x7f8] sm:$0xff]
  %v3611 = vpack.c.bf16 %v3363, %v3355
  %v3612 = vpack.c.bf16 %v3364, %v3356
  %v3613 = vpack.c.bf16 %v3365, %v3357
  %v3614 = vpack.c.bf16 %v3366, %v3358
  %v3615 = vpack.c.bf16 %v3367, %v3359
  %v3616 = vpack.c.bf16 %v3368, %v3360
  %v3617 = vpack.c.bf16 %v3369, %v3361
  %v3618 = vpack.c.bf16 %v3370, %v3362
  %v3619 = vpack.c.bf16 %v3379, %v3371
  %v3620 = vpack.c.bf16 %v3380, %v3372
  %v3621 = vpack.c.bf16 %v3381, %v3373
  %v3622 = vpack.c.bf16 %v3382, %v3374
  %v3623 = vpack.c.bf16 %v3383, %v3375
  %v3624 = vpack.c.bf16 %v3384, %v3376
  %v3625 = vpack.c.bf16 %v3385, %v3377
  %v3626 = vpack.c.bf16 %v3386, %v3378
  %v3627 = vpack.c.bf16 %v3395, %v3387
  %v3628 = vpack.c.bf16 %v3396, %v3388
  %v3629 = vpack.c.bf16 %v3397, %v3389
  %v3630 = vpack.c.bf16 %v3398, %v3390
  %v3631 = vpack.c.bf16 %v3399, %v3391
  %v3632 = vpack.c.bf16 %v3400, %v3392
  %v3633 = vpack.c.bf16 %v3401, %v3393
  %v3634 = vpack.c.bf16 %v3402, %v3394
  %v3635 = vpack.c.bf16 %v3411, %v3403
  %v3636 = vpack.c.bf16 %v3412, %v3404
  %v3637 = vpack.c.bf16 %v3413, %v3405
  %v3638 = vpack.c.bf16 %v3414, %v3406
  %v3639 = vpack.c.bf16 %v3415, %v3407
  %v3640 = vpack.c.bf16 %v3416, %v3408
  %v3641 = vpack.c.bf16 %v3417, %v3409
  %v3642 = vpack.c.bf16 %v3418, %v3410
  %v3643 = vpack.c.bf16 %v3427, %v3419
  %v3644 = vpack.c.bf16 %v3428, %v3420
  %v3645 = vpack.c.bf16 %v3429, %v3421
  %v3646 = vpack.c.bf16 %v3430, %v3422
  %v3647 = vpack.c.bf16 %v3431, %v3423
  %v3648 = vpack.c.bf16 %v3432, %v3424
  %v3649 = vpack.c.bf16 %v3433, %v3425
  %v3650 = vpack.c.bf16 %v3434, %v3426
  %v3651 = vpack.c.bf16 %v3443, %v3435
  %v3652 = vpack.c.bf16 %v3444, %v3436
  %v3653 = vpack.c.bf16 %v3445, %v3437
  %v3654 = vpack.c.bf16 %v3446, %v3438
  %v3655 = vpack.c.bf16 %v3447, %v3439
  %v3656 = vpack.c.bf16 %v3448, %v3440
  %v3657 = vpack.c.bf16 %v3449, %v3441
  %v3658 = vpack.c.bf16 %v3450, %v3442
  %v3659 = vpack.c.bf16 %v3459, %v3451
  %v3660 = vpack.c.bf16 %v3460, %v3452
  %v3661 = vpack.c.bf16 %v3461, %v3453
  %v3662 = vpack.c.bf16 %v3462, %v3454
  %v3663 = vpack.c.bf16 %v3463, %v3455
  %v3664 = vpack.c.bf16 %v3464, %v3456
  %v3665 = vpack.c.bf16 %v3465, %v3457
  %v3666 = vpack.c.bf16 %v3466, %v3458
  %v3667 = vpack.c.bf16 %v3475, %v3467
  %v3668 = vpack.c.bf16 %v3476, %v3468
  %v3669 = vpack.c.bf16 %v3477, %v3469
  %v3670 = vpack.c.bf16 %v3478, %v3470
  %v3671 = vpack.c.bf16 %v3479, %v3471
  %v3672 = vpack.c.bf16 %v3480, %v3472
  %v3673 = vpack.c.bf16 %v3481, %v3473
  %v3674 = vpack.c.bf16 %v3482, %v3474
  %v3675 = vpack.c.bf16 %v3491, %v3483
  %v3676 = vpack.c.bf16 %v3492, %v3484
  %v3677 = vpack.c.bf16 %v3493, %v3485
  %v3678 = vpack.c.bf16 %v3494, %v3486
  %v3679 = vpack.c.bf16 %v3495, %v3487
  %v3680 = vpack.c.bf16 %v3496, %v3488
  %v3681 = vpack.c.bf16 %v3497, %v3489
  %v3682 = vpack.c.bf16 %v3498, %v3490
  %v3683 = vpack.c.bf16 %v3507, %v3499
  %v3684 = vpack.c.bf16 %v3508, %v3500
  %v3685 = vpack.c.bf16 %v3509, %v3501
  %v3686 = vpack.c.bf16 %v3510, %v3502
  %v3687 = vpack.c.bf16 %v3511, %v3503
  %v3688 = vpack.c.bf16 %v3512, %v3504
  %v3689 = vpack.c.bf16 %v3513, %v3505
  %v3690 = vpack.c.bf16 %v3514, %v3506
  %v3691 = vpack.c.bf16 %v3523, %v3515
  %v3692 = vpack.c.bf16 %v3524, %v3516
  %v3693 = vpack.c.bf16 %v3525, %v3517
  %v3694 = vpack.c.bf16 %v3526, %v3518
  %v3695 = vpack.c.bf16 %v3527, %v3519
  %v3696 = vpack.c.bf16 %v3528, %v3520
  %v3697 = vpack.c.bf16 %v3529, %v3521
  %v3698 = vpack.c.bf16 %v3530, %v3522
  %v3699 = vpack.c.bf16 %v3539, %v3531
  %v3700 = vpack.c.bf16 %v3540, %v3532
  %v3701 = vpack.c.bf16 %v3541, %v3533
  %v3702 = vpack.c.bf16 %v3542, %v3534
  %v3703 = vpack.c.bf16 %v3543, %v3535
  %v3704 = vpack.c.bf16 %v3544, %v3536
  %v3705 = vpack.c.bf16 %v3545, %v3537
  %v3706 = vpack.c.bf16 %v3546, %v3538
  %v3707 = vpack.c.bf16 %v3555, %v3547
  %v3708 = vpack.c.bf16 %v3556, %v3548
  %v3709 = vpack.c.bf16 %v3557, %v3549
  %v3710 = vpack.c.bf16 %v3558, %v3550
  %v3711 = vpack.c.bf16 %v3559, %v3551
  %v3712 = vpack.c.bf16 %v3560, %v3552
  %v3713 = vpack.c.bf16 %v3561, %v3553
  %v3714 = vpack.c.bf16 %v3562, %v3554
  %v3715 = vpack.c.bf16 %v3571, %v3563
  %v3716 = vpack.c.bf16 %v3572, %v3564
  %v3717 = vpack.c.bf16 %v3573, %v3565
  %v3718 = vpack.c.bf16 %v3574, %v3566
  %v3719 = vpack.c.bf16 %v3575, %v3567
  %v3720 = vpack.c.bf16 %v3576, %v3568
  %v3721 = vpack.c.bf16 %v3577, %v3569
  %v3722 = vpack.c.bf16 %v3578, %v3570
  %v3723 = vpack.c.bf16 %v3587, %v3579
  %v3724 = vpack.c.bf16 %v3588, %v3580
  %v3725 = vpack.c.bf16 %v3589, %v3581
  %v3726 = vpack.c.bf16 %v3590, %v3582
  %v3727 = vpack.c.bf16 %v3591, %v3583
  %v3728 = vpack.c.bf16 %v3592, %v3584
  %v3729 = vpack.c.bf16 %v3593, %v3585
  %v3730 = vpack.c.bf16 %v3594, %v3586
  %v3731 = vpack.c.bf16 %v3603, %v3595
  %v3732 = vpack.c.bf16 %v3604, %v3596
  %v3733 = vpack.c.bf16 %v3605, %v3597
  %v3734 = vpack.c.bf16 %v3606, %v3598
  %v3735 = vpack.c.bf16 %v3607, %v3599
  %v3736 = vpack.c.bf16 %v3608, %v3600
  %v3737 = vpack.c.bf16 %v3609, %v3601
  %v3738 = vpack.c.bf16 %v3610, %v3602
  %v3739 = vld [vmem:[%s14] sm:$0xff]
  %v3740 = vld [vmem:[%s6] sm:$0xff]
  %v3741 = vld [vmem:[%s7] sm:$0xff]
  %v3742 = vpack.c.bf16 %v2415, %v2412
  %v3743 = vpack.c.bf16 %v2423, %v2420
  %v3744 = vpack.c.bf16 %v2431, %v2428
  %v3745 = vpack.c.bf16 %v2439, %v2436
  %v3746 = vpack.c.bf16 %v2447, %v2444
  %v3747 = vpack.c.bf16 %v2455, %v2452
  %v3748 = vpack.c.bf16 %v2463, %v2460
  %v3749 = vpack.c.bf16 %v2471, %v2468
  %v3750 = vpack.c.bf16 %v2528, %v2525
  %v3751 = vpack.c.bf16 %v2536, %v2533
  %v3752 = vpack.c.bf16 %v2544, %v2541
  %v3753 = vpack.c.bf16 %v2552, %v2549
  %v3754 = vpack.c.bf16 %v2560, %v2557
  %v3755 = vpack.c.bf16 %v2568, %v2565
  %v3756 = vpack.c.bf16 %v2576, %v2573
  %v3757 = vpack.c.bf16 %v2584, %v2581
  %3758 = vxpose.xlu0.b32.start [1/16] %v1977, 128
  %3759 = vxpose.xlu0.b32.cont [2/16] %v1978, 128
  %3760 = vxpose.xlu0.b32.cont [3/16] %v1979, 128
  %3761 = vxpose.xlu0.b32.cont [4/16] %v1980, 128
  %3762 = vxpose.xlu0.b32.cont [5/16] %v1981, 128
  %3763 = vxpose.xlu0.b32.cont [6/16] %v1982, 128
  %3764 = vxpose.xlu0.b32.cont [7/16] %v1983, 128
  %3765 = vxpose.xlu0.b32.cont [8/16] %v1984, 128
  %3766 = vxpose.xlu0.b32.cont [9/16] %v1985, 128
  %3767 = vxpose.xlu0.b32.cont [10/16] %v1986, 128
  %3768 = vxpose.xlu0.b32.cont [11/16] %v1987, 128
  %3769 = vxpose.xlu0.b32.cont [12/16] %v1988, 128
  %3770 = vxpose.xlu0.b32.cont [13/16] %v1989, 128
  %3771 = vxpose.xlu0.b32.cont [14/16] %v1990, 128
  %3772 = vxpose.xlu0.b32.cont [15/16] %v1991, 128
  %3773 = vxpose.xlu0.b32.end [16/16] %v1992, 128
  %v3774 = vpop.trf.xlu0
  %v3775 = vpop.trf.xlu0
  %v3776 = vpop.trf.xlu0
  %v3777 = vpop.trf.xlu0
  %v3778 = vpop.trf.xlu0
  %v3779 = vpop.trf.xlu0
  %v3780 = vpop.trf.xlu0
  %v3781 = vpop.trf.xlu0
  %v3782 = vpop.trf.xlu0
  %v3783 = vpop.trf.xlu0
  %v3784 = vpop.trf.xlu0
  %v3785 = vpop.trf.xlu0
  %v3786 = vpop.trf.xlu0
  %v3787 = vpop.trf.xlu0
  %v3788 = vpop.trf.xlu0
  %v3789 = vpop.trf.xlu0
  %3790 = vxpose.xlu0.b32.start [1/16] %v2412, 128
  %3791 = vxpose.xlu0.b32.cont [2/16] %v2415, 128
  %3792 = vxpose.xlu0.b32.cont [3/16] %v2420, 128
  %3793 = vxpose.xlu0.b32.cont [4/16] %v2423, 128
  %3794 = vxpose.xlu0.b32.cont [5/16] %v2428, 128
  %3795 = vxpose.xlu0.b32.cont [6/16] %v2431, 128
  %3796 = vxpose.xlu0.b32.cont [7/16] %v2436, 128
  %3797 = vxpose.xlu0.b32.cont [8/16] %v2439, 128
  %3798 = vxpose.xlu0.b32.cont [9/16] %v2444, 128
  %3799 = vxpose.xlu0.b32.cont [10/16] %v2447, 128
  %3800 = vxpose.xlu0.b32.cont [11/16] %v2452, 128
  %3801 = vxpose.xlu0.b32.cont [12/16] %v2455, 128
  %3802 = vxpose.xlu0.b32.cont [13/16] %v2460, 128
  %3803 = vxpose.xlu0.b32.cont [14/16] %v2463, 128
  %3804 = vxpose.xlu0.b32.cont [15/16] %v2468, 128
  %3805 = vxpose.xlu0.b32.end [16/16] %v2471, 128
  %v3806 = vpop.trf.xlu0
  %v3807 = vpop.trf.xlu0
  %v3808 = vpop.trf.xlu0
  %v3809 = vpop.trf.xlu0
  %v3810 = vpop.trf.xlu0
  %v3811 = vpop.trf.xlu0
  %v3812 = vpop.trf.xlu0
  %v3813 = vpop.trf.xlu0
  %v3814 = vpop.trf.xlu0
  %v3815 = vpop.trf.xlu0
  %v3816 = vpop.trf.xlu0
  %v3817 = vpop.trf.xlu0
  %v3818 = vpop.trf.xlu0
  %v3819 = vpop.trf.xlu0
  %v3820 = vpop.trf.xlu0
  %v3821 = vpop.trf.xlu0
  %v3822 = vpack.c.bf16 %v3775, %v3774
  %v3823 = vpack.c.bf16 %v3777, %v3776
  %v3824 = vpack.c.bf16 %v3779, %v3778
  %v3825 = vpack.c.bf16 %v3781, %v3780
  %v3826 = vpack.c.bf16 %v3783, %v3782
  %v3827 = vpack.c.bf16 %v3785, %v3784
  %v3828 = vpack.c.bf16 %v3787, %v3786
  %v3829 = vpack.c.bf16 %v3789, %v3788
  %v3830 = vpack.c.bf16 %v3807, %v3806
  %v3831 = vpack.c.bf16 %v3809, %v3808
  %v3832 = vpack.c.bf16 %v3811, %v3810
  %v3833 = vpack.c.bf16 %v3813, %v3812
  %v3834 = vpack.c.bf16 %v3815, %v3814
  %v3835 = vpack.c.bf16 %v3817, %v3816
  %v3836 = vpack.c.bf16 %v3819, %v3818
  %v3837 = vpack.c.bf16 %v3821, %v3820
  %3838 = vxpose.xlu0.b32.start [1/16] %v2073, 128
  %3839 = vxpose.xlu0.b32.cont [2/16] %v2074, 128
  %3840 = vxpose.xlu0.b32.cont [3/16] %v2075, 128
  %3841 = vxpose.xlu0.b32.cont [4/16] %v2076, 128
  %3842 = vxpose.xlu0.b32.cont [5/16] %v2077, 128
  %3843 = vxpose.xlu0.b32.cont [6/16] %v2078, 128
  %3844 = vxpose.xlu0.b32.cont [7/16] %v2079, 128
  %3845 = vxpose.xlu0.b32.cont [8/16] %v2080, 128
  %3846 = vxpose.xlu0.b32.cont [9/16] %v2081, 128
  %3847 = vxpose.xlu0.b32.cont [10/16] %v2082, 128
  %3848 = vxpose.xlu0.b32.cont [11/16] %v2083, 128
  %3849 = vxpose.xlu0.b32.cont [12/16] %v2084, 128
  %3850 = vxpose.xlu0.b32.cont [13/16] %v2085, 128
  %3851 = vxpose.xlu0.b32.cont [14/16] %v2086, 128
  %3852 = vxpose.xlu0.b32.cont [15/16] %v2087, 128
  %3853 = vxpose.xlu0.b32.end [16/16] %v2088, 128
  %v3854 = vpop.trf.xlu0
  %v3855 = vpop.trf.xlu0
  %v3856 = vpop.trf.xlu0
  %v3857 = vpop.trf.xlu0
  %v3858 = vpop.trf.xlu0
  %v3859 = vpop.trf.xlu0
  %v3860 = vpop.trf.xlu0
  %v3861 = vpop.trf.xlu0
  %v3862 = vpop.trf.xlu0
  %v3863 = vpop.trf.xlu0
  %v3864 = vpop.trf.xlu0
  %v3865 = vpop.trf.xlu0
  %v3866 = vpop.trf.xlu0
  %v3867 = vpop.trf.xlu0
  %v3868 = vpop.trf.xlu0
  %v3869 = vpop.trf.xlu0
  %3870 = vxpose.xlu0.b32.start [1/16] %v2525, 128
  %3871 = vxpose.xlu0.b32.cont [2/16] %v2528, 128
  %3872 = vxpose.xlu0.b32.cont [3/16] %v2533, 128
  %3873 = vxpose.xlu0.b32.cont [4/16] %v2536, 128
  %3874 = vxpose.xlu0.b32.cont [5/16] %v2541, 128
  %3875 = vxpose.xlu0.b32.cont [6/16] %v2544, 128
  %3876 = vxpose.xlu0.b32.cont [7/16] %v2549, 128
  %3877 = vxpose.xlu0.b32.cont [8/16] %v2552, 128
  %3878 = vxpose.xlu0.b32.cont [9/16] %v2557, 128
  %3879 = vxpose.xlu0.b32.cont [10/16] %v2560, 128
  %3880 = vxpose.xlu0.b32.cont [11/16] %v2565, 128
  %3881 = vxpose.xlu0.b32.cont [12/16] %v2568, 128
  %3882 = vxpose.xlu0.b32.cont [13/16] %v2573, 128
  %3883 = vxpose.xlu0.b32.cont [14/16] %v2576, 128
  %3884 = vxpose.xlu0.b32.cont [15/16] %v2581, 128
  %3885 = vxpose.xlu0.b32.end [16/16] %v2584, 128
  %v3886 = vpop.trf.xlu0
  %v3887 = vpop.trf.xlu0
  %v3888 = vpop.trf.xlu0
  %v3889 = vpop.trf.xlu0
  %v3890 = vpop.trf.xlu0
  %v3891 = vpop.trf.xlu0
  %v3892 = vpop.trf.xlu0
  %v3893 = vpop.trf.xlu0
  %v3894 = vpop.trf.xlu0
  %v3895 = vpop.trf.xlu0
  %v3896 = vpop.trf.xlu0
  %v3897 = vpop.trf.xlu0
  %v3898 = vpop.trf.xlu0
  %v3899 = vpop.trf.xlu0
  %v3900 = vpop.trf.xlu0
  %v3901 = vpop.trf.xlu0
  %v3902 = vpack.c.bf16 %v3855, %v3854
  %v3903 = vpack.c.bf16 %v3857, %v3856
  %v3904 = vpack.c.bf16 %v3859, %v3858
  %v3905 = vpack.c.bf16 %v3861, %v3860
  %v3906 = vpack.c.bf16 %v3863, %v3862
  %v3907 = vpack.c.bf16 %v3865, %v3864
  %v3908 = vpack.c.bf16 %v3867, %v3866
  %v3909 = vpack.c.bf16 %v3869, %v3868
  %v3910 = vpack.c.bf16 %v3887, %v3886
  %v3911 = vpack.c.bf16 %v3889, %v3888
  %v3912 = vpack.c.bf16 %v3891, %v3890
  %v3913 = vpack.c.bf16 %v3893, %v3892
  %v3914 = vpack.c.bf16 %v3895, %v3894
  %v3915 = vpack.c.bf16 %v3897, %v3896
  %v3916 = vpack.c.bf16 %v3899, %v3898
  %v3917 = vpack.c.bf16 %v3901, %v3900
  %3918 = vmatprep.subr.bf16.mxu0 %v3668
  %3919 = vmatpush1.bf16.msra.mxu0 %v3667
  %3920 = vmatprep.subr.bf16.mxu0 %v3660
  %3921 = vmatpush1.bf16.msra.mxu0 %v3659
  %3922 = vmatprep.subr.bf16.mxu0 %v3652
  %3923 = vmatpush1.bf16.msra.mxu0 %v3651
  %3924 = vmatprep.subr.bf16.mxu0 %v3644
  %3925 = vmatpush1.bf16.msra.mxu0 %v3643
  %3926 = vmatprep.subr.bf16.mxu0 %v3636
  %3927 = vmatpush1.bf16.msra.mxu0 %v3635
  %3928 = vmatprep.subr.bf16.mxu0 %v3628
  %3929 = vmatpush1.bf16.msra.mxu0 %v3627
  %3930 = vmatprep.subr.bf16.mxu0 %v3620
  %3931 = vmatpush1.bf16.msra.mxu0 %v3619
  %3932 = vmatprep.subr.bf16.mxu0 %v3612
  %3933 = vmatpush1.bf16.msra.mxu0 %v3611
  %3934 = vmatprep.subr.bf16.mxu0 %v3732
  %3935 = vmatpush2.bf16.msra.mxu0 %v3731
  %3936 = vmatprep.subr.bf16.mxu0 %v3724
  %3937 = vmatpush2.bf16.msra.mxu0 %v3723
  %3938 = vmatprep.subr.bf16.mxu0 %v3716
  %3939 = vmatpush2.bf16.msra.mxu0 %v3715
  %3940 = vmatprep.subr.bf16.mxu0 %v3708
  %3941 = vmatpush2.bf16.msra.mxu0 %v3707
  %3942 = vmatprep.subr.bf16.mxu0 %v3700
  %3943 = vmatpush2.bf16.msra.mxu0 %v3699
  %3944 = vmatprep.subr.bf16.mxu0 %v3692
  %3945 = vmatpush2.bf16.msra.mxu0 %v3691
  %3946 = vmatprep.subr.bf16.mxu0 %v3684
  %3947 = vmatpush2.bf16.msra.mxu0 %v3683
  %3948 = vmatprep.subr.bf16.mxu0 %v3676
  %3949 = vmatpush2.bf16.msra.mxu0 %v3675
  %3950 = vmatprep.mubr.bf16.mxu0 0
  %3951 = vmatmul.mubr.bf16.gmra.mxu0 0
  %v3952 = vpop.f32.mrf.mxu0
  %v3953 = vadd.f32 0.0, %v3952
  %v3954 = vpop.f32.mrf.mxu0
  %v3955 = vadd.f32 0.0, %v3954
  %v3956 = vpop.f32.mrf.mxu0
  %v3957 = vadd.f32 0.0, %v3956
  %v3958 = vpop.f32.mrf.mxu0
  %v3959 = vadd.f32 0.0, %v3958
  %3960 = vdwg.mxu0
  %3961 = vmatprep.subr.bf16.mxu0 %v3670
  %3962 = vmatpush1.bf16.msra.mxu0 %v3669
  %3963 = vmatprep.subr.bf16.mxu0 %v3662
  %3964 = vmatpush1.bf16.msra.mxu0 %v3661
  %3965 = vmatprep.subr.bf16.mxu0 %v3654
  %3966 = vmatpush1.bf16.msra.mxu0 %v3653
  %3967 = vmatprep.subr.bf16.mxu0 %v3646
  %3968 = vmatpush1.bf16.msra.mxu0 %v3645
  %3969 = vmatprep.subr.bf16.mxu0 %v3638
  %3970 = vmatpush1.bf16.msra.mxu0 %v3637
  %3971 = vmatprep.subr.bf16.mxu0 %v3630
  %3972 = vmatpush1.bf16.msra.mxu0 %v3629
  %3973 = vmatprep.subr.bf16.mxu0 %v3622
  %3974 = vmatpush1.bf16.msra.mxu0 %v3621
  %3975 = vmatprep.subr.bf16.mxu0 %v3614
  %3976 = vmatpush1.bf16.msra.mxu0 %v3613
  %3977 = vmatprep.subr.bf16.mxu0 %v3734
  %3978 = vmatpush2.bf16.msra.mxu0 %v3733
  %3979 = vmatprep.subr.bf16.mxu0 %v3726
  %3980 = vmatpush2.bf16.msra.mxu0 %v3725
  %3981 = vmatprep.subr.bf16.mxu0 %v3718
  %3982 = vmatpush2.bf16.msra.mxu0 %v3717
  %3983 = vmatprep.subr.bf16.mxu0 %v3710
  %3984 = vmatpush2.bf16.msra.mxu0 %v3709
  %3985 = vmatprep.subr.bf16.mxu0 %v3702
  %3986 = vmatpush2.bf16.msra.mxu0 %v3701
  %3987 = vmatprep.subr.bf16.mxu0 %v3694
  %3988 = vmatpush2.bf16.msra.mxu0 %v3693
  %3989 = vmatprep.subr.bf16.mxu0 %v3686
  %3990 = vmatpush2.bf16.msra.mxu0 %v3685
  %3991 = vmatprep.subr.bf16.mxu0 %v3678
  %3992 = vmatpush2.bf16.msra.mxu0 %v3677
  %3993 = vmatprep.mubr.bf16.mxu0 0
  %3994 = vmatmul.mubr.bf16.gmra.mxu0 0
  %v3995 = vpop.f32.mrf.mxu0
  %v3996 = vadd.f32 0.0, %v3995
  %v3997 = vpop.f32.mrf.mxu0
  %v3998 = vadd.f32 0.0, %v3997
  %v3999 = vpop.f32.mrf.mxu0
  %v4000 = vadd.f32 0.0, %v3999
  %v4001 = vpop.f32.mrf.mxu0
  %v4002 = vadd.f32 0.0, %v4001
  %4003 = vdwg.mxu0
  %4004 = vmatprep.subr.bf16.mxu0 %v3672
  %4005 = vmatpush1.bf16.msra.mxu0 %v3671
  %4006 = vmatprep.subr.bf16.mxu0 %v3664
  %4007 = vmatpush1.bf16.msra.mxu0 %v3663
  %4008 = vmatprep.subr.bf16.mxu0 %v3656
  %4009 = vmatpush1.bf16.msra.mxu0 %v3655
  %4010 = vmatprep.subr.bf16.mxu0 %v3648
  %4011 = vmatpush1.bf16.msra.mxu0 %v3647
  %4012 = vmatprep.subr.bf16.mxu0 %v3640
  %4013 = vmatpush1.bf16.msra.mxu0 %v3639
  %4014 = vmatprep.subr.bf16.mxu0 %v3632
  %4015 = vmatpush1.bf16.msra.mxu0 %v3631
  %4016 = vmatprep.subr.bf16.mxu0 %v3624
  %4017 = vmatpush1.bf16.msra.mxu0 %v3623
  %4018 = vmatprep.subr.bf16.mxu0 %v3616
  %4019 = vmatpush1.bf16.msra.mxu0 %v3615
  %4020 = vmatprep.subr.bf16.mxu0 %v3736
  %4021 = vmatpush2.bf16.msra.mxu0 %v3735
  %4022 = vmatprep.subr.bf16.mxu0 %v3728
  %4023 = vmatpush2.bf16.msra.mxu0 %v3727
  %4024 = vmatprep.subr.bf16.mxu0 %v3720
  %4025 = vmatpush2.bf16.msra.mxu0 %v3719
  %4026 = vmatprep.subr.bf16.mxu0 %v3712
  %4027 = vmatpush2.bf16.msra.mxu0 %v3711
  %4028 = vmatprep.subr.bf16.mxu0 %v3704
  %4029 = vmatpush2.bf16.msra.mxu0 %v3703
  %4030 = vmatprep.subr.bf16.mxu0 %v3696
  %4031 = vmatpush2.bf16.msra.mxu0 %v3695
  %4032 = vmatprep.subr.bf16.mxu0 %v3688
  %4033 = vmatpush2.bf16.msra.mxu0 %v3687
  %4034 = vmatprep.subr.bf16.mxu0 %v3680
  %4035 = vmatpush2.bf16.msra.mxu0 %v3679
  %4036 = vmatprep.mubr.bf16.mxu0 0
  %4037 = vmatmul.mubr.bf16.gmra.mxu0 0
  %v4038 = vpop.f32.mrf.mxu0
  %v4039 = vadd.f32 0.0, %v4038
  %v4040 = vpop.f32.mrf.mxu0
  %v4041 = vadd.f32 0.0, %v4040
  %v4042 = vpop.f32.mrf.mxu0
  %v4043 = vadd.f32 0.0, %v4042
  %v4044 = vpop.f32.mrf.mxu0
  %v4045 = vadd.f32 0.0, %v4044
  %4046 = vdwg.mxu0
  %4047 = vmatprep.subr.bf16.mxu0 %v3674
  %4048 = vmatpush1.bf16.msra.mxu0 %v3673
  %4049 = vmatprep.subr.bf16.mxu0 %v3666
  %4050 = vmatpush1.bf16.msra.mxu0 %v3665
  %4051 = vmatprep.subr.bf16.mxu0 %v3658
  %4052 = vmatpush1.bf16.msra.mxu0 %v3657
  %4053 = vmatprep.subr.bf16.mxu0 %v3650
  %4054 = vmatpush1.bf16.msra.mxu0 %v3649
  %4055 = vmatprep.subr.bf16.mxu0 %v3642
  %4056 = vmatpush1.bf16.msra.mxu0 %v3641
  %4057 = vmatprep.subr.bf16.mxu0 %v3634
  %4058 = vmatpush1.bf16.msra.mxu0 %v3633
  %4059 = vmatprep.subr.bf16.mxu0 %v3626
  %4060 = vmatpush1.bf16.msra.mxu0 %v3625
  %4061 = vmatprep.subr.bf16.mxu0 %v3618
  %4062 = vmatpush1.bf16.msra.mxu0 %v3617
  %4063 = vmatprep.subr.bf16.mxu0 %v3738
  %4064 = vmatpush2.bf16.msra.mxu0 %v3737
  %4065 = vmatprep.subr.bf16.mxu0 %v3730
  %4066 = vmatpush2.bf16.msra.mxu0 %v3729
  %4067 = vmatprep.subr.bf16.mxu0 %v3722
  %4068 = vmatpush2.bf16.msra.mxu0 %v3721
  %4069 = vmatprep.subr.bf16.mxu0 %v3714
  %4070 = vmatpush2.bf16.msra.mxu0 %v3713
  %4071 = vmatprep.subr.bf16.mxu0 %v3706
  %4072 = vmatpush2.bf16.msra.mxu0 %v3705
  %4073 = vmatprep.subr.bf16.mxu0 %v3698
  %4074 = vmatpush2.bf16.msra.mxu0 %v3697
  %4075 = vmatprep.subr.bf16.mxu0 %v3690
  %4076 = vmatpush2.bf16.msra.mxu0 %v3689
  %4077 = vmatprep.subr.bf16.mxu0 %v3682
  %4078 = vmatpush2.bf16.msra.mxu0 %v3681
  %4079 = vmatprep.mubr.bf16.mxu0 0
  %4080 = vmatmul.mubr.bf16.gmra.mxu0 0
  %v4081 = vpop.f32.mrf.mxu0
  %v4082 = vadd.f32 0.0, %v4081
  %v4083 = vpop.f32.mrf.mxu0
  %v4084 = vadd.f32 0.0, %v4083
  %v4085 = vpop.f32.mrf.mxu0
  %v4086 = vadd.f32 0.0, %v4085
  %v4087 = vpop.f32.mrf.mxu0
  %v4088 = vadd.f32 0.0, %v4087
  %4089 = vdwg.mxu0
  %4090 = vmatprep.subr.bf16.mxu0 %v3156
  %4091 = vmatpush1.bf16.msra.mxu0 %v3155
  %4092 = vmatprep.subr.bf16.mxu0 %v3148
  %4093 = vmatpush1.bf16.msra.mxu0 %v3147
  %4094 = vmatprep.subr.bf16.mxu0 %v3140
  %4095 = vmatpush1.bf16.msra.mxu0 %v3139
  %4096 = vmatprep.subr.bf16.mxu0 %v3132
  %4097 = vmatpush1.bf16.msra.mxu0 %v3131
  %4098 = vmatprep.subr.bf16.mxu0 %v3124
  %4099 = vmatpush1.bf16.msra.mxu0 %v3123
  %4100 = vmatprep.subr.bf16.mxu0 %v3116
  %4101 = vmatpush1.bf16.msra.mxu0 %v3115
  %4102 = vmatprep.subr.bf16.mxu0 %v3108
  %4103 = vmatpush1.bf16.msra.mxu0 %v3107
  %4104 = vmatprep.subr.bf16.mxu0 %v3100
  %4105 = vmatpush1.bf16.msra.mxu0 %v3099
  %4106 = vmatprep.subr.bf16.mxu0 %v3220
  %4107 = vmatpush2.bf16.msra.mxu0 %v3219
  %4108 = vmatprep.subr.bf16.mxu0 %v3212
  %4109 = vmatpush2.bf16.msra.mxu0 %v3211
  %4110 = vmatprep.subr.bf16.mxu0 %v3204
  %4111 = vmatpush2.bf16.msra.mxu0 %v3203
  %4112 = vmatprep.subr.bf16.mxu0 %v3196
  %4113 = vmatpush2.bf16.msra.mxu0 %v3195
  %4114 = vmatprep.subr.bf16.mxu0 %v3188
  %4115 = vmatpush2.bf16.msra.mxu0 %v3187
  %4116 = vmatprep.subr.bf16.mxu0 %v3180
  %4117 = vmatpush2.bf16.msra.mxu0 %v3179
  %4118 = vmatprep.subr.bf16.mxu0 %v3172
  %4119 = vmatpush2.bf16.msra.mxu0 %v3171
  %4120 = vmatprep.subr.bf16.mxu0 %v3164
  %4121 = vmatpush2.bf16.msra.mxu0 %v3163
  %4122 = vmatprep.mubr.bf16.mxu0 0
  %4123 = vmatmul.mubr.bf16.gmra.mxu0 0
  %v4124 = vpop.f32.mrf.mxu0
  %v4125 = vadd.f32 %v3953, %v4124
  %v4126 = vpop.f32.mrf.mxu0
  %v4127 = vadd.f32 %v3955, %v4126
  %v4128 = vpop.f32.mrf.mxu0
  %v4129 = vadd.f32 %v3957, %v4128
  %v4130 = vpop.f32.mrf.mxu0
  %v4131 = vadd.f32 %v3959, %v4130
  %4132 = vdwg.mxu0
  %4133 = vmatprep.subr.bf16.mxu0 %v3284
  %4134 = vmatpush1.bf16.msra.mxu0 %v3283
  %4135 = vmatprep.subr.bf16.mxu0 %v3276
  %4136 = vmatpush1.bf16.msra.mxu0 %v3275
  %4137 = vmatprep.subr.bf16.mxu0 %v3268
  %4138 = vmatpush1.bf16.msra.mxu0 %v3267
  %4139 = vmatprep.subr.bf16.mxu0 %v3260
  %4140 = vmatpush1.bf16.msra.mxu0 %v3259
  %4141 = vmatprep.subr.bf16.mxu0 %v3252
  %4142 = vmatpush1.bf16.msra.mxu0 %v3251
  %4143 = vmatprep.subr.bf16.mxu0 %v3244
  %4144 = vmatpush1.bf16.msra.mxu0 %v3243
  %4145 = vmatprep.subr.bf16.mxu0 %v3236
  %4146 = vmatpush1.bf16.msra.mxu0 %v3235
  %4147 = vmatprep.subr.bf16.mxu0 %v3228
  %4148 = vmatpush1.bf16.msra.mxu0 %v3227
  %4149 = vmatprep.subr.bf16.mxu0 %v3348
  %4150 = vmatpush2.bf16.msra.mxu0 %v3347
  %4151 = vmatprep.subr.bf16.mxu0 %v3340
  %4152 = vmatpush2.bf16.msra.mxu0 %v3339
  %4153 = vmatprep.subr.bf16.mxu0 %v3332
  %4154 = vmatpush2.bf16.msra.mxu0 %v3331
  %4155 = vmatprep.subr.bf16.mxu0 %v3324
  %4156 = vmatpush2.bf16.msra.mxu0 %v3323
  %4157 = vmatprep.subr.bf16.mxu0 %v3316
  %4158 = vmatpush2.bf16.msra.mxu0 %v3315
  %4159 = vmatprep.subr.bf16.mxu0 %v3308
  %4160 = vmatpush2.bf16.msra.mxu0 %v3307
  %4161 = vmatprep.subr.bf16.mxu0 %v3300
  %4162 = vmatpush2.bf16.msra.mxu0 %v3299
  %4163 = vmatprep.subr.bf16.mxu0 %v3292
  %4164 = vmatpush2.bf16.msra.mxu0 %v3291
  %4165 = vmatprep.mubr.bf16.mxu0 0
  %4166 = vmatmul.mubr.bf16.gmra.mxu0 0
  %v4167 = vpop.f32.mrf.mxu0
  %v4168 = vadd.f32 %v4125, %v4167
  %v4169 = vpop.f32.mrf.mxu0
  %v4170 = vadd.f32 %v4127, %v4169
  %v4171 = vpop.f32.mrf.mxu0
  %v4172 = vadd.f32 %v4129, %v4171
  %v4173 = vpop.f32.mrf.mxu0
  %v4174 = vadd.f32 %v4131, %v4173
  %4175 = vdwg.mxu0
  %4176 = vmatprep.subr.bf16.mxu0 %v3158
  %4177 = vmatpush1.bf16.msra.mxu0 %v3157
  %4178 = vmatprep.subr.bf16.mxu0 %v3150
  %4179 = vmatpush1.bf16.msra.mxu0 %v3149
  %4180 = vmatprep.subr.bf16.mxu0 %v3142
  %4181 = vmatpush1.bf16.msra.mxu0 %v3141
  %4182 = vmatprep.subr.bf16.mxu0 %v3134
  %4183 = vmatpush1.bf16.msra.mxu0 %v3133
  %4184 = vmatprep.subr.bf16.mxu0 %v3126
  %4185 = vmatpush1.bf16.msra.mxu0 %v3125
  %4186 = vmatprep.subr.bf16.mxu0 %v3118
  %4187 = vmatpush1.bf16.msra.mxu0 %v3117
  %4188 = vmatprep.subr.bf16.mxu0 %v3110
  %4189 = vmatpush1.bf16.msra.mxu0 %v3109
  %4190 = vmatprep.subr.bf16.mxu0 %v3102
  %4191 = vmatpush1.bf16.msra.mxu0 %v3101
  %4192 = vmatprep.subr.bf16.mxu0 %v3222
  %4193 = vmatpush2.bf16.msra.mxu0 %v3221
  %4194 = vmatprep.subr.bf16.mxu0 %v3214
  %4195 = vmatpush2.bf16.msra.mxu0 %v3213
  %4196 = vmatprep.subr.bf16.mxu0 %v3206
  %4197 = vmatpush2.bf16.msra.mxu0 %v3205
  %4198 = vmatprep.subr.bf16.mxu0 %v3198
  %4199 = vmatpush2.bf16.msra.mxu0 %v3197
  %4200 = vmatprep.subr.bf16.mxu0 %v3190
  %4201 = vmatpush2.bf16.msra.mxu0 %v3189
  %4202 = vmatprep.subr.bf16.mxu0 %v3182
  %4203 = vmatpush2.bf16.msra.mxu0 %v3181
  %4204 = vmatprep.subr.bf16.mxu0 %v3174
  %4205 = vmatpush2.bf16.msra.mxu0 %v3173
  %4206 = vmatprep.subr.bf16.mxu0 %v3166
  %4207 = vmatpush2.bf16.msra.mxu0 %v3165
  %4208 = vmatprep.mubr.bf16.mxu0 0
  %4209 = vmatmul.mubr.bf16.gmra.mxu0 0
  %v4210 = vpop.f32.mrf.mxu0
  %v4211 = vadd.f32 %v3996, %v4210
  %v4212 = vpop.f32.mrf.mxu0
  %v4213 = vadd.f32 %v3998, %v4212
  %v4214 = vpop.f32.mrf.mxu0
  %v4215 = vadd.f32 %v4000, %v4214
  %v4216 = vpop.f32.mrf.mxu0
  %v4217 = vadd.f32 %v4002, %v4216
  %4218 = vdwg.mxu0
  %4219 = vmatprep.subr.bf16.mxu0 %v3286
  %4220 = vmatpush1.bf16.msra.mxu0 %v3285
  %4221 = vmatprep.subr.bf16.mxu0 %v3278
  %4222 = vmatpush1.bf16.msra.mxu0 %v3277
  %4223 = vmatprep.subr.bf16.mxu0 %v3270
  %4224 = vmatpush1.bf16.msra.mxu0 %v3269
  %4225 = vmatprep.subr.bf16.mxu0 %v3262
  %4226 = vmatpush1.bf16.msra.mxu0 %v3261
  %4227 = vmatprep.subr.bf16.mxu0 %v3254
  %4228 = vmatpush1.bf16.msra.mxu0 %v3253
  %4229 = vmatprep.subr.bf16.mxu0 %v3246
  %4230 = vmatpush1.bf16.msra.mxu0 %v3245
  %4231 = vmatprep.subr.bf16.mxu0 %v3238
  %4232 = vmatpush1.bf16.msra.mxu0 %v3237
  %4233 = vmatprep.subr.bf16.mxu0 %v3230
  %4234 = vmatpush1.bf16.msra.mxu0 %v3229
  %4235 = vmatprep.subr.bf16.mxu0 %v3350
  %4236 = vmatpush2.bf16.msra.mxu0 %v3349
  %4237 = vmatprep.subr.bf16.mxu0 %v3342
  %4238 = vmatpush2.bf16.msra.mxu0 %v3341
  %4239 = vmatprep.subr.bf16.mxu0 %v3334
  %4240 = vmatpush2.bf16.msra.mxu0 %v3333
  %4241 = vmatprep.subr.bf16.mxu0 %v3326
  %4242 = vmatpush2.bf16.msra.mxu0 %v3325
  %4243 = vmatprep.subr.bf16.mxu0 %v3318
  %4244 = vmatpush2.bf16.msra.mxu0 %v3317
  %4245 = vmatprep.subr.bf16.mxu0 %v3310
  %4246 = vmatpush2.bf16.msra.mxu0 %v3309
  %4247 = vmatprep.subr.bf16.mxu0 %v3302
  %4248 = vmatpush2.bf16.msra.mxu0 %v3301
  %4249 = vmatprep.subr.bf16.mxu0 %v3294
  %4250 = vmatpush2.bf16.msra.mxu0 %v3293
  %4251 = vmatprep.mubr.bf16.mxu0 0
  %4252 = vmatmul.mubr.bf16.gmra.mxu0 0
  %v4253 = vpop.f32.mrf.mxu0
  %v4254 = vadd.f32 %v4211, %v4253
  %v4255 = vpop.f32.mrf.mxu0
  %v4256 = vadd.f32 %v4213, %v4255
  %v4257 = vpop.f32.mrf.mxu0
  %v4258 = vadd.f32 %v4215, %v4257
  %v4259 = vpop.f32.mrf.mxu0
  %v4260 = vadd.f32 %v4217, %v4259
  %4261 = vdwg.mxu0
  %4262 = vmatprep.subr.bf16.mxu0 %v3160
  %4263 = vmatpush1.bf16.msra.mxu0 %v3159
  %4264 = vmatprep.subr.bf16.mxu0 %v3152
  %4265 = vmatpush1.bf16.msra.mxu0 %v3151
  %4266 = vmatprep.subr.bf16.mxu0 %v3144
  %4267 = vmatpush1.bf16.msra.mxu0 %v3143
  %4268 = vmatprep.subr.bf16.mxu0 %v3136
  %4269 = vmatpush1.bf16.msra.mxu0 %v3135
  %4270 = vmatprep.subr.bf16.mxu0 %v3128
  %4271 = vmatpush1.bf16.msra.mxu0 %v3127
  %4272 = vmatprep.subr.bf16.mxu0 %v3120
  %4273 = vmatpush1.bf16.msra.mxu0 %v3119
  %4274 = vmatprep.subr.bf16.mxu0 %v3112
  %4275 = vmatpush1.bf16.msra.mxu0 %v3111
  %4276 = vmatprep.subr.bf16.mxu0 %v3104
  %4277 = vmatpush1.bf16.msra.mxu0 %v3103
  %4278 = vmatprep.subr.bf16.mxu0 %v3224
  %4279 = vmatpush2.bf16.msra.mxu0 %v3223
  %4280 = vmatprep.subr.bf16.mxu0 %v3216
  %4281 = vmatpush2.bf16.msra.mxu0 %v3215
  %4282 = vmatprep.subr.bf16.mxu0 %v3208
  %4283 = vmatpush2.bf16.msra.mxu0 %v3207
  %4284 = vmatprep.subr.bf16.mxu0 %v3200
  %4285 = vmatpush2.bf16.msra.mxu0 %v3199
  %4286 = vmatprep.subr.bf16.mxu0 %v3192
  %4287 = vmatpush2.bf16.msra.mxu0 %v3191
  %4288 = vmatprep.subr.bf16.mxu0 %v3184
  %4289 = vmatpush2.bf16.msra.mxu0 %v3183
  %4290 = vmatprep.subr.bf16.mxu0 %v3176
  %4291 = vmatpush2.bf16.msra.mxu0 %v3175
  %4292 = vmatprep.subr.bf16.mxu0 %v3168
  %4293 = vmatpush2.bf16.msra.mxu0 %v3167
  %4294 = vmatprep.mubr.bf16.mxu0 0
  %4295 = vmatmul.mubr.bf16.gmra.mxu0 0
  %v4296 = vpop.f32.mrf.mxu0
  %v4297 = vadd.f32 %v4039, %v4296
  %v4298 = vpop.f32.mrf.mxu0
  %v4299 = vadd.f32 %v4041, %v4298
  %v4300 = vpop.f32.mrf.mxu0
  %v4301 = vadd.f32 %v4043, %v4300
  %v4302 = vpop.f32.mrf.mxu0
  %v4303 = vadd.f32 %v4045, %v4302
  %4304 = vdwg.mxu0
  %4305 = vmatprep.subr.bf16.mxu0 %v3288
  %4306 = vmatpush1.bf16.msra.mxu0 %v3287
  %4307 = vmatprep.subr.bf16.mxu0 %v3280
  %4308 = vmatpush1.bf16.msra.mxu0 %v3279
  %4309 = vmatprep.subr.bf16.mxu0 %v3272
  %4310 = vmatpush1.bf16.msra.mxu0 %v3271
  %4311 = vmatprep.subr.bf16.mxu0 %v3264
  %4312 = vmatpush1.bf16.msra.mxu0 %v3263
  %4313 = vmatprep.subr.bf16.mxu0 %v3256
  %4314 = vmatpush1.bf16.msra.mxu0 %v3255
  %4315 = vmatprep.subr.bf16.mxu0 %v3248
  %4316 = vmatpush1.bf16.msra.mxu0 %v3247
  %4317 = vmatprep.subr.bf16.mxu0 %v3240
  %4318 = vmatpush1.bf16.msra.mxu0 %v3239
  %4319 = vmatprep.subr.bf16.mxu0 %v3232
  %4320 = vmatpush1.bf16.msra.mxu0 %v3231
  %4321 = vmatprep.subr.bf16.mxu0 %v3352
  %4322 = vmatpush2.bf16.msra.mxu0 %v3351
  %4323 = vmatprep.subr.bf16.mxu0 %v3344
  %4324 = vmatpush2.bf16.msra.mxu0 %v3343
  %4325 = vmatprep.subr.bf16.mxu0 %v3336
  %4326 = vmatpush2.bf16.msra.mxu0 %v3335
  %4327 = vmatprep.subr.bf16.mxu0 %v3328
  %4328 = vmatpush2.bf16.msra.mxu0 %v3327
  %4329 = vmatprep.subr.bf16.mxu0 %v3320
  %4330 = vmatpush2.bf16.msra.mxu0 %v3319
  %4331 = vmatprep.subr.bf16.mxu0 %v3312
  %4332 = vmatpush2.bf16.msra.mxu0 %v3311
  %4333 = vmatprep.subr.bf16.mxu0 %v3304
  %4334 = vmatpush2.bf16.msra.mxu0 %v3303
  %4335 = vmatprep.subr.bf16.mxu0 %v3296
  %4336 = vmatpush2.bf16.msra.mxu0 %v3295
  %4337 = vmatprep.mubr.bf16.mxu0 0
  %4338 = vmatmul.mubr.bf16.gmra.mxu0 0
  %v4339 = vpop.f32.mrf.mxu0
  %v4340 = vadd.f32 %v4297, %v4339
  %v4341 = vpop.f32.mrf.mxu0
  %v4342 = vadd.f32 %v4299, %v4341
  %v4343 = vpop.f32.mrf.mxu0
  %v4344 = vadd.f32 %v4301, %v4343
  %v4345 = vpop.f32.mrf.mxu0
  %v4346 = vadd.f32 %v4303, %v4345
  %4347 = vdwg.mxu0
  %4348 = vmatprep.subr.bf16.mxu0 %v3162
  %4349 = vmatpush1.bf16.msra.mxu0 %v3161
  %4350 = vmatprep.subr.bf16.mxu0 %v3154
  %4351 = vmatpush1.bf16.msra.mxu0 %v3153
  %4352 = vmatprep.subr.bf16.mxu0 %v3146
  %4353 = vmatpush1.bf16.msra.mxu0 %v3145
  %4354 = vmatprep.subr.bf16.mxu0 %v3138
  %4355 = vmatpush1.bf16.msra.mxu0 %v3137
  %4356 = vmatprep.subr.bf16.mxu0 %v3130
  %4357 = vmatpush1.bf16.msra.mxu0 %v3129
  %4358 = vmatprep.subr.bf16.mxu0 %v3122
  %4359 = vmatpush1.bf16.msra.mxu0 %v3121
  %4360 = vmatprep.subr.bf16.mxu0 %v3114
  %4361 = vmatpush1.bf16.msra.mxu0 %v3113
  %4362 = vmatprep.subr.bf16.mxu0 %v3106
  %4363 = vmatpush1.bf16.msra.mxu0 %v3105
  %4364 = vmatprep.subr.bf16.mxu0 %v3226
  %4365 = vmatpush2.bf16.msra.mxu0 %v3225
  %4366 = vmatprep.subr.bf16.mxu0 %v3218
  %4367 = vmatpush2.bf16.msra.mxu0 %v3217
  %4368 = vmatprep.subr.bf16.mxu0 %v3210
  %4369 = vmatpush2.bf16.msra.mxu0 %v3209
  %4370 = vmatprep.subr.bf16.mxu0 %v3202
  %4371 = vmatpush2.bf16.msra.mxu0 %v3201
  %4372 = vmatprep.subr.bf16.mxu0 %v3194
  %4373 = vmatpush2.bf16.msra.mxu0 %v3193
  %4374 = vmatprep.subr.bf16.mxu0 %v3186
  %4375 = vmatpush2.bf16.msra.mxu0 %v3185
  %4376 = vmatprep.subr.bf16.mxu0 %v3178
  %4377 = vmatpush2.bf16.msra.mxu0 %v3177
  %4378 = vmatprep.subr.bf16.mxu0 %v3170
  %4379 = vmatpush2.bf16.msra.mxu0 %v3169
  %4380 = vmatprep.mubr.bf16.mxu0 0
  %4381 = vmatmul.mubr.bf16.gmra.mxu0 0
  %v4382 = vpop.f32.mrf.mxu0
  %v4383 = vadd.f32 %v4082, %v4382
  %v4384 = vpop.f32.mrf.mxu0
  %v4385 = vadd.f32 %v4084, %v4384
  %v4386 = vpop.f32.mrf.mxu0
  %v4387 = vadd.f32 %v4086, %v4386
  %v4388 = vpop.f32.mrf.mxu0
  %v4389 = vadd.f32 %v4088, %v4388
  %4390 = vdwg.mxu0
  %4391 = vmatprep.subr.bf16.mxu0 %v3290
  %4392 = vmatpush1.bf16.msra.mxu0 %v3289
  %4393 = vmatprep.subr.bf16.mxu0 %v3282
  %4394 = vmatpush1.bf16.msra.mxu0 %v3281
  %4395 = vmatprep.subr.bf16.mxu0 %v3274
  %4396 = vmatpush1.bf16.msra.mxu0 %v3273
  %4397 = vmatprep.subr.bf16.mxu0 %v3266
  %4398 = vmatpush1.bf16.msra.mxu0 %v3265
  %4399 = vmatprep.subr.bf16.mxu0 %v3258
  %4400 = vmatpush1.bf16.msra.mxu0 %v3257
  %4401 = vmatprep.subr.bf16.mxu0 %v3250
  %4402 = vmatpush1.bf16.msra.mxu0 %v3249
  %4403 = vmatprep.subr.bf16.mxu0 %v3242
  %4404 = vmatpush1.bf16.msra.mxu0 %v3241
  %4405 = vmatprep.subr.bf16.mxu0 %v3234
  %4406 = vmatpush1.bf16.msra.mxu0 %v3233
  %4407 = vmatprep.subr.bf16.mxu0 %v3354
  %4408 = vmatpush2.bf16.msra.mxu0 %v3353
  %4409 = vmatprep.subr.bf16.mxu0 %v3346
  %4410 = vmatpush2.bf16.msra.mxu0 %v3345
  %4411 = vmatprep.subr.bf16.mxu0 %v3338
  %4412 = vmatpush2.bf16.msra.mxu0 %v3337
  %4413 = vmatprep.subr.bf16.mxu0 %v3330
  %4414 = vmatpush2.bf16.msra.mxu0 %v3329
  %4415 = vmatprep.subr.bf16.mxu0 %v3322
  %4416 = vmatpush2.bf16.msra.mxu0 %v3321
  %4417 = vmatprep.subr.bf16.mxu0 %v3314
  %4418 = vmatpush2.bf16.msra.mxu0 %v3313
  %4419 = vmatprep.subr.bf16.mxu0 %v3306
  %4420 = vmatpush2.bf16.msra.mxu0 %v3305
  %4421 = vmatprep.subr.bf16.mxu0 %v3298
  %4422 = vmatpush2.bf16.msra.mxu0 %v3297
  %4423 = vmatprep.mubr.bf16.mxu0 0
  %4424 = vmatmul.mubr.bf16.gmra.mxu0 0
  %v4425 = vpop.f32.mrf.mxu0
  %v4426 = vadd.f32 %v4383, %v4425
  %v4427 = vpop.f32.mrf.mxu0
  %v4428 = vadd.f32 %v4385, %v4427
  %v4429 = vpop.f32.mrf.mxu0
  %v4430 = vadd.f32 %v4387, %v4429
  %v4431 = vpop.f32.mrf.mxu0
  %v4432 = vadd.f32 %v4389, %v4431
  %4433 = vdwg.mxu0
  %v4435 = vlaneseq
  %v4436 = vshrl.u32 %v4435, 7
  %v4437 = vsub.s32 0, %v4436
  %v4438 = vrot.slane %v3739, %v4437
  %v4439 = vlaneseq
  %v4440 = vshrl.u32 %v4439, 7
  %v4441 = vsub.s32 1, %v4440
  %v4442 = vrot.slane %v3739, %v4441
  %v4443 = vlaneseq
  %v4444 = vshrl.u32 %v4443, 7
  %v4445 = vsub.s32 2, %v4444
  %v4446 = vrot.slane %v3739, %v4445
  %v4447 = vlaneseq
  %v4448 = vshrl.u32 %v4447, 7
  %v4449 = vsub.s32 3, %v4448
  %v4450 = vrot.slane %v3739, %v4449
  %v4451 = vlaneseq
  %v4452 = vshrl.u32 %v4451, 7
  %v4453 = vsub.s32 4, %v4452
  %v4454 = vrot.slane %v3739, %v4453
  %v4455 = vlaneseq
  %v4456 = vshrl.u32 %v4455, 7
  %v4457 = vsub.s32 5, %v4456
  %v4458 = vrot.slane %v3739, %v4457
  %v4459 = vlaneseq
  %v4460 = vshrl.u32 %v4459, 7
  %v4461 = vsub.s32 6, %v4460
  %v4462 = vrot.slane %v3739, %v4461
  %v4463 = vlaneseq
  %v4464 = vshrl.u32 %v4463, 7
  %v4465 = vsub.s32 7, %v4464
  %v4466 = vrot.slane %v3739, %v4465
  %v4475 = vadd.f32 %v4168, %v4438
  %v4476 = vadd.f32 %v4170, %v4442
  %v4477 = vadd.f32 %v4254, %v4446
  %v4478 = vadd.f32 %v4256, %v4450
  %v4479 = vadd.f32 %v4340, %v4454
  %v4480 = vadd.f32 %v4342, %v4458
  %v4481 = vadd.f32 %v4426, %v4462
  %v4482 = vadd.f32 %v4428, %v4466
  %v4483 = vadd.f32 %v4172, %v4438
  %v4484 = vadd.f32 %v4174, %v4442
  %v4485 = vadd.f32 %v4258, %v4446
  %v4486 = vadd.f32 %v4260, %v4450
  %v4487 = vadd.f32 %v4344, %v4454
  %v4488 = vadd.f32 %v4346, %v4458
  %v4489 = vadd.f32 %v4430, %v4462
  %v4490 = vadd.f32 %v4432, %v4466
  %v4491 = vxor.u32 %v4475, 2147483648
  %v4492 = vxor.u32 %v4476, 2147483648
  %v4493 = vxor.u32 %v4483, 2147483648
  %v4494 = vxor.u32 %v4484, 2147483648
  %v4495 = vmul.f32 %v4491, 1.442695
  %v4496 = vpow.pop %v4495
  %v4497 = vmul.f32 %v4492, 1.442695
  %v4498 = vpow.pop %v4497
  %v4499 = vmul.f32 %v4493, 1.442695
  %v4500 = vpow.pop %v4499
  %v4501 = vmul.f32 %v4494, 1.442695
  %v4502 = vpow.pop %v4501
  %v4503 = vadd.f32 %v4496, 1.0
  %v4504 = vadd.f32 %v4498, 1.0
  %v4505 = vadd.f32 %v4500, 1.0
  %v4506 = vadd.f32 %v4502, 1.0
  %v4507 = vrcp.pop %v4503
  %v4508 = vmul.f32 1.0, %v4507
  %v4509 = vrcp.pop %v4504
  %v4510 = vmul.f32 1.0, %v4509
  %v4511 = vrcp.pop %v4505
  %v4512 = vmul.f32 1.0, %v4511
  %v4513 = vrcp.pop %v4506
  %v4514 = vmul.f32 1.0, %v4513
  %v4515 = vxor.u32 %v4477, 2147483648
  %v4516 = vxor.u32 %v4478, 2147483648
  %v4517 = vxor.u32 %v4485, 2147483648
  %v4518 = vxor.u32 %v4486, 2147483648
  %v4519 = vmul.f32 %v4515, 1.442695
  %v4520 = vpow.pop %v4519
  %v4521 = vmul.f32 %v4516, 1.442695
  %v4522 = vpow.pop %v4521
  %v4523 = vmul.f32 %v4517, 1.442695
  %v4524 = vpow.pop %v4523
  %v4525 = vmul.f32 %v4518, 1.442695
  %v4526 = vpow.pop %v4525
  %v4527 = vadd.f32 %v4520, 1.0
  %v4528 = vadd.f32 %v4522, 1.0
  %v4529 = vadd.f32 %v4524, 1.0
  %v4530 = vadd.f32 %v4526, 1.0
  %v4531 = vrcp.pop %v4527
  %v4532 = vmul.f32 1.0, %v4531
  %v4533 = vrcp.pop %v4528
  %v4534 = vmul.f32 1.0, %v4533
  %v4535 = vrcp.pop %v4529
  %v4536 = vmul.f32 1.0, %v4535
  %v4537 = vrcp.pop %v4530
  %v4538 = vmul.f32 1.0, %v4537
  %v4539 = vtanh.pop %v4479
  %v4540 = vtanh.pop %v4480
  %v4541 = vtanh.pop %v4487
  %v4542 = vtanh.pop %v4488
  %v4543 = vxor.u32 %v4481, 2147483648
  %v4544 = vxor.u32 %v4482, 2147483648
  %v4545 = vxor.u32 %v4489, 2147483648
  %v4546 = vxor.u32 %v4490, 2147483648
  %v4547 = vmul.f32 %v4543, 1.442695
  %v4548 = vpow.pop %v4547
  %v4549 = vmul.f32 %v4544, 1.442695
  %v4550 = vpow.pop %v4549
  %v4551 = vmul.f32 %v4545, 1.442695
  %v4552 = vpow.pop %v4551
  %v4553 = vmul.f32 %v4546, 1.442695
  %v4554 = vpow.pop %v4553
  %v4555 = vadd.f32 %v4548, 1.0
  %v4556 = vadd.f32 %v4550, 1.0
  %v4557 = vadd.f32 %v4552, 1.0
  %v4558 = vadd.f32 %v4554, 1.0
  %v4559 = vrcp.pop %v4555
  %v4560 = vmul.f32 1.0, %v4559
  %v4561 = vrcp.pop %v4556
  %v4562 = vmul.f32 1.0, %v4561
  %v4563 = vrcp.pop %v4557
  %v4564 = vmul.f32 1.0, %v4563
  %v4565 = vrcp.pop %v4558
  %v4566 = vmul.f32 1.0, %v4565
  %v4567 = vmul.f32 %v4532, 0.0
  %v4568 = vmul.f32 %v4534, 0.0
  %v4569 = vmul.f32 %v4536, 0.0
  %v4570 = vmul.f32 %v4538, 0.0
  %v4571 = vmul.f32 %v4508, %v4539
  %v4572 = vmul.f32 %v4510, %v4540
  %v4573 = vmul.f32 %v4512, %v4541
  %v4574 = vmul.f32 %v4514, %v4542
  %v4575 = vadd.f32 %v4567, %v4571
  %v4576 = vadd.f32 %v4568, %v4572
  %v4577 = vadd.f32 %v4569, %v4573
  %v4578 = vadd.f32 %v4570, %v4574
  %v4579 = vtanh.pop %v4575
  %v4580 = vtanh.pop %v4576
  %v4581 = vtanh.pop %v4577
  %v4582 = vtanh.pop %v4578
  %v4583 = vmul.f32 %v4560, %v4579
  %v4584 = vmul.f32 %v4562, %v4580
  %v4585 = vmul.f32 %v4564, %v4581
  %v4586 = vmul.f32 %v4566, %v4582
  %v4587 = vpack.c.bf16 %v4583, %v4583
  %v4588 = vpack.c.bf16 %v4584, %v4584
  %4589 = vmatprep.subr.bf16.mxu0 0
  %4590 = vmatpush1.bf16.msra.mxu0 %v3829
  %4591 = vmatprep.subr.bf16.mxu0 0
  %4592 = vmatpush1.bf16.msra.mxu0 %v3828
  %4593 = vmatprep.subr.bf16.mxu0 0
  %4594 = vmatpush1.bf16.msra.mxu0 %v3827
  %4595 = vmatprep.subr.bf16.mxu0 0
  %4596 = vmatpush1.bf16.msra.mxu0 %v3826
  %4597 = vmatprep.subr.bf16.mxu0 0
  %4598 = vmatpush1.bf16.msra.mxu0 %v3825
  %4599 = vmatprep.subr.bf16.mxu0 0
  %4600 = vmatpush1.bf16.msra.mxu0 %v3824
  %4601 = vmatprep.subr.bf16.mxu0 0
  %4602 = vmatpush1.bf16.msra.mxu0 %v3823
  %4603 = vmatprep.subr.bf16.mxu0 0
  %4604 = vmatpush1.bf16.msra.mxu0 %v3822
  %4605 = vmatprep.subr.bf16.mxu0 0
  %4606 = vmatpush2.bf16.msra.mxu0 %v3837
  %4607 = vmatprep.subr.bf16.mxu0 0
  %4608 = vmatpush2.bf16.msra.mxu0 %v3836
  %4609 = vmatprep.subr.bf16.mxu0 0
  %4610 = vmatpush2.bf16.msra.mxu0 %v3835
  %4611 = vmatprep.subr.bf16.mxu0 0
  %4612 = vmatpush2.bf16.msra.mxu0 %v3834
  %4613 = vmatprep.subr.bf16.mxu0 0
  %4614 = vmatpush2.bf16.msra.mxu0 %v3833
  %4615 = vmatprep.subr.bf16.mxu0 0
  %4616 = vmatpush2.bf16.msra.mxu0 %v3832
  %4617 = vmatprep.subr.bf16.mxu0 0
  %4618 = vmatpush2.bf16.msra.mxu0 %v3831
  %4619 = vmatprep.subr.bf16.mxu0 0
  %4620 = vmatpush2.bf16.msra.mxu0 %v3830
  %4621 = vmatprep.mubr.bf16.mxu0 %v4588
  %4622 = vmatmul.mubr.bf16.gmra.mxu0 %v4587
  %v4623 = vpop.f32.mrf.mxu0
  %v4624 = vadd.f32 0.0, %v4623
  %v4625 = vpop.f32.mrf.mxu0
  %v4626 = vpop.f32.mrf.mxu0
  %v4627 = vpop.f32.mrf.mxu0
  %4628 = vdwg.mxu0
  %vm4629 = vcmp.gt.f32.partialorder %v3740, 0.5
  %v4630 = vsel %vm4629, %v4624, -1e+30
  %4631 = vmax.xlane.f32.xlu0 %v4630
  %v4632 = vpop.xlane.xlu0 %4631
  %v4633 = vsub.f32 %v4630, %v4632
  %v4634 = vmul.f32 %v4633, 1.442695
  %v4635 = vpow.pop %v4634
  %v4636 = vsel %vm4629, %v4635, 0.0
  %4637 = vadd.xlane.f32.xlu0 %v4636
  %v4638 = vpop.xlane.xlu0 %4637
  %v4639 = vmax.f32 %v4638, 1e-20
  %v4640 = vrcp.pop %v4639
  %v4641 = vmul.f32 %v4636, %v4640
  %v4642 = vpack.c.bf16 %v4641, %v4641
  %4643 = vmatprep.subr.bf16.mxu0 %v3749
  %4644 = vmatpush1.bf16.msra.mxu0 %v2096
  %4645 = vmatprep.subr.bf16.mxu0 %v3748
  %4646 = vmatpush1.bf16.msra.mxu0 %v2095
  %4647 = vmatprep.subr.bf16.mxu0 %v3747
  %4648 = vmatpush1.bf16.msra.mxu0 %v2094
  %4649 = vmatprep.subr.bf16.mxu0 %v3746
  %4650 = vmatpush1.bf16.msra.mxu0 %v2093
  %4651 = vmatprep.subr.bf16.mxu0 %v3745
  %4652 = vmatpush1.bf16.msra.mxu0 %v2092
  %4653 = vmatprep.subr.bf16.mxu0 %v3744
  %4654 = vmatpush1.bf16.msra.mxu0 %v2091
  %4655 = vmatprep.subr.bf16.mxu0 %v3743
  %4656 = vmatpush1.bf16.msra.mxu0 %v2090
  %4657 = vmatprep.subr.bf16.mxu0 %v3742
  %4658 = vmatpush1.bf16.msra.mxu0 %v2089
  %4659 = vmatprep.subr.bf16.mxu0 0
  %4660 = vmatpush2.bf16.msra.mxu0 0
  %4661 = vmatprep.subr.bf16.mxu0 0
  %4662 = vmatpush2.bf16.msra.mxu0 0
  %4663 = vmatprep.subr.bf16.mxu0 0
  %4664 = vmatpush2.bf16.msra.mxu0 0
  %4665 = vmatprep.subr.bf16.mxu0 0
  %4666 = vmatpush2.bf16.msra.mxu0 0
  %4667 = vmatprep.subr.bf16.mxu0 0
  %4668 = vmatpush2.bf16.msra.mxu0 0
  %4669 = vmatprep.subr.bf16.mxu0 0
  %4670 = vmatpush2.bf16.msra.mxu0 0
  %4671 = vmatprep.subr.bf16.mxu0 0
  %4672 = vmatpush2.bf16.msra.mxu0 0
  %4673 = vmatprep.subr.bf16.mxu0 0
  %4674 = vmatpush2.bf16.msra.mxu0 0
  %4675 = vmatprep.mubr.bf16.mxu0 0
  %4676 = vmatmul.mubr.bf16.gmra.mxu0 %v4642
  %v4677 = vpop.f32.mrf.mxu0
  %v4678 = vadd.f32 0.0, %v4677
  %v4679 = vpop.f32.mrf.mxu0
  %v4680 = vadd.f32 0.0, %v4679
  %v4681 = vpop.f32.mrf.mxu0
  %v4682 = vpop.f32.mrf.mxu0
  %4683 = vdwg.mxu0
  %v4684 = vpack.c.bf16 %v4585, %v4585
  %v4685 = vpack.c.bf16 %v4586, %v4586
  %4686 = vmatprep.subr.bf16.mxu0 0
  %4687 = vmatpush1.bf16.msra.mxu0 %v3909
  %4688 = vmatprep.subr.bf16.mxu0 0
  %4689 = vmatpush1.bf16.msra.mxu0 %v3908
  %4690 = vmatprep.subr.bf16.mxu0 0
  %4691 = vmatpush1.bf16.msra.mxu0 %v3907
  %4692 = vmatprep.subr.bf16.mxu0 0
  %4693 = vmatpush1.bf16.msra.mxu0 %v3906
  %4694 = vmatprep.subr.bf16.mxu0 0
  %4695 = vmatpush1.bf16.msra.mxu0 %v3905
  %4696 = vmatprep.subr.bf16.mxu0 0
  %4697 = vmatpush1.bf16.msra.mxu0 %v3904
  %4698 = vmatprep.subr.bf16.mxu0 0
  %4699 = vmatpush1.bf16.msra.mxu0 %v3903
  %4700 = vmatprep.subr.bf16.mxu0 0
  %4701 = vmatpush1.bf16.msra.mxu0 %v3902
  %4702 = vmatprep.subr.bf16.mxu0 0
  %4703 = vmatpush2.bf16.msra.mxu0 %v3917
  %4704 = vmatprep.subr.bf16.mxu0 0
  %4705 = vmatpush2.bf16.msra.mxu0 %v3916
  %4706 = vmatprep.subr.bf16.mxu0 0
  %4707 = vmatpush2.bf16.msra.mxu0 %v3915
  %4708 = vmatprep.subr.bf16.mxu0 0
  %4709 = vmatpush2.bf16.msra.mxu0 %v3914
  %4710 = vmatprep.subr.bf16.mxu0 0
  %4711 = vmatpush2.bf16.msra.mxu0 %v3913
  %4712 = vmatprep.subr.bf16.mxu0 0
  %4713 = vmatpush2.bf16.msra.mxu0 %v3912
  %4714 = vmatprep.subr.bf16.mxu0 0
  %4715 = vmatpush2.bf16.msra.mxu0 %v3911
  %4716 = vmatprep.subr.bf16.mxu0 0
  %4717 = vmatpush2.bf16.msra.mxu0 %v3910
  %4718 = vmatprep.mubr.bf16.mxu0 %v4685
  %4719 = vmatmul.mubr.bf16.gmra.mxu0 %v4684
  %v4720 = vpop.f32.mrf.mxu0
  %v4721 = vadd.f32 0.0, %v4720
  %v4722 = vpop.f32.mrf.mxu0
  %v4723 = vpop.f32.mrf.mxu0
  %v4724 = vpop.f32.mrf.mxu0
  %4725 = vdwg.mxu0
  %vm4726 = vcmp.gt.f32.partialorder %v3741, 0.5
  %v4727 = vsel %vm4726, %v4721, -1e+30
  %4728 = vmax.xlane.f32.xlu0 %v4727
  %v4729 = vpop.xlane.xlu0 %4728
  %v4730 = vsub.f32 %v4727, %v4729
  %v4731 = vmul.f32 %v4730, 1.442695
  %v4732 = vpow.pop %v4731
  %v4733 = vsel %vm4726, %v4732, 0.0
  %4734 = vadd.xlane.f32.xlu0 %v4733
  %v4735 = vpop.xlane.xlu0 %4734
  %v4736 = vmax.f32 %v4735, 1e-20
  %v4737 = vrcp.pop %v4736
  %v4738 = vmul.f32 %v4733, %v4737
  %v4739 = vpack.c.bf16 %v4738, %v4738
  %4740 = vmatprep.subr.bf16.mxu0 %v3757
  %4741 = vmatpush1.bf16.msra.mxu0 %v2104
  %4742 = vmatprep.subr.bf16.mxu0 %v3756
  %4743 = vmatpush1.bf16.msra.mxu0 %v2103
  %4744 = vmatprep.subr.bf16.mxu0 %v3755
  %4745 = vmatpush1.bf16.msra.mxu0 %v2102
  %4746 = vmatprep.subr.bf16.mxu0 %v3754
  %4747 = vmatpush1.bf16.msra.mxu0 %v2101
  %4748 = vmatprep.subr.bf16.mxu0 %v3753
  %4749 = vmatpush1.bf16.msra.mxu0 %v2100
  %4750 = vmatprep.subr.bf16.mxu0 %v3752
  %4751 = vmatpush1.bf16.msra.mxu0 %v2099
  %4752 = vmatprep.subr.bf16.mxu0 %v3751
  %4753 = vmatpush1.bf16.msra.mxu0 %v2098
  %4754 = vmatprep.subr.bf16.mxu0 %v3750
  %4755 = vmatpush1.bf16.msra.mxu0 %v2097
  %4756 = vmatprep.subr.bf16.mxu0 0
  %4757 = vmatpush2.bf16.msra.mxu0 0
  %4758 = vmatprep.subr.bf16.mxu0 0
  %4759 = vmatpush2.bf16.msra.mxu0 0
  %4760 = vmatprep.subr.bf16.mxu0 0
  %4761 = vmatpush2.bf16.msra.mxu0 0
  %4762 = vmatprep.subr.bf16.mxu0 0
  %4763 = vmatpush2.bf16.msra.mxu0 0
  %4764 = vmatprep.subr.bf16.mxu0 0
  %4765 = vmatpush2.bf16.msra.mxu0 0
  %4766 = vmatprep.subr.bf16.mxu0 0
  %4767 = vmatpush2.bf16.msra.mxu0 0
  %4768 = vmatprep.subr.bf16.mxu0 0
  %4769 = vmatpush2.bf16.msra.mxu0 0
  %4770 = vmatprep.subr.bf16.mxu0 0
  %4771 = vmatpush2.bf16.msra.mxu0 0
  %4772 = vmatprep.mubr.bf16.mxu0 0
  %4773 = vmatmul.mubr.bf16.gmra.mxu0 %v4739
  %v4774 = vpop.f32.mrf.mxu0
  %v4775 = vadd.f32 0.0, %v4774
  %v4776 = vpop.f32.mrf.mxu0
  %v4777 = vadd.f32 0.0, %v4776
  %v4778 = vpop.f32.mrf.mxu0
  %v4779 = vpop.f32.mrf.mxu0
  %4780 = vdwg.mxu0
  %v4781 = vpack.c.bf16 %v4585, %v4583
  %v4782 = vpack.c.bf16 %v4586, %v4584
  %v4783 = vpack.c.bf16 %v4775, %v4678
  %v4784 = vpack.c.bf16 %v4777, %v4680
  %4785 = vmatprep.subr.bf16.mxu0 %v3668
  %4786 = vmatpush1.bf16.msra.mxu0 %v3667
  %4787 = vmatprep.subr.bf16.mxu0 %v3660
  %4788 = vmatpush1.bf16.msra.mxu0 %v3659
  %4789 = vmatprep.subr.bf16.mxu0 %v3652
  %4790 = vmatpush1.bf16.msra.mxu0 %v3651
  %4791 = vmatprep.subr.bf16.mxu0 %v3644
  %4792 = vmatpush1.bf16.msra.mxu0 %v3643
  %4793 = vmatprep.subr.bf16.mxu0 %v3636
  %4794 = vmatpush1.bf16.msra.mxu0 %v3635
  %4795 = vmatprep.subr.bf16.mxu0 %v3628
  %4796 = vmatpush1.bf16.msra.mxu0 %v3627
  %4797 = vmatprep.subr.bf16.mxu0 %v3620
  %4798 = vmatpush1.bf16.msra.mxu0 %v3619
  %4799 = vmatprep.subr.bf16.mxu0 %v3612
  %4800 = vmatpush1.bf16.msra.mxu0 %v3611
  %4801 = vmatprep.subr.bf16.mxu0 %v3732
  %4802 = vmatpush2.bf16.msra.mxu0 %v3731
  %4803 = vmatprep.subr.bf16.mxu0 %v3724
  %4804 = vmatpush2.bf16.msra.mxu0 %v3723
  %4805 = vmatprep.subr.bf16.mxu0 %v3716
  %4806 = vmatpush2.bf16.msra.mxu0 %v3715
  %4807 = vmatprep.subr.bf16.mxu0 %v3708
  %4808 = vmatpush2.bf16.msra.mxu0 %v3707
  %4809 = vmatprep.subr.bf16.mxu0 %v3700
  %4810 = vmatpush2.bf16.msra.mxu0 %v3699
  %4811 = vmatprep.subr.bf16.mxu0 %v3692
  %4812 = vmatpush2.bf16.msra.mxu0 %v3691
  %4813 = vmatprep.subr.bf16.mxu0 %v3684
  %4814 = vmatpush2.bf16.msra.mxu0 %v3683
  %4815 = vmatprep.subr.bf16.mxu0 %v3676
  %4816 = vmatpush2.bf16.msra.mxu0 %v3675
  %4817 = vmatprep.mubr.bf16.mxu0 %v4782
  %4818 = vmatmul.mubr.bf16.gmra.mxu0 %v4781
  %v4819 = vpop.f32.mrf.mxu0
  %v4820 = vadd.f32 0.0, %v4819
  %v4821 = vpop.f32.mrf.mxu0
  %v4822 = vadd.f32 0.0, %v4821
  %v4823 = vpop.f32.mrf.mxu0
  %v4824 = vadd.f32 0.0, %v4823
  %v4825 = vpop.f32.mrf.mxu0
  %v4826 = vadd.f32 0.0, %v4825
  %4827 = vdwg.mxu0
  %4828 = vmatprep.subr.bf16.mxu0 %v3670
  %4829 = vmatpush1.bf16.msra.mxu0 %v3669
  %4830 = vmatprep.subr.bf16.mxu0 %v3662
  %4831 = vmatpush1.bf16.msra.mxu0 %v3661
  %4832 = vmatprep.subr.bf16.mxu0 %v3654
  %4833 = vmatpush1.bf16.msra.mxu0 %v3653
  %4834 = vmatprep.subr.bf16.mxu0 %v3646
  %4835 = vmatpush1.bf16.msra.mxu0 %v3645
  %4836 = vmatprep.subr.bf16.mxu0 %v3638
  %4837 = vmatpush1.bf16.msra.mxu0 %v3637
  %4838 = vmatprep.subr.bf16.mxu0 %v3630
  %4839 = vmatpush1.bf16.msra.mxu0 %v3629
  %4840 = vmatprep.subr.bf16.mxu0 %v3622
  %4841 = vmatpush1.bf16.msra.mxu0 %v3621
  %4842 = vmatprep.subr.bf16.mxu0 %v3614
  %4843 = vmatpush1.bf16.msra.mxu0 %v3613
  %4844 = vmatprep.subr.bf16.mxu0 %v3734
  %4845 = vmatpush2.bf16.msra.mxu0 %v3733
  %4846 = vmatprep.subr.bf16.mxu0 %v3726
  %4847 = vmatpush2.bf16.msra.mxu0 %v3725
  %4848 = vmatprep.subr.bf16.mxu0 %v3718
  %4849 = vmatpush2.bf16.msra.mxu0 %v3717
  %4850 = vmatprep.subr.bf16.mxu0 %v3710
  %4851 = vmatpush2.bf16.msra.mxu0 %v3709
  %4852 = vmatprep.subr.bf16.mxu0 %v3702
  %4853 = vmatpush2.bf16.msra.mxu0 %v3701
  %4854 = vmatprep.subr.bf16.mxu0 %v3694
  %4855 = vmatpush2.bf16.msra.mxu0 %v3693
  %4856 = vmatprep.subr.bf16.mxu0 %v3686
  %4857 = vmatpush2.bf16.msra.mxu0 %v3685
  %4858 = vmatprep.subr.bf16.mxu0 %v3678
  %4859 = vmatpush2.bf16.msra.mxu0 %v3677
  %4860 = vmatprep.mubr.bf16.mxu0 %v4782
  %4861 = vmatmul.mubr.bf16.gmra.mxu0 %v4781
  %v4862 = vpop.f32.mrf.mxu0
  %v4863 = vadd.f32 0.0, %v4862
  %v4864 = vpop.f32.mrf.mxu0
  %v4865 = vadd.f32 0.0, %v4864
  %v4866 = vpop.f32.mrf.mxu0
  %v4867 = vadd.f32 0.0, %v4866
  %v4868 = vpop.f32.mrf.mxu0
  %v4869 = vadd.f32 0.0, %v4868
  %4870 = vdwg.mxu0
  %4871 = vmatprep.subr.bf16.mxu0 %v3672
  %4872 = vmatpush1.bf16.msra.mxu0 %v3671
  %4873 = vmatprep.subr.bf16.mxu0 %v3664
  %4874 = vmatpush1.bf16.msra.mxu0 %v3663
  %4875 = vmatprep.subr.bf16.mxu0 %v3656
  %4876 = vmatpush1.bf16.msra.mxu0 %v3655
  %4877 = vmatprep.subr.bf16.mxu0 %v3648
  %4878 = vmatpush1.bf16.msra.mxu0 %v3647
  %4879 = vmatprep.subr.bf16.mxu0 %v3640
  %4880 = vmatpush1.bf16.msra.mxu0 %v3639
  %4881 = vmatprep.subr.bf16.mxu0 %v3632
  %4882 = vmatpush1.bf16.msra.mxu0 %v3631
  %4883 = vmatprep.subr.bf16.mxu0 %v3624
  %4884 = vmatpush1.bf16.msra.mxu0 %v3623
  %4885 = vmatprep.subr.bf16.mxu0 %v3616
  %4886 = vmatpush1.bf16.msra.mxu0 %v3615
  %4887 = vmatprep.subr.bf16.mxu0 %v3736
  %4888 = vmatpush2.bf16.msra.mxu0 %v3735
  %4889 = vmatprep.subr.bf16.mxu0 %v3728
  %4890 = vmatpush2.bf16.msra.mxu0 %v3727
  %4891 = vmatprep.subr.bf16.mxu0 %v3720
  %4892 = vmatpush2.bf16.msra.mxu0 %v3719
  %4893 = vmatprep.subr.bf16.mxu0 %v3712
  %4894 = vmatpush2.bf16.msra.mxu0 %v3711
  %4895 = vmatprep.subr.bf16.mxu0 %v3704
  %4896 = vmatpush2.bf16.msra.mxu0 %v3703
  %4897 = vmatprep.subr.bf16.mxu0 %v3696
  %4898 = vmatpush2.bf16.msra.mxu0 %v3695
  %4899 = vmatprep.subr.bf16.mxu0 %v3688
  %4900 = vmatpush2.bf16.msra.mxu0 %v3687
  %4901 = vmatprep.subr.bf16.mxu0 %v3680
  %4902 = vmatpush2.bf16.msra.mxu0 %v3679
  %4903 = vmatprep.mubr.bf16.mxu0 %v4782
  %4904 = vmatmul.mubr.bf16.gmra.mxu0 %v4781
  %v4905 = vpop.f32.mrf.mxu0
  %v4906 = vadd.f32 0.0, %v4905
  %v4907 = vpop.f32.mrf.mxu0
  %v4908 = vadd.f32 0.0, %v4907
  %v4909 = vpop.f32.mrf.mxu0
  %v4910 = vadd.f32 0.0, %v4909
  %v4911 = vpop.f32.mrf.mxu0
  %v4912 = vadd.f32 0.0, %v4911
  %4913 = vdwg.mxu0
  %4914 = vmatprep.subr.bf16.mxu0 %v3674
  %4915 = vmatpush1.bf16.msra.mxu0 %v3673
  %4916 = vmatprep.subr.bf16.mxu0 %v3666
  %4917 = vmatpush1.bf16.msra.mxu0 %v3665
  %4918 = vmatprep.subr.bf16.mxu0 %v3658
  %4919 = vmatpush1.bf16.msra.mxu0 %v3657
  %4920 = vmatprep.subr.bf16.mxu0 %v3650
  %4921 = vmatpush1.bf16.msra.mxu0 %v3649
  %4922 = vmatprep.subr.bf16.mxu0 %v3642
  %4923 = vmatpush1.bf16.msra.mxu0 %v3641
  %4924 = vmatprep.subr.bf16.mxu0 %v3634
  %4925 = vmatpush1.bf16.msra.mxu0 %v3633
  %4926 = vmatprep.subr.bf16.mxu0 %v3626
  %4927 = vmatpush1.bf16.msra.mxu0 %v3625
  %4928 = vmatprep.subr.bf16.mxu0 %v3618
  %4929 = vmatpush1.bf16.msra.mxu0 %v3617
  %4930 = vmatprep.subr.bf16.mxu0 %v3738
  %4931 = vmatpush2.bf16.msra.mxu0 %v3737
  %4932 = vmatprep.subr.bf16.mxu0 %v3730
  %4933 = vmatpush2.bf16.msra.mxu0 %v3729
  %4934 = vmatprep.subr.bf16.mxu0 %v3722
  %4935 = vmatpush2.bf16.msra.mxu0 %v3721
  %4936 = vmatprep.subr.bf16.mxu0 %v3714
  %4937 = vmatpush2.bf16.msra.mxu0 %v3713
  %4938 = vmatprep.subr.bf16.mxu0 %v3706
  %4939 = vmatpush2.bf16.msra.mxu0 %v3705
  %4940 = vmatprep.subr.bf16.mxu0 %v3698
  %4941 = vmatpush2.bf16.msra.mxu0 %v3697
  %4942 = vmatprep.subr.bf16.mxu0 %v3690
  %4943 = vmatpush2.bf16.msra.mxu0 %v3689
  %4944 = vmatprep.subr.bf16.mxu0 %v3682
  %4945 = vmatpush2.bf16.msra.mxu0 %v3681
  %4946 = vmatprep.mubr.bf16.mxu0 %v4782
  %4947 = vmatmul.mubr.bf16.gmra.mxu0 %v4781
  %v4948 = vpop.f32.mrf.mxu0
  %v4949 = vadd.f32 0.0, %v4948
  %v4950 = vpop.f32.mrf.mxu0
  %v4951 = vadd.f32 0.0, %v4950
  %v4952 = vpop.f32.mrf.mxu0
  %v4953 = vadd.f32 0.0, %v4952
  %v4954 = vpop.f32.mrf.mxu0
  %v4955 = vadd.f32 0.0, %v4954
  %4956 = vdwg.mxu0
  %4957 = vmatprep.subr.bf16.mxu0 %v3156
  %4958 = vmatpush1.bf16.msra.mxu0 %v3155
  %4959 = vmatprep.subr.bf16.mxu0 %v3148
  %4960 = vmatpush1.bf16.msra.mxu0 %v3147
  %4961 = vmatprep.subr.bf16.mxu0 %v3140
  %4962 = vmatpush1.bf16.msra.mxu0 %v3139
  %4963 = vmatprep.subr.bf16.mxu0 %v3132
  %4964 = vmatpush1.bf16.msra.mxu0 %v3131
  %4965 = vmatprep.subr.bf16.mxu0 %v3124
  %4966 = vmatpush1.bf16.msra.mxu0 %v3123
  %4967 = vmatprep.subr.bf16.mxu0 %v3116
  %4968 = vmatpush1.bf16.msra.mxu0 %v3115
  %4969 = vmatprep.subr.bf16.mxu0 %v3108
  %4970 = vmatpush1.bf16.msra.mxu0 %v3107
  %4971 = vmatprep.subr.bf16.mxu0 %v3100
  %4972 = vmatpush1.bf16.msra.mxu0 %v3099
  %4973 = vmatprep.subr.bf16.mxu0 %v3220
  %4974 = vmatpush2.bf16.msra.mxu0 %v3219
  %4975 = vmatprep.subr.bf16.mxu0 %v3212
  %4976 = vmatpush2.bf16.msra.mxu0 %v3211
  %4977 = vmatprep.subr.bf16.mxu0 %v3204
  %4978 = vmatpush2.bf16.msra.mxu0 %v3203
  %4979 = vmatprep.subr.bf16.mxu0 %v3196
  %4980 = vmatpush2.bf16.msra.mxu0 %v3195
  %4981 = vmatprep.subr.bf16.mxu0 %v3188
  %4982 = vmatpush2.bf16.msra.mxu0 %v3187
  %4983 = vmatprep.subr.bf16.mxu0 %v3180
  %4984 = vmatpush2.bf16.msra.mxu0 %v3179
  %4985 = vmatprep.subr.bf16.mxu0 %v3172
  %4986 = vmatpush2.bf16.msra.mxu0 %v3171
  %4987 = vmatprep.subr.bf16.mxu0 %v3164
  %4988 = vmatpush2.bf16.msra.mxu0 %v3163
  %4989 = vmatprep.mubr.bf16.mxu0 %v4782
  %4990 = vmatmul.mubr.bf16.gmra.mxu0 %v4781
  %v4991 = vpop.f32.mrf.mxu0
  %v4992 = vadd.f32 %v4820, %v4991
  %v4993 = vpop.f32.mrf.mxu0
  %v4994 = vadd.f32 %v4822, %v4993
  %v4995 = vpop.f32.mrf.mxu0
  %v4996 = vadd.f32 %v4824, %v4995
  %v4997 = vpop.f32.mrf.mxu0
  %v4998 = vadd.f32 %v4826, %v4997
  %4999 = vdwg.mxu0
  %5000 = vmatprep.subr.bf16.mxu0 %v3284
  %5001 = vmatpush1.bf16.msra.mxu0 %v3283
  %5002 = vmatprep.subr.bf16.mxu0 %v3276
  %5003 = vmatpush1.bf16.msra.mxu0 %v3275
  %5004 = vmatprep.subr.bf16.mxu0 %v3268
  %5005 = vmatpush1.bf16.msra.mxu0 %v3267
  %5006 = vmatprep.subr.bf16.mxu0 %v3260
  %5007 = vmatpush1.bf16.msra.mxu0 %v3259
  %5008 = vmatprep.subr.bf16.mxu0 %v3252
  %5009 = vmatpush1.bf16.msra.mxu0 %v3251
  %5010 = vmatprep.subr.bf16.mxu0 %v3244
  %5011 = vmatpush1.bf16.msra.mxu0 %v3243
  %5012 = vmatprep.subr.bf16.mxu0 %v3236
  %5013 = vmatpush1.bf16.msra.mxu0 %v3235
  %5014 = vmatprep.subr.bf16.mxu0 %v3228
  %5015 = vmatpush1.bf16.msra.mxu0 %v3227
  %5016 = vmatprep.subr.bf16.mxu0 %v3348
  %5017 = vmatpush2.bf16.msra.mxu0 %v3347
  %5018 = vmatprep.subr.bf16.mxu0 %v3340
  %5019 = vmatpush2.bf16.msra.mxu0 %v3339
  %5020 = vmatprep.subr.bf16.mxu0 %v3332
  %5021 = vmatpush2.bf16.msra.mxu0 %v3331
  %5022 = vmatprep.subr.bf16.mxu0 %v3324
  %5023 = vmatpush2.bf16.msra.mxu0 %v3323
  %5024 = vmatprep.subr.bf16.mxu0 %v3316
  %5025 = vmatpush2.bf16.msra.mxu0 %v3315
  %5026 = vmatprep.subr.bf16.mxu0 %v3308
  %5027 = vmatpush2.bf16.msra.mxu0 %v3307
  %5028 = vmatprep.subr.bf16.mxu0 %v3300
  %5029 = vmatpush2.bf16.msra.mxu0 %v3299
  %5030 = vmatprep.subr.bf16.mxu0 %v3292
  %5031 = vmatpush2.bf16.msra.mxu0 %v3291
  %5032 = vmatprep.mubr.bf16.mxu0 %v4784
  %5033 = vmatmul.mubr.bf16.gmra.mxu0 %v4783
  %v5034 = vpop.f32.mrf.mxu0
  %v5035 = vadd.f32 %v4992, %v5034
  %v5036 = vpop.f32.mrf.mxu0
  %v5037 = vadd.f32 %v4994, %v5036
  %v5038 = vpop.f32.mrf.mxu0
  %v5039 = vadd.f32 %v4996, %v5038
  %v5040 = vpop.f32.mrf.mxu0
  %v5041 = vadd.f32 %v4998, %v5040
  %5042 = vdwg.mxu0
  %5043 = vmatprep.subr.bf16.mxu0 %v3158
  %5044 = vmatpush1.bf16.msra.mxu0 %v3157
  %5045 = vmatprep.subr.bf16.mxu0 %v3150
  %5046 = vmatpush1.bf16.msra.mxu0 %v3149
  %5047 = vmatprep.subr.bf16.mxu0 %v3142
  %5048 = vmatpush1.bf16.msra.mxu0 %v3141
  %5049 = vmatprep.subr.bf16.mxu0 %v3134
  %5050 = vmatpush1.bf16.msra.mxu0 %v3133
  %5051 = vmatprep.subr.bf16.mxu0 %v3126
  %5052 = vmatpush1.bf16.msra.mxu0 %v3125
  %5053 = vmatprep.subr.bf16.mxu0 %v3118
  %5054 = vmatpush1.bf16.msra.mxu0 %v3117
  %5055 = vmatprep.subr.bf16.mxu0 %v3110
  %5056 = vmatpush1.bf16.msra.mxu0 %v3109
  %5057 = vmatprep.subr.bf16.mxu0 %v3102
  %5058 = vmatpush1.bf16.msra.mxu0 %v3101
  %5059 = vmatprep.subr.bf16.mxu0 %v3222
  %5060 = vmatpush2.bf16.msra.mxu0 %v3221
  %5061 = vmatprep.subr.bf16.mxu0 %v3214
  %5062 = vmatpush2.bf16.msra.mxu0 %v3213
  %5063 = vmatprep.subr.bf16.mxu0 %v3206
  %5064 = vmatpush2.bf16.msra.mxu0 %v3205
  %5065 = vmatprep.subr.bf16.mxu0 %v3198
  %5066 = vmatpush2.bf16.msra.mxu0 %v3197
  %5067 = vmatprep.subr.bf16.mxu0 %v3190
  %5068 = vmatpush2.bf16.msra.mxu0 %v3189
  %5069 = vmatprep.subr.bf16.mxu0 %v3182
  %5070 = vmatpush2.bf16.msra.mxu0 %v3181
  %5071 = vmatprep.subr.bf16.mxu0 %v3174
  %5072 = vmatpush2.bf16.msra.mxu0 %v3173
  %5073 = vmatprep.subr.bf16.mxu0 %v3166
  %5074 = vmatpush2.bf16.msra.mxu0 %v3165
  %5075 = vmatprep.mubr.bf16.mxu0 %v4782
  %5076 = vmatmul.mubr.bf16.gmra.mxu0 %v4781
  %v5077 = vpop.f32.mrf.mxu0
  %v5078 = vadd.f32 %v4863, %v5077
  %v5079 = vpop.f32.mrf.mxu0
  %v5080 = vadd.f32 %v4865, %v5079
  %v5081 = vpop.f32.mrf.mxu0
  %v5082 = vadd.f32 %v4867, %v5081
  %v5083 = vpop.f32.mrf.mxu0
  %v5084 = vadd.f32 %v4869, %v5083
  %5085 = vdwg.mxu0
  %5086 = vmatprep.subr.bf16.mxu0 %v3286
  %5087 = vmatpush1.bf16.msra.mxu0 %v3285
  %5088 = vmatprep.subr.bf16.mxu0 %v3278
  %5089 = vmatpush1.bf16.msra.mxu0 %v3277
  %5090 = vmatprep.subr.bf16.mxu0 %v3270
  %5091 = vmatpush1.bf16.msra.mxu0 %v3269
  %5092 = vmatprep.subr.bf16.mxu0 %v3262
  %5093 = vmatpush1.bf16.msra.mxu0 %v3261
  %5094 = vmatprep.subr.bf16.mxu0 %v3254
  %5095 = vmatpush1.bf16.msra.mxu0 %v3253
  %5096 = vmatprep.subr.bf16.mxu0 %v3246
  %5097 = vmatpush1.bf16.msra.mxu0 %v3245
  %5098 = vmatprep.subr.bf16.mxu0 %v3238
  %5099 = vmatpush1.bf16.msra.mxu0 %v3237
  %5100 = vmatprep.subr.bf16.mxu0 %v3230
  %5101 = vmatpush1.bf16.msra.mxu0 %v3229
  %5102 = vmatprep.subr.bf16.mxu0 %v3350
  %5103 = vmatpush2.bf16.msra.mxu0 %v3349
  %5104 = vmatprep.subr.bf16.mxu0 %v3342
  %5105 = vmatpush2.bf16.msra.mxu0 %v3341
  %5106 = vmatprep.subr.bf16.mxu0 %v3334
  %5107 = vmatpush2.bf16.msra.mxu0 %v3333
  %5108 = vmatprep.subr.bf16.mxu0 %v3326
  %5109 = vmatpush2.bf16.msra.mxu0 %v3325
  %5110 = vmatprep.subr.bf16.mxu0 %v3318
  %5111 = vmatpush2.bf16.msra.mxu0 %v3317
  %5112 = vmatprep.subr.bf16.mxu0 %v3310
  %5113 = vmatpush2.bf16.msra.mxu0 %v3309
  %5114 = vmatprep.subr.bf16.mxu0 %v3302
  %5115 = vmatpush2.bf16.msra.mxu0 %v3301
  %5116 = vmatprep.subr.bf16.mxu0 %v3294
  %5117 = vmatpush2.bf16.msra.mxu0 %v3293
  %5118 = vmatprep.mubr.bf16.mxu0 %v4784
  %5119 = vmatmul.mubr.bf16.gmra.mxu0 %v4783
  %v5120 = vpop.f32.mrf.mxu0
  %v5121 = vadd.f32 %v5078, %v5120
  %v5122 = vpop.f32.mrf.mxu0
  %v5123 = vadd.f32 %v5080, %v5122
  %v5124 = vpop.f32.mrf.mxu0
  %v5125 = vadd.f32 %v5082, %v5124
  %v5126 = vpop.f32.mrf.mxu0
  %v5127 = vadd.f32 %v5084, %v5126
  %5128 = vdwg.mxu0
  %5129 = vmatprep.subr.bf16.mxu0 %v3160
  %5130 = vmatpush1.bf16.msra.mxu0 %v3159
  %5131 = vmatprep.subr.bf16.mxu0 %v3152
  %5132 = vmatpush1.bf16.msra.mxu0 %v3151
  %5133 = vmatprep.subr.bf16.mxu0 %v3144
  %5134 = vmatpush1.bf16.msra.mxu0 %v3143
  %5135 = vmatprep.subr.bf16.mxu0 %v3136
  %5136 = vmatpush1.bf16.msra.mxu0 %v3135
  %5137 = vmatprep.subr.bf16.mxu0 %v3128
  %5138 = vmatpush1.bf16.msra.mxu0 %v3127
  %5139 = vmatprep.subr.bf16.mxu0 %v3120
  %5140 = vmatpush1.bf16.msra.mxu0 %v3119
  %5141 = vmatprep.subr.bf16.mxu0 %v3112
  %5142 = vmatpush1.bf16.msra.mxu0 %v3111
  %5143 = vmatprep.subr.bf16.mxu0 %v3104
  %5144 = vmatpush1.bf16.msra.mxu0 %v3103
  %5145 = vmatprep.subr.bf16.mxu0 %v3224
  %5146 = vmatpush2.bf16.msra.mxu0 %v3223
  %5147 = vmatprep.subr.bf16.mxu0 %v3216
  %5148 = vmatpush2.bf16.msra.mxu0 %v3215
  %5149 = vmatprep.subr.bf16.mxu0 %v3208
  %5150 = vmatpush2.bf16.msra.mxu0 %v3207
  %5151 = vmatprep.subr.bf16.mxu0 %v3200
  %5152 = vmatpush2.bf16.msra.mxu0 %v3199
  %5153 = vmatprep.subr.bf16.mxu0 %v3192
  %5154 = vmatpush2.bf16.msra.mxu0 %v3191
  %5155 = vmatprep.subr.bf16.mxu0 %v3184
  %5156 = vmatpush2.bf16.msra.mxu0 %v3183
  %5157 = vmatprep.subr.bf16.mxu0 %v3176
  %5158 = vmatpush2.bf16.msra.mxu0 %v3175
  %5159 = vmatprep.subr.bf16.mxu0 %v3168
  %5160 = vmatpush2.bf16.msra.mxu0 %v3167
  %5161 = vmatprep.mubr.bf16.mxu0 %v4782
  %5162 = vmatmul.mubr.bf16.gmra.mxu0 %v4781
  %v5163 = vpop.f32.mrf.mxu0
  %v5164 = vadd.f32 %v4906, %v5163
  %v5165 = vpop.f32.mrf.mxu0
  %v5166 = vadd.f32 %v4908, %v5165
  %v5167 = vpop.f32.mrf.mxu0
  %v5168 = vadd.f32 %v4910, %v5167
  %v5169 = vpop.f32.mrf.mxu0
  %v5170 = vadd.f32 %v4912, %v5169
  %5171 = vdwg.mxu0
  %5172 = vmatprep.subr.bf16.mxu0 %v3288
  %5173 = vmatpush1.bf16.msra.mxu0 %v3287
  %5174 = vmatprep.subr.bf16.mxu0 %v3280
  %5175 = vmatpush1.bf16.msra.mxu0 %v3279
  %5176 = vmatprep.subr.bf16.mxu0 %v3272
  %5177 = vmatpush1.bf16.msra.mxu0 %v3271
  %5178 = vmatprep.subr.bf16.mxu0 %v3264
  %5179 = vmatpush1.bf16.msra.mxu0 %v3263
  %5180 = vmatprep.subr.bf16.mxu0 %v3256
  %5181 = vmatpush1.bf16.msra.mxu0 %v3255
  %5182 = vmatprep.subr.bf16.mxu0 %v3248
  %5183 = vmatpush1.bf16.msra.mxu0 %v3247
  %5184 = vmatprep.subr.bf16.mxu0 %v3240
  %5185 = vmatpush1.bf16.msra.mxu0 %v3239
  %5186 = vmatprep.subr.bf16.mxu0 %v3232
  %5187 = vmatpush1.bf16.msra.mxu0 %v3231
  %5188 = vmatprep.subr.bf16.mxu0 %v3352
  %5189 = vmatpush2.bf16.msra.mxu0 %v3351
  %5190 = vmatprep.subr.bf16.mxu0 %v3344
  %5191 = vmatpush2.bf16.msra.mxu0 %v3343
  %5192 = vmatprep.subr.bf16.mxu0 %v3336
  %5193 = vmatpush2.bf16.msra.mxu0 %v3335
  %5194 = vmatprep.subr.bf16.mxu0 %v3328
  %5195 = vmatpush2.bf16.msra.mxu0 %v3327
  %5196 = vmatprep.subr.bf16.mxu0 %v3320
  %5197 = vmatpush2.bf16.msra.mxu0 %v3319
  %5198 = vmatprep.subr.bf16.mxu0 %v3312
  %5199 = vmatpush2.bf16.msra.mxu0 %v3311
  %5200 = vmatprep.subr.bf16.mxu0 %v3304
  %5201 = vmatpush2.bf16.msra.mxu0 %v3303
  %5202 = vmatprep.subr.bf16.mxu0 %v3296
  %5203 = vmatpush2.bf16.msra.mxu0 %v3295
  %5204 = vmatprep.mubr.bf16.mxu0 %v4784
  %5205 = vmatmul.mubr.bf16.gmra.mxu0 %v4783
  %v5206 = vpop.f32.mrf.mxu0
  %v5207 = vadd.f32 %v5164, %v5206
  %v5208 = vpop.f32.mrf.mxu0
  %v5209 = vadd.f32 %v5166, %v5208
  %v5210 = vpop.f32.mrf.mxu0
  %v5211 = vadd.f32 %v5168, %v5210
  %v5212 = vpop.f32.mrf.mxu0
  %v5213 = vadd.f32 %v5170, %v5212
  %5214 = vdwg.mxu0
  %5215 = vmatprep.subr.bf16.mxu0 %v3162
  %5216 = vmatpush1.bf16.msra.mxu0 %v3161
  %5217 = vmatprep.subr.bf16.mxu0 %v3154
  %5218 = vmatpush1.bf16.msra.mxu0 %v3153
  %5219 = vmatprep.subr.bf16.mxu0 %v3146
  %5220 = vmatpush1.bf16.msra.mxu0 %v3145
  %5221 = vmatprep.subr.bf16.mxu0 %v3138
  %5222 = vmatpush1.bf16.msra.mxu0 %v3137
  %5223 = vmatprep.subr.bf16.mxu0 %v3130
  %5224 = vmatpush1.bf16.msra.mxu0 %v3129
  %5225 = vmatprep.subr.bf16.mxu0 %v3122
  %5226 = vmatpush1.bf16.msra.mxu0 %v3121
  %5227 = vmatprep.subr.bf16.mxu0 %v3114
  %5228 = vmatpush1.bf16.msra.mxu0 %v3113
  %5229 = vmatprep.subr.bf16.mxu0 %v3106
  %5230 = vmatpush1.bf16.msra.mxu0 %v3105
  %5231 = vmatprep.subr.bf16.mxu0 %v3226
  %5232 = vmatpush2.bf16.msra.mxu0 %v3225
  %5233 = vmatprep.subr.bf16.mxu0 %v3218
  %5234 = vmatpush2.bf16.msra.mxu0 %v3217
  %5235 = vmatprep.subr.bf16.mxu0 %v3210
  %5236 = vmatpush2.bf16.msra.mxu0 %v3209
  %5237 = vmatprep.subr.bf16.mxu0 %v3202
  %5238 = vmatpush2.bf16.msra.mxu0 %v3201
  %5239 = vmatprep.subr.bf16.mxu0 %v3194
  %5240 = vmatpush2.bf16.msra.mxu0 %v3193
  %5241 = vmatprep.subr.bf16.mxu0 %v3186
  %5242 = vmatpush2.bf16.msra.mxu0 %v3185
  %5243 = vmatprep.subr.bf16.mxu0 %v3178
  %5244 = vmatpush2.bf16.msra.mxu0 %v3177
  %5245 = vmatprep.subr.bf16.mxu0 %v3170
  %5246 = vmatpush2.bf16.msra.mxu0 %v3169
  %5247 = vmatprep.mubr.bf16.mxu0 %v4782
  %5248 = vmatmul.mubr.bf16.gmra.mxu0 %v4781
  %v5249 = vpop.f32.mrf.mxu0
  %v5250 = vadd.f32 %v4949, %v5249
  %v5251 = vpop.f32.mrf.mxu0
  %v5252 = vadd.f32 %v4951, %v5251
  %v5253 = vpop.f32.mrf.mxu0
  %v5254 = vadd.f32 %v4953, %v5253
  %v5255 = vpop.f32.mrf.mxu0
  %v5256 = vadd.f32 %v4955, %v5255
  %5257 = vdwg.mxu0
  %5258 = vmatprep.subr.bf16.mxu0 %v3290
  %5259 = vmatpush1.bf16.msra.mxu0 %v3289
  %5260 = vmatprep.subr.bf16.mxu0 %v3282
  %5261 = vmatpush1.bf16.msra.mxu0 %v3281
  %5262 = vmatprep.subr.bf16.mxu0 %v3274
  %5263 = vmatpush1.bf16.msra.mxu0 %v3273
  %5264 = vmatprep.subr.bf16.mxu0 %v3266
  %5265 = vmatpush1.bf16.msra.mxu0 %v3265
  %5266 = vmatprep.subr.bf16.mxu0 %v3258
  %5267 = vmatpush1.bf16.msra.mxu0 %v3257
  %5268 = vmatprep.subr.bf16.mxu0 %v3250
  %5269 = vmatpush1.bf16.msra.mxu0 %v3249
  %5270 = vmatprep.subr.bf16.mxu0 %v3242
  %5271 = vmatpush1.bf16.msra.mxu0 %v3241
  %5272 = vmatprep.subr.bf16.mxu0 %v3234
  %5273 = vmatpush1.bf16.msra.mxu0 %v3233
  %5274 = vmatprep.subr.bf16.mxu0 %v3354
  %5275 = vmatpush2.bf16.msra.mxu0 %v3353
  %5276 = vmatprep.subr.bf16.mxu0 %v3346
  %5277 = vmatpush2.bf16.msra.mxu0 %v3345
  %5278 = vmatprep.subr.bf16.mxu0 %v3338
  %5279 = vmatpush2.bf16.msra.mxu0 %v3337
  %5280 = vmatprep.subr.bf16.mxu0 %v3330
  %5281 = vmatpush2.bf16.msra.mxu0 %v3329
  %5282 = vmatprep.subr.bf16.mxu0 %v3322
  %5283 = vmatpush2.bf16.msra.mxu0 %v3321
  %5284 = vmatprep.subr.bf16.mxu0 %v3314
  %5285 = vmatpush2.bf16.msra.mxu0 %v3313
  %5286 = vmatprep.subr.bf16.mxu0 %v3306
  %5287 = vmatpush2.bf16.msra.mxu0 %v3305
  %5288 = vmatprep.subr.bf16.mxu0 %v3298
  %5289 = vmatpush2.bf16.msra.mxu0 %v3297
  %5290 = vmatprep.mubr.bf16.mxu0 %v4784
  %5291 = vmatmul.mubr.bf16.gmra.mxu0 %v4783
  %v5292 = vpop.f32.mrf.mxu0
  %v5293 = vadd.f32 %v5250, %v5292
  %v5294 = vpop.f32.mrf.mxu0
  %v5295 = vadd.f32 %v5252, %v5294
  %v5296 = vpop.f32.mrf.mxu0
  %v5297 = vadd.f32 %v5254, %v5296
  %v5298 = vpop.f32.mrf.mxu0
  %v5299 = vadd.f32 %v5256, %v5298
  %5300 = vdwg.mxu0
  %v5301 = vadd.f32 %v5035, %v4438
  %v5302 = vadd.f32 %v5037, %v4442
  %v5303 = vadd.f32 %v5121, %v4446
  %v5304 = vadd.f32 %v5123, %v4450
  %v5305 = vadd.f32 %v5207, %v4454
  %v5306 = vadd.f32 %v5209, %v4458
  %v5307 = vadd.f32 %v5293, %v4462
  %v5308 = vadd.f32 %v5295, %v4466
  %v5309 = vadd.f32 %v5039, %v4438
  %v5310 = vadd.f32 %v5041, %v4442
  %v5311 = vadd.f32 %v5125, %v4446
  %v5312 = vadd.f32 %v5127, %v4450
  %v5313 = vadd.f32 %v5211, %v4454
  %v5314 = vadd.f32 %v5213, %v4458
  %v5315 = vadd.f32 %v5297, %v4462
  %v5316 = vadd.f32 %v5299, %v4466
  %v5317 = vxor.u32 %v5301, 2147483648
  %v5318 = vxor.u32 %v5302, 2147483648
  %v5319 = vxor.u32 %v5309, 2147483648
  %v5320 = vxor.u32 %v5310, 2147483648
  %v5321 = vmul.f32 %v5317, 1.442695
  %v5322 = vpow.pop %v5321
  %v5323 = vmul.f32 %v5318, 1.442695
  %v5324 = vpow.pop %v5323
  %v5325 = vmul.f32 %v5319, 1.442695
  %v5326 = vpow.pop %v5325
  %v5327 = vmul.f32 %v5320, 1.442695
  %v5328 = vpow.pop %v5327
  %v5329 = vadd.f32 %v5322, 1.0
  %v5330 = vadd.f32 %v5324, 1.0
  %v5331 = vadd.f32 %v5326, 1.0
  %v5332 = vadd.f32 %v5328, 1.0
  %v5333 = vrcp.pop %v5329
  %v5334 = vmul.f32 1.0, %v5333
  %v5335 = vrcp.pop %v5330
  %v5336 = vmul.f32 1.0, %v5335
  %v5337 = vrcp.pop %v5331
  %v5338 = vmul.f32 1.0, %v5337
  %v5339 = vrcp.pop %v5332
  %v5340 = vmul.f32 1.0, %v5339
  %v5341 = vxor.u32 %v5303, 2147483648
  %v5342 = vxor.u32 %v5304, 2147483648
  %v5343 = vxor.u32 %v5311, 2147483648
  %v5344 = vxor.u32 %v5312, 2147483648
  %v5345 = vmul.f32 %v5341, 1.442695
  %v5346 = vpow.pop %v5345
  %v5347 = vmul.f32 %v5342, 1.442695
  %v5348 = vpow.pop %v5347
  %v5349 = vmul.f32 %v5343, 1.442695
  %v5350 = vpow.pop %v5349
  %v5351 = vmul.f32 %v5344, 1.442695
  %v5352 = vpow.pop %v5351
  %v5353 = vadd.f32 %v5346, 1.0
  %v5354 = vadd.f32 %v5348, 1.0
  %v5355 = vadd.f32 %v5350, 1.0
  %v5356 = vadd.f32 %v5352, 1.0
  %v5357 = vrcp.pop %v5353
  %v5358 = vmul.f32 1.0, %v5357
  %v5359 = vrcp.pop %v5354
  %v5360 = vmul.f32 1.0, %v5359
  %v5361 = vrcp.pop %v5355
  %v5362 = vmul.f32 1.0, %v5361
  %v5363 = vrcp.pop %v5356
  %v5364 = vmul.f32 1.0, %v5363
  %v5365 = vtanh.pop %v5305
  %v5366 = vtanh.pop %v5306
  %v5367 = vtanh.pop %v5313
  %v5368 = vtanh.pop %v5314
  %v5369 = vxor.u32 %v5307, 2147483648
  %v5370 = vxor.u32 %v5308, 2147483648
  %v5371 = vxor.u32 %v5315, 2147483648
  %v5372 = vxor.u32 %v5316, 2147483648
  %v5373 = vmul.f32 %v5369, 1.442695
  %v5374 = vpow.pop %v5373
  %v5375 = vmul.f32 %v5370, 1.442695
  %v5376 = vpow.pop %v5375
  %v5377 = vmul.f32 %v5371, 1.442695
  %v5378 = vpow.pop %v5377
  %v5379 = vmul.f32 %v5372, 1.442695
  %v5380 = vpow.pop %v5379
  %v5381 = vadd.f32 %v5374, 1.0
  %v5382 = vadd.f32 %v5376, 1.0
  %v5383 = vadd.f32 %v5378, 1.0
  %v5384 = vadd.f32 %v5380, 1.0
  %v5385 = vrcp.pop %v5381
  %v5386 = vmul.f32 1.0, %v5385
  %v5387 = vrcp.pop %v5382
  %v5388 = vmul.f32 1.0, %v5387
  %v5389 = vrcp.pop %v5383
  %v5390 = vmul.f32 1.0, %v5389
  %v5391 = vrcp.pop %v5384
  %v5392 = vmul.f32 1.0, %v5391
  %v5393 = vmul.f32 %v5358, %v4575
  %v5394 = vmul.f32 %v5360, %v4576
  %v5395 = vmul.f32 %v5362, %v4577
  %v5396 = vmul.f32 %v5364, %v4578
  %v5397 = vmul.f32 %v5334, %v5365
  %v5398 = vmul.f32 %v5336, %v5366
  %v5399 = vmul.f32 %v5338, %v5367
  %v5400 = vmul.f32 %v5340, %v5368
  %v5401 = vadd.f32 %v5393, %v5397
  %v5402 = vadd.f32 %v5394, %v5398
  %v5403 = vadd.f32 %v5395, %v5399
  %v5404 = vadd.f32 %v5396, %v5400
  %v5405 = vtanh.pop %v5401
  %v5406 = vtanh.pop %v5402
  %v5407 = vtanh.pop %v5403
  %v5408 = vtanh.pop %v5404
  %v5409 = vmul.f32 %v5386, %v5405
  %v5410 = vmul.f32 %v5388, %v5406
  %v5411 = vmul.f32 %v5390, %v5407
  %v5412 = vmul.f32 %v5392, %v5408
  %v5413 = vpack.c.bf16 %v5409, %v5409
  %v5414 = vpack.c.bf16 %v5410, %v5410
  %5415 = vmatprep.subr.bf16.mxu0 0
  %5416 = vmatpush1.bf16.msra.mxu0 %v3829
  %5417 = vmatprep.subr.bf16.mxu0 0
  %5418 = vmatpush1.bf16.msra.mxu0 %v3828
  %5419 = vmatprep.subr.bf16.mxu0 0
  %5420 = vmatpush1.bf16.msra.mxu0 %v3827
  %5421 = vmatprep.subr.bf16.mxu0 0
  %5422 = vmatpush1.bf16.msra.mxu0 %v3826
  %5423 = vmatprep.subr.bf16.mxu0 0
  %5424 = vmatpush1.bf16.msra.mxu0 %v3825
  %5425 = vmatprep.subr.bf16.mxu0 0
  %5426 = vmatpush1.bf16.msra.mxu0 %v3824
  %5427 = vmatprep.subr.bf16.mxu0 0
  %5428 = vmatpush1.bf16.msra.mxu0 %v3823
  %5429 = vmatprep.subr.bf16.mxu0 0
  %5430 = vmatpush1.bf16.msra.mxu0 %v3822
  %5431 = vmatprep.subr.bf16.mxu0 0
  %5432 = vmatpush2.bf16.msra.mxu0 %v3837
  %5433 = vmatprep.subr.bf16.mxu0 0
  %5434 = vmatpush2.bf16.msra.mxu0 %v3836
  %5435 = vmatprep.subr.bf16.mxu0 0
  %5436 = vmatpush2.bf16.msra.mxu0 %v3835
  %5437 = vmatprep.subr.bf16.mxu0 0
  %5438 = vmatpush2.bf16.msra.mxu0 %v3834
  %5439 = vmatprep.subr.bf16.mxu0 0
  %5440 = vmatpush2.bf16.msra.mxu0 %v3833
  %5441 = vmatprep.subr.bf16.mxu0 0
  %5442 = vmatpush2.bf16.msra.mxu0 %v3832
  %5443 = vmatprep.subr.bf16.mxu0 0
  %5444 = vmatpush2.bf16.msra.mxu0 %v3831
  %5445 = vmatprep.subr.bf16.mxu0 0
  %5446 = vmatpush2.bf16.msra.mxu0 %v3830
  %5447 = vmatprep.mubr.bf16.mxu0 %v5414
  %5448 = vmatmul.mubr.bf16.gmra.mxu0 %v5413
  %v5449 = vpop.f32.mrf.mxu0
  %v5450 = vadd.f32 0.0, %v5449
  %v5451 = vpop.f32.mrf.mxu0
  %v5452 = vpop.f32.mrf.mxu0
  %v5453 = vpop.f32.mrf.mxu0
  %5454 = vdwg.mxu0
  %v5455 = vsel %vm4629, %v5450, -1e+30
  %5456 = vmax.xlane.f32.xlu0 %v5455
  %v5457 = vpop.xlane.xlu0 %5456
  %v5458 = vsub.f32 %v5455, %v5457
  %v5459 = vmul.f32 %v5458, 1.442695
  %v5460 = vpow.pop %v5459
  %v5461 = vsel %vm4629, %v5460, 0.0
  %5462 = vadd.xlane.f32.xlu0 %v5461
  %v5463 = vpop.xlane.xlu0 %5462
  %v5464 = vmax.f32 %v5463, 1e-20
  %v5465 = vrcp.pop %v5464
  %v5466 = vmul.f32 %v5461, %v5465
  %v5467 = vpack.c.bf16 %v5466, %v5466
  %5468 = vmatprep.subr.bf16.mxu0 %v3749
  %5469 = vmatpush1.bf16.msra.mxu0 %v2096
  %5470 = vmatprep.subr.bf16.mxu0 %v3748
  %5471 = vmatpush1.bf16.msra.mxu0 %v2095
  %5472 = vmatprep.subr.bf16.mxu0 %v3747
  %5473 = vmatpush1.bf16.msra.mxu0 %v2094
  %5474 = vmatprep.subr.bf16.mxu0 %v3746
  %5475 = vmatpush1.bf16.msra.mxu0 %v2093
  %5476 = vmatprep.subr.bf16.mxu0 %v3745
  %5477 = vmatpush1.bf16.msra.mxu0 %v2092
  %5478 = vmatprep.subr.bf16.mxu0 %v3744
  %5479 = vmatpush1.bf16.msra.mxu0 %v2091
  %5480 = vmatprep.subr.bf16.mxu0 %v3743
  %5481 = vmatpush1.bf16.msra.mxu0 %v2090
  %5482 = vmatprep.subr.bf16.mxu0 %v3742
  %5483 = vmatpush1.bf16.msra.mxu0 %v2089
  %5484 = vmatprep.subr.bf16.mxu0 0
  %5485 = vmatpush2.bf16.msra.mxu0 0
  %5486 = vmatprep.subr.bf16.mxu0 0
  %5487 = vmatpush2.bf16.msra.mxu0 0
  %5488 = vmatprep.subr.bf16.mxu0 0
  %5489 = vmatpush2.bf16.msra.mxu0 0
  %5490 = vmatprep.subr.bf16.mxu0 0
  %5491 = vmatpush2.bf16.msra.mxu0 0
  %5492 = vmatprep.subr.bf16.mxu0 0
  %5493 = vmatpush2.bf16.msra.mxu0 0
  %5494 = vmatprep.subr.bf16.mxu0 0
  %5495 = vmatpush2.bf16.msra.mxu0 0
  %5496 = vmatprep.subr.bf16.mxu0 0
  %5497 = vmatpush2.bf16.msra.mxu0 0
  %5498 = vmatprep.subr.bf16.mxu0 0
  %5499 = vmatpush2.bf16.msra.mxu0 0
  %5500 = vmatprep.mubr.bf16.mxu0 0
  %5501 = vmatmul.mubr.bf16.gmra.mxu0 %v5467
  %v5502 = vpop.f32.mrf.mxu0
  %v5503 = vadd.f32 0.0, %v5502
  %v5504 = vpop.f32.mrf.mxu0
  %v5505 = vadd.f32 0.0, %v5504
  %v5506 = vpop.f32.mrf.mxu0
  %v5507 = vpop.f32.mrf.mxu0
  %5508 = vdwg.mxu0
  %v5509 = vpack.c.bf16 %v5411, %v5411
  %v5510 = vpack.c.bf16 %v5412, %v5412
  %5511 = vmatprep.subr.bf16.mxu0 0
  %5512 = vmatpush1.bf16.msra.mxu0 %v3909
  %5513 = vmatprep.subr.bf16.mxu0 0
  %5514 = vmatpush1.bf16.msra.mxu0 %v3908
  %5515 = vmatprep.subr.bf16.mxu0 0
  %5516 = vmatpush1.bf16.msra.mxu0 %v3907
  %5517 = vmatprep.subr.bf16.mxu0 0
  %5518 = vmatpush1.bf16.msra.mxu0 %v3906
  %5519 = vmatprep.subr.bf16.mxu0 0
  %5520 = vmatpush1.bf16.msra.mxu0 %v3905
  %5521 = vmatprep.subr.bf16.mxu0 0
  %5522 = vmatpush1.bf16.msra.mxu0 %v3904
  %5523 = vmatprep.subr.bf16.mxu0 0
  %5524 = vmatpush1.bf16.msra.mxu0 %v3903
  %5525 = vmatprep.subr.bf16.mxu0 0
  %5526 = vmatpush1.bf16.msra.mxu0 %v3902
  %5527 = vmatprep.subr.bf16.mxu0 0
  %5528 = vmatpush2.bf16.msra.mxu0 %v3917
  %5529 = vmatprep.subr.bf16.mxu0 0
  %5530 = vmatpush2.bf16.msra.mxu0 %v3916
  %5531 = vmatprep.subr.bf16.mxu0 0
  %5532 = vmatpush2.bf16.msra.mxu0 %v3915
  %5533 = vmatprep.subr.bf16.mxu0 0
  %5534 = vmatpush2.bf16.msra.mxu0 %v3914
  %5535 = vmatprep.subr.bf16.mxu0 0
  %5536 = vmatpush2.bf16.msra.mxu0 %v3913
  %5537 = vmatprep.subr.bf16.mxu0 0
  %5538 = vmatpush2.bf16.msra.mxu0 %v3912
  %5539 = vmatprep.subr.bf16.mxu0 0
  %5540 = vmatpush2.bf16.msra.mxu0 %v3911
  %5541 = vmatprep.subr.bf16.mxu0 0
  %5542 = vmatpush2.bf16.msra.mxu0 %v3910
  %5543 = vmatprep.mubr.bf16.mxu0 %v5510
  %5544 = vmatmul.mubr.bf16.gmra.mxu0 %v5509
  %v5545 = vpop.f32.mrf.mxu0
  %v5546 = vadd.f32 0.0, %v5545
  %v5547 = vpop.f32.mrf.mxu0
  %v5548 = vpop.f32.mrf.mxu0
  %v5549 = vpop.f32.mrf.mxu0
  %5550 = vdwg.mxu0
  %v5551 = vsel %vm4726, %v5546, -1e+30
  %5552 = vmax.xlane.f32.xlu0 %v5551
  %v5553 = vpop.xlane.xlu0 %5552
  %v5554 = vsub.f32 %v5551, %v5553
  %v5555 = vmul.f32 %v5554, 1.442695
  %v5556 = vpow.pop %v5555
  %v5557 = vsel %vm4726, %v5556, 0.0
  %5558 = vadd.xlane.f32.xlu0 %v5557
  %v5559 = vpop.xlane.xlu0 %5558
  %v5560 = vmax.f32 %v5559, 1e-20
  %v5561 = vrcp.pop %v5560
  %v5562 = vmul.f32 %v5557, %v5561
  %v5563 = vpack.c.bf16 %v5562, %v5562
  %5564 = vmatprep.subr.bf16.mxu0 %v3757
  %5565 = vmatpush1.bf16.msra.mxu0 %v2104
  %5566 = vmatprep.subr.bf16.mxu0 %v3756
  %5567 = vmatpush1.bf16.msra.mxu0 %v2103
  %5568 = vmatprep.subr.bf16.mxu0 %v3755
  %5569 = vmatpush1.bf16.msra.mxu0 %v2102
  %5570 = vmatprep.subr.bf16.mxu0 %v3754
  %5571 = vmatpush1.bf16.msra.mxu0 %v2101
  %5572 = vmatprep.subr.bf16.mxu0 %v3753
  %5573 = vmatpush1.bf16.msra.mxu0 %v2100
  %5574 = vmatprep.subr.bf16.mxu0 %v3752
  %5575 = vmatpush1.bf16.msra.mxu0 %v2099
  %5576 = vmatprep.subr.bf16.mxu0 %v3751
  %5577 = vmatpush1.bf16.msra.mxu0 %v2098
  %5578 = vmatprep.subr.bf16.mxu0 %v3750
  %5579 = vmatpush1.bf16.msra.mxu0 %v2097
  %5580 = vmatprep.subr.bf16.mxu0 0
  %5581 = vmatpush2.bf16.msra.mxu0 0
  %5582 = vmatprep.subr.bf16.mxu0 0
  %5583 = vmatpush2.bf16.msra.mxu0 0
  %5584 = vmatprep.subr.bf16.mxu0 0
  %5585 = vmatpush2.bf16.msra.mxu0 0
  %5586 = vmatprep.subr.bf16.mxu0 0
  %5587 = vmatpush2.bf16.msra.mxu0 0
  %5588 = vmatprep.subr.bf16.mxu0 0
  %5589 = vmatpush2.bf16.msra.mxu0 0
  %5590 = vmatprep.subr.bf16.mxu0 0
  %5591 = vmatpush2.bf16.msra.mxu0 0
  %5592 = vmatprep.subr.bf16.mxu0 0
  %5593 = vmatpush2.bf16.msra.mxu0 0
  %5594 = vmatprep.subr.bf16.mxu0 0
  %5595 = vmatpush2.bf16.msra.mxu0 0
  %5596 = vmatprep.mubr.bf16.mxu0 0
  %5597 = vmatmul.mubr.bf16.gmra.mxu0 %v5563
  %v5598 = vpop.f32.mrf.mxu0
  %v5599 = vadd.f32 0.0, %v5598
  %v5600 = vpop.f32.mrf.mxu0
  %v5601 = vadd.f32 0.0, %v5600
  %v5602 = vpop.f32.mrf.mxu0
  %v5603 = vpop.f32.mrf.mxu0
  %5604 = vdwg.mxu0
  %v5605 = vld [vmem:[%s15] sm:$0xff]
  %v5607 = vlaneseq
  %v5608 = vshrl.u32 %v5607, 7
  %v5609 = vsub.s32 0, %v5608
  %v5610 = vrot.slane %v5605, %v5609
  %v5611 = vlaneseq
  %v5612 = vshrl.u32 %v5611, 7
  %v5613 = vsub.s32 1, %v5612
  %v5614 = vrot.slane %v5605, %v5613
  %v5615 = vlaneseq
  %v5616 = vshrl.u32 %v5615, 7
  %v5617 = vsub.s32 2, %v5616
  %v5618 = vrot.slane %v5605, %v5617
  %v5619 = vlaneseq
  %v5620 = vshrl.u32 %v5619, 7
  %v5621 = vsub.s32 3, %v5620
  %v5622 = vrot.slane %v5605, %v5621
  %v5623 = vlaneseq
  %v5624 = vshrl.u32 %v5623, 7
  %v5625 = vsub.s32 4, %v5624
  %v5626 = vrot.slane %v5605, %v5625
  %v5627 = vlaneseq
  %v5628 = vshrl.u32 %v5627, 7
  %v5629 = vsub.s32 5, %v5628
  %v5630 = vrot.slane %v5605, %v5629
  %v5631 = vlaneseq
  %v5632 = vshrl.u32 %v5631, 7
  %v5633 = vsub.s32 6, %v5632
  %v5634 = vrot.slane %v5605, %v5633
  %v5635 = vlaneseq
  %v5636 = vshrl.u32 %v5635, 7
  %v5637 = vsub.s32 7, %v5636
  %v5638 = vrot.slane %v5605, %v5637
  %v5647 = vmul.f32 %v5409, %v5610
  %v5648 = vmul.f32 %v5410, %v5614
  %v5649 = vmul.f32 %v5503, %v5618
  %v5650 = vmul.f32 %v5505, %v5622
  %v5651 = vmul.f32 %v5411, %v5626
  %v5652 = vmul.f32 %v5412, %v5630
  %v5653 = vmul.f32 %v5599, %v5634
  %v5654 = vmul.f32 %v5601, %v5638
  %v5655 = vadd.f32 %v5647, %v5648
  %v5656 = vadd.f32 %v5655, %v5649
  %v5657 = vadd.f32 %v5656, %v5650
  %v5658 = vadd.f32 %v5657, %v5651
  %v5659 = vadd.f32 %v5658, %v5652
  %v5660 = vadd.f32 %v5659, %v5653
  %v5661 = vadd.f32 %v5660, %v5654
  %5662 = vadd.xlane.f32.xlu0 %v5661
  %v5663 = vpop.xlane.xlu0 %5662
  %v5664 = vld [vmem:[#allocation2] sm:$0x1]
  %v5666 = vlaneseq
  %v5667 = vshrl.u32 %v5666, 7
  %v5668 = vsub.s32 0, %v5667
  %v5669 = vrot.slane %v5664, %v5668
  %v5671 = vadd.f32 %v5663, %v5669
  %5673 = vset.pattern.permute.xlu0 0
  %5674 = vperm.xlu0 %5673, %v5671
  %v5675 = vpop.permute.xlu0 %5674
  %5677 = vst [vmem:[%s17] sm:$0xff] %v5675
  // Predicated region
  $region70: #{cgib_forward.1} parent=0 // pred_check
    _
  $region71: #{cgib_forward.1} parent=0 // pred_check_branch
    %5679 = sbr.rel (0) target = $region73
  $region72: #{cgib_forward.1} parent=0 // pred_region
    _
  $region73: #{cgib_forward.1} parent=0 // pred_fallthru
    _
  // Predicated region
  $region74: #{cgib_forward.1} parent=0 // pred_check
    _
  $region75: #{cgib_forward.1} parent=0 // pred_check_branch
    %5681 = sbr.rel (0) target = $region77
  $region76: #{cgib_forward.1} parent=0 // pred_region
    _
  $region77: #{cgib_forward.1} parent=0 // pred_fallthru
    _
  // Predicated region
  $region78: #{cgib_forward.1} parent=0 // pred_check
    _
  $region79: #{cgib_forward.1} parent=0 // pred_check_branch
    %5683 = sbr.rel (0) target = $region81
  $region80: #{cgib_forward.1} parent=0 // pred_region
    _
  $region81: #{cgib_forward.1} parent=0 // pred_fallthru
    _
  // Predicated region
  $region82: #{cgib_forward.1} parent=0 // pred_check
    _
  $region83: #{cgib_forward.1} parent=0 // pred_check_branch
    %5685 = sbr.rel (0) target = $region85
  $region84: #{cgib_forward.1} parent=0 // pred_region
    _
  $region85: #{cgib_forward.1} parent=0 // pred_fallthru
    _

</llo_original>
